<compile_context>
chip_gen: v7x
topology: tpu7x:2x2x1
jax: 0.10.0
libtpu: 0.0.40
codegen_flags: <defaults>
</compile_context>

<pallas_src>
import functools

import jax
import jax.numpy as jnp
import numpy as np
from jax.experimental import pallas as pl
from jax.experimental.pallas import tpu as pltpu


# ----------------------------------------------------------------------------
# Constant pooling matrix (transposed): Pt[s, o] = 1.0 if spatial index s is
# inside the 5x5 window (stride 3) of pooled output o, else 0.  Exact in bf16;
# the 1/25 average scale is folded into the conv weight in the wrapper.
# ----------------------------------------------------------------------------
@functools.lru_cache(maxsize=None)
def _pool_matrix_t(h_in, w_in, k=5, s=3):
    h_out = (h_in - k) // s + 1
    w_out = (w_in - k) // s + 1
    P = np.zeros((h_in * w_in, h_out * w_out), dtype=np.float32)
    for i in range(h_out):
        for j in range(w_out):
            o = i * w_out + j
            for di in range(k):
                for dj in range(k):
                    P[(s * i + di) * w_in + (s * j + dj), o] = 1.0
    return P, h_out * w_out, k * k


# ----------------------------------------------------------------------------
# Fused kernel: pool -> relayout -> conv+BN+relu -> flatten -> fc1+relu -> fc2
# ----------------------------------------------------------------------------
def _inception_aux_kernel(x_ref, ptT_ref, wct_ref, bn_scale_ref, bn_shift_ref,
                          w1_ref, b1_ref, w2_ref, b2_ref, o_ref, *, tn, hw, cp):
    hw_in = x_ref.shape[-1]                                   # H*W
    d_conv = wct_ref.shape[-1]                                # 128

    # x block arrives in native NCHW order: (tn, cp, HW).  Merge leading dims
    # (free: cp is a multiple of 8) and cast to bf16 in VMEM.
    xb = x_ref[...].reshape(tn * cp, hw_in).astype(jnp.bfloat16)

    # 1) avg-pool: ONE matmul for the whole batch tile, contracting HW.
    #    ptT entries are exactly 0/1; 1/25 is folded into the conv weight.
    pooled = jnp.dot(xb, ptT_ref[...],
                     preferred_element_type=jnp.float32)      # (tn*cp, hw) f32

    # 2) channels -> lanes: transpose the (small) pooled tensor, not x.
    pooled = pooled.reshape(tn, cp, hw)
    pooled = jnp.transpose(pooled, (0, 2, 1))                 # (tn, hw, cp)
    pooled = pooled.astype(jnp.bfloat16).reshape(tn * hw, cp)

    # 3) 1x1 conv (contract channels) + folded BN affine + ReLU.
    conv = jnp.dot(pooled, wct_ref[...],
                   preferred_element_type=jnp.float32)        # (tn*hw, 128) f32
    conv = jnp.maximum(conv * bn_scale_ref[...] + bn_shift_ref[...], 0.0)

    # 4) flatten to per-sample features (fc1 columns pre-permuted in the
    #    wrapper to reproduce PyTorch NCHW view(N, -1) order).
    feat = conv.astype(jnp.bfloat16).reshape(tn, hw * d_conv) # (tn, 2048) bf16

    # 5) fc1 + ReLU  (dropout p=0.7 is identity in eval mode)
    h1 = jnp.dot(feat, w1_ref[...], preferred_element_type=jnp.float32)
    h1 = jnp.maximum(h1 + b1_ref[...], 0.0).astype(jnp.bfloat16)   # (tn, 1024)

    # 6) fc2, lane-dense (classes padded to a multiple of 128)
    out = jnp.dot(h1, w2_ref[...], preferred_element_type=jnp.float32)
    o_ref[...] = (out + b2_ref[...]).astype(o_ref.dtype)


def _const_spec(shape):
    """BlockSpec for a grid-invariant operand: constant index map, single buffer."""
    zeros = (0,) * len(shape)
    return pl.BlockSpec(shape, lambda i, _z=zeros: _z, pipeline_mode=pl.Buffered(1))


# ----------------------------------------------------------------------------
# Wrapper: weight folding / layout prep (constant-folded under jit) + pallas_call
# ----------------------------------------------------------------------------
def inception_aux_forward(x, params, *, tn=128):
    N, C, H, W = x.shape
    HW = H * W
    ptT_np, hw, kk = _pool_matrix_t(H, W)
    d_conv = params["conv_w"].shape[0]            # 128
    d_fc1 = params["fc1_b"].shape[0]              # 1024
    assert params["fc1_w"].shape == (d_fc1, d_conv * hw), "fc1 expects 128*4*4 features"
    assert tn > 0 and tn % 8 == 0

    # --- batch tile size: large M for the fc matmuls, clamped to the (padded)
    #     batch.  On v7x keep 2*x_tile_bytes + weights <~ 56 MiB and >= 2 grid
    #     steps so both TensorCores get work; v5e/v6e can go to tn=128-256. ---
    tn_eff = min(tn, 8 * pl.cdiv(N, 8))
    n_pad = tn_eff * pl.cdiv(N, tn_eff)

    # --- channels padded to a multiple of 8 (sublane alignment for the in-kernel
    #     relayout); no-op for realistic GoogLeNet C (512).  For C like 528,
    #     padding to a multiple of 128 (640) would also lane-align the conv. ---
    cp = 8 * pl.cdiv(C, 8)

    # --- activations: NCHW -> (N, C, HW) is a free view (no HBM pass); pad
    #     channels / batch only when needed (padded rows are wasted work). ---
    xr = x.reshape(N, C, HW)
    if cp != C:
        xr = jnp.pad(xr, ((0, 0), (0, cp - C), (0, 0)))
    if n_pad != N:
        xr = jnp.pad(xr, ((0, n_pad - N), (0, 0), (0, 0)))

    # --- weights: exact 0/1 pool matrix; 1/25 + BN folded; fc1 columns permuted.
    ptT = jnp.asarray(ptT_np, jnp.bfloat16)                          # (HW, hw)
    wct = jnp.zeros((cp, d_conv), jnp.float32).at[:C, :].set(
        params["conv_w"].T.astype(jnp.float32))
    wct = (wct * (1.0 / float(kk))).astype(jnp.bfloat16)             # (cp, 128)
    eps = 1e-5
    scale = params["bn_gamma"] / jnp.sqrt(params["bn_var"] + eps)
    shift = params["bn_beta"] + (params["conv_b"] - params["bn_mean"]) * scale
    bn_scale = scale.reshape(1, d_conv).astype(jnp.float32)
    bn_shift = shift.reshape(1, d_conv).astype(jnp.float32)
    # permute fc1 columns from PyTorch flatten order (k*hw + o) to kernel order (o*128 + k)
    w1p = (params["fc1_w"].reshape(d_fc1, d_conv, hw)
           .transpose(0, 2, 1).reshape(d_fc1, hw * d_conv))
    w1t = w1p.T.astype(jnp.bfloat16)                                 # (2048, 1024)
    b1 = params["fc1_b"].reshape(1, d_fc1).astype(jnp.float32)
    nc = params["fc2_w"].shape[0]
    ncp = 128 * pl.cdiv(nc, 128)                                     # lane-dense fc2 output
    w2t = jnp.zeros((d_fc1, ncp), jnp.bfloat16).at[:, :nc].set(
        params["fc2_w"].T.astype(jnp.bfloat16))
    b2 = jnp.zeros((1, ncp), jnp.float32).at[0, :nc].set(
        params["fc2_b"].astype(jnp.float32))

    # --- VMEM budget: 2 buffers for the x tile + single-buffered weights + slack.
    x_tile_bytes = tn_eff * cp * HW * x.dtype.itemsize
    w_bytes = 2 * (ptT.size + wct.size + w1t.size + w2t.size) + 4 * (b1.size + b2.size + 2 * d_conv)
    interm_bytes = 8 * tn_eff * (hw * cp + hw * d_conv + d_fc1 + ncp)
    vmem_limit = int(min(100 * 2**20,
                         max(32 * 2**20, 2 * x_tile_bytes + w_bytes + interm_bytes + 8 * 2**20)))

    kernel = functools.partial(_inception_aux_kernel, tn=tn_eff, hw=hw, cp=cp)
    out = pl.pallas_call(
        kernel,
        out_shape=jax.ShapeDtypeStruct((n_pad, ncp), jnp.float32),
        grid=(n_pad // tn_eff,),
        in_specs=[
            pl.BlockSpec((tn_eff, cp, HW), lambda i: (i, 0, 0)),     # x batch tile (NCHW view)
            _const_spec((HW, hw)),                                   # pooling matrix^T (0/1)
            _const_spec((cp, d_conv)),                               # 1x1 conv weight^T / 25
            _const_spec((1, d_conv)),                                # BN scale
            _const_spec((1, d_conv)),                                # BN shift (+conv bias)
            _const_spec((hw * d_conv, d_fc1)),                       # fc1 weight^T (permuted)
            _const_spec((1, d_fc1)),                                 # fc1 bias
            _const_spec((d_fc1, ncp)),                               # fc2 weight^T (padded)
            _const_spec((1, ncp)),                                   # fc2 bias (padded)
        ],
        out_specs=pl.BlockSpec((tn_eff, ncp), lambda i: (i, 0)),
        compiler_params=pltpu.CompilerParams(
            dimension_semantics=("parallel",),    # batch tiles -> both TCs on v7x
            vmem_limit_bytes=vmem_limit,
        ),
    )(xr, ptT, wct, bn_scale, bn_shift, w1t, b1, w2t, b2)
    return out[:N, :nc]


# ----------------------------------------------------------------------------
# Pure-JAX reference (f32), eval-mode semantics of the PyTorch module.
# ----------------------------------------------------------------------------
def inception_aux_reference(x, params, eps=1e-5):
    k, s = 5, 3
    N, C, H, W = x.shape
    ho, wo = (H - k) // s + 1, (W - k) // s + 1
    pooled = jnp.stack(
        [jnp.stack([x[:, :, s * i:s * i + k, s * j:s * j + k].mean(axis=(2, 3))
                    for j in range(wo)], axis=-1) for i in range(ho)],
        axis=-2)                                                     # (N, C, ho, wo)
    conv = jnp.einsum("nchw,kc->nkhw", pooled, params["conv_w"])
    conv = conv + params["conv_b"][None, :, None, None]
    scale = params["bn_gamma"] / jnp.sqrt(params["bn_var"] + eps)
    conv = (conv - params["bn_mean"][None, :, None, None]) * scale[None, :, None, None]
    conv = conv + params["bn_beta"][None, :, None, None]
    conv = jnp.maximum(conv, 0.0)
    feat = conv.reshape(N, -1)
    h1 = jnp.maximum(feat @ params["fc1_w"].T + params["fc1_b"], 0.0)
    return h1 @ params["fc2_w"].T + params["fc2_b"]


def init_params(key, in_channels, num_classes):
    ks = jax.random.split(key, 6)
    return {
        "conv_w": 0.05 * jax.random.normal(ks[0], (128, in_channels), jnp.float32),
        "conv_b": 0.01 * jax.random.normal(ks[1], (128,), jnp.float32),
        "bn_gamma": jnp.ones((128,), jnp.float32),
        "bn_beta": jnp.zeros((128,), jnp.float32),
        "bn_mean": jnp.zeros((128,), jnp.float32),
        "bn_var": jnp.ones((128,), jnp.float32),
        "fc1_w": 0.02 * jax.random.normal(ks[2], (1024, 2048), jnp.float32),
        "fc1_b": 0.01 * jax.random.normal(ks[3], (1024,), jnp.float32),
        "fc2_w": 0.02 * jax.random.normal(ks[4], (num_classes, 1024), jnp.float32),
        "fc2_b": 0.01 * jax.random.normal(ks[5], (num_classes,), jnp.float32),
    }


if __name__ == "__main__":
    # fc1 expects 2048 = 128 * 4 * 4 features, which fixes 14x14 spatial input
    # (AvgPool2d(5, stride=3): (14 - 5)//3 + 1 = 4).
    batch, in_channels, spatial, num_classes = 2, 4, 14, 10
    key = jax.random.PRNGKey(0)
    k_x, k_p = jax.random.split(key)
    x = jax.random.normal(k_x, (batch, in_channels, spatial, spatial), jnp.float32)
    params = init_params(k_p, in_channels, num_classes)

    fwd = jax.jit(inception_aux_forward)
    out = jax.block_until_ready(fwd(x, params))
    assert out.shape == (batch, num_classes)
    assert bool(jnp.all(jnp.isfinite(out)))

    ref = inception_aux_reference(x, params)
    np.testing.assert_allclose(np.asarray(out), np.asarray(ref), rtol=2e-2, atol=2e-2)
    print("KERNEL_OK")
</pallas_src>

<mosaic_0001>
module attributes {stable_mosaic.version = 11 : i64} {
  func.func @_inception_aux_kernel(%arg0: i32, %arg1: memref<8x8x196xf32, #tpu.memory_space<vmem>>, %arg2: memref<196x16xbf16, #tpu.memory_space<vmem>>, %arg3: memref<8x128xbf16, #tpu.memory_space<vmem>>, %arg4: memref<1x128xf32, #tpu.memory_space<vmem>>, %arg5: memref<1x128xf32, #tpu.memory_space<vmem>>, %arg6: memref<2048x1024xbf16, #tpu.memory_space<vmem>>, %arg7: memref<1x1024xf32, #tpu.memory_space<vmem>>, %arg8: memref<1024x128xbf16, #tpu.memory_space<vmem>>, %arg9: memref<1x128xf32, #tpu.memory_space<vmem>>, %arg10: memref<8x128xf32, #tpu.memory_space<vmem>>) attributes {dimension_semantics = [#tpu.dimension_semantics<parallel>], iteration_bounds = array<i64: 1>, scalar_prefetch = 0 : i64, scratch_operands = 0 : i64, tpu.core_type = #tpu.core_type<tc>, window_params = [{transform_indices = @transform_0, window_bounds = array<i64: 8, 8, 196>}, {pipeline_mode = #tpu.pipeline_mode<synchronous>, transform_indices = @transform_1, window_bounds = array<i64: 196, 16>}, {pipeline_mode = #tpu.pipeline_mode<synchronous>, transform_indices = @transform_2, window_bounds = array<i64: 8, 128>}, {pipeline_mode = #tpu.pipeline_mode<synchronous>, transform_indices = @transform_3, window_bounds = array<i64: 1, 128>}, {pipeline_mode = #tpu.pipeline_mode<synchronous>, transform_indices = @transform_4, window_bounds = array<i64: 1, 128>}, {pipeline_mode = #tpu.pipeline_mode<synchronous>, transform_indices = @transform_5, window_bounds = array<i64: 2048, 1024>}, {pipeline_mode = #tpu.pipeline_mode<synchronous>, transform_indices = @transform_6, window_bounds = array<i64: 1, 1024>}, {pipeline_mode = #tpu.pipeline_mode<synchronous>, transform_indices = @transform_7, window_bounds = array<i64: 1024, 128>}, {pipeline_mode = #tpu.pipeline_mode<synchronous>, transform_indices = @transform_8, window_bounds = array<i64: 1, 128>}, {transform_indices = @transform_9, window_bounds = array<i64: 8, 128>}]} {
    %c0 = arith.constant 0 : index
    %c0_0 = arith.constant 0 : index
    %c0_1 = arith.constant 0 : index
    %0 = vector.load %arg1[%c0, %c0_0, %c0_1] : memref<8x8x196xf32, #tpu.memory_space<vmem>>, vector<8x8x196xf32>
    %1 = vector.shape_cast %0 : vector<8x8x196xf32> to vector<64x196xf32>
    %2 = arith.truncf %1 : vector<64x196xf32> to vector<64x196xbf16>
    %c0_2 = arith.constant 0 : index
    %c0_3 = arith.constant 0 : index
    %3 = vector.load %arg2[%c0_2, %c0_3] : memref<196x16xbf16, #tpu.memory_space<vmem>>, vector<196x16xbf16>
    %cst = arith.constant dense<0.000000e+00> : vector<64x16xf32>
    %4 = tpu.matmul %2, %3, %cst {dimension_numbers = #tpu.dot_dimension_numbers<[1], [0], [0], [1], [0, 0, 1, 1], [], []>} : vector<64x196xbf16>, vector<196x16xbf16>, vector<64x16xf32> -> vector<64x16xf32>
    %5 = vector.shape_cast %4 : vector<64x16xf32> to vector<8x8x16xf32>
    %6 = tpu.transpose %5, [0, 2, 1] : vector<8x8x16xf32> -> vector<8x16x8xf32>
    %7 = arith.truncf %6 : vector<8x16x8xf32> to vector<8x16x8xbf16>
    %8 = vector.shape_cast %7 : vector<8x16x8xbf16> to vector<128x8xbf16>
    %c0_4 = arith.constant 0 : index
    %c0_5 = arith.constant 0 : index
    %9 = vector.load %arg3[%c0_4, %c0_5] : memref<8x128xbf16, #tpu.memory_space<vmem>>, vector<8x128xbf16>
    %cst_6 = arith.constant dense<0.000000e+00> : vector<128x128xf32>
    %10 = tpu.matmul %8, %9, %cst_6 {dimension_numbers = #tpu.dot_dimension_numbers<[1], [0], [0], [1], [0, 0, 1, 1], [], []>} : vector<128x8xbf16>, vector<8x128xbf16>, vector<128x128xf32> -> vector<128x128xf32>
    %c0_7 = arith.constant 0 : index
    %c0_8 = arith.constant 0 : index
    %11 = vector.load %arg4[%c0_7, %c0_8] : memref<1x128xf32, #tpu.memory_space<vmem>>, vector<1x128xf32>
    %12 = vector.broadcast %11 : vector<1x128xf32> to vector<128x128xf32>
    %13 = arith.mulf %10, %12 : vector<128x128xf32>
    %c0_9 = arith.constant 0 : index
    %c0_10 = arith.constant 0 : index
    %14 = vector.load %arg5[%c0_9, %c0_10] : memref<1x128xf32, #tpu.memory_space<vmem>>, vector<1x128xf32>
    %15 = vector.broadcast %14 : vector<1x128xf32> to vector<128x128xf32>
    %16 = arith.addf %13, %15 : vector<128x128xf32>
    %cst_11 = arith.constant 0.000000e+00 : f32
    %17 = vector.broadcast %cst_11 : f32 to vector<128x128xf32>
    %18 = arith.maximumf %16, %17 : vector<128x128xf32>
    %19 = arith.truncf %18 : vector<128x128xf32> to vector<128x128xbf16>
    %20 = vector.shape_cast %19 : vector<128x128xbf16> to vector<8x2048xbf16>
    %c0_12 = arith.constant 0 : index
    %c0_13 = arith.constant 0 : index
    %21 = vector.load %arg6[%c0_12, %c0_13] : memref<2048x1024xbf16, #tpu.memory_space<vmem>>, vector<2048x1024xbf16>
    %cst_14 = arith.constant dense<0.000000e+00> : vector<8x1024xf32>
    %22 = tpu.matmul %20, %21, %cst_14 {dimension_numbers = #tpu.dot_dimension_numbers<[1], [0], [0], [1], [0, 0, 1, 1], [], []>} : vector<8x2048xbf16>, vector<2048x1024xbf16>, vector<8x1024xf32> -> vector<8x1024xf32>
    %c0_15 = arith.constant 0 : index
    %c0_16 = arith.constant 0 : index
    %23 = vector.load %arg7[%c0_15, %c0_16] : memref<1x1024xf32, #tpu.memory_space<vmem>>, vector<1x1024xf32>
    %24 = vector.broadcast %23 : vector<1x1024xf32> to vector<8x1024xf32>
    %25 = arith.addf %22, %24 : vector<8x1024xf32>
    %cst_17 = arith.constant 0.000000e+00 : f32
    %26 = vector.broadcast %cst_17 : f32 to vector<8x1024xf32>
    %27 = arith.maximumf %25, %26 : vector<8x1024xf32>
    %28 = arith.truncf %27 : vector<8x1024xf32> to vector<8x1024xbf16>
    %c0_18 = arith.constant 0 : index
    %c0_19 = arith.constant 0 : index
    %29 = vector.load %arg8[%c0_18, %c0_19] : memref<1024x128xbf16, #tpu.memory_space<vmem>>, vector<1024x128xbf16>
    %cst_20 = arith.constant dense<0.000000e+00> : vector<8x128xf32>
    %30 = tpu.matmul %28, %29, %cst_20 {dimension_numbers = #tpu.dot_dimension_numbers<[1], [0], [0], [1], [0, 0, 1, 1], [], []>} : vector<8x1024xbf16>, vector<1024x128xbf16>, vector<8x128xf32> -> vector<8x128xf32>
    %c0_21 = arith.constant 0 : index
    %c0_22 = arith.constant 0 : index
    %31 = vector.load %arg9[%c0_21, %c0_22] : memref<1x128xf32, #tpu.memory_space<vmem>>, vector<1x128xf32>
    %32 = vector.broadcast %31 : vector<1x128xf32> to vector<8x128xf32>
    %33 = arith.addf %30, %32 : vector<8x128xf32>
    %c0_23 = arith.constant 0 : index
    %c0_24 = arith.constant 0 : index
    %34 = vector.load %arg10[%c0_23, %c0_24] : memref<8x128xf32, #tpu.memory_space<vmem>>, vector<8x128xf32>
    tpu.vector_store %arg10[%c0_23, %c0_24], %33 {strides = array<i32>} : memref<8x128xf32, #tpu.memory_space<vmem>>, vector<8x128xf32>,
    return
  }
  func.func @transform_0(%arg0: i32) -> (i32, i32, i32) {
    %c0_i32 = arith.constant 0 : i32
    %c0_i32_0 = arith.constant 0 : i32
    %c0_i32_1 = arith.constant 0 : i32
    return %arg0, %c0_i32, %c0_i32_0 : i32, i32, i32
  }
  func.func @transform_1(%arg0: i32) -> (i32, i32) {
    %c0_i32 = arith.constant 0 : i32
    %c0_i32_0 = arith.constant 0 : i32
    %c0_i32_1 = arith.constant 0 : i32
    return %c0_i32, %c0_i32_0 : i32, i32
  }
  func.func @transform_2(%arg0: i32) -> (i32, i32) {
    %c0_i32 = arith.constant 0 : i32
    %c0_i32_0 = arith.constant 0 : i32
    %c0_i32_1 = arith.constant 0 : i32
    return %c0_i32, %c0_i32_0 : i32, i32
  }
  func.func @transform_3(%arg0: i32) -> (i32, i32) {
    %c0_i32 = arith.constant 0 : i32
    %c0_i32_0 = arith.constant 0 : i32
    %c0_i32_1 = arith.constant 0 : i32
    return %c0_i32, %c0_i32_0 : i32, i32
  }
  func.func @transform_4(%arg0: i32) -> (i32, i32) {
    %c0_i32 = arith.constant 0 : i32
    %c0_i32_0 = arith.constant 0 : i32
    %c0_i32_1 = arith.constant 0 : i32
    return %c0_i32, %c0_i32_0 : i32, i32
  }
  func.func @transform_5(%arg0: i32) -> (i32, i32) {
    %c0_i32 = arith.constant 0 : i32
    %c0_i32_0 = arith.constant 0 : i32
    %c0_i32_1 = arith.constant 0 : i32
    return %c0_i32, %c0_i32_0 : i32, i32
  }
  func.func @transform_6(%arg0: i32) -> (i32, i32) {
    %c0_i32 = arith.constant 0 : i32
    %c0_i32_0 = arith.constant 0 : i32
    %c0_i32_1 = arith.constant 0 : i32
    return %c0_i32, %c0_i32_0 : i32, i32
  }
  func.func @transform_7(%arg0: i32) -> (i32, i32) {
    %c0_i32 = arith.constant 0 : i32
    %c0_i32_0 = arith.constant 0 : i32
    %c0_i32_1 = arith.constant 0 : i32
    return %c0_i32, %c0_i32_0 : i32, i32
  }
  func.func @transform_8(%arg0: i32) -> (i32, i32) {
    %c0_i32 = arith.constant 0 : i32
    %c0_i32_0 = arith.constant 0 : i32
    %c0_i32_1 = arith.constant 0 : i32
    return %c0_i32, %c0_i32_0 : i32, i32
  }
  func.func @transform_9(%arg0: i32) -> (i32, i32) {
    %c0_i32 = arith.constant 0 : i32
    %c0_i32_0 = arith.constant 0 : i32
    return %arg0, %c0_i32 : i32, i32
  }
}

</mosaic_0001>

<llo_original>
// kernel: inception_aux_forward.1
$region0: #{inception_aux_forward.1}
  #allocation0 [shape = 'u32[]', space=smem, size = 0x4, offset = 0x4, fixed_abs, tag = 'smem constant byte address 0x4 - core index']
  #allocation1 [shape = 'u32[144,128]{1,0:T(1,128)}', space=vmem, size = 0x12000, scoped, tag = 'internal scratch']
  %s0 = inlined_call_operand.vmem [shape: f32[8,8,196], index: 0, kind: input, shape index: {}]
  %s1 = inlined_call_operand.vmem [shape: bf16[196,16], index: 1, kind: input, shape index: {}]
  %s2 = inlined_call_operand.vmem [shape: bf16[8,128], index: 2, kind: input, shape index: {}]
  %s3 = inlined_call_operand.vmem [shape: f32[1,128], index: 3, kind: input, shape index: {}]
  %s4 = inlined_call_operand.vmem [shape: f32[1,128], index: 4, kind: input, shape index: {}]
  %s5 = inlined_call_operand.vmem [shape: bf16[2048,1024], index: 5, kind: input, shape index: {}]
  %s6 = inlined_call_operand.vmem [shape: f32[1,1024], index: 6, kind: input, shape index: {}]
  %s7 = inlined_call_operand.vmem [shape: bf16[1024,128], index: 7, kind: input, shape index: {}]
  %s8 = inlined_call_operand.vmem [shape: f32[1,128], index: 8, kind: input, shape index: {}]
  %s9 = inlined_call_operand.vmem [shape: f32[8,128], index: 9, kind: output, shape index: {}]
  %s10 = sld [smem:[#allocation0]]
  $region46: #{inception_aux_forward.1} parent=0
    _
  %s12 = ssub.s32 1, %s10
  %s13 = scalar_select 0, %s12, %s10
  // Predicated region
  $region2: #{inception_aux_forward.1} parent=0 // pred_check
    _
  $region3: #{inception_aux_forward.1} parent=0 // pred_check_branch
    %15 = sbr.rel (0) target = $region5
  $region4: #{inception_aux_forward.1} parent=0 // pred_region
    _
  $region5: #{inception_aux_forward.1} parent=0 // pred_fallthru
    _
  // Predicated region
  $region6: #{inception_aux_forward.1} parent=0 // pred_check
    _
  $region7: #{inception_aux_forward.1} parent=0 // pred_check_branch
    %17 = sbr.rel (0) target = $region9
  $region8: #{inception_aux_forward.1} parent=0 // pred_region
    _
  $region9: #{inception_aux_forward.1} parent=0 // pred_fallthru
    _
  // Predicated region
  $region10: #{inception_aux_forward.1} parent=0 // pred_check
    _
  $region11: #{inception_aux_forward.1} parent=0 // pred_check_branch
    %19 = sbr.rel (0) target = $region13
  $region12: #{inception_aux_forward.1} parent=0 // pred_region
    _
  $region13: #{inception_aux_forward.1} parent=0 // pred_fallthru
    _
  // Predicated region
  $region14: #{inception_aux_forward.1} parent=0 // pred_check
    _
  $region15: #{inception_aux_forward.1} parent=0 // pred_check_branch
    %21 = sbr.rel (0) target = $region17
  $region16: #{inception_aux_forward.1} parent=0 // pred_region
    _
  $region17: #{inception_aux_forward.1} parent=0 // pred_fallthru
    _
  // Predicated region
  $region18: #{inception_aux_forward.1} parent=0 // pred_check
    _
  $region19: #{inception_aux_forward.1} parent=0 // pred_check_branch
    %23 = sbr.rel (0) target = $region21
  $region20: #{inception_aux_forward.1} parent=0 // pred_region
    _
  $region21: #{inception_aux_forward.1} parent=0 // pred_fallthru
    _
  // Predicated region
  $region22: #{inception_aux_forward.1} parent=0 // pred_check
    _
  $region23: #{inception_aux_forward.1} parent=0 // pred_check_branch
    %25 = sbr.rel (0) target = $region25
  $region24: #{inception_aux_forward.1} parent=0 // pred_region
    _
  $region25: #{inception_aux_forward.1} parent=0 // pred_fallthru
    _
  // Predicated region
  $region26: #{inception_aux_forward.1} parent=0 // pred_check
    _
  $region27: #{inception_aux_forward.1} parent=0 // pred_check_branch
    %27 = sbr.rel (0) target = $region29
  $region28: #{inception_aux_forward.1} parent=0 // pred_region
    _
  $region29: #{inception_aux_forward.1} parent=0 // pred_fallthru
    _
  // Predicated region
  $region30: #{inception_aux_forward.1} parent=0 // pred_check
    _
  $region31: #{inception_aux_forward.1} parent=0 // pred_check_branch
    %29 = sbr.rel (0) target = $region33
  $region32: #{inception_aux_forward.1} parent=0 // pred_region
    _
  $region33: #{inception_aux_forward.1} parent=0 // pred_fallthru
    _
  // Predicated region
  $region34: #{inception_aux_forward.1} parent=0 // pred_check
    _
  $region35: #{inception_aux_forward.1} parent=0 // pred_check_branch
    %31 = sbr.rel (0) target = $region37
  $region36: #{inception_aux_forward.1} parent=0 // pred_region
    _
  $region37: #{inception_aux_forward.1} parent=0 // pred_fallthru
    _
  %v33 = vld [vmem:[%s0] sm:$0xff]
  %v34 = vld [vmem:[%s0 + $0x8] sm:$0xff]
  %v35 = vld [vmem:[%s0 + $0x10] sm:$0xff]
  %v36 = vld [vmem:[%s0 + $0x18] sm:$0xff]
  %v37 = vld [vmem:[%s0 + $0x20] sm:$0xff]
  %v38 = vld [vmem:[%s0 + $0x28] sm:$0xff]
  %v39 = vld [vmem:[%s0 + $0x30] sm:$0xff]
  %v40 = vld [vmem:[%s0 + $0x38] sm:$0xff]
  %v41 = vld [vmem:[%s0 + $0x40] sm:$0xff]
  %v42 = vld [vmem:[%s0 + $0x48] sm:$0xff]
  %v43 = vld [vmem:[%s0 + $0x50] sm:$0xff]
  %v44 = vld [vmem:[%s0 + $0x58] sm:$0xff]
  %v45 = vld [vmem:[%s0 + $0x60] sm:$0xff]
  %v46 = vld [vmem:[%s0 + $0x68] sm:$0xff]
  %v47 = vld [vmem:[%s0 + $0x70] sm:$0xff]
  %v48 = vld [vmem:[%s0 + $0x78] sm:$0xff]
  %v49 = vpack.c.bf16 %v35, %v33
  %v50 = vpack.c.bf16 %v36, %v34
  %v51 = vpack.c.bf16 %v39, %v37
  %v52 = vpack.c.bf16 %v40, %v38
  %v53 = vpack.c.bf16 %v43, %v41
  %v54 = vpack.c.bf16 %v44, %v42
  %v55 = vpack.c.bf16 %v47, %v45
  %v56 = vpack.c.bf16 %v48, %v46
  %v57 = vld [vmem:[%s1] sm:$0xf]
  %v58 = vld [vmem:[%s1 + $0x4] sm:$0xf]
  %v59 = vld [vmem:[%s1 + $0x8] sm:$0xf]
  %v60 = vld [vmem:[%s1 + $0xc] sm:$0xf]
  %v61 = vld [vmem:[%s1 + $0x10] sm:$0xf]
  %v62 = vld [vmem:[%s1 + $0x14] sm:$0xf]
  %v63 = vld [vmem:[%s1 + $0x18] sm:$0xf]
  %v64 = vld [vmem:[%s1 + $0x1c] sm:$0xf]
  %v65 = vld [vmem:[%s1 + $0x20] sm:$0xf]
  %v66 = vld [vmem:[%s1 + $0x24] sm:$0xf]
  %v67 = vld [vmem:[%s1 + $0x28] sm:$0xf]
  %v68 = vld [vmem:[%s1 + $0x2c] sm:$0xf]
  %v69 = vld [vmem:[%s1 + $0x30] sm:$0xf]
  %v70 = vld [vmem:[%s1 + $0x34] sm:$0xf]
  %v71 = vld [vmem:[%s1 + $0x38] sm:$0xf]
  %v72 = vld [vmem:[%s1 + $0x3c] sm:$0xf]
  %v73 = vld [vmem:[%s1 + $0x40] sm:$0xf]
  %v74 = vld [vmem:[%s1 + $0x44] sm:$0xf]
  %v75 = vld [vmem:[%s1 + $0x48] sm:$0xf]
  %v76 = vld [vmem:[%s1 + $0x4c] sm:$0xf]
  %v77 = vld [vmem:[%s1 + $0x50] sm:$0xf]
  %v78 = vld [vmem:[%s1 + $0x54] sm:$0xf]
  %v79 = vld [vmem:[%s1 + $0x58] sm:$0xf]
  %v80 = vld [vmem:[%s1 + $0x5c] sm:$0xf]
  %v81 = vld [vmem:[%s1 + $0x60] sm:$0x3]
  %v107 = vunpack.c.l.b16 %v57
  %v108 = vunpack.c.l.b16 %v58
  %v109 = vunpack.c.l.b16 %v59
  %v110 = vunpack.c.l.b16 %v60
  %v111 = vunpack.c.l.b16 %v61
  %v112 = vunpack.c.l.b16 %v62
  %v113 = vunpack.c.l.b16 %v63
  %v114 = vunpack.c.l.b16 %v64
  %v115 = vunpack.c.l.b16 %v65
  %v116 = vunpack.c.l.b16 %v66
  %v117 = vunpack.c.l.b16 %v67
  %v118 = vunpack.c.l.b16 %v68
  %v119 = vunpack.c.l.b16 %v69
  %v120 = vunpack.c.l.b16 %v70
  %v121 = vunpack.c.l.b16 %v71
  %v122 = vunpack.c.l.b16 %v72
  %v123 = vunpack.c.l.b16 %v73
  %v124 = vunpack.c.l.b16 %v74
  %v125 = vunpack.c.l.b16 %v75
  %v126 = vunpack.c.l.b16 %v76
  %v127 = vunpack.c.l.b16 %v77
  %v128 = vunpack.c.l.b16 %v78
  %v129 = vunpack.c.l.b16 %v79
  %v130 = vunpack.c.l.b16 %v80
  %v131 = vunpack.c.l.b16 %v81
  %v132 = vpack.c.b16 %v108, %v107
  %v133 = vpack.c.b16 %v110, %v109
  %v134 = vpack.c.b16 %v112, %v111
  %v135 = vpack.c.b16 %v114, %v113
  %v136 = vpack.c.b16 %v116, %v115
  %v137 = vpack.c.b16 %v118, %v117
  %v138 = vpack.c.b16 %v120, %v119
  %v139 = vpack.c.b16 %v122, %v121
  %v140 = vpack.c.b16 %v124, %v123
  %v141 = vpack.c.b16 %v126, %v125
  %v142 = vpack.c.b16 %v128, %v127
  %v143 = vpack.c.b16 %v130, %v129
  %v144 = vpack.c.b16 %v131, %v131
  %vm157 = vcmask 556032
  %v159 = vsel %vm157, %v50, 0
  %v162 = vsel %vm157, %v52, 0
  %v165 = vsel %vm157, %v54, 0
  %v168 = vsel %vm157, %v56, 0
  %vm170 = vcmask 1041408
  %v172 = vsel %vm170, %v144, 0
  %174 = vmatprep.subr.bf16.mxu0 0
  %175 = vmatpush1.bf16.msra.mxu0 %v132
  %176 = vmatprep.subr.bf16.mxu0 0
  %177 = vmatpush1.bf16.msra.mxu0 %v133
  %178 = vmatprep.subr.bf16.mxu0 0
  %179 = vmatpush1.bf16.msra.mxu0 %v134
  %180 = vmatprep.subr.bf16.mxu0 0
  %181 = vmatpush1.bf16.msra.mxu0 %v135
  %182 = vmatprep.subr.bf16.mxu0 0
  %183 = vmatpush1.bf16.msra.mxu0 %v136
  %184 = vmatprep.subr.bf16.mxu0 0
  %185 = vmatpush1.bf16.msra.mxu0 %v137
  %186 = vmatprep.subr.bf16.mxu0 0
  %187 = vmatpush1.bf16.msra.mxu0 %v138
  %188 = vmatprep.subr.bf16.mxu0 0
  %189 = vmatpush1.bf16.msra.mxu0 %v139
  %190 = vmatprep.subr.bf16.mxu0 0
  %191 = vmatpush1.bf16.msra.mxu0 %v140
  %192 = vmatprep.subr.bf16.mxu0 0
  %193 = vmatpush1.bf16.msra.mxu0 %v141
  %194 = vmatprep.subr.bf16.mxu0 0
  %195 = vmatpush1.bf16.msra.mxu0 %v142
  %196 = vmatprep.subr.bf16.mxu0 0
  %197 = vmatpush1.bf16.msra.mxu0 %v143
  %198 = vmatprep.subr.bf16.mxu0 0
  %199 = vmatpush1.bf16.msra.mxu0 %v172
  %200 = vmatprep.subr.bf16.mxu0 0
  %201 = vmatpush1.bf16.msra.mxu0 0
  %202 = vmatprep.subr.bf16.mxu0 0
  %203 = vmatpush1.bf16.msra.mxu0 0
  %204 = vmatprep.subr.bf16.mxu0 0
  %205 = vmatpush1.bf16.msra.mxu0 0
  %206 = vmatprep.mubr.bf16.mxu0 %v159
  %207 = vmatmul.mubr.bf16.gmra.mrb[0].mxu0 %v49
  %v208 = vpop.f32.mrb[0].mxu0
  %v209 = vadd.f32 0.0, %v208
  %v210 = vpop.f32.mrb[0].mxu0
  %v211 = vpop.f32.mrb[0].mxu0
  %v212 = vadd.f32 0.0, %v211
  %v213 = vpop.f32.mrb[0].mxu0
  %214 = vmatprep.mubr.bf16.mxu0 %v162
  %215 = vmatmul.mubr.bf16.gmra.mrb[0].mxu0 %v51
  %v216 = vpop.f32.mrb[0].mxu0
  %v217 = vadd.f32 0.0, %v216
  %v218 = vpop.f32.mrb[0].mxu0
  %v219 = vpop.f32.mrb[0].mxu0
  %v220 = vadd.f32 0.0, %v219
  %v221 = vpop.f32.mrb[0].mxu0
  %222 = vmatprep.mubr.bf16.mxu0 %v165
  %223 = vmatmul.mubr.bf16.gmra.mrb[0].mxu0 %v53
  %v224 = vpop.f32.mrb[0].mxu0
  %v225 = vadd.f32 0.0, %v224
  %v226 = vpop.f32.mrb[0].mxu0
  %v227 = vpop.f32.mrb[0].mxu0
  %v228 = vadd.f32 0.0, %v227
  %v229 = vpop.f32.mrb[0].mxu0
  %230 = vmatprep.mubr.bf16.mxu0 %v168
  %231 = vmatmul.mubr.bf16.gmra.mrb[0].mxu0 %v55
  %v232 = vpop.f32.mrb[0].mxu0
  %v233 = vadd.f32 0.0, %v232
  %v234 = vpop.f32.mrb[0].mxu0
  %v235 = vpop.f32.mrb[0].mxu0
  %v236 = vadd.f32 0.0, %v235
  %v237 = vpop.f32.mrb[0].mxu0
  %238 = vdwg.mxu0
  %239 = vxpose.xlu0.b32.start [1/16] %v209, 128
  %240 = vxpose.xlu0.b32.cont [2/16] 0.0, 128
  %241 = vxpose.xlu0.b32.cont [3/16] 0.0, 128
  %242 = vxpose.xlu0.b32.cont [4/16] 0.0, 128
  %243 = vxpose.xlu0.b32.cont [5/16] 0.0, 128
  %244 = vxpose.xlu0.b32.cont [6/16] 0.0, 128
  %245 = vxpose.xlu0.b32.cont [7/16] 0.0, 128
  %246 = vxpose.xlu0.b32.cont [8/16] 0.0, 128
  %247 = vxpose.xlu0.b32.cont [9/16] 0.0, 128
  %248 = vxpose.xlu0.b32.cont [10/16] 0.0, 128
  %249 = vxpose.xlu0.b32.cont [11/16] 0.0, 128
  %250 = vxpose.xlu0.b32.cont [12/16] 0.0, 128
  %251 = vxpose.xlu0.b32.cont [13/16] 0.0, 128
  %252 = vxpose.xlu0.b32.cont [14/16] 0.0, 128
  %253 = vxpose.xlu0.b32.cont [15/16] 0.0, 128
  %254 = vxpose.xlu0.b32.end [16/16] 0.0, 128
  %v255 = vpop.trf.xlu0
  %v256 = vpop.trf.xlu0
  %v257 = vpop.trf.xlu0
  %v258 = vpop.trf.xlu0
  %v259 = vpop.trf.xlu0
  %v260 = vpop.trf.xlu0
  %v261 = vpop.trf.xlu0
  %v262 = vpop.trf.xlu0
  %v263 = vpop.trf.xlu0
  %v264 = vpop.trf.xlu0
  %v265 = vpop.trf.xlu0
  %v266 = vpop.trf.xlu0
  %v267 = vpop.trf.xlu0
  %v268 = vpop.trf.xlu0
  %v269 = vpop.trf.xlu0
  %v270 = vpop.trf.xlu0
  %271 = vxpose.xlu0.b32.start [1/16] %v212, 128
  %272 = vxpose.xlu0.b32.cont [2/16] 0.0, 128
  %273 = vxpose.xlu0.b32.cont [3/16] 0.0, 128
  %274 = vxpose.xlu0.b32.cont [4/16] 0.0, 128
  %275 = vxpose.xlu0.b32.cont [5/16] 0.0, 128
  %276 = vxpose.xlu0.b32.cont [6/16] 0.0, 128
  %277 = vxpose.xlu0.b32.cont [7/16] 0.0, 128
  %278 = vxpose.xlu0.b32.cont [8/16] 0.0, 128
  %279 = vxpose.xlu0.b32.cont [9/16] 0.0, 128
  %280 = vxpose.xlu0.b32.cont [10/16] 0.0, 128
  %281 = vxpose.xlu0.b32.cont [11/16] 0.0, 128
  %282 = vxpose.xlu0.b32.cont [12/16] 0.0, 128
  %283 = vxpose.xlu0.b32.cont [13/16] 0.0, 128
  %284 = vxpose.xlu0.b32.cont [14/16] 0.0, 128
  %285 = vxpose.xlu0.b32.cont [15/16] 0.0, 128
  %286 = vxpose.xlu0.b32.end [16/16] 0.0, 128
  %v287 = vpop.trf.xlu0
  %v288 = vpop.trf.xlu0
  %v289 = vpop.trf.xlu0
  %v290 = vpop.trf.xlu0
  %v291 = vpop.trf.xlu0
  %v292 = vpop.trf.xlu0
  %v293 = vpop.trf.xlu0
  %v294 = vpop.trf.xlu0
  %v295 = vpop.trf.xlu0
  %v296 = vpop.trf.xlu0
  %v297 = vpop.trf.xlu0
  %v298 = vpop.trf.xlu0
  %v299 = vpop.trf.xlu0
  %v300 = vpop.trf.xlu0
  %v301 = vpop.trf.xlu0
  %v302 = vpop.trf.xlu0
  %303 = vxpose.xlu0.b32.start [1/16] %v217, 128
  %304 = vxpose.xlu0.b32.cont [2/16] 0.0, 128
  %305 = vxpose.xlu0.b32.cont [3/16] 0.0, 128
  %306 = vxpose.xlu0.b32.cont [4/16] 0.0, 128
  %307 = vxpose.xlu0.b32.cont [5/16] 0.0, 128
  %308 = vxpose.xlu0.b32.cont [6/16] 0.0, 128
  %309 = vxpose.xlu0.b32.cont [7/16] 0.0, 128
  %310 = vxpose.xlu0.b32.cont [8/16] 0.0, 128
  %311 = vxpose.xlu0.b32.cont [9/16] 0.0, 128
  %312 = vxpose.xlu0.b32.cont [10/16] 0.0, 128
  %313 = vxpose.xlu0.b32.cont [11/16] 0.0, 128
  %314 = vxpose.xlu0.b32.cont [12/16] 0.0, 128
  %315 = vxpose.xlu0.b32.cont [13/16] 0.0, 128
  %316 = vxpose.xlu0.b32.cont [14/16] 0.0, 128
  %317 = vxpose.xlu0.b32.cont [15/16] 0.0, 128
  %318 = vxpose.xlu0.b32.end [16/16] 0.0, 128
  %v319 = vpop.trf.xlu0
  %v320 = vpop.trf.xlu0
  %v321 = vpop.trf.xlu0
  %v322 = vpop.trf.xlu0
  %v323 = vpop.trf.xlu0
  %v324 = vpop.trf.xlu0
  %v325 = vpop.trf.xlu0
  %v326 = vpop.trf.xlu0
  %v327 = vpop.trf.xlu0
  %v328 = vpop.trf.xlu0
  %v329 = vpop.trf.xlu0
  %v330 = vpop.trf.xlu0
  %v331 = vpop.trf.xlu0
  %v332 = vpop.trf.xlu0
  %v333 = vpop.trf.xlu0
  %v334 = vpop.trf.xlu0
  %335 = vxpose.xlu0.b32.start [1/16] %v220, 128
  %336 = vxpose.xlu0.b32.cont [2/16] 0.0, 128
  %337 = vxpose.xlu0.b32.cont [3/16] 0.0, 128
  %338 = vxpose.xlu0.b32.cont [4/16] 0.0, 128
  %339 = vxpose.xlu0.b32.cont [5/16] 0.0, 128
  %340 = vxpose.xlu0.b32.cont [6/16] 0.0, 128
  %341 = vxpose.xlu0.b32.cont [7/16] 0.0, 128
  %342 = vxpose.xlu0.b32.cont [8/16] 0.0, 128
  %343 = vxpose.xlu0.b32.cont [9/16] 0.0, 128
  %344 = vxpose.xlu0.b32.cont [10/16] 0.0, 128
  %345 = vxpose.xlu0.b32.cont [11/16] 0.0, 128
  %346 = vxpose.xlu0.b32.cont [12/16] 0.0, 128
  %347 = vxpose.xlu0.b32.cont [13/16] 0.0, 128
  %348 = vxpose.xlu0.b32.cont [14/16] 0.0, 128
  %349 = vxpose.xlu0.b32.cont [15/16] 0.0, 128
  %350 = vxpose.xlu0.b32.end [16/16] 0.0, 128
  %v351 = vpop.trf.xlu0
  %v352 = vpop.trf.xlu0
  %v353 = vpop.trf.xlu0
  %v354 = vpop.trf.xlu0
  %v355 = vpop.trf.xlu0
  %v356 = vpop.trf.xlu0
  %v357 = vpop.trf.xlu0
  %v358 = vpop.trf.xlu0
  %v359 = vpop.trf.xlu0
  %v360 = vpop.trf.xlu0
  %v361 = vpop.trf.xlu0
  %v362 = vpop.trf.xlu0
  %v363 = vpop.trf.xlu0
  %v364 = vpop.trf.xlu0
  %v365 = vpop.trf.xlu0
  %v366 = vpop.trf.xlu0
  %367 = vxpose.xlu0.b32.start [1/16] %v225, 128
  %368 = vxpose.xlu0.b32.cont [2/16] 0.0, 128
  %369 = vxpose.xlu0.b32.cont [3/16] 0.0, 128
  %370 = vxpose.xlu0.b32.cont [4/16] 0.0, 128
  %371 = vxpose.xlu0.b32.cont [5/16] 0.0, 128
  %372 = vxpose.xlu0.b32.cont [6/16] 0.0, 128
  %373 = vxpose.xlu0.b32.cont [7/16] 0.0, 128
  %374 = vxpose.xlu0.b32.cont [8/16] 0.0, 128
  %375 = vxpose.xlu0.b32.cont [9/16] 0.0, 128
  %376 = vxpose.xlu0.b32.cont [10/16] 0.0, 128
  %377 = vxpose.xlu0.b32.cont [11/16] 0.0, 128
  %378 = vxpose.xlu0.b32.cont [12/16] 0.0, 128
  %379 = vxpose.xlu0.b32.cont [13/16] 0.0, 128
  %380 = vxpose.xlu0.b32.cont [14/16] 0.0, 128
  %381 = vxpose.xlu0.b32.cont [15/16] 0.0, 128
  %382 = vxpose.xlu0.b32.end [16/16] 0.0, 128
  %v383 = vpop.trf.xlu0
  %v384 = vpop.trf.xlu0
  %v385 = vpop.trf.xlu0
  %v386 = vpop.trf.xlu0
  %v387 = vpop.trf.xlu0
  %v388 = vpop.trf.xlu0
  %v389 = vpop.trf.xlu0
  %v390 = vpop.trf.xlu0
  %v391 = vpop.trf.xlu0
  %v392 = vpop.trf.xlu0
  %v393 = vpop.trf.xlu0
  %v394 = vpop.trf.xlu0
  %v395 = vpop.trf.xlu0
  %v396 = vpop.trf.xlu0
  %v397 = vpop.trf.xlu0
  %v398 = vpop.trf.xlu0
  %399 = vxpose.xlu0.b32.start [1/16] %v228, 128
  %400 = vxpose.xlu0.b32.cont [2/16] 0.0, 128
  %401 = vxpose.xlu0.b32.cont [3/16] 0.0, 128
  %402 = vxpose.xlu0.b32.cont [4/16] 0.0, 128
  %403 = vxpose.xlu0.b32.cont [5/16] 0.0, 128
  %404 = vxpose.xlu0.b32.cont [6/16] 0.0, 128
  %405 = vxpose.xlu0.b32.cont [7/16] 0.0, 128
  %406 = vxpose.xlu0.b32.cont [8/16] 0.0, 128
  %407 = vxpose.xlu0.b32.cont [9/16] 0.0, 128
  %408 = vxpose.xlu0.b32.cont [10/16] 0.0, 128
  %409 = vxpose.xlu0.b32.cont [11/16] 0.0, 128
  %410 = vxpose.xlu0.b32.cont [12/16] 0.0, 128
  %411 = vxpose.xlu0.b32.cont [13/16] 0.0, 128
  %412 = vxpose.xlu0.b32.cont [14/16] 0.0, 128
  %413 = vxpose.xlu0.b32.cont [15/16] 0.0, 128
  %414 = vxpose.xlu0.b32.end [16/16] 0.0, 128
  %v415 = vpop.trf.xlu0
  %v416 = vpop.trf.xlu0
  %v417 = vpop.trf.xlu0
  %v418 = vpop.trf.xlu0
  %v419 = vpop.trf.xlu0
  %v420 = vpop.trf.xlu0
  %v421 = vpop.trf.xlu0
  %v422 = vpop.trf.xlu0
  %v423 = vpop.trf.xlu0
  %v424 = vpop.trf.xlu0
  %v425 = vpop.trf.xlu0
  %v426 = vpop.trf.xlu0
  %v427 = vpop.trf.xlu0
  %v428 = vpop.trf.xlu0
  %v429 = vpop.trf.xlu0
  %v430 = vpop.trf.xlu0
  %431 = vxpose.xlu0.b32.start [1/16] %v233, 128
  %432 = vxpose.xlu0.b32.cont [2/16] 0.0, 128
  %433 = vxpose.xlu0.b32.cont [3/16] 0.0, 128
  %434 = vxpose.xlu0.b32.cont [4/16] 0.0, 128
  %435 = vxpose.xlu0.b32.cont [5/16] 0.0, 128
  %436 = vxpose.xlu0.b32.cont [6/16] 0.0, 128
  %437 = vxpose.xlu0.b32.cont [7/16] 0.0, 128
  %438 = vxpose.xlu0.b32.cont [8/16] 0.0, 128
  %439 = vxpose.xlu0.b32.cont [9/16] 0.0, 128
  %440 = vxpose.xlu0.b32.cont [10/16] 0.0, 128
  %441 = vxpose.xlu0.b32.cont [11/16] 0.0, 128
  %442 = vxpose.xlu0.b32.cont [12/16] 0.0, 128
  %443 = vxpose.xlu0.b32.cont [13/16] 0.0, 128
  %444 = vxpose.xlu0.b32.cont [14/16] 0.0, 128
  %445 = vxpose.xlu0.b32.cont [15/16] 0.0, 128
  %446 = vxpose.xlu0.b32.end [16/16] 0.0, 128
  %v447 = vpop.trf.xlu0
  %v448 = vpop.trf.xlu0
  %v449 = vpop.trf.xlu0
  %v450 = vpop.trf.xlu0
  %v451 = vpop.trf.xlu0
  %v452 = vpop.trf.xlu0
  %v453 = vpop.trf.xlu0
  %v454 = vpop.trf.xlu0
  %v455 = vpop.trf.xlu0
  %v456 = vpop.trf.xlu0
  %v457 = vpop.trf.xlu0
  %v458 = vpop.trf.xlu0
  %v459 = vpop.trf.xlu0
  %v460 = vpop.trf.xlu0
  %v461 = vpop.trf.xlu0
  %v462 = vpop.trf.xlu0
  %463 = vxpose.xlu0.b32.start [1/16] %v236, 128
  %464 = vxpose.xlu0.b32.cont [2/16] 0.0, 128
  %465 = vxpose.xlu0.b32.cont [3/16] 0.0, 128
  %466 = vxpose.xlu0.b32.cont [4/16] 0.0, 128
  %467 = vxpose.xlu0.b32.cont [5/16] 0.0, 128
  %468 = vxpose.xlu0.b32.cont [6/16] 0.0, 128
  %469 = vxpose.xlu0.b32.cont [7/16] 0.0, 128
  %470 = vxpose.xlu0.b32.cont [8/16] 0.0, 128
  %471 = vxpose.xlu0.b32.cont [9/16] 0.0, 128
  %472 = vxpose.xlu0.b32.cont [10/16] 0.0, 128
  %473 = vxpose.xlu0.b32.cont [11/16] 0.0, 128
  %474 = vxpose.xlu0.b32.cont [12/16] 0.0, 128
  %475 = vxpose.xlu0.b32.cont [13/16] 0.0, 128
  %476 = vxpose.xlu0.b32.cont [14/16] 0.0, 128
  %477 = vxpose.xlu0.b32.cont [15/16] 0.0, 128
  %478 = vxpose.xlu0.b32.end [16/16] 0.0, 128
  %v479 = vpop.trf.xlu0
  %v480 = vpop.trf.xlu0
  %v481 = vpop.trf.xlu0
  %v482 = vpop.trf.xlu0
  %v483 = vpop.trf.xlu0
  %v484 = vpop.trf.xlu0
  %v485 = vpop.trf.xlu0
  %v486 = vpop.trf.xlu0
  %v487 = vpop.trf.xlu0
  %v488 = vpop.trf.xlu0
  %v489 = vpop.trf.xlu0
  %v490 = vpop.trf.xlu0
  %v491 = vpop.trf.xlu0
  %v492 = vpop.trf.xlu0
  %v493 = vpop.trf.xlu0
  %v494 = vpop.trf.xlu0
  %v495 = vpack.c.bf16 %v256, %v255
  %v496 = vpack.c.bf16 %v288, %v287
  %v497 = vpack.c.bf16 %v320, %v319
  %v498 = vpack.c.bf16 %v352, %v351
  %v499 = vpack.c.bf16 %v384, %v383
  %v500 = vpack.c.bf16 %v416, %v415
  %v501 = vpack.c.bf16 %v448, %v447
  %v502 = vpack.c.bf16 %v480, %v479
  %v503 = vld [vmem:[%s2] sm:$0xf]
  %vm504 = vcmask 64512
  %v506 = vsel %vm504, %v495, 0
  %v509 = vsel %vm504, %v496, 0
  %v512 = vsel %vm504, %v497, 0
  %v515 = vsel %vm504, %v498, 0
  %v518 = vsel %vm504, %v499, 0
  %v521 = vsel %vm504, %v500, 0
  %v524 = vsel %vm504, %v501, 0
  %v527 = vsel %vm504, %v502, 0
  %vm529 = vcmask 1043456
  %v531 = vsel %vm529, %v503, 0
  %533 = vmatprep.subr.bf16.mxu0 0
  %534 = vmatpush1.bf16.msra.mxu0 %v531
  %535 = vmatprep.subr.bf16.mxu0 0
  %536 = vmatpush1.bf16.msra.mxu0 0
  %537 = vmatprep.subr.bf16.mxu0 0
  %538 = vmatpush1.bf16.msra.mxu0 0
  %539 = vmatprep.subr.bf16.mxu0 0
  %540 = vmatpush1.bf16.msra.mxu0 0
  %541 = vmatprep.subr.bf16.mxu0 0
  %542 = vmatpush1.bf16.msra.mxu0 0
  %543 = vmatprep.subr.bf16.mxu0 0
  %544 = vmatpush1.bf16.msra.mxu0 0
  %545 = vmatprep.subr.bf16.mxu0 0
  %546 = vmatpush1.bf16.msra.mxu0 0
  %547 = vmatprep.subr.bf16.mxu0 0
  %548 = vmatpush1.bf16.msra.mxu0 0
  %549 = vmatprep.subr.bf16.mxu0 0
  %550 = vmatpush1.bf16.msra.mxu0 0
  %551 = vmatprep.subr.bf16.mxu0 0
  %552 = vmatpush1.bf16.msra.mxu0 0
  %553 = vmatprep.subr.bf16.mxu0 0
  %554 = vmatpush1.bf16.msra.mxu0 0
  %555 = vmatprep.subr.bf16.mxu0 0
  %556 = vmatpush1.bf16.msra.mxu0 0
  %557 = vmatprep.subr.bf16.mxu0 0
  %558 = vmatpush1.bf16.msra.mxu0 0
  %559 = vmatprep.subr.bf16.mxu0 0
  %560 = vmatpush1.bf16.msra.mxu0 0
  %561 = vmatprep.subr.bf16.mxu0 0
  %562 = vmatpush1.bf16.msra.mxu0 0
  %563 = vmatprep.subr.bf16.mxu0 0
  %564 = vmatpush1.bf16.msra.mxu0 0
  %565 = vmatprep.mubr.bf16.mxu0 0
  %566 = vmatmul.mubr.bf16.gmra.mrb[0].mxu0 %v506
  %v567 = vpop.f32.mrb[0].mxu0
  %v568 = vadd.f32 0.0, %v567
  %v569 = vpop.f32.mrb[0].mxu0
  %v570 = vpop.f32.mrb[0].mxu0
  %v571 = vadd.f32 0.0, %v570
  %v572 = vpop.f32.mrb[0].mxu0
  %573 = vmatprep.mubr.bf16.mxu0 0
  %574 = vmatmul.mubr.bf16.gmra.mrb[0].mxu0 %v509
  %v575 = vpop.f32.mrb[0].mxu0
  %v576 = vadd.f32 0.0, %v575
  %v577 = vpop.f32.mrb[0].mxu0
  %v578 = vpop.f32.mrb[0].mxu0
  %v579 = vadd.f32 0.0, %v578
  %v580 = vpop.f32.mrb[0].mxu0
  %581 = vmatprep.mubr.bf16.mxu0 0
  %582 = vmatmul.mubr.bf16.gmra.mrb[0].mxu0 %v512
  %v583 = vpop.f32.mrb[0].mxu0
  %v584 = vadd.f32 0.0, %v583
  %v585 = vpop.f32.mrb[0].mxu0
  %v586 = vpop.f32.mrb[0].mxu0
  %v587 = vadd.f32 0.0, %v586
  %v588 = vpop.f32.mrb[0].mxu0
  %589 = vmatprep.mubr.bf16.mxu0 0
  %590 = vmatmul.mubr.bf16.gmra.mrb[0].mxu0 %v515
  %v591 = vpop.f32.mrb[0].mxu0
  %v592 = vadd.f32 0.0, %v591
  %v593 = vpop.f32.mrb[0].mxu0
  %v594 = vpop.f32.mrb[0].mxu0
  %v595 = vadd.f32 0.0, %v594
  %v596 = vpop.f32.mrb[0].mxu0
  %597 = vmatprep.mubr.bf16.mxu0 0
  %598 = vmatmul.mubr.bf16.gmra.mrb[0].mxu0 %v518
  %v599 = vpop.f32.mrb[0].mxu0
  %v600 = vadd.f32 0.0, %v599
  %v601 = vpop.f32.mrb[0].mxu0
  %v602 = vpop.f32.mrb[0].mxu0
  %v603 = vadd.f32 0.0, %v602
  %v604 = vpop.f32.mrb[0].mxu0
  %605 = vmatprep.mubr.bf16.mxu0 0
  %606 = vmatmul.mubr.bf16.gmra.mrb[0].mxu0 %v521
  %v607 = vpop.f32.mrb[0].mxu0
  %v608 = vadd.f32 0.0, %v607
  %v609 = vpop.f32.mrb[0].mxu0
  %v610 = vpop.f32.mrb[0].mxu0
  %v611 = vadd.f32 0.0, %v610
  %v612 = vpop.f32.mrb[0].mxu0
  %613 = vmatprep.mubr.bf16.mxu0 0
  %614 = vmatmul.mubr.bf16.gmra.mrb[0].mxu0 %v524
  %v615 = vpop.f32.mrb[0].mxu0
  %v616 = vadd.f32 0.0, %v615
  %v617 = vpop.f32.mrb[0].mxu0
  %v618 = vpop.f32.mrb[0].mxu0
  %v619 = vadd.f32 0.0, %v618
  %v620 = vpop.f32.mrb[0].mxu0
  %621 = vmatprep.mubr.bf16.mxu0 0
  %622 = vmatmul.mubr.bf16.gmra.mrb[0].mxu0 %v527
  %v623 = vpop.f32.mrb[0].mxu0
  %v624 = vadd.f32 0.0, %v623
  %v625 = vpop.f32.mrb[0].mxu0
  %v626 = vpop.f32.mrb[0].mxu0
  %v627 = vadd.f32 0.0, %v626
  %v628 = vpop.f32.mrb[0].mxu0
  %629 = vdwg.mxu0
  %v630 = vld [vmem:[%s3] sm:$0x1]
  %v632 = vlaneseq
  %v633 = vshrl.u32 %v632, 7
  %v634 = vsub.s32 0, %v633
  %v635 = vrot.slane %v630, %v634
  %v637 = vmul.f32 %v568, %v635
  %v638 = vmul.f32 %v571, %v635
  %v639 = vmul.f32 %v576, %v635
  %v640 = vmul.f32 %v579, %v635
  %v641 = vmul.f32 %v584, %v635
  %v642 = vmul.f32 %v587, %v635
  %v643 = vmul.f32 %v592, %v635
  %v644 = vmul.f32 %v595, %v635
  %v645 = vmul.f32 %v600, %v635
  %v646 = vmul.f32 %v603, %v635
  %v647 = vmul.f32 %v608, %v635
  %v648 = vmul.f32 %v611, %v635
  %v649 = vmul.f32 %v616, %v635
  %v650 = vmul.f32 %v619, %v635
  %v651 = vmul.f32 %v624, %v635
  %v652 = vmul.f32 %v627, %v635
  %v653 = vld [vmem:[%s4] sm:$0x1]
  %v655 = vlaneseq
  %v656 = vshrl.u32 %v655, 7
  %v657 = vsub.s32 0, %v656
  %v658 = vrot.slane %v653, %v657
  %v660 = vadd.f32 %v637, %v658
  %v661 = vadd.f32 %v638, %v658
  %v662 = vadd.f32 %v639, %v658
  %v663 = vadd.f32 %v640, %v658
  %v664 = vadd.f32 %v641, %v658
  %v665 = vadd.f32 %v642, %v658
  %v666 = vadd.f32 %v643, %v658
  %v667 = vadd.f32 %v644, %v658
  %v668 = vadd.f32 %v645, %v658
  %v669 = vadd.f32 %v646, %v658
  %v670 = vadd.f32 %v647, %v658
  %v671 = vadd.f32 %v648, %v658
  %v672 = vadd.f32 %v649, %v658
  %v673 = vadd.f32 %v650, %v658
  %v674 = vadd.f32 %v651, %v658
  %v675 = vadd.f32 %v652, %v658
  %v676 = vmax.f32 %v660, 0.0
  %v677 = vmax.f32 %v661, 0.0
  %v678 = vmax.f32 %v662, 0.0
  %v679 = vmax.f32 %v663, 0.0
  %v680 = vmax.f32 %v664, 0.0
  %v681 = vmax.f32 %v665, 0.0
  %v682 = vmax.f32 %v666, 0.0
  %v683 = vmax.f32 %v667, 0.0
  %v684 = vmax.f32 %v668, 0.0
  %v685 = vmax.f32 %v669, 0.0
  %v686 = vmax.f32 %v670, 0.0
  %v687 = vmax.f32 %v671, 0.0
  %v688 = vmax.f32 %v672, 0.0
  %v689 = vmax.f32 %v673, 0.0
  %v690 = vmax.f32 %v674, 0.0
  %v691 = vmax.f32 %v675, 0.0
  %v692 = vpack.c.bf16 %v677, %v676
  %v693 = vpack.c.bf16 %v679, %v678
  %v694 = vpack.c.bf16 %v681, %v680
  %v695 = vpack.c.bf16 %v683, %v682
  %v696 = vpack.c.bf16 %v685, %v684
  %v697 = vpack.c.bf16 %v687, %v686
  %v698 = vpack.c.bf16 %v689, %v688
  %v699 = vpack.c.bf16 %v691, %v690
  %v700 = vld [vmem:[%s5] sm:$0xff]
  %v701 = vld [vmem:[%s5 + $0x8] sm:$0xff]
  %v702 = vld [vmem:[%s5 + $0x10] sm:$0xff]
  %v703 = vld [vmem:[%s5 + $0x18] sm:$0xff]
  %v704 = vld [vmem:[%s5 + $0x20] sm:$0xff]
  %v705 = vld [vmem:[%s5 + $0x28] sm:$0xff]
  %v706 = vld [vmem:[%s5 + $0x30] sm:$0xff]
  %v707 = vld [vmem:[%s5 + $0x38] sm:$0xff]
  %v708 = vld [vmem:[%s5 + $0x40] sm:$0xff]
  %v709 = vld [vmem:[%s5 + $0x48] sm:$0xff]
  %v710 = vld [vmem:[%s5 + $0x50] sm:$0xff]
  %v711 = vld [vmem:[%s5 + $0x58] sm:$0xff]
  %v712 = vld [vmem:[%s5 + $0x60] sm:$0xff]
  %v713 = vld [vmem:[%s5 + $0x68] sm:$0xff]
  %v714 = vld [vmem:[%s5 + $0x70] sm:$0xff]
  %v715 = vld [vmem:[%s5 + $0x78] sm:$0xff]
  %v716 = vld [vmem:[%s5 + $0x80] sm:$0xff]
  %v717 = vld [vmem:[%s5 + $0x88] sm:$0xff]
  %v718 = vld [vmem:[%s5 + $0x90] sm:$0xff]
  %v719 = vld [vmem:[%s5 + $0x98] sm:$0xff]
  %v720 = vld [vmem:[%s5 + $0xa0] sm:$0xff]
  %v721 = vld [vmem:[%s5 + $0xa8] sm:$0xff]
  %v722 = vld [vmem:[%s5 + $0xb0] sm:$0xff]
  %v723 = vld [vmem:[%s5 + $0xb8] sm:$0xff]
  %v724 = vld [vmem:[%s5 + $0xc0] sm:$0xff]
  %v725 = vld [vmem:[%s5 + $0xc8] sm:$0xff]
  %v726 = vld [vmem:[%s5 + $0xd0] sm:$0xff]
  %v727 = vld [vmem:[%s5 + $0xd8] sm:$0xff]
  %v728 = vld [vmem:[%s5 + $0xe0] sm:$0xff]
  %v729 = vld [vmem:[%s5 + $0xe8] sm:$0xff]
  %v730 = vld [vmem:[%s5 + $0xf0] sm:$0xff]
  %v731 = vld [vmem:[%s5 + $0xf8] sm:$0xff]
  %v732 = vld [vmem:[%s5 + $0x100] sm:$0xff]
  %v733 = vld [vmem:[%s5 + $0x108] sm:$0xff]
  %v734 = vld [vmem:[%s5 + $0x110] sm:$0xff]
  %v735 = vld [vmem:[%s5 + $0x118] sm:$0xff]
  %v736 = vld [vmem:[%s5 + $0x120] sm:$0xff]
  %v737 = vld [vmem:[%s5 + $0x128] sm:$0xff]
  %v738 = vld [vmem:[%s5 + $0x130] sm:$0xff]
  %v739 = vld [vmem:[%s5 + $0x138] sm:$0xff]
  %v740 = vld [vmem:[%s5 + $0x140] sm:$0xff]
  %v741 = vld [vmem:[%s5 + $0x148] sm:$0xff]
  %v742 = vld [vmem:[%s5 + $0x150] sm:$0xff]
  %v743 = vld [vmem:[%s5 + $0x158] sm:$0xff]
  %v744 = vld [vmem:[%s5 + $0x160] sm:$0xff]
  %v745 = vld [vmem:[%s5 + $0x168] sm:$0xff]
  %v746 = vld [vmem:[%s5 + $0x170] sm:$0xff]
  %v747 = vld [vmem:[%s5 + $0x178] sm:$0xff]
  %v748 = vld [vmem:[%s5 + $0x180] sm:$0xff]
  %v749 = vld [vmem:[%s5 + $0x188] sm:$0xff]
  %v750 = vld [vmem:[%s5 + $0x190] sm:$0xff]
  %v751 = vld [vmem:[%s5 + $0x198] sm:$0xff]
  %v752 = vld [vmem:[%s5 + $0x1a0] sm:$0xff]
  %v753 = vld [vmem:[%s5 + $0x1a8] sm:$0xff]
  %v754 = vld [vmem:[%s5 + $0x1b0] sm:$0xff]
  %v755 = vld [vmem:[%s5 + $0x1b8] sm:$0xff]
  %v756 = vld [vmem:[%s5 + $0x1c0] sm:$0xff]
  %v757 = vld [vmem:[%s5 + $0x1c8] sm:$0xff]
  %v758 = vld [vmem:[%s5 + $0x1d0] sm:$0xff]
  %v759 = vld [vmem:[%s5 + $0x1d8] sm:$0xff]
  %v760 = vld [vmem:[%s5 + $0x1e0] sm:$0xff]
  %v761 = vld [vmem:[%s5 + $0x1e8] sm:$0xff]
  %v762 = vld [vmem:[%s5 + $0x1f0] sm:$0xff]
  %v763 = vld [vmem:[%s5 + $0x1f8] sm:$0xff]
  %v764 = vld [vmem:[%s5 + $0x200] sm:$0xff]
  %v765 = vld [vmem:[%s5 + $0x208] sm:$0xff]
  %v766 = vld [vmem:[%s5 + $0x210] sm:$0xff]
  %v767 = vld [vmem:[%s5 + $0x218] sm:$0xff]
  %v768 = vld [vmem:[%s5 + $0x220] sm:$0xff]
  %v769 = vld [vmem:[%s5 + $0x228] sm:$0xff]
  %v770 = vld [vmem:[%s5 + $0x230] sm:$0xff]
  %v771 = vld [vmem:[%s5 + $0x238] sm:$0xff]
  %v772 = vld [vmem:[%s5 + $0x240] sm:$0xff]
  %v773 = vld [vmem:[%s5 + $0x248] sm:$0xff]
  %v774 = vld [vmem:[%s5 + $0x250] sm:$0xff]
  %v775 = vld [vmem:[%s5 + $0x258] sm:$0xff]
  %v776 = vld [vmem:[%s5 + $0x260] sm:$0xff]
  %v777 = vld [vmem:[%s5 + $0x268] sm:$0xff]
  %v778 = vld [vmem:[%s5 + $0x270] sm:$0xff]
  %v779 = vld [vmem:[%s5 + $0x278] sm:$0xff]
  %v780 = vld [vmem:[%s5 + $0x280] sm:$0xff]
  %v781 = vld [vmem:[%s5 + $0x288] sm:$0xff]
  %v782 = vld [vmem:[%s5 + $0x290] sm:$0xff]
  %v783 = vld [vmem:[%s5 + $0x298] sm:$0xff]
  %v784 = vld [vmem:[%s5 + $0x2a0] sm:$0xff]
  %v785 = vld [vmem:[%s5 + $0x2a8] sm:$0xff]
  %v786 = vld [vmem:[%s5 + $0x2b0] sm:$0xff]
  %v787 = vld [vmem:[%s5 + $0x2b8] sm:$0xff]
  %v788 = vld [vmem:[%s5 + $0x2c0] sm:$0xff]
  %v789 = vld [vmem:[%s5 + $0x2c8] sm:$0xff]
  %v790 = vld [vmem:[%s5 + $0x2d0] sm:$0xff]
  %v791 = vld [vmem:[%s5 + $0x2d8] sm:$0xff]
  %v792 = vld [vmem:[%s5 + $0x2e0] sm:$0xff]
  %v793 = vld [vmem:[%s5 + $0x2e8] sm:$0xff]
  %v794 = vld [vmem:[%s5 + $0x2f0] sm:$0xff]
  %v795 = vld [vmem:[%s5 + $0x2f8] sm:$0xff]
  %v796 = vld [vmem:[%s5 + $0x300] sm:$0xff]
  %v797 = vld [vmem:[%s5 + $0x308] sm:$0xff]
  %v798 = vld [vmem:[%s5 + $0x310] sm:$0xff]
  %v799 = vld [vmem:[%s5 + $0x318] sm:$0xff]
  %v800 = vld [vmem:[%s5 + $0x320] sm:$0xff]
  %v801 = vld [vmem:[%s5 + $0x328] sm:$0xff]
  %v802 = vld [vmem:[%s5 + $0x330] sm:$0xff]
  %v803 = vld [vmem:[%s5 + $0x338] sm:$0xff]
  %v804 = vld [vmem:[%s5 + $0x340] sm:$0xff]
  %v805 = vld [vmem:[%s5 + $0x348] sm:$0xff]
  %v806 = vld [vmem:[%s5 + $0x350] sm:$0xff]
  %v807 = vld [vmem:[%s5 + $0x358] sm:$0xff]
  %v808 = vld [vmem:[%s5 + $0x360] sm:$0xff]
  %v809 = vld [vmem:[%s5 + $0x368] sm:$0xff]
  %v810 = vld [vmem:[%s5 + $0x370] sm:$0xff]
  %v811 = vld [vmem:[%s5 + $0x378] sm:$0xff]
  %v812 = vld [vmem:[%s5 + $0x380] sm:$0xff]
  %v813 = vld [vmem:[%s5 + $0x388] sm:$0xff]
  %v814 = vld [vmem:[%s5 + $0x390] sm:$0xff]
  %v815 = vld [vmem:[%s5 + $0x398] sm:$0xff]
  %v816 = vld [vmem:[%s5 + $0x3a0] sm:$0xff]
  %v817 = vld [vmem:[%s5 + $0x3a8] sm:$0xff]
  %v818 = vld [vmem:[%s5 + $0x3b0] sm:$0xff]
  %v819 = vld [vmem:[%s5 + $0x3b8] sm:$0xff]
  %v820 = vld [vmem:[%s5 + $0x3c0] sm:$0xff]
  %v821 = vld [vmem:[%s5 + $0x3c8] sm:$0xff]
  %v822 = vld [vmem:[%s5 + $0x3d0] sm:$0xff]
  %v823 = vld [vmem:[%s5 + $0x3d8] sm:$0xff]
  %v824 = vld [vmem:[%s5 + $0x3e0] sm:$0xff]
  %v825 = vld [vmem:[%s5 + $0x3e8] sm:$0xff]
  %v826 = vld [vmem:[%s5 + $0x3f0] sm:$0xff]
  %v827 = vld [vmem:[%s5 + $0x3f8] sm:$0xff]
  %v828 = vld [vmem:[%s5 + $0x400] sm:$0xff]
  %v829 = vld [vmem:[%s5 + $0x408] sm:$0xff]
  %v830 = vld [vmem:[%s5 + $0x410] sm:$0xff]
  %v831 = vld [vmem:[%s5 + $0x418] sm:$0xff]
  %v832 = vld [vmem:[%s5 + $0x420] sm:$0xff]
  %v833 = vld [vmem:[%s5 + $0x428] sm:$0xff]
  %v834 = vld [vmem:[%s5 + $0x430] sm:$0xff]
  %v835 = vld [vmem:[%s5 + $0x438] sm:$0xff]
  %v836 = vld [vmem:[%s5 + $0x440] sm:$0xff]
  %v837 = vld [vmem:[%s5 + $0x448] sm:$0xff]
  %v838 = vld [vmem:[%s5 + $0x450] sm:$0xff]
  %v839 = vld [vmem:[%s5 + $0x458] sm:$0xff]
  %v840 = vld [vmem:[%s5 + $0x460] sm:$0xff]
  %v841 = vld [vmem:[%s5 + $0x468] sm:$0xff]
  %v842 = vld [vmem:[%s5 + $0x470] sm:$0xff]
  %v843 = vld [vmem:[%s5 + $0x478] sm:$0xff]
  %v844 = vld [vmem:[%s5 + $0x480] sm:$0xff]
  %v845 = vld [vmem:[%s5 + $0x488] sm:$0xff]
  %v846 = vld [vmem:[%s5 + $0x490] sm:$0xff]
  %v847 = vld [vmem:[%s5 + $0x498] sm:$0xff]
  %v848 = vld [vmem:[%s5 + $0x4a0] sm:$0xff]
  %v849 = vld [vmem:[%s5 + $0x4a8] sm:$0xff]
  %v850 = vld [vmem:[%s5 + $0x4b0] sm:$0xff]
  %v851 = vld [vmem:[%s5 + $0x4b8] sm:$0xff]
  %v852 = vld [vmem:[%s5 + $0x4c0] sm:$0xff]
  %v853 = vld [vmem:[%s5 + $0x4c8] sm:$0xff]
  %v854 = vld [vmem:[%s5 + $0x4d0] sm:$0xff]
  %v855 = vld [vmem:[%s5 + $0x4d8] sm:$0xff]
  %v856 = vld [vmem:[%s5 + $0x4e0] sm:$0xff]
  %v857 = vld [vmem:[%s5 + $0x4e8] sm:$0xff]
  %v858 = vld [vmem:[%s5 + $0x4f0] sm:$0xff]
  %v859 = vld [vmem:[%s5 + $0x4f8] sm:$0xff]
  %v860 = vld [vmem:[%s5 + $0x500] sm:$0xff]
  %v861 = vld [vmem:[%s5 + $0x508] sm:$0xff]
  %v862 = vld [vmem:[%s5 + $0x510] sm:$0xff]
  %v863 = vld [vmem:[%s5 + $0x518] sm:$0xff]
  %v864 = vld [vmem:[%s5 + $0x520] sm:$0xff]
  %v865 = vld [vmem:[%s5 + $0x528] sm:$0xff]
  %v866 = vld [vmem:[%s5 + $0x530] sm:$0xff]
  %v867 = vld [vmem:[%s5 + $0x538] sm:$0xff]
  %v868 = vld [vmem:[%s5 + $0x540] sm:$0xff]
  %v869 = vld [vmem:[%s5 + $0x548] sm:$0xff]
  %v870 = vld [vmem:[%s5 + $0x550] sm:$0xff]
  %v871 = vld [vmem:[%s5 + $0x558] sm:$0xff]
  %v872 = vld [vmem:[%s5 + $0x560] sm:$0xff]
  %v873 = vld [vmem:[%s5 + $0x568] sm:$0xff]
  %v874 = vld [vmem:[%s5 + $0x570] sm:$0xff]
  %v875 = vld [vmem:[%s5 + $0x578] sm:$0xff]
  %v876 = vld [vmem:[%s5 + $0x580] sm:$0xff]
  %v877 = vld [vmem:[%s5 + $0x588] sm:$0xff]
  %v878 = vld [vmem:[%s5 + $0x590] sm:$0xff]
  %v879 = vld [vmem:[%s5 + $0x598] sm:$0xff]
  %v880 = vld [vmem:[%s5 + $0x5a0] sm:$0xff]
  %v881 = vld [vmem:[%s5 + $0x5a8] sm:$0xff]
  %v882 = vld [vmem:[%s5 + $0x5b0] sm:$0xff]
  %v883 = vld [vmem:[%s5 + $0x5b8] sm:$0xff]
  %v884 = vld [vmem:[%s5 + $0x5c0] sm:$0xff]
  %v885 = vld [vmem:[%s5 + $0x5c8] sm:$0xff]
  %v886 = vld [vmem:[%s5 + $0x5d0] sm:$0xff]
  %v887 = vld [vmem:[%s5 + $0x5d8] sm:$0xff]
  %v888 = vld [vmem:[%s5 + $0x5e0] sm:$0xff]
  %v889 = vld [vmem:[%s5 + $0x5e8] sm:$0xff]
  %v890 = vld [vmem:[%s5 + $0x5f0] sm:$0xff]
  %v891 = vld [vmem:[%s5 + $0x5f8] sm:$0xff]
  %v892 = vld [vmem:[%s5 + $0x600] sm:$0xff]
  %v893 = vld [vmem:[%s5 + $0x608] sm:$0xff]
  %v894 = vld [vmem:[%s5 + $0x610] sm:$0xff]
  %v895 = vld [vmem:[%s5 + $0x618] sm:$0xff]
  %v896 = vld [vmem:[%s5 + $0x620] sm:$0xff]
  %v897 = vld [vmem:[%s5 + $0x628] sm:$0xff]
  %v898 = vld [vmem:[%s5 + $0x630] sm:$0xff]
  %v899 = vld [vmem:[%s5 + $0x638] sm:$0xff]
  %v900 = vld [vmem:[%s5 + $0x640] sm:$0xff]
  %v901 = vld [vmem:[%s5 + $0x648] sm:$0xff]
  %v902 = vld [vmem:[%s5 + $0x650] sm:$0xff]
  %v903 = vld [vmem:[%s5 + $0x658] sm:$0xff]
  %v904 = vld [vmem:[%s5 + $0x660] sm:$0xff]
  %v905 = vld [vmem:[%s5 + $0x668] sm:$0xff]
  %v906 = vld [vmem:[%s5 + $0x670] sm:$0xff]
  %v907 = vld [vmem:[%s5 + $0x678] sm:$0xff]
  %v908 = vld [vmem:[%s5 + $0x680] sm:$0xff]
  %v909 = vld [vmem:[%s5 + $0x688] sm:$0xff]
  %v910 = vld [vmem:[%s5 + $0x690] sm:$0xff]
  %v911 = vld [vmem:[%s5 + $0x698] sm:$0xff]
  %v912 = vld [vmem:[%s5 + $0x6a0] sm:$0xff]
  %v913 = vld [vmem:[%s5 + $0x6a8] sm:$0xff]
  %v914 = vld [vmem:[%s5 + $0x6b0] sm:$0xff]
  %v915 = vld [vmem:[%s5 + $0x6b8] sm:$0xff]
  %v916 = vld [vmem:[%s5 + $0x6c0] sm:$0xff]
  %v917 = vld [vmem:[%s5 + $0x6c8] sm:$0xff]
  %v918 = vld [vmem:[%s5 + $0x6d0] sm:$0xff]
  %v919 = vld [vmem:[%s5 + $0x6d8] sm:$0xff]
  %v920 = vld [vmem:[%s5 + $0x6e0] sm:$0xff]
  %v921 = vld [vmem:[%s5 + $0x6e8] sm:$0xff]
  %v922 = vld [vmem:[%s5 + $0x6f0] sm:$0xff]
  %v923 = vld [vmem:[%s5 + $0x6f8] sm:$0xff]
  %v924 = vld [vmem:[%s5 + $0x700] sm:$0xff]
  %v925 = vld [vmem:[%s5 + $0x708] sm:$0xff]
  %v926 = vld [vmem:[%s5 + $0x710] sm:$0xff]
  %v927 = vld [vmem:[%s5 + $0x718] sm:$0xff]
  %v928 = vld [vmem:[%s5 + $0x720] sm:$0xff]
  %v929 = vld [vmem:[%s5 + $0x728] sm:$0xff]
  %v930 = vld [vmem:[%s5 + $0x730] sm:$0xff]
  %v931 = vld [vmem:[%s5 + $0x738] sm:$0xff]
  %v932 = vld [vmem:[%s5 + $0x740] sm:$0xff]
  %v933 = vld [vmem:[%s5 + $0x748] sm:$0xff]
  %v934 = vld [vmem:[%s5 + $0x750] sm:$0xff]
  %v935 = vld [vmem:[%s5 + $0x758] sm:$0xff]
  %v936 = vld [vmem:[%s5 + $0x760] sm:$0xff]
  %v937 = vld [vmem:[%s5 + $0x768] sm:$0xff]
  %v938 = vld [vmem:[%s5 + $0x770] sm:$0xff]
  %v939 = vld [vmem:[%s5 + $0x778] sm:$0xff]
  %v940 = vld [vmem:[%s5 + $0x780] sm:$0xff]
  %v941 = vld [vmem:[%s5 + $0x788] sm:$0xff]
  %v942 = vld [vmem:[%s5 + $0x790] sm:$0xff]
  %v943 = vld [vmem:[%s5 + $0x798] sm:$0xff]
  %v944 = vld [vmem:[%s5 + $0x7a0] sm:$0xff]
  %v945 = vld [vmem:[%s5 + $0x7a8] sm:$0xff]
  %v946 = vld [vmem:[%s5 + $0x7b0] sm:$0xff]
  %v947 = vld [vmem:[%s5 + $0x7b8] sm:$0xff]
  %v948 = vld [vmem:[%s5 + $0x7c0] sm:$0xff]
  %v949 = vld [vmem:[%s5 + $0x7c8] sm:$0xff]
  %v950 = vld [vmem:[%s5 + $0x7d0] sm:$0xff]
  %v951 = vld [vmem:[%s5 + $0x7d8] sm:$0xff]
  %v952 = vld [vmem:[%s5 + $0x7e0] sm:$0xff]
  %v953 = vld [vmem:[%s5 + $0x7e8] sm:$0xff]
  %v954 = vld [vmem:[%s5 + $0x7f0] sm:$0xff]
  %v955 = vld [vmem:[%s5 + $0x7f8] sm:$0xff]
  %v956 = vld [vmem:[%s5 + $0x800] sm:$0xff]
  %v957 = vld [vmem:[%s5 + $0x808] sm:$0xff]
  %v958 = vld [vmem:[%s5 + $0x810] sm:$0xff]
  %v959 = vld [vmem:[%s5 + $0x818] sm:$0xff]
  %v960 = vld [vmem:[%s5 + $0x820] sm:$0xff]
  %v961 = vld [vmem:[%s5 + $0x828] sm:$0xff]
  %v962 = vld [vmem:[%s5 + $0x830] sm:$0xff]
  %v963 = vld [vmem:[%s5 + $0x838] sm:$0xff]
  %v964 = vld [vmem:[%s5 + $0x840] sm:$0xff]
  %v965 = vld [vmem:[%s5 + $0x848] sm:$0xff]
  %v966 = vld [vmem:[%s5 + $0x850] sm:$0xff]
  %v967 = vld [vmem:[%s5 + $0x858] sm:$0xff]
  %v968 = vld [vmem:[%s5 + $0x860] sm:$0xff]
  %v969 = vld [vmem:[%s5 + $0x868] sm:$0xff]
  %v970 = vld [vmem:[%s5 + $0x870] sm:$0xff]
  %v971 = vld [vmem:[%s5 + $0x878] sm:$0xff]
  %v972 = vld [vmem:[%s5 + $0x880] sm:$0xff]
  %v973 = vld [vmem:[%s5 + $0x888] sm:$0xff]
  %v974 = vld [vmem:[%s5 + $0x890] sm:$0xff]
  %v975 = vld [vmem:[%s5 + $0x898] sm:$0xff]
  %v976 = vld [vmem:[%s5 + $0x8a0] sm:$0xff]
  %v977 = vld [vmem:[%s5 + $0x8a8] sm:$0xff]
  %v978 = vld [vmem:[%s5 + $0x8b0] sm:$0xff]
  %v979 = vld [vmem:[%s5 + $0x8b8] sm:$0xff]
  %v980 = vld [vmem:[%s5 + $0x8c0] sm:$0xff]
  %v981 = vld [vmem:[%s5 + $0x8c8] sm:$0xff]
  %v982 = vld [vmem:[%s5 + $0x8d0] sm:$0xff]
  %v983 = vld [vmem:[%s5 + $0x8d8] sm:$0xff]
  %v984 = vld [vmem:[%s5 + $0x8e0] sm:$0xff]
  %v985 = vld [vmem:[%s5 + $0x8e8] sm:$0xff]
  %v986 = vld [vmem:[%s5 + $0x8f0] sm:$0xff]
  %v987 = vld [vmem:[%s5 + $0x8f8] sm:$0xff]
  %v988 = vld [vmem:[%s5 + $0x900] sm:$0xff]
  %v989 = vld [vmem:[%s5 + $0x908] sm:$0xff]
  %v990 = vld [vmem:[%s5 + $0x910] sm:$0xff]
  %v991 = vld [vmem:[%s5 + $0x918] sm:$0xff]
  %v992 = vld [vmem:[%s5 + $0x920] sm:$0xff]
  %v993 = vld [vmem:[%s5 + $0x928] sm:$0xff]
  %v994 = vld [vmem:[%s5 + $0x930] sm:$0xff]
  %v995 = vld [vmem:[%s5 + $0x938] sm:$0xff]
  %v996 = vld [vmem:[%s5 + $0x940] sm:$0xff]
  %v997 = vld [vmem:[%s5 + $0x948] sm:$0xff]
  %v998 = vld [vmem:[%s5 + $0x950] sm:$0xff]
  %v999 = vld [vmem:[%s5 + $0x958] sm:$0xff]
  %v1000 = vld [vmem:[%s5 + $0x960] sm:$0xff]
  %v1001 = vld [vmem:[%s5 + $0x968] sm:$0xff]
  %v1002 = vld [vmem:[%s5 + $0x970] sm:$0xff]
  %v1003 = vld [vmem:[%s5 + $0x978] sm:$0xff]
  %v1004 = vld [vmem:[%s5 + $0x980] sm:$0xff]
  %v1005 = vld [vmem:[%s5 + $0x988] sm:$0xff]
  %v1006 = vld [vmem:[%s5 + $0x990] sm:$0xff]
  %v1007 = vld [vmem:[%s5 + $0x998] sm:$0xff]
  %v1008 = vld [vmem:[%s5 + $0x9a0] sm:$0xff]
  %v1009 = vld [vmem:[%s5 + $0x9a8] sm:$0xff]
  %v1010 = vld [vmem:[%s5 + $0x9b0] sm:$0xff]
  %v1011 = vld [vmem:[%s5 + $0x9b8] sm:$0xff]
  %v1012 = vld [vmem:[%s5 + $0x9c0] sm:$0xff]
  %v1013 = vld [vmem:[%s5 + $0x9c8] sm:$0xff]
  %v1014 = vld [vmem:[%s5 + $0x9d0] sm:$0xff]
  %v1015 = vld [vmem:[%s5 + $0x9d8] sm:$0xff]
  %v1016 = vld [vmem:[%s5 + $0x9e0] sm:$0xff]
  %v1017 = vld [vmem:[%s5 + $0x9e8] sm:$0xff]
  %v1018 = vld [vmem:[%s5 + $0x9f0] sm:$0xff]
  %v1019 = vld [vmem:[%s5 + $0x9f8] sm:$0xff]
  %v1020 = vld [vmem:[%s5 + $0xa00] sm:$0xff]
  %v1021 = vld [vmem:[%s5 + $0xa08] sm:$0xff]
  %v1022 = vld [vmem:[%s5 + $0xa10] sm:$0xff]
  %v1023 = vld [vmem:[%s5 + $0xa18] sm:$0xff]
  %v1024 = vld [vmem:[%s5 + $0xa20] sm:$0xff]
  %v1025 = vld [vmem:[%s5 + $0xa28] sm:$0xff]
  %v1026 = vld [vmem:[%s5 + $0xa30] sm:$0xff]
  %v1027 = vld [vmem:[%s5 + $0xa38] sm:$0xff]
  %v1028 = vld [vmem:[%s5 + $0xa40] sm:$0xff]
  %v1029 = vld [vmem:[%s5 + $0xa48] sm:$0xff]
  %v1030 = vld [vmem:[%s5 + $0xa50] sm:$0xff]
  %v1031 = vld [vmem:[%s5 + $0xa58] sm:$0xff]
  %v1032 = vld [vmem:[%s5 + $0xa60] sm:$0xff]
  %v1033 = vld [vmem:[%s5 + $0xa68] sm:$0xff]
  %v1034 = vld [vmem:[%s5 + $0xa70] sm:$0xff]
  %v1035 = vld [vmem:[%s5 + $0xa78] sm:$0xff]
  %v1036 = vld [vmem:[%s5 + $0xa80] sm:$0xff]
  %v1037 = vld [vmem:[%s5 + $0xa88] sm:$0xff]
  %v1038 = vld [vmem:[%s5 + $0xa90] sm:$0xff]
  %v1039 = vld [vmem:[%s5 + $0xa98] sm:$0xff]
  %v1040 = vld [vmem:[%s5 + $0xaa0] sm:$0xff]
  %v1041 = vld [vmem:[%s5 + $0xaa8] sm:$0xff]
  %v1042 = vld [vmem:[%s5 + $0xab0] sm:$0xff]
  %v1043 = vld [vmem:[%s5 + $0xab8] sm:$0xff]
  %v1044 = vld [vmem:[%s5 + $0xac0] sm:$0xff]
  %v1045 = vld [vmem:[%s5 + $0xac8] sm:$0xff]
  %v1046 = vld [vmem:[%s5 + $0xad0] sm:$0xff]
  %v1047 = vld [vmem:[%s5 + $0xad8] sm:$0xff]
  %v1048 = vld [vmem:[%s5 + $0xae0] sm:$0xff]
  %v1049 = vld [vmem:[%s5 + $0xae8] sm:$0xff]
  %v1050 = vld [vmem:[%s5 + $0xaf0] sm:$0xff]
  %v1051 = vld [vmem:[%s5 + $0xaf8] sm:$0xff]
  %v1052 = vld [vmem:[%s5 + $0xb00] sm:$0xff]
  %v1053 = vld [vmem:[%s5 + $0xb08] sm:$0xff]
  %v1054 = vld [vmem:[%s5 + $0xb10] sm:$0xff]
  %v1055 = vld [vmem:[%s5 + $0xb18] sm:$0xff]
  %v1056 = vld [vmem:[%s5 + $0xb20] sm:$0xff]
  %v1057 = vld [vmem:[%s5 + $0xb28] sm:$0xff]
  %v1058 = vld [vmem:[%s5 + $0xb30] sm:$0xff]
  %v1059 = vld [vmem:[%s5 + $0xb38] sm:$0xff]
  %v1060 = vld [vmem:[%s5 + $0xb40] sm:$0xff]
  %v1061 = vld [vmem:[%s5 + $0xb48] sm:$0xff]
  %v1062 = vld [vmem:[%s5 + $0xb50] sm:$0xff]
  %v1063 = vld [vmem:[%s5 + $0xb58] sm:$0xff]
  %v1064 = vld [vmem:[%s5 + $0xb60] sm:$0xff]
  %v1065 = vld [vmem:[%s5 + $0xb68] sm:$0xff]
  %v1066 = vld [vmem:[%s5 + $0xb70] sm:$0xff]
  %v1067 = vld [vmem:[%s5 + $0xb78] sm:$0xff]
  %v1068 = vld [vmem:[%s5 + $0xb80] sm:$0xff]
  %v1069 = vld [vmem:[%s5 + $0xb88] sm:$0xff]
  %v1070 = vld [vmem:[%s5 + $0xb90] sm:$0xff]
  %v1071 = vld [vmem:[%s5 + $0xb98] sm:$0xff]
  %v1072 = vld [vmem:[%s5 + $0xba0] sm:$0xff]
  %v1073 = vld [vmem:[%s5 + $0xba8] sm:$0xff]
  %v1074 = vld [vmem:[%s5 + $0xbb0] sm:$0xff]
  %v1075 = vld [vmem:[%s5 + $0xbb8] sm:$0xff]
  %v1076 = vld [vmem:[%s5 + $0xbc0] sm:$0xff]
  %v1077 = vld [vmem:[%s5 + $0xbc8] sm:$0xff]
  %v1078 = vld [vmem:[%s5 + $0xbd0] sm:$0xff]
  %v1079 = vld [vmem:[%s5 + $0xbd8] sm:$0xff]
  %v1080 = vld [vmem:[%s5 + $0xbe0] sm:$0xff]
  %v1081 = vld [vmem:[%s5 + $0xbe8] sm:$0xff]
  %v1082 = vld [vmem:[%s5 + $0xbf0] sm:$0xff]
  %v1083 = vld [vmem:[%s5 + $0xbf8] sm:$0xff]
  %v1084 = vld [vmem:[%s5 + $0xc00] sm:$0xff]
  %v1085 = vld [vmem:[%s5 + $0xc08] sm:$0xff]
  %v1086 = vld [vmem:[%s5 + $0xc10] sm:$0xff]
  %v1087 = vld [vmem:[%s5 + $0xc18] sm:$0xff]
  %v1088 = vld [vmem:[%s5 + $0xc20] sm:$0xff]
  %v1089 = vld [vmem:[%s5 + $0xc28] sm:$0xff]
  %v1090 = vld [vmem:[%s5 + $0xc30] sm:$0xff]
  %v1091 = vld [vmem:[%s5 + $0xc38] sm:$0xff]
  %v1092 = vld [vmem:[%s5 + $0xc40] sm:$0xff]
  %v1093 = vld [vmem:[%s5 + $0xc48] sm:$0xff]
  %v1094 = vld [vmem:[%s5 + $0xc50] sm:$0xff]
  %v1095 = vld [vmem:[%s5 + $0xc58] sm:$0xff]
  %v1096 = vld [vmem:[%s5 + $0xc60] sm:$0xff]
  %v1097 = vld [vmem:[%s5 + $0xc68] sm:$0xff]
  %v1098 = vld [vmem:[%s5 + $0xc70] sm:$0xff]
  %v1099 = vld [vmem:[%s5 + $0xc78] sm:$0xff]
  %v1100 = vld [vmem:[%s5 + $0xc80] sm:$0xff]
  %v1101 = vld [vmem:[%s5 + $0xc88] sm:$0xff]
  %v1102 = vld [vmem:[%s5 + $0xc90] sm:$0xff]
  %v1103 = vld [vmem:[%s5 + $0xc98] sm:$0xff]
  %v1104 = vld [vmem:[%s5 + $0xca0] sm:$0xff]
  %v1105 = vld [vmem:[%s5 + $0xca8] sm:$0xff]
  %v1106 = vld [vmem:[%s5 + $0xcb0] sm:$0xff]
  %v1107 = vld [vmem:[%s5 + $0xcb8] sm:$0xff]
  %v1108 = vld [vmem:[%s5 + $0xcc0] sm:$0xff]
  %v1109 = vld [vmem:[%s5 + $0xcc8] sm:$0xff]
  %v1110 = vld [vmem:[%s5 + $0xcd0] sm:$0xff]
  %v1111 = vld [vmem:[%s5 + $0xcd8] sm:$0xff]
  %v1112 = vld [vmem:[%s5 + $0xce0] sm:$0xff]
  %v1113 = vld [vmem:[%s5 + $0xce8] sm:$0xff]
  %v1114 = vld [vmem:[%s5 + $0xcf0] sm:$0xff]
  %v1115 = vld [vmem:[%s5 + $0xcf8] sm:$0xff]
  %v1116 = vld [vmem:[%s5 + $0xd00] sm:$0xff]
  %v1117 = vld [vmem:[%s5 + $0xd08] sm:$0xff]
  %v1118 = vld [vmem:[%s5 + $0xd10] sm:$0xff]
  %v1119 = vld [vmem:[%s5 + $0xd18] sm:$0xff]
  %v1120 = vld [vmem:[%s5 + $0xd20] sm:$0xff]
  %v1121 = vld [vmem:[%s5 + $0xd28] sm:$0xff]
  %v1122 = vld [vmem:[%s5 + $0xd30] sm:$0xff]
  %v1123 = vld [vmem:[%s5 + $0xd38] sm:$0xff]
  %v1124 = vld [vmem:[%s5 + $0xd40] sm:$0xff]
  %v1125 = vld [vmem:[%s5 + $0xd48] sm:$0xff]
  %v1126 = vld [vmem:[%s5 + $0xd50] sm:$0xff]
  %v1127 = vld [vmem:[%s5 + $0xd58] sm:$0xff]
  %v1128 = vld [vmem:[%s5 + $0xd60] sm:$0xff]
  %v1129 = vld [vmem:[%s5 + $0xd68] sm:$0xff]
  %v1130 = vld [vmem:[%s5 + $0xd70] sm:$0xff]
  %v1131 = vld [vmem:[%s5 + $0xd78] sm:$0xff]
  %v1132 = vld [vmem:[%s5 + $0xd80] sm:$0xff]
  %v1133 = vld [vmem:[%s5 + $0xd88] sm:$0xff]
  %v1134 = vld [vmem:[%s5 + $0xd90] sm:$0xff]
  %v1135 = vld [vmem:[%s5 + $0xd98] sm:$0xff]
  %v1136 = vld [vmem:[%s5 + $0xda0] sm:$0xff]
  %v1137 = vld [vmem:[%s5 + $0xda8] sm:$0xff]
  %v1138 = vld [vmem:[%s5 + $0xdb0] sm:$0xff]
  %v1139 = vld [vmem:[%s5 + $0xdb8] sm:$0xff]
  %v1140 = vld [vmem:[%s5 + $0xdc0] sm:$0xff]
  %v1141 = vld [vmem:[%s5 + $0xdc8] sm:$0xff]
  %v1142 = vld [vmem:[%s5 + $0xdd0] sm:$0xff]
  %v1143 = vld [vmem:[%s5 + $0xdd8] sm:$0xff]
  %v1144 = vld [vmem:[%s5 + $0xde0] sm:$0xff]
  %v1145 = vld [vmem:[%s5 + $0xde8] sm:$0xff]
  %v1146 = vld [vmem:[%s5 + $0xdf0] sm:$0xff]
  %v1147 = vld [vmem:[%s5 + $0xdf8] sm:$0xff]
  %v1148 = vld [vmem:[%s5 + $0xe00] sm:$0xff]
  %v1149 = vld [vmem:[%s5 + $0xe08] sm:$0xff]
  %v1150 = vld [vmem:[%s5 + $0xe10] sm:$0xff]
  %v1151 = vld [vmem:[%s5 + $0xe18] sm:$0xff]
  %v1152 = vld [vmem:[%s5 + $0xe20] sm:$0xff]
  %v1153 = vld [vmem:[%s5 + $0xe28] sm:$0xff]
  %v1154 = vld [vmem:[%s5 + $0xe30] sm:$0xff]
  %v1155 = vld [vmem:[%s5 + $0xe38] sm:$0xff]
  %v1156 = vld [vmem:[%s5 + $0xe40] sm:$0xff]
  %v1157 = vld [vmem:[%s5 + $0xe48] sm:$0xff]
  %v1158 = vld [vmem:[%s5 + $0xe50] sm:$0xff]
  %v1159 = vld [vmem:[%s5 + $0xe58] sm:$0xff]
  %v1160 = vld [vmem:[%s5 + $0xe60] sm:$0xff]
  %v1161 = vld [vmem:[%s5 + $0xe68] sm:$0xff]
  %v1162 = vld [vmem:[%s5 + $0xe70] sm:$0xff]
  %v1163 = vld [vmem:[%s5 + $0xe78] sm:$0xff]
  %v1164 = vld [vmem:[%s5 + $0xe80] sm:$0xff]
  %v1165 = vld [vmem:[%s5 + $0xe88] sm:$0xff]
  %v1166 = vld [vmem:[%s5 + $0xe90] sm:$0xff]
  %v1167 = vld [vmem:[%s5 + $0xe98] sm:$0xff]
  %v1168 = vld [vmem:[%s5 + $0xea0] sm:$0xff]
  %v1169 = vld [vmem:[%s5 + $0xea8] sm:$0xff]
  %v1170 = vld [vmem:[%s5 + $0xeb0] sm:$0xff]
  %v1171 = vld [vmem:[%s5 + $0xeb8] sm:$0xff]
  %v1172 = vld [vmem:[%s5 + $0xec0] sm:$0xff]
  %v1173 = vld [vmem:[%s5 + $0xec8] sm:$0xff]
  %v1174 = vld [vmem:[%s5 + $0xed0] sm:$0xff]
  %v1175 = vld [vmem:[%s5 + $0xed8] sm:$0xff]
  %v1176 = vld [vmem:[%s5 + $0xee0] sm:$0xff]
  %v1177 = vld [vmem:[%s5 + $0xee8] sm:$0xff]
  %v1178 = vld [vmem:[%s5 + $0xef0] sm:$0xff]
  %v1179 = vld [vmem:[%s5 + $0xef8] sm:$0xff]
  %v1180 = vld [vmem:[%s5 + $0xf00] sm:$0xff]
  %v1181 = vld [vmem:[%s5 + $0xf08] sm:$0xff]
  %v1182 = vld [vmem:[%s5 + $0xf10] sm:$0xff]
  %v1183 = vld [vmem:[%s5 + $0xf18] sm:$0xff]
  %v1184 = vld [vmem:[%s5 + $0xf20] sm:$0xff]
  %v1185 = vld [vmem:[%s5 + $0xf28] sm:$0xff]
  %v1186 = vld [vmem:[%s5 + $0xf30] sm:$0xff]
  %v1187 = vld [vmem:[%s5 + $0xf38] sm:$0xff]
  %v1188 = vld [vmem:[%s5 + $0xf40] sm:$0xff]
  %v1189 = vld [vmem:[%s5 + $0xf48] sm:$0xff]
  %v1190 = vld [vmem:[%s5 + $0xf50] sm:$0xff]
  %v1191 = vld [vmem:[%s5 + $0xf58] sm:$0xff]
  %v1192 = vld [vmem:[%s5 + $0xf60] sm:$0xff]
  %v1193 = vld [vmem:[%s5 + $0xf68] sm:$0xff]
  %v1194 = vld [vmem:[%s5 + $0xf70] sm:$0xff]
  %v1195 = vld [vmem:[%s5 + $0xf78] sm:$0xff]
  %v1196 = vld [vmem:[%s5 + $0xf80] sm:$0xff]
  %v1197 = vld [vmem:[%s5 + $0xf88] sm:$0xff]
  %v1198 = vld [vmem:[%s5 + $0xf90] sm:$0xff]
  %v1199 = vld [vmem:[%s5 + $0xf98] sm:$0xff]
  %v1200 = vld [vmem:[%s5 + $0xfa0] sm:$0xff]
  %v1201 = vld [vmem:[%s5 + $0xfa8] sm:$0xff]
  %v1202 = vld [vmem:[%s5 + $0xfb0] sm:$0xff]
  %v1203 = vld [vmem:[%s5 + $0xfb8] sm:$0xff]
  %v1204 = vld [vmem:[%s5 + $0xfc0] sm:$0xff]
  %v1205 = vld [vmem:[%s5 + $0xfc8] sm:$0xff]
  %v1206 = vld [vmem:[%s5 + $0xfd0] sm:$0xff]
  %v1207 = vld [vmem:[%s5 + $0xfd8] sm:$0xff]
  %v1208 = vld [vmem:[%s5 + $0xfe0] sm:$0xff]
  %v1209 = vld [vmem:[%s5 + $0xfe8] sm:$0xff]
  %v1210 = vld [vmem:[%s5 + $0xff0] sm:$0xff]
  %v1211 = vld [vmem:[%s5 + $0xff8] sm:$0xff]
  %v1212 = vld [vmem:[%s5 + $0x1000] sm:$0xff]
  %v1213 = vld [vmem:[%s5 + $0x1008] sm:$0xff]
  %v1214 = vld [vmem:[%s5 + $0x1010] sm:$0xff]
  %v1215 = vld [vmem:[%s5 + $0x1018] sm:$0xff]
  %v1216 = vld [vmem:[%s5 + $0x1020] sm:$0xff]
  %v1217 = vld [vmem:[%s5 + $0x1028] sm:$0xff]
  %v1218 = vld [vmem:[%s5 + $0x1030] sm:$0xff]
  %v1219 = vld [vmem:[%s5 + $0x1038] sm:$0xff]
  %v1220 = vld [vmem:[%s5 + $0x1040] sm:$0xff]
  %v1221 = vld [vmem:[%s5 + $0x1048] sm:$0xff]
  %v1222 = vld [vmem:[%s5 + $0x1050] sm:$0xff]
  %v1223 = vld [vmem:[%s5 + $0x1058] sm:$0xff]
  %v1224 = vld [vmem:[%s5 + $0x1060] sm:$0xff]
  %v1225 = vld [vmem:[%s5 + $0x1068] sm:$0xff]
  %v1226 = vld [vmem:[%s5 + $0x1070] sm:$0xff]
  %v1227 = vld [vmem:[%s5 + $0x1078] sm:$0xff]
  %v1228 = vld [vmem:[%s5 + $0x1080] sm:$0xff]
  %v1229 = vld [vmem:[%s5 + $0x1088] sm:$0xff]
  %v1230 = vld [vmem:[%s5 + $0x1090] sm:$0xff]
  %v1231 = vld [vmem:[%s5 + $0x1098] sm:$0xff]
  %v1232 = vld [vmem:[%s5 + $0x10a0] sm:$0xff]
  %v1233 = vld [vmem:[%s5 + $0x10a8] sm:$0xff]
  %v1234 = vld [vmem:[%s5 + $0x10b0] sm:$0xff]
  %v1235 = vld [vmem:[%s5 + $0x10b8] sm:$0xff]
  %v1236 = vld [vmem:[%s5 + $0x10c0] sm:$0xff]
  %v1237 = vld [vmem:[%s5 + $0x10c8] sm:$0xff]
  %v1238 = vld [vmem:[%s5 + $0x10d0] sm:$0xff]
  %v1239 = vld [vmem:[%s5 + $0x10d8] sm:$0xff]
  %v1240 = vld [vmem:[%s5 + $0x10e0] sm:$0xff]
  %v1241 = vld [vmem:[%s5 + $0x10e8] sm:$0xff]
  %v1242 = vld [vmem:[%s5 + $0x10f0] sm:$0xff]
  %v1243 = vld [vmem:[%s5 + $0x10f8] sm:$0xff]
  %v1244 = vld [vmem:[%s5 + $0x1100] sm:$0xff]
  %v1245 = vld [vmem:[%s5 + $0x1108] sm:$0xff]
  %v1246 = vld [vmem:[%s5 + $0x1110] sm:$0xff]
  %v1247 = vld [vmem:[%s5 + $0x1118] sm:$0xff]
  %v1248 = vld [vmem:[%s5 + $0x1120] sm:$0xff]
  %v1249 = vld [vmem:[%s5 + $0x1128] sm:$0xff]
  %v1250 = vld [vmem:[%s5 + $0x1130] sm:$0xff]
  %v1251 = vld [vmem:[%s5 + $0x1138] sm:$0xff]
  %v1252 = vld [vmem:[%s5 + $0x1140] sm:$0xff]
  %v1253 = vld [vmem:[%s5 + $0x1148] sm:$0xff]
  %v1254 = vld [vmem:[%s5 + $0x1150] sm:$0xff]
  %v1255 = vld [vmem:[%s5 + $0x1158] sm:$0xff]
  %v1256 = vld [vmem:[%s5 + $0x1160] sm:$0xff]
  %v1257 = vld [vmem:[%s5 + $0x1168] sm:$0xff]
  %v1258 = vld [vmem:[%s5 + $0x1170] sm:$0xff]
  %v1259 = vld [vmem:[%s5 + $0x1178] sm:$0xff]
  %v1260 = vld [vmem:[%s5 + $0x1180] sm:$0xff]
  %v1261 = vld [vmem:[%s5 + $0x1188] sm:$0xff]
  %v1262 = vld [vmem:[%s5 + $0x1190] sm:$0xff]
  %v1263 = vld [vmem:[%s5 + $0x1198] sm:$0xff]
  %v1264 = vld [vmem:[%s5 + $0x11a0] sm:$0xff]
  %v1265 = vld [vmem:[%s5 + $0x11a8] sm:$0xff]
  %v1266 = vld [vmem:[%s5 + $0x11b0] sm:$0xff]
  %v1267 = vld [vmem:[%s5 + $0x11b8] sm:$0xff]
  %v1268 = vld [vmem:[%s5 + $0x11c0] sm:$0xff]
  %v1269 = vld [vmem:[%s5 + $0x11c8] sm:$0xff]
  %v1270 = vld [vmem:[%s5 + $0x11d0] sm:$0xff]
  %v1271 = vld [vmem:[%s5 + $0x11d8] sm:$0xff]
  %v1272 = vld [vmem:[%s5 + $0x11e0] sm:$0xff]
  %v1273 = vld [vmem:[%s5 + $0x11e8] sm:$0xff]
  %v1274 = vld [vmem:[%s5 + $0x11f0] sm:$0xff]
  %v1275 = vld [vmem:[%s5 + $0x11f8] sm:$0xff]
  %v1276 = vld [vmem:[%s5 + $0x1200] sm:$0xff]
  %v1277 = vld [vmem:[%s5 + $0x1208] sm:$0xff]
  %v1278 = vld [vmem:[%s5 + $0x1210] sm:$0xff]
  %v1279 = vld [vmem:[%s5 + $0x1218] sm:$0xff]
  %v1280 = vld [vmem:[%s5 + $0x1220] sm:$0xff]
  %v1281 = vld [vmem:[%s5 + $0x1228] sm:$0xff]
  %v1282 = vld [vmem:[%s5 + $0x1230] sm:$0xff]
  %v1283 = vld [vmem:[%s5 + $0x1238] sm:$0xff]
  %v1284 = vld [vmem:[%s5 + $0x1240] sm:$0xff]
  %v1285 = vld [vmem:[%s5 + $0x1248] sm:$0xff]
  %v1286 = vld [vmem:[%s5 + $0x1250] sm:$0xff]
  %v1287 = vld [vmem:[%s5 + $0x1258] sm:$0xff]
  %v1288 = vld [vmem:[%s5 + $0x1260] sm:$0xff]
  %v1289 = vld [vmem:[%s5 + $0x1268] sm:$0xff]
  %v1290 = vld [vmem:[%s5 + $0x1270] sm:$0xff]
  %v1291 = vld [vmem:[%s5 + $0x1278] sm:$0xff]
  %v1292 = vld [vmem:[%s5 + $0x1280] sm:$0xff]
  %v1293 = vld [vmem:[%s5 + $0x1288] sm:$0xff]
  %v1294 = vld [vmem:[%s5 + $0x1290] sm:$0xff]
  %v1295 = vld [vmem:[%s5 + $0x1298] sm:$0xff]
  %v1296 = vld [vmem:[%s5 + $0x12a0] sm:$0xff]
  %v1297 = vld [vmem:[%s5 + $0x12a8] sm:$0xff]
  %v1298 = vld [vmem:[%s5 + $0x12b0] sm:$0xff]
  %v1299 = vld [vmem:[%s5 + $0x12b8] sm:$0xff]
  %v1300 = vld [vmem:[%s5 + $0x12c0] sm:$0xff]
  %v1301 = vld [vmem:[%s5 + $0x12c8] sm:$0xff]
  %v1302 = vld [vmem:[%s5 + $0x12d0] sm:$0xff]
  %v1303 = vld [vmem:[%s5 + $0x12d8] sm:$0xff]
  %v1304 = vld [vmem:[%s5 + $0x12e0] sm:$0xff]
  %v1305 = vld [vmem:[%s5 + $0x12e8] sm:$0xff]
  %v1306 = vld [vmem:[%s5 + $0x12f0] sm:$0xff]
  %v1307 = vld [vmem:[%s5 + $0x12f8] sm:$0xff]
  %v1308 = vld [vmem:[%s5 + $0x1300] sm:$0xff]
  %v1309 = vld [vmem:[%s5 + $0x1308] sm:$0xff]
  %v1310 = vld [vmem:[%s5 + $0x1310] sm:$0xff]
  %v1311 = vld [vmem:[%s5 + $0x1318] sm:$0xff]
  %v1312 = vld [vmem:[%s5 + $0x1320] sm:$0xff]
  %v1313 = vld [vmem:[%s5 + $0x1328] sm:$0xff]
  %v1314 = vld [vmem:[%s5 + $0x1330] sm:$0xff]
  %v1315 = vld [vmem:[%s5 + $0x1338] sm:$0xff]
  %v1316 = vld [vmem:[%s5 + $0x1340] sm:$0xff]
  %v1317 = vld [vmem:[%s5 + $0x1348] sm:$0xff]
  %v1318 = vld [vmem:[%s5 + $0x1350] sm:$0xff]
  %v1319 = vld [vmem:[%s5 + $0x1358] sm:$0xff]
  %v1320 = vld [vmem:[%s5 + $0x1360] sm:$0xff]
  %v1321 = vld [vmem:[%s5 + $0x1368] sm:$0xff]
  %v1322 = vld [vmem:[%s5 + $0x1370] sm:$0xff]
  %v1323 = vld [vmem:[%s5 + $0x1378] sm:$0xff]
  %v1324 = vld [vmem:[%s5 + $0x1380] sm:$0xff]
  %v1325 = vld [vmem:[%s5 + $0x1388] sm:$0xff]
  %v1326 = vld [vmem:[%s5 + $0x1390] sm:$0xff]
  %v1327 = vld [vmem:[%s5 + $0x1398] sm:$0xff]
  %v1328 = vld [vmem:[%s5 + $0x13a0] sm:$0xff]
  %v1329 = vld [vmem:[%s5 + $0x13a8] sm:$0xff]
  %v1330 = vld [vmem:[%s5 + $0x13b0] sm:$0xff]
  %v1331 = vld [vmem:[%s5 + $0x13b8] sm:$0xff]
  %v1332 = vld [vmem:[%s5 + $0x13c0] sm:$0xff]
  %v1333 = vld [vmem:[%s5 + $0x13c8] sm:$0xff]
  %v1334 = vld [vmem:[%s5 + $0x13d0] sm:$0xff]
  %v1335 = vld [vmem:[%s5 + $0x13d8] sm:$0xff]
  %v1336 = vld [vmem:[%s5 + $0x13e0] sm:$0xff]
  %v1337 = vld [vmem:[%s5 + $0x13e8] sm:$0xff]
  %v1338 = vld [vmem:[%s5 + $0x13f0] sm:$0xff]
  %v1339 = vld [vmem:[%s5 + $0x13f8] sm:$0xff]
  %v1340 = vld [vmem:[%s5 + $0x1400] sm:$0xff]
  %v1341 = vld [vmem:[%s5 + $0x1408] sm:$0xff]
  %v1342 = vld [vmem:[%s5 + $0x1410] sm:$0xff]
  %v1343 = vld [vmem:[%s5 + $0x1418] sm:$0xff]
  %v1344 = vld [vmem:[%s5 + $0x1420] sm:$0xff]
  %v1345 = vld [vmem:[%s5 + $0x1428] sm:$0xff]
  %v1346 = vld [vmem:[%s5 + $0x1430] sm:$0xff]
  %v1347 = vld [vmem:[%s5 + $0x1438] sm:$0xff]
  %v1348 = vld [vmem:[%s5 + $0x1440] sm:$0xff]
  %v1349 = vld [vmem:[%s5 + $0x1448] sm:$0xff]
  %v1350 = vld [vmem:[%s5 + $0x1450] sm:$0xff]
  %v1351 = vld [vmem:[%s5 + $0x1458] sm:$0xff]
  %v1352 = vld [vmem:[%s5 + $0x1460] sm:$0xff]
  %v1353 = vld [vmem:[%s5 + $0x1468] sm:$0xff]
  %v1354 = vld [vmem:[%s5 + $0x1470] sm:$0xff]
  %v1355 = vld [vmem:[%s5 + $0x1478] sm:$0xff]
  %v1356 = vld [vmem:[%s5 + $0x1480] sm:$0xff]
  %v1357 = vld [vmem:[%s5 + $0x1488] sm:$0xff]
  %v1358 = vld [vmem:[%s5 + $0x1490] sm:$0xff]
  %v1359 = vld [vmem:[%s5 + $0x1498] sm:$0xff]
  %v1360 = vld [vmem:[%s5 + $0x14a0] sm:$0xff]
  %v1361 = vld [vmem:[%s5 + $0x14a8] sm:$0xff]
  %v1362 = vld [vmem:[%s5 + $0x14b0] sm:$0xff]
  %v1363 = vld [vmem:[%s5 + $0x14b8] sm:$0xff]
  %v1364 = vld [vmem:[%s5 + $0x14c0] sm:$0xff]
  %v1365 = vld [vmem:[%s5 + $0x14c8] sm:$0xff]
  %v1366 = vld [vmem:[%s5 + $0x14d0] sm:$0xff]
  %v1367 = vld [vmem:[%s5 + $0x14d8] sm:$0xff]
  %v1368 = vld [vmem:[%s5 + $0x14e0] sm:$0xff]
  %v1369 = vld [vmem:[%s5 + $0x14e8] sm:$0xff]
  %v1370 = vld [vmem:[%s5 + $0x14f0] sm:$0xff]
  %v1371 = vld [vmem:[%s5 + $0x14f8] sm:$0xff]
  %v1372 = vld [vmem:[%s5 + $0x1500] sm:$0xff]
  %v1373 = vld [vmem:[%s5 + $0x1508] sm:$0xff]
  %v1374 = vld [vmem:[%s5 + $0x1510] sm:$0xff]
  %v1375 = vld [vmem:[%s5 + $0x1518] sm:$0xff]
  %v1376 = vld [vmem:[%s5 + $0x1520] sm:$0xff]
  %v1377 = vld [vmem:[%s5 + $0x1528] sm:$0xff]
  %v1378 = vld [vmem:[%s5 + $0x1530] sm:$0xff]
  %v1379 = vld [vmem:[%s5 + $0x1538] sm:$0xff]
  %v1380 = vld [vmem:[%s5 + $0x1540] sm:$0xff]
  %v1381 = vld [vmem:[%s5 + $0x1548] sm:$0xff]
  %v1382 = vld [vmem:[%s5 + $0x1550] sm:$0xff]
  %v1383 = vld [vmem:[%s5 + $0x1558] sm:$0xff]
  %v1384 = vld [vmem:[%s5 + $0x1560] sm:$0xff]
  %v1385 = vld [vmem:[%s5 + $0x1568] sm:$0xff]
  %v1386 = vld [vmem:[%s5 + $0x1570] sm:$0xff]
  %v1387 = vld [vmem:[%s5 + $0x1578] sm:$0xff]
  %v1388 = vld [vmem:[%s5 + $0x1580] sm:$0xff]
  %v1389 = vld [vmem:[%s5 + $0x1588] sm:$0xff]
  %v1390 = vld [vmem:[%s5 + $0x1590] sm:$0xff]
  %v1391 = vld [vmem:[%s5 + $0x1598] sm:$0xff]
  %v1392 = vld [vmem:[%s5 + $0x15a0] sm:$0xff]
  %v1393 = vld [vmem:[%s5 + $0x15a8] sm:$0xff]
  %v1394 = vld [vmem:[%s5 + $0x15b0] sm:$0xff]
  %v1395 = vld [vmem:[%s5 + $0x15b8] sm:$0xff]
  %v1396 = vld [vmem:[%s5 + $0x15c0] sm:$0xff]
  %v1397 = vld [vmem:[%s5 + $0x15c8] sm:$0xff]
  %v1398 = vld [vmem:[%s5 + $0x15d0] sm:$0xff]
  %v1399 = vld [vmem:[%s5 + $0x15d8] sm:$0xff]
  %v1400 = vld [vmem:[%s5 + $0x15e0] sm:$0xff]
  %v1401 = vld [vmem:[%s5 + $0x15e8] sm:$0xff]
  %v1402 = vld [vmem:[%s5 + $0x15f0] sm:$0xff]
  %v1403 = vld [vmem:[%s5 + $0x15f8] sm:$0xff]
  %v1404 = vld [vmem:[%s5 + $0x1600] sm:$0xff]
  %v1405 = vld [vmem:[%s5 + $0x1608] sm:$0xff]
  %v1406 = vld [vmem:[%s5 + $0x1610] sm:$0xff]
  %v1407 = vld [vmem:[%s5 + $0x1618] sm:$0xff]
  %v1408 = vld [vmem:[%s5 + $0x1620] sm:$0xff]
  %v1409 = vld [vmem:[%s5 + $0x1628] sm:$0xff]
  %v1410 = vld [vmem:[%s5 + $0x1630] sm:$0xff]
  %v1411 = vld [vmem:[%s5 + $0x1638] sm:$0xff]
  %v1412 = vld [vmem:[%s5 + $0x1640] sm:$0xff]
  %v1413 = vld [vmem:[%s5 + $0x1648] sm:$0xff]
  %v1414 = vld [vmem:[%s5 + $0x1650] sm:$0xff]
  %v1415 = vld [vmem:[%s5 + $0x1658] sm:$0xff]
  %v1416 = vld [vmem:[%s5 + $0x1660] sm:$0xff]
  %v1417 = vld [vmem:[%s5 + $0x1668] sm:$0xff]
  %v1418 = vld [vmem:[%s5 + $0x1670] sm:$0xff]
  %v1419 = vld [vmem:[%s5 + $0x1678] sm:$0xff]
  %v1420 = vld [vmem:[%s5 + $0x1680] sm:$0xff]
  %v1421 = vld [vmem:[%s5 + $0x1688] sm:$0xff]
  %v1422 = vld [vmem:[%s5 + $0x1690] sm:$0xff]
  %v1423 = vld [vmem:[%s5 + $0x1698] sm:$0xff]
  %v1424 = vld [vmem:[%s5 + $0x16a0] sm:$0xff]
  %v1425 = vld [vmem:[%s5 + $0x16a8] sm:$0xff]
  %v1426 = vld [vmem:[%s5 + $0x16b0] sm:$0xff]
  %v1427 = vld [vmem:[%s5 + $0x16b8] sm:$0xff]
  %v1428 = vld [vmem:[%s5 + $0x16c0] sm:$0xff]
  %v1429 = vld [vmem:[%s5 + $0x16c8] sm:$0xff]
  %v1430 = vld [vmem:[%s5 + $0x16d0] sm:$0xff]
  %v1431 = vld [vmem:[%s5 + $0x16d8] sm:$0xff]
  %v1432 = vld [vmem:[%s5 + $0x16e0] sm:$0xff]
  %v1433 = vld [vmem:[%s5 + $0x16e8] sm:$0xff]
  %v1434 = vld [vmem:[%s5 + $0x16f0] sm:$0xff]
  %v1435 = vld [vmem:[%s5 + $0x16f8] sm:$0xff]
  %v1436 = vld [vmem:[%s5 + $0x1700] sm:$0xff]
  %v1437 = vld [vmem:[%s5 + $0x1708] sm:$0xff]
  %v1438 = vld [vmem:[%s5 + $0x1710] sm:$0xff]
  %v1439 = vld [vmem:[%s5 + $0x1718] sm:$0xff]
  %v1440 = vld [vmem:[%s5 + $0x1720] sm:$0xff]
  %v1441 = vld [vmem:[%s5 + $0x1728] sm:$0xff]
  %v1442 = vld [vmem:[%s5 + $0x1730] sm:$0xff]
  %v1443 = vld [vmem:[%s5 + $0x1738] sm:$0xff]
  %v1444 = vld [vmem:[%s5 + $0x1740] sm:$0xff]
  %v1445 = vld [vmem:[%s5 + $0x1748] sm:$0xff]
  %v1446 = vld [vmem:[%s5 + $0x1750] sm:$0xff]
  %v1447 = vld [vmem:[%s5 + $0x1758] sm:$0xff]
  %v1448 = vld [vmem:[%s5 + $0x1760] sm:$0xff]
  %v1449 = vld [vmem:[%s5 + $0x1768] sm:$0xff]
  %v1450 = vld [vmem:[%s5 + $0x1770] sm:$0xff]
  %v1451 = vld [vmem:[%s5 + $0x1778] sm:$0xff]
  %v1452 = vld [vmem:[%s5 + $0x1780] sm:$0xff]
  %v1453 = vld [vmem:[%s5 + $0x1788] sm:$0xff]
  %v1454 = vld [vmem:[%s5 + $0x1790] sm:$0xff]
  %v1455 = vld [vmem:[%s5 + $0x1798] sm:$0xff]
  %v1456 = vld [vmem:[%s5 + $0x17a0] sm:$0xff]
  %v1457 = vld [vmem:[%s5 + $0x17a8] sm:$0xff]
  %v1458 = vld [vmem:[%s5 + $0x17b0] sm:$0xff]
  %v1459 = vld [vmem:[%s5 + $0x17b8] sm:$0xff]
  %v1460 = vld [vmem:[%s5 + $0x17c0] sm:$0xff]
  %v1461 = vld [vmem:[%s5 + $0x17c8] sm:$0xff]
  %v1462 = vld [vmem:[%s5 + $0x17d0] sm:$0xff]
  %v1463 = vld [vmem:[%s5 + $0x17d8] sm:$0xff]
  %v1464 = vld [vmem:[%s5 + $0x17e0] sm:$0xff]
  %v1465 = vld [vmem:[%s5 + $0x17e8] sm:$0xff]
  %v1466 = vld [vmem:[%s5 + $0x17f0] sm:$0xff]
  %v1467 = vld [vmem:[%s5 + $0x17f8] sm:$0xff]
  %v1468 = vld [vmem:[%s5 + $0x1800] sm:$0xff]
  %v1469 = vld [vmem:[%s5 + $0x1808] sm:$0xff]
  %v1470 = vld [vmem:[%s5 + $0x1810] sm:$0xff]
  %v1471 = vld [vmem:[%s5 + $0x1818] sm:$0xff]
  %v1472 = vld [vmem:[%s5 + $0x1820] sm:$0xff]
  %v1473 = vld [vmem:[%s5 + $0x1828] sm:$0xff]
  %v1474 = vld [vmem:[%s5 + $0x1830] sm:$0xff]
  %v1475 = vld [vmem:[%s5 + $0x1838] sm:$0xff]
  %v1476 = vld [vmem:[%s5 + $0x1840] sm:$0xff]
  %v1477 = vld [vmem:[%s5 + $0x1848] sm:$0xff]
  %v1478 = vld [vmem:[%s5 + $0x1850] sm:$0xff]
  %v1479 = vld [vmem:[%s5 + $0x1858] sm:$0xff]
  %v1480 = vld [vmem:[%s5 + $0x1860] sm:$0xff]
  %v1481 = vld [vmem:[%s5 + $0x1868] sm:$0xff]
  %v1482 = vld [vmem:[%s5 + $0x1870] sm:$0xff]
  %v1483 = vld [vmem:[%s5 + $0x1878] sm:$0xff]
  %v1484 = vld [vmem:[%s5 + $0x1880] sm:$0xff]
  %v1485 = vld [vmem:[%s5 + $0x1888] sm:$0xff]
  %v1486 = vld [vmem:[%s5 + $0x1890] sm:$0xff]
  %v1487 = vld [vmem:[%s5 + $0x1898] sm:$0xff]
  %v1488 = vld [vmem:[%s5 + $0x18a0] sm:$0xff]
  %v1489 = vld [vmem:[%s5 + $0x18a8] sm:$0xff]
  %v1490 = vld [vmem:[%s5 + $0x18b0] sm:$0xff]
  %v1491 = vld [vmem:[%s5 + $0x18b8] sm:$0xff]
  %v1492 = vld [vmem:[%s5 + $0x18c0] sm:$0xff]
  %v1493 = vld [vmem:[%s5 + $0x18c8] sm:$0xff]
  %v1494 = vld [vmem:[%s5 + $0x18d0] sm:$0xff]
  %v1495 = vld [vmem:[%s5 + $0x18d8] sm:$0xff]
  %v1496 = vld [vmem:[%s5 + $0x18e0] sm:$0xff]
  %v1497 = vld [vmem:[%s5 + $0x18e8] sm:$0xff]
  %v1498 = vld [vmem:[%s5 + $0x18f0] sm:$0xff]
  %v1499 = vld [vmem:[%s5 + $0x18f8] sm:$0xff]
  %v1500 = vld [vmem:[%s5 + $0x1900] sm:$0xff]
  %v1501 = vld [vmem:[%s5 + $0x1908] sm:$0xff]
  %v1502 = vld [vmem:[%s5 + $0x1910] sm:$0xff]
  %v1503 = vld [vmem:[%s5 + $0x1918] sm:$0xff]
  %v1504 = vld [vmem:[%s5 + $0x1920] sm:$0xff]
  %v1505 = vld [vmem:[%s5 + $0x1928] sm:$0xff]
  %v1506 = vld [vmem:[%s5 + $0x1930] sm:$0xff]
  %v1507 = vld [vmem:[%s5 + $0x1938] sm:$0xff]
  %v1508 = vld [vmem:[%s5 + $0x1940] sm:$0xff]
  %v1509 = vld [vmem:[%s5 + $0x1948] sm:$0xff]
  %v1510 = vld [vmem:[%s5 + $0x1950] sm:$0xff]
  %v1511 = vld [vmem:[%s5 + $0x1958] sm:$0xff]
  %v1512 = vld [vmem:[%s5 + $0x1960] sm:$0xff]
  %v1513 = vld [vmem:[%s5 + $0x1968] sm:$0xff]
  %v1514 = vld [vmem:[%s5 + $0x1970] sm:$0xff]
  %v1515 = vld [vmem:[%s5 + $0x1978] sm:$0xff]
  %v1516 = vld [vmem:[%s5 + $0x1980] sm:$0xff]
  %v1517 = vld [vmem:[%s5 + $0x1988] sm:$0xff]
  %v1518 = vld [vmem:[%s5 + $0x1990] sm:$0xff]
  %v1519 = vld [vmem:[%s5 + $0x1998] sm:$0xff]
  %v1520 = vld [vmem:[%s5 + $0x19a0] sm:$0xff]
  %v1521 = vld [vmem:[%s5 + $0x19a8] sm:$0xff]
  %v1522 = vld [vmem:[%s5 + $0x19b0] sm:$0xff]
  %v1523 = vld [vmem:[%s5 + $0x19b8] sm:$0xff]
  %v1524 = vld [vmem:[%s5 + $0x19c0] sm:$0xff]
  %v1525 = vld [vmem:[%s5 + $0x19c8] sm:$0xff]
  %v1526 = vld [vmem:[%s5 + $0x19d0] sm:$0xff]
  %v1527 = vld [vmem:[%s5 + $0x19d8] sm:$0xff]
  %v1528 = vld [vmem:[%s5 + $0x19e0] sm:$0xff]
  %v1529 = vld [vmem:[%s5 + $0x19e8] sm:$0xff]
  %v1530 = vld [vmem:[%s5 + $0x19f0] sm:$0xff]
  %v1531 = vld [vmem:[%s5 + $0x19f8] sm:$0xff]
  %v1532 = vld [vmem:[%s5 + $0x1a00] sm:$0xff]
  %v1533 = vld [vmem:[%s5 + $0x1a08] sm:$0xff]
  %v1534 = vld [vmem:[%s5 + $0x1a10] sm:$0xff]
  %v1535 = vld [vmem:[%s5 + $0x1a18] sm:$0xff]
  %v1536 = vld [vmem:[%s5 + $0x1a20] sm:$0xff]
  %v1537 = vld [vmem:[%s5 + $0x1a28] sm:$0xff]
  %v1538 = vld [vmem:[%s5 + $0x1a30] sm:$0xff]
  %v1539 = vld [vmem:[%s5 + $0x1a38] sm:$0xff]
  %v1540 = vld [vmem:[%s5 + $0x1a40] sm:$0xff]
  %v1541 = vld [vmem:[%s5 + $0x1a48] sm:$0xff]
  %v1542 = vld [vmem:[%s5 + $0x1a50] sm:$0xff]
  %v1543 = vld [vmem:[%s5 + $0x1a58] sm:$0xff]
  %v1544 = vld [vmem:[%s5 + $0x1a60] sm:$0xff]
  %v1545 = vld [vmem:[%s5 + $0x1a68] sm:$0xff]
  %v1546 = vld [vmem:[%s5 + $0x1a70] sm:$0xff]
  %v1547 = vld [vmem:[%s5 + $0x1a78] sm:$0xff]
  %v1548 = vld [vmem:[%s5 + $0x1a80] sm:$0xff]
  %v1549 = vld [vmem:[%s5 + $0x1a88] sm:$0xff]
  %v1550 = vld [vmem:[%s5 + $0x1a90] sm:$0xff]
  %v1551 = vld [vmem:[%s5 + $0x1a98] sm:$0xff]
  %v1552 = vld [vmem:[%s5 + $0x1aa0] sm:$0xff]
  %v1553 = vld [vmem:[%s5 + $0x1aa8] sm:$0xff]
  %v1554 = vld [vmem:[%s5 + $0x1ab0] sm:$0xff]
  %v1555 = vld [vmem:[%s5 + $0x1ab8] sm:$0xff]
  %v1556 = vld [vmem:[%s5 + $0x1ac0] sm:$0xff]
  %v1557 = vld [vmem:[%s5 + $0x1ac8] sm:$0xff]
  %v1558 = vld [vmem:[%s5 + $0x1ad0] sm:$0xff]
  %v1559 = vld [vmem:[%s5 + $0x1ad8] sm:$0xff]
  %v1560 = vld [vmem:[%s5 + $0x1ae0] sm:$0xff]
  %v1561 = vld [vmem:[%s5 + $0x1ae8] sm:$0xff]
  %v1562 = vld [vmem:[%s5 + $0x1af0] sm:$0xff]
  %v1563 = vld [vmem:[%s5 + $0x1af8] sm:$0xff]
  %v1564 = vld [vmem:[%s5 + $0x1b00] sm:$0xff]
  %v1565 = vld [vmem:[%s5 + $0x1b08] sm:$0xff]
  %v1566 = vld [vmem:[%s5 + $0x1b10] sm:$0xff]
  %v1567 = vld [vmem:[%s5 + $0x1b18] sm:$0xff]
  %v1568 = vld [vmem:[%s5 + $0x1b20] sm:$0xff]
  %v1569 = vld [vmem:[%s5 + $0x1b28] sm:$0xff]
  %v1570 = vld [vmem:[%s5 + $0x1b30] sm:$0xff]
  %v1571 = vld [vmem:[%s5 + $0x1b38] sm:$0xff]
  %v1572 = vld [vmem:[%s5 + $0x1b40] sm:$0xff]
  %v1573 = vld [vmem:[%s5 + $0x1b48] sm:$0xff]
  %v1574 = vld [vmem:[%s5 + $0x1b50] sm:$0xff]
  %v1575 = vld [vmem:[%s5 + $0x1b58] sm:$0xff]
  %v1576 = vld [vmem:[%s5 + $0x1b60] sm:$0xff]
  %v1577 = vld [vmem:[%s5 + $0x1b68] sm:$0xff]
  %v1578 = vld [vmem:[%s5 + $0x1b70] sm:$0xff]
  %v1579 = vld [vmem:[%s5 + $0x1b78] sm:$0xff]
  %v1580 = vld [vmem:[%s5 + $0x1b80] sm:$0xff]
  %v1581 = vld [vmem:[%s5 + $0x1b88] sm:$0xff]
  %v1582 = vld [vmem:[%s5 + $0x1b90] sm:$0xff]
  %v1583 = vld [vmem:[%s5 + $0x1b98] sm:$0xff]
  %v1584 = vld [vmem:[%s5 + $0x1ba0] sm:$0xff]
  %v1585 = vld [vmem:[%s5 + $0x1ba8] sm:$0xff]
  %v1586 = vld [vmem:[%s5 + $0x1bb0] sm:$0xff]
  %v1587 = vld [vmem:[%s5 + $0x1bb8] sm:$0xff]
  %v1588 = vld [vmem:[%s5 + $0x1bc0] sm:$0xff]
  %v1589 = vld [vmem:[%s5 + $0x1bc8] sm:$0xff]
  %v1590 = vld [vmem:[%s5 + $0x1bd0] sm:$0xff]
  %v1591 = vld [vmem:[%s5 + $0x1bd8] sm:$0xff]
  %v1592 = vld [vmem:[%s5 + $0x1be0] sm:$0xff]
  %v1593 = vld [vmem:[%s5 + $0x1be8] sm:$0xff]
  %v1594 = vld [vmem:[%s5 + $0x1bf0] sm:$0xff]
  %v1595 = vld [vmem:[%s5 + $0x1bf8] sm:$0xff]
  %v1596 = vld [vmem:[%s5 + $0x1c00] sm:$0xff]
  %v1597 = vld [vmem:[%s5 + $0x1c08] sm:$0xff]
  %v1598 = vld [vmem:[%s5 + $0x1c10] sm:$0xff]
  %v1599 = vld [vmem:[%s5 + $0x1c18] sm:$0xff]
  %v1600 = vld [vmem:[%s5 + $0x1c20] sm:$0xff]
  %v1601 = vld [vmem:[%s5 + $0x1c28] sm:$0xff]
  %v1602 = vld [vmem:[%s5 + $0x1c30] sm:$0xff]
  %v1603 = vld [vmem:[%s5 + $0x1c38] sm:$0xff]
  %v1604 = vld [vmem:[%s5 + $0x1c40] sm:$0xff]
  %v1605 = vld [vmem:[%s5 + $0x1c48] sm:$0xff]
  %v1606 = vld [vmem:[%s5 + $0x1c50] sm:$0xff]
  %v1607 = vld [vmem:[%s5 + $0x1c58] sm:$0xff]
  %v1608 = vld [vmem:[%s5 + $0x1c60] sm:$0xff]
  %v1609 = vld [vmem:[%s5 + $0x1c68] sm:$0xff]
  %v1610 = vld [vmem:[%s5 + $0x1c70] sm:$0xff]
  %v1611 = vld [vmem:[%s5 + $0x1c78] sm:$0xff]
  %v1612 = vld [vmem:[%s5 + $0x1c80] sm:$0xff]
  %v1613 = vld [vmem:[%s5 + $0x1c88] sm:$0xff]
  %v1614 = vld [vmem:[%s5 + $0x1c90] sm:$0xff]
  %v1615 = vld [vmem:[%s5 + $0x1c98] sm:$0xff]
  %v1616 = vld [vmem:[%s5 + $0x1ca0] sm:$0xff]
  %v1617 = vld [vmem:[%s5 + $0x1ca8] sm:$0xff]
  %v1618 = vld [vmem:[%s5 + $0x1cb0] sm:$0xff]
  %v1619 = vld [vmem:[%s5 + $0x1cb8] sm:$0xff]
  %v1620 = vld [vmem:[%s5 + $0x1cc0] sm:$0xff]
  %v1621 = vld [vmem:[%s5 + $0x1cc8] sm:$0xff]
  %v1622 = vld [vmem:[%s5 + $0x1cd0] sm:$0xff]
  %v1623 = vld [vmem:[%s5 + $0x1cd8] sm:$0xff]
  %v1624 = vld [vmem:[%s5 + $0x1ce0] sm:$0xff]
  %v1625 = vld [vmem:[%s5 + $0x1ce8] sm:$0xff]
  %v1626 = vld [vmem:[%s5 + $0x1cf0] sm:$0xff]
  %v1627 = vld [vmem:[%s5 + $0x1cf8] sm:$0xff]
  %v1628 = vld [vmem:[%s5 + $0x1d00] sm:$0xff]
  %v1629 = vld [vmem:[%s5 + $0x1d08] sm:$0xff]
  %v1630 = vld [vmem:[%s5 + $0x1d10] sm:$0xff]
  %v1631 = vld [vmem:[%s5 + $0x1d18] sm:$0xff]
  %v1632 = vld [vmem:[%s5 + $0x1d20] sm:$0xff]
  %v1633 = vld [vmem:[%s5 + $0x1d28] sm:$0xff]
  %v1634 = vld [vmem:[%s5 + $0x1d30] sm:$0xff]
  %v1635 = vld [vmem:[%s5 + $0x1d38] sm:$0xff]
  %v1636 = vld [vmem:[%s5 + $0x1d40] sm:$0xff]
  %v1637 = vld [vmem:[%s5 + $0x1d48] sm:$0xff]
  %v1638 = vld [vmem:[%s5 + $0x1d50] sm:$0xff]
  %v1639 = vld [vmem:[%s5 + $0x1d58] sm:$0xff]
  %v1640 = vld [vmem:[%s5 + $0x1d60] sm:$0xff]
  %v1641 = vld [vmem:[%s5 + $0x1d68] sm:$0xff]
  %v1642 = vld [vmem:[%s5 + $0x1d70] sm:$0xff]
  %v1643 = vld [vmem:[%s5 + $0x1d78] sm:$0xff]
  %v1644 = vld [vmem:[%s5 + $0x1d80] sm:$0xff]
  %v1645 = vld [vmem:[%s5 + $0x1d88] sm:$0xff]
  %v1646 = vld [vmem:[%s5 + $0x1d90] sm:$0xff]
  %v1647 = vld [vmem:[%s5 + $0x1d98] sm:$0xff]
  %v1648 = vld [vmem:[%s5 + $0x1da0] sm:$0xff]
  %v1649 = vld [vmem:[%s5 + $0x1da8] sm:$0xff]
  %v1650 = vld [vmem:[%s5 + $0x1db0] sm:$0xff]
  %v1651 = vld [vmem:[%s5 + $0x1db8] sm:$0xff]
  %v1652 = vld [vmem:[%s5 + $0x1dc0] sm:$0xff]
  %v1653 = vld [vmem:[%s5 + $0x1dc8] sm:$0xff]
  %v1654 = vld [vmem:[%s5 + $0x1dd0] sm:$0xff]
  %v1655 = vld [vmem:[%s5 + $0x1dd8] sm:$0xff]
  %v1656 = vld [vmem:[%s5 + $0x1de0] sm:$0xff]
  %v1657 = vld [vmem:[%s5 + $0x1de8] sm:$0xff]
  %v1658 = vld [vmem:[%s5 + $0x1df0] sm:$0xff]
  %v1659 = vld [vmem:[%s5 + $0x1df8] sm:$0xff]
  %v1660 = vld [vmem:[%s5 + $0x1e00] sm:$0xff]
  %v1661 = vld [vmem:[%s5 + $0x1e08] sm:$0xff]
  %v1662 = vld [vmem:[%s5 + $0x1e10] sm:$0xff]
  %v1663 = vld [vmem:[%s5 + $0x1e18] sm:$0xff]
  %v1664 = vld [vmem:[%s5 + $0x1e20] sm:$0xff]
  %v1665 = vld [vmem:[%s5 + $0x1e28] sm:$0xff]
  %v1666 = vld [vmem:[%s5 + $0x1e30] sm:$0xff]
  %v1667 = vld [vmem:[%s5 + $0x1e38] sm:$0xff]
  %v1668 = vld [vmem:[%s5 + $0x1e40] sm:$0xff]
  %v1669 = vld [vmem:[%s5 + $0x1e48] sm:$0xff]
  %v1670 = vld [vmem:[%s5 + $0x1e50] sm:$0xff]
  %v1671 = vld [vmem:[%s5 + $0x1e58] sm:$0xff]
  %v1672 = vld [vmem:[%s5 + $0x1e60] sm:$0xff]
  %v1673 = vld [vmem:[%s5 + $0x1e68] sm:$0xff]
  %v1674 = vld [vmem:[%s5 + $0x1e70] sm:$0xff]
  %v1675 = vld [vmem:[%s5 + $0x1e78] sm:$0xff]
  %v1676 = vld [vmem:[%s5 + $0x1e80] sm:$0xff]
  %v1677 = vld [vmem:[%s5 + $0x1e88] sm:$0xff]
  %v1678 = vld [vmem:[%s5 + $0x1e90] sm:$0xff]
  %v1679 = vld [vmem:[%s5 + $0x1e98] sm:$0xff]
  %v1680 = vld [vmem:[%s5 + $0x1ea0] sm:$0xff]
  %v1681 = vld [vmem:[%s5 + $0x1ea8] sm:$0xff]
  %v1682 = vld [vmem:[%s5 + $0x1eb0] sm:$0xff]
  %v1683 = vld [vmem:[%s5 + $0x1eb8] sm:$0xff]
  %v1684 = vld [vmem:[%s5 + $0x1ec0] sm:$0xff]
  %v1685 = vld [vmem:[%s5 + $0x1ec8] sm:$0xff]
  %v1686 = vld [vmem:[%s5 + $0x1ed0] sm:$0xff]
  %v1687 = vld [vmem:[%s5 + $0x1ed8] sm:$0xff]
  %v1688 = vld [vmem:[%s5 + $0x1ee0] sm:$0xff]
  %v1689 = vld [vmem:[%s5 + $0x1ee8] sm:$0xff]
  %v1690 = vld [vmem:[%s5 + $0x1ef0] sm:$0xff]
  %v1691 = vld [vmem:[%s5 + $0x1ef8] sm:$0xff]
  %v1692 = vld [vmem:[%s5 + $0x1f00] sm:$0xff]
  %v1693 = vld [vmem:[%s5 + $0x1f08] sm:$0xff]
  %v1694 = vld [vmem:[%s5 + $0x1f10] sm:$0xff]
  %v1695 = vld [vmem:[%s5 + $0x1f18] sm:$0xff]
  %v1696 = vld [vmem:[%s5 + $0x1f20] sm:$0xff]
  %v1697 = vld [vmem:[%s5 + $0x1f28] sm:$0xff]
  %v1698 = vld [vmem:[%s5 + $0x1f30] sm:$0xff]
  %v1699 = vld [vmem:[%s5 + $0x1f38] sm:$0xff]
  %v1700 = vld [vmem:[%s5 + $0x1f40] sm:$0xff]
  %v1701 = vld [vmem:[%s5 + $0x1f48] sm:$0xff]
  %v1702 = vld [vmem:[%s5 + $0x1f50] sm:$0xff]
  %v1703 = vld [vmem:[%s5 + $0x1f58] sm:$0xff]
  %v1704 = vld [vmem:[%s5 + $0x1f60] sm:$0xff]
  %v1705 = vld [vmem:[%s5 + $0x1f68] sm:$0xff]
  %v1706 = vld [vmem:[%s5 + $0x1f70] sm:$0xff]
  %v1707 = vld [vmem:[%s5 + $0x1f78] sm:$0xff]
  %v1708 = vld [vmem:[%s5 + $0x1f80] sm:$0xff]
  %v1709 = vld [vmem:[%s5 + $0x1f88] sm:$0xff]
  %v1710 = vld [vmem:[%s5 + $0x1f90] sm:$0xff]
  %v1711 = vld [vmem:[%s5 + $0x1f98] sm:$0xff]
  %v1712 = vld [vmem:[%s5 + $0x1fa0] sm:$0xff]
  %v1713 = vld [vmem:[%s5 + $0x1fa8] sm:$0xff]
  %v1714 = vld [vmem:[%s5 + $0x1fb0] sm:$0xff]
  %v1715 = vld [vmem:[%s5 + $0x1fb8] sm:$0xff]
  %v1716 = vld [vmem:[%s5 + $0x1fc0] sm:$0xff]
  %v1717 = vld [vmem:[%s5 + $0x1fc8] sm:$0xff]
  %v1718 = vld [vmem:[%s5 + $0x1fd0] sm:$0xff]
  %v1719 = vld [vmem:[%s5 + $0x1fd8] sm:$0xff]
  %v1720 = vld [vmem:[%s5 + $0x1fe0] sm:$0xff]
  %v1721 = vld [vmem:[%s5 + $0x1fe8] sm:$0xff]
  %v1722 = vld [vmem:[%s5 + $0x1ff0] sm:$0xff]
  %v1723 = vld [vmem:[%s5 + $0x1ff8] sm:$0xff]
  %v1724 = vld [vmem:[%s6] sm:$0xff]
  %v1726 = vlaneseq
  %v1727 = vshrl.u32 %v1726, 7
  %v1728 = vsub.s32 0, %v1727
  %v1729 = vrot.slane %v1724, %v1728
  %v1730 = vlaneseq
  %v1731 = vshrl.u32 %v1730, 7
  %v1732 = vsub.s32 1, %v1731
  %v1733 = vrot.slane %v1724, %v1732
  %v1734 = vlaneseq
  %v1735 = vshrl.u32 %v1734, 7
  %v1736 = vsub.s32 2, %v1735
  %v1737 = vrot.slane %v1724, %v1736
  %v1738 = vlaneseq
  %v1739 = vshrl.u32 %v1738, 7
  %v1740 = vsub.s32 3, %v1739
  %v1741 = vrot.slane %v1724, %v1740
  %v1742 = vlaneseq
  %v1743 = vshrl.u32 %v1742, 7
  %v1744 = vsub.s32 4, %v1743
  %v1745 = vrot.slane %v1724, %v1744
  %v1746 = vlaneseq
  %v1747 = vshrl.u32 %v1746, 7
  %v1748 = vsub.s32 5, %v1747
  %v1749 = vrot.slane %v1724, %v1748
  %v1750 = vlaneseq
  %v1751 = vshrl.u32 %v1750, 7
  %v1752 = vsub.s32 6, %v1751
  %v1753 = vrot.slane %v1724, %v1752
  %v1754 = vlaneseq
  %v1755 = vshrl.u32 %v1754, 7
  %v1756 = vsub.s32 7, %v1755
  %v1757 = vrot.slane %v1724, %v1756
  %v1774 = vunpack.c.l.b16 %v692
  %v1775 = vunpack.c.h.b16 %v692
  %v1776 = vunpack.c.l.b16 %v693
  %v1777 = vunpack.c.h.b16 %v693
  %v1778 = vunpack.c.l.b16 %v694
  %v1779 = vunpack.c.h.b16 %v694
  %v1780 = vunpack.c.l.b16 %v695
  %v1781 = vunpack.c.h.b16 %v695
  %v1782 = vunpack.c.l.b16 %v696
  %v1783 = vunpack.c.h.b16 %v696
  %v1784 = vunpack.c.l.b16 %v697
  %v1785 = vunpack.c.h.b16 %v697
  %v1786 = vunpack.c.l.b16 %v698
  %v1787 = vunpack.c.h.b16 %v698
  %v1788 = vunpack.c.l.b16 %v699
  %v1789 = vunpack.c.h.b16 %v699
  %v1790 = vpack.i.b16 %v1776, %v1774
  %v1791 = vpack.i.b16 %v1777, %v1775
  %v1792 = vpack.i.b16 %v1780, %v1778
  %v1793 = vpack.i.b16 %v1781, %v1779
  %v1794 = vpack.i.b16 %v1784, %v1782
  %v1795 = vpack.i.b16 %v1785, %v1783
  %v1796 = vpack.i.b16 %v1788, %v1786
  %v1797 = vpack.i.b16 %v1789, %v1787
  %v1798 = vcombine.low %v1790, %v1792
  %v1799 = vcombine.high %v1790, %v1792
  %v1800 = vcombine.low %v1794, %v1796
  %v1801 = vcombine.high %v1794, %v1796
  %v1803 = vunpack.c.l.s4 1966171168
  %v1804 = vunpack.c.0.s8 %v1803
  %v1805 = vlaneseq
  %v1806 = vshrl.u32 %v1805, 7
  %v1807 = vsub.s32 %v1804, %v1806
  %v1808 = vrot.slane %v1798, %v1807
  %v1810 = vunpack.c.l.s4 1966171168
  %v1811 = vunpack.c.0.s8 %v1810
  %v1812 = vlaneseq
  %v1813 = vshrl.u32 %v1812, 7
  %v1814 = vsub.s32 %v1811, %v1813
  %v1815 = vrot.slane %v1799, %v1814
  %v1817 = vunpack.c.l.s4 1966171168
  %v1818 = vunpack.c.0.s8 %v1817
  %v1819 = vlaneseq
  %v1820 = vshrl.u32 %v1819, 7
  %v1821 = vsub.s32 %v1818, %v1820
  %v1822 = vrot.slane %v1800, %v1821
  %v1824 = vunpack.c.l.s4 1966171168
  %v1825 = vunpack.c.0.s8 %v1824
  %v1826 = vlaneseq
  %v1827 = vshrl.u32 %v1826, 7
  %v1828 = vsub.s32 %v1825, %v1827
  %v1829 = vrot.slane %v1801, %v1828
  %v1830 = vcombine.low %v1808, %v1822
  %v1831 = vcombine.high %v1808, %v1822
  %v1832 = vcombine.low %v1815, %v1829
  %v1833 = vcombine.high %v1815, %v1829
  %v1835 = vunpack.c.l.s4 1966171168
  %v1836 = vunpack.c.0.s8 %v1835
  %v1837 = vlaneseq
  %v1838 = vshrl.u32 %v1837, 7
  %v1839 = vsub.s32 %v1836, %v1838
  %v1840 = vrot.slane %v1830, %v1839
  %v1842 = vunpack.c.l.s4 1966171168
  %v1843 = vunpack.c.0.s8 %v1842
  %v1844 = vlaneseq
  %v1845 = vshrl.u32 %v1844, 7
  %v1846 = vsub.s32 %v1843, %v1845
  %v1847 = vrot.slane %v1832, %v1846
  %v1849 = vunpack.c.l.s4 1966171168
  %v1850 = vunpack.c.0.s8 %v1849
  %v1851 = vlaneseq
  %v1852 = vshrl.u32 %v1851, 7
  %v1853 = vsub.s32 %v1850, %v1852
  %v1854 = vrot.slane %v1831, %v1853
  %v1856 = vunpack.c.l.s4 1966171168
  %v1857 = vunpack.c.0.s8 %v1856
  %v1858 = vlaneseq
  %v1859 = vshrl.u32 %v1858, 7
  %v1860 = vsub.s32 %v1857, %v1859
  %v1861 = vrot.slane %v1833, %v1860
  %v1862 = vcombine.high %v1840, %v1840
  %v1863 = vcombine.high %v1847, %v1847
  %v1864 = vcombine.high %v1854, %v1854
  %v1865 = vcombine.high %v1861, %v1861
  %v1866 = vcombine.low %v1791, %v1793
  %v1867 = vcombine.high %v1791, %v1793
  %v1868 = vcombine.low %v1795, %v1797
  %v1869 = vcombine.high %v1795, %v1797
  %v1871 = vunpack.c.l.s4 1966171168
  %v1872 = vunpack.c.0.s8 %v1871
  %v1873 = vlaneseq
  %v1874 = vshrl.u32 %v1873, 7
  %v1875 = vsub.s32 %v1872, %v1874
  %v1876 = vrot.slane %v1866, %v1875
  %v1878 = vunpack.c.l.s4 1966171168
  %v1879 = vunpack.c.0.s8 %v1878
  %v1880 = vlaneseq
  %v1881 = vshrl.u32 %v1880, 7
  %v1882 = vsub.s32 %v1879, %v1881
  %v1883 = vrot.slane %v1867, %v1882
  %v1885 = vunpack.c.l.s4 1966171168
  %v1886 = vunpack.c.0.s8 %v1885
  %v1887 = vlaneseq
  %v1888 = vshrl.u32 %v1887, 7
  %v1889 = vsub.s32 %v1886, %v1888
  %v1890 = vrot.slane %v1868, %v1889
  %v1892 = vunpack.c.l.s4 1966171168
  %v1893 = vunpack.c.0.s8 %v1892
  %v1894 = vlaneseq
  %v1895 = vshrl.u32 %v1894, 7
  %v1896 = vsub.s32 %v1893, %v1895
  %v1897 = vrot.slane %v1869, %v1896
  %v1898 = vcombine.low %v1876, %v1890
  %v1899 = vcombine.high %v1876, %v1890
  %v1900 = vcombine.low %v1883, %v1897
  %v1901 = vcombine.high %v1883, %v1897
  %v1903 = vunpack.c.l.s4 1966171168
  %v1904 = vunpack.c.0.s8 %v1903
  %v1905 = vlaneseq
  %v1906 = vshrl.u32 %v1905, 7
  %v1907 = vsub.s32 %v1904, %v1906
  %v1908 = vrot.slane %v1898, %v1907
  %v1910 = vunpack.c.l.s4 1966171168
  %v1911 = vunpack.c.0.s8 %v1910
  %v1912 = vlaneseq
  %v1913 = vshrl.u32 %v1912, 7
  %v1914 = vsub.s32 %v1911, %v1913
  %v1915 = vrot.slane %v1900, %v1914
  %v1917 = vunpack.c.l.s4 1966171168
  %v1918 = vunpack.c.0.s8 %v1917
  %v1919 = vlaneseq
  %v1920 = vshrl.u32 %v1919, 7
  %v1921 = vsub.s32 %v1918, %v1920
  %v1922 = vrot.slane %v1899, %v1921
  %v1924 = vunpack.c.l.s4 1966171168
  %v1925 = vunpack.c.0.s8 %v1924
  %v1926 = vlaneseq
  %v1927 = vshrl.u32 %v1926, 7
  %v1928 = vsub.s32 %v1925, %v1927
  %v1929 = vrot.slane %v1901, %v1928
  %v1930 = vcombine.high %v1908, %v1908
  %v1931 = vcombine.high %v1915, %v1915
  %v1932 = vcombine.high %v1922, %v1922
  %v1933 = vcombine.high %v1929, %v1929
  %v2974 = vunpack.c.l.b16 %v700
  %v2975 = vunpack.c.h.b16 %v700
  %v2976 = vunpack.c.l.b16 %v701
  %v2977 = vunpack.c.h.b16 %v701
  %v2978 = vunpack.c.l.b16 %v702
  %v2979 = vunpack.c.h.b16 %v702
  %v2980 = vunpack.c.l.b16 %v703
  %v2981 = vunpack.c.h.b16 %v703
  %v2982 = vunpack.c.l.b16 %v704
  %v2983 = vunpack.c.h.b16 %v704
  %v2984 = vunpack.c.l.b16 %v705
  %v2985 = vunpack.c.h.b16 %v705
  %v2986 = vunpack.c.l.b16 %v706
  %v2987 = vunpack.c.h.b16 %v706
  %v2988 = vunpack.c.l.b16 %v707
  %v2989 = vunpack.c.h.b16 %v707
  %v2990 = vunpack.c.l.b16 %v708
  %v2991 = vunpack.c.h.b16 %v708
  %v2992 = vunpack.c.l.b16 %v709
  %v2993 = vunpack.c.h.b16 %v709
  %v2994 = vunpack.c.l.b16 %v710
  %v2995 = vunpack.c.h.b16 %v710
  %v2996 = vunpack.c.l.b16 %v711
  %v2997 = vunpack.c.h.b16 %v711
  %v2998 = vunpack.c.l.b16 %v712
  %v2999 = vunpack.c.h.b16 %v712
  %v3000 = vunpack.c.l.b16 %v713
  %v3001 = vunpack.c.h.b16 %v713
  %v3002 = vunpack.c.l.b16 %v714
  %v3003 = vunpack.c.h.b16 %v714
  %v3004 = vunpack.c.l.b16 %v715
  %v3005 = vunpack.c.h.b16 %v715
  %v3006 = vunpack.c.l.b16 %v716
  %v3007 = vunpack.c.h.b16 %v716
  %v3008 = vunpack.c.l.b16 %v717
  %v3009 = vunpack.c.h.b16 %v717
  %v3010 = vunpack.c.l.b16 %v718
  %v3011 = vunpack.c.h.b16 %v718
  %v3012 = vunpack.c.l.b16 %v719
  %v3013 = vunpack.c.h.b16 %v719
  %v3014 = vunpack.c.l.b16 %v720
  %v3015 = vunpack.c.h.b16 %v720
  %v3016 = vunpack.c.l.b16 %v721
  %v3017 = vunpack.c.h.b16 %v721
  %v3018 = vunpack.c.l.b16 %v722
  %v3019 = vunpack.c.h.b16 %v722
  %v3020 = vunpack.c.l.b16 %v723
  %v3021 = vunpack.c.h.b16 %v723
  %v3022 = vunpack.c.l.b16 %v724
  %v3023 = vunpack.c.h.b16 %v724
  %v3024 = vunpack.c.l.b16 %v725
  %v3025 = vunpack.c.h.b16 %v725
  %v3026 = vunpack.c.l.b16 %v726
  %v3027 = vunpack.c.h.b16 %v726
  %v3028 = vunpack.c.l.b16 %v727
  %v3029 = vunpack.c.h.b16 %v727
  %v3030 = vunpack.c.l.b16 %v728
  %v3031 = vunpack.c.h.b16 %v728
  %v3032 = vunpack.c.l.b16 %v729
  %v3033 = vunpack.c.h.b16 %v729
  %v3034 = vunpack.c.l.b16 %v730
  %v3035 = vunpack.c.h.b16 %v730
  %v3036 = vunpack.c.l.b16 %v731
  %v3037 = vunpack.c.h.b16 %v731
  %v3038 = vunpack.c.l.b16 %v732
  %v3039 = vunpack.c.h.b16 %v732
  %v3040 = vunpack.c.l.b16 %v733
  %v3041 = vunpack.c.h.b16 %v733
  %v3042 = vunpack.c.l.b16 %v734
  %v3043 = vunpack.c.h.b16 %v734
  %v3044 = vunpack.c.l.b16 %v735
  %v3045 = vunpack.c.h.b16 %v735
  %v3046 = vunpack.c.l.b16 %v736
  %v3047 = vunpack.c.h.b16 %v736
  %v3048 = vunpack.c.l.b16 %v737
  %v3049 = vunpack.c.h.b16 %v737
  %v3050 = vunpack.c.l.b16 %v738
  %v3051 = vunpack.c.h.b16 %v738
  %v3052 = vunpack.c.l.b16 %v739
  %v3053 = vunpack.c.h.b16 %v739
  %v3054 = vunpack.c.l.b16 %v740
  %v3055 = vunpack.c.h.b16 %v740
  %v3056 = vunpack.c.l.b16 %v741
  %v3057 = vunpack.c.h.b16 %v741
  %v3058 = vunpack.c.l.b16 %v742
  %v3059 = vunpack.c.h.b16 %v742
  %v3060 = vunpack.c.l.b16 %v743
  %v3061 = vunpack.c.h.b16 %v743
  %v3062 = vunpack.c.l.b16 %v744
  %v3063 = vunpack.c.h.b16 %v744
  %v3064 = vunpack.c.l.b16 %v745
  %v3065 = vunpack.c.h.b16 %v745
  %v3066 = vunpack.c.l.b16 %v746
  %v3067 = vunpack.c.h.b16 %v746
  %v3068 = vunpack.c.l.b16 %v747
  %v3069 = vunpack.c.h.b16 %v747
  %v3070 = vunpack.c.l.b16 %v748
  %v3071 = vunpack.c.h.b16 %v748
  %v3072 = vunpack.c.l.b16 %v749
  %v3073 = vunpack.c.h.b16 %v749
  %v3074 = vunpack.c.l.b16 %v750
  %v3075 = vunpack.c.h.b16 %v750
  %v3076 = vunpack.c.l.b16 %v751
  %v3077 = vunpack.c.h.b16 %v751
  %v3078 = vunpack.c.l.b16 %v752
  %v3079 = vunpack.c.h.b16 %v752
  %v3080 = vunpack.c.l.b16 %v753
  %v3081 = vunpack.c.h.b16 %v753
  %v3082 = vunpack.c.l.b16 %v754
  %v3083 = vunpack.c.h.b16 %v754
  %v3084 = vunpack.c.l.b16 %v755
  %v3085 = vunpack.c.h.b16 %v755
  %v3086 = vunpack.c.l.b16 %v756
  %v3087 = vunpack.c.h.b16 %v756
  %v3088 = vunpack.c.l.b16 %v757
  %v3089 = vunpack.c.h.b16 %v757
  %v3090 = vunpack.c.l.b16 %v758
  %v3091 = vunpack.c.h.b16 %v758
  %v3092 = vunpack.c.l.b16 %v759
  %v3093 = vunpack.c.h.b16 %v759
  %v3094 = vunpack.c.l.b16 %v760
  %v3095 = vunpack.c.h.b16 %v760
  %v3096 = vunpack.c.l.b16 %v761
  %v3097 = vunpack.c.h.b16 %v761
  %v3098 = vunpack.c.l.b16 %v762
  %v3099 = vunpack.c.h.b16 %v762
  %v3100 = vunpack.c.l.b16 %v763
  %v3101 = vunpack.c.h.b16 %v763
  %v3102 = vunpack.c.l.b16 %v764
  %v3103 = vunpack.c.h.b16 %v764
  %v3104 = vunpack.c.l.b16 %v765
  %v3105 = vunpack.c.h.b16 %v765
  %v3106 = vunpack.c.l.b16 %v766
  %v3107 = vunpack.c.h.b16 %v766
  %v3108 = vunpack.c.l.b16 %v767
  %v3109 = vunpack.c.h.b16 %v767
  %v3110 = vunpack.c.l.b16 %v768
  %v3111 = vunpack.c.h.b16 %v768
  %v3112 = vunpack.c.l.b16 %v769
  %v3113 = vunpack.c.h.b16 %v769
  %v3114 = vunpack.c.l.b16 %v770
  %v3115 = vunpack.c.h.b16 %v770
  %v3116 = vunpack.c.l.b16 %v771
  %v3117 = vunpack.c.h.b16 %v771
  %v3118 = vunpack.c.l.b16 %v772
  %v3119 = vunpack.c.h.b16 %v772
  %v3120 = vunpack.c.l.b16 %v773
  %v3121 = vunpack.c.h.b16 %v773
  %v3122 = vunpack.c.l.b16 %v774
  %v3123 = vunpack.c.h.b16 %v774
  %v3124 = vunpack.c.l.b16 %v775
  %v3125 = vunpack.c.h.b16 %v775
  %v3126 = vunpack.c.l.b16 %v776
  %v3127 = vunpack.c.h.b16 %v776
  %v3128 = vunpack.c.l.b16 %v777
  %v3129 = vunpack.c.h.b16 %v777
  %v3130 = vunpack.c.l.b16 %v778
  %v3131 = vunpack.c.h.b16 %v778
  %v3132 = vunpack.c.l.b16 %v779
  %v3133 = vunpack.c.h.b16 %v779
  %v3134 = vunpack.c.l.b16 %v780
  %v3135 = vunpack.c.h.b16 %v780
  %v3136 = vunpack.c.l.b16 %v781
  %v3137 = vunpack.c.h.b16 %v781
  %v3138 = vunpack.c.l.b16 %v782
  %v3139 = vunpack.c.h.b16 %v782
  %v3140 = vunpack.c.l.b16 %v783
  %v3141 = vunpack.c.h.b16 %v783
  %v3142 = vunpack.c.l.b16 %v784
  %v3143 = vunpack.c.h.b16 %v784
  %v3144 = vunpack.c.l.b16 %v785
  %v3145 = vunpack.c.h.b16 %v785
  %v3146 = vunpack.c.l.b16 %v786
  %v3147 = vunpack.c.h.b16 %v786
  %v3148 = vunpack.c.l.b16 %v787
  %v3149 = vunpack.c.h.b16 %v787
  %v3150 = vunpack.c.l.b16 %v788
  %v3151 = vunpack.c.h.b16 %v788
  %v3152 = vunpack.c.l.b16 %v789
  %v3153 = vunpack.c.h.b16 %v789
  %v3154 = vunpack.c.l.b16 %v790
  %v3155 = vunpack.c.h.b16 %v790
  %v3156 = vunpack.c.l.b16 %v791
  %v3157 = vunpack.c.h.b16 %v791
  %v3158 = vunpack.c.l.b16 %v792
  %v3159 = vunpack.c.h.b16 %v792
  %v3160 = vunpack.c.l.b16 %v793
  %v3161 = vunpack.c.h.b16 %v793
  %v3162 = vunpack.c.l.b16 %v794
  %v3163 = vunpack.c.h.b16 %v794
  %v3164 = vunpack.c.l.b16 %v795
  %v3165 = vunpack.c.h.b16 %v795
  %v3166 = vunpack.c.l.b16 %v796
  %v3167 = vunpack.c.h.b16 %v796
  %v3168 = vunpack.c.l.b16 %v797
  %v3169 = vunpack.c.h.b16 %v797
  %v3170 = vunpack.c.l.b16 %v798
  %v3171 = vunpack.c.h.b16 %v798
  %v3172 = vunpack.c.l.b16 %v799
  %v3173 = vunpack.c.h.b16 %v799
  %v3174 = vunpack.c.l.b16 %v800
  %v3175 = vunpack.c.h.b16 %v800
  %v3176 = vunpack.c.l.b16 %v801
  %v3177 = vunpack.c.h.b16 %v801
  %v3178 = vunpack.c.l.b16 %v802
  %v3179 = vunpack.c.h.b16 %v802
  %v3180 = vunpack.c.l.b16 %v803
  %v3181 = vunpack.c.h.b16 %v803
  %v3182 = vunpack.c.l.b16 %v804
  %v3183 = vunpack.c.h.b16 %v804
  %v3184 = vunpack.c.l.b16 %v805
  %v3185 = vunpack.c.h.b16 %v805
  %v3186 = vunpack.c.l.b16 %v806
  %v3187 = vunpack.c.h.b16 %v806
  %v3188 = vunpack.c.l.b16 %v807
  %v3189 = vunpack.c.h.b16 %v807
  %v3190 = vunpack.c.l.b16 %v808
  %v3191 = vunpack.c.h.b16 %v808
  %v3192 = vunpack.c.l.b16 %v809
  %v3193 = vunpack.c.h.b16 %v809
  %v3194 = vunpack.c.l.b16 %v810
  %v3195 = vunpack.c.h.b16 %v810
  %v3196 = vunpack.c.l.b16 %v811
  %v3197 = vunpack.c.h.b16 %v811
  %v3198 = vunpack.c.l.b16 %v812
  %v3199 = vunpack.c.h.b16 %v812
  %v3200 = vunpack.c.l.b16 %v813
  %v3201 = vunpack.c.h.b16 %v813
  %v3202 = vunpack.c.l.b16 %v814
  %v3203 = vunpack.c.h.b16 %v814
  %v3204 = vunpack.c.l.b16 %v815
  %v3205 = vunpack.c.h.b16 %v815
  %v3206 = vunpack.c.l.b16 %v816
  %v3207 = vunpack.c.h.b16 %v816
  %v3208 = vunpack.c.l.b16 %v817
  %v3209 = vunpack.c.h.b16 %v817
  %v3210 = vunpack.c.l.b16 %v818
  %v3211 = vunpack.c.h.b16 %v818
  %v3212 = vunpack.c.l.b16 %v819
  %v3213 = vunpack.c.h.b16 %v819
  %v3214 = vunpack.c.l.b16 %v820
  %v3215 = vunpack.c.h.b16 %v820
  %v3216 = vunpack.c.l.b16 %v821
  %v3217 = vunpack.c.h.b16 %v821
  %v3218 = vunpack.c.l.b16 %v822
  %v3219 = vunpack.c.h.b16 %v822
  %v3220 = vunpack.c.l.b16 %v823
  %v3221 = vunpack.c.h.b16 %v823
  %v3222 = vunpack.c.l.b16 %v824
  %v3223 = vunpack.c.h.b16 %v824
  %v3224 = vunpack.c.l.b16 %v825
  %v3225 = vunpack.c.h.b16 %v825
  %v3226 = vunpack.c.l.b16 %v826
  %v3227 = vunpack.c.h.b16 %v826
  %v3228 = vunpack.c.l.b16 %v827
  %v3229 = vunpack.c.h.b16 %v827
  %v3230 = vunpack.c.l.b16 %v828
  %v3231 = vunpack.c.h.b16 %v828
  %v3232 = vunpack.c.l.b16 %v829
  %v3233 = vunpack.c.h.b16 %v829
  %v3234 = vunpack.c.l.b16 %v830
  %v3235 = vunpack.c.h.b16 %v830
  %v3236 = vunpack.c.l.b16 %v831
  %v3237 = vunpack.c.h.b16 %v831
  %v3238 = vunpack.c.l.b16 %v832
  %v3239 = vunpack.c.h.b16 %v832
  %v3240 = vunpack.c.l.b16 %v833
  %v3241 = vunpack.c.h.b16 %v833
  %v3242 = vunpack.c.l.b16 %v834
  %v3243 = vunpack.c.h.b16 %v834
  %v3244 = vunpack.c.l.b16 %v835
  %v3245 = vunpack.c.h.b16 %v835
  %v3246 = vunpack.c.l.b16 %v836
  %v3247 = vunpack.c.h.b16 %v836
  %v3248 = vunpack.c.l.b16 %v837
  %v3249 = vunpack.c.h.b16 %v837
  %v3250 = vunpack.c.l.b16 %v838
  %v3251 = vunpack.c.h.b16 %v838
  %v3252 = vunpack.c.l.b16 %v839
  %v3253 = vunpack.c.h.b16 %v839
  %v3254 = vunpack.c.l.b16 %v840
  %v3255 = vunpack.c.h.b16 %v840
  %v3256 = vunpack.c.l.b16 %v841
  %v3257 = vunpack.c.h.b16 %v841
  %v3258 = vunpack.c.l.b16 %v842
  %v3259 = vunpack.c.h.b16 %v842
  %v3260 = vunpack.c.l.b16 %v843
  %v3261 = vunpack.c.h.b16 %v843
  %v3262 = vunpack.c.l.b16 %v844
  %v3263 = vunpack.c.h.b16 %v844
  %v3264 = vunpack.c.l.b16 %v845
  %v3265 = vunpack.c.h.b16 %v845
  %v3266 = vunpack.c.l.b16 %v846
  %v3267 = vunpack.c.h.b16 %v846
  %v3268 = vunpack.c.l.b16 %v847
  %v3269 = vunpack.c.h.b16 %v847
  %v3270 = vunpack.c.l.b16 %v848
  %v3271 = vunpack.c.h.b16 %v848
  %v3272 = vunpack.c.l.b16 %v849
  %v3273 = vunpack.c.h.b16 %v849
  %v3274 = vunpack.c.l.b16 %v850
  %v3275 = vunpack.c.h.b16 %v850
  %v3276 = vunpack.c.l.b16 %v851
  %v3277 = vunpack.c.h.b16 %v851
  %v3278 = vunpack.c.l.b16 %v852
  %v3279 = vunpack.c.h.b16 %v852
  %v3280 = vunpack.c.l.b16 %v853
  %v3281 = vunpack.c.h.b16 %v853
  %v3282 = vunpack.c.l.b16 %v854
  %v3283 = vunpack.c.h.b16 %v854
  %v3284 = vunpack.c.l.b16 %v855
  %v3285 = vunpack.c.h.b16 %v855
  %v3286 = vunpack.c.l.b16 %v856
  %v3287 = vunpack.c.h.b16 %v856
  %v3288 = vunpack.c.l.b16 %v857
  %v3289 = vunpack.c.h.b16 %v857
  %v3290 = vunpack.c.l.b16 %v858
  %v3291 = vunpack.c.h.b16 %v858
  %v3292 = vunpack.c.l.b16 %v859
  %v3293 = vunpack.c.h.b16 %v859
  %v3294 = vunpack.c.l.b16 %v860
  %v3295 = vunpack.c.h.b16 %v860
  %v3296 = vunpack.c.l.b16 %v861
  %v3297 = vunpack.c.h.b16 %v861
  %v3298 = vunpack.c.l.b16 %v862
  %v3299 = vunpack.c.h.b16 %v862
  %v3300 = vunpack.c.l.b16 %v863
  %v3301 = vunpack.c.h.b16 %v863
  %v3302 = vunpack.c.l.b16 %v864
  %v3303 = vunpack.c.h.b16 %v864
  %v3304 = vunpack.c.l.b16 %v865
  %v3305 = vunpack.c.h.b16 %v865
  %v3306 = vunpack.c.l.b16 %v866
  %v3307 = vunpack.c.h.b16 %v866
  %v3308 = vunpack.c.l.b16 %v867
  %v3309 = vunpack.c.h.b16 %v867
  %v3310 = vunpack.c.l.b16 %v868
  %v3311 = vunpack.c.h.b16 %v868
  %v3312 = vunpack.c.l.b16 %v869
  %v3313 = vunpack.c.h.b16 %v869
  %v3314 = vunpack.c.l.b16 %v870
  %v3315 = vunpack.c.h.b16 %v870
  %v3316 = vunpack.c.l.b16 %v871
  %v3317 = vunpack.c.h.b16 %v871
  %v3318 = vunpack.c.l.b16 %v872
  %v3319 = vunpack.c.h.b16 %v872
  %v3320 = vunpack.c.l.b16 %v873
  %v3321 = vunpack.c.h.b16 %v873
  %v3322 = vunpack.c.l.b16 %v874
  %v3323 = vunpack.c.h.b16 %v874
  %v3324 = vunpack.c.l.b16 %v875
  %v3325 = vunpack.c.h.b16 %v875
  %v3326 = vunpack.c.l.b16 %v876
  %v3327 = vunpack.c.h.b16 %v876
  %v3328 = vunpack.c.l.b16 %v877
  %v3329 = vunpack.c.h.b16 %v877
  %v3330 = vunpack.c.l.b16 %v878
  %v3331 = vunpack.c.h.b16 %v878
  %v3332 = vunpack.c.l.b16 %v879
  %v3333 = vunpack.c.h.b16 %v879
  %v3334 = vunpack.c.l.b16 %v880
  %v3335 = vunpack.c.h.b16 %v880
  %v3336 = vunpack.c.l.b16 %v881
  %v3337 = vunpack.c.h.b16 %v881
  %v3338 = vunpack.c.l.b16 %v882
  %v3339 = vunpack.c.h.b16 %v882
  %v3340 = vunpack.c.l.b16 %v883
  %v3341 = vunpack.c.h.b16 %v883
  %v3342 = vunpack.c.l.b16 %v884
  %v3343 = vunpack.c.h.b16 %v884
  %v3344 = vunpack.c.l.b16 %v885
  %v3345 = vunpack.c.h.b16 %v885
  %v3346 = vunpack.c.l.b16 %v886
  %v3347 = vunpack.c.h.b16 %v886
  %v3348 = vunpack.c.l.b16 %v887
  %v3349 = vunpack.c.h.b16 %v887
  %v3350 = vunpack.c.l.b16 %v888
  %v3351 = vunpack.c.h.b16 %v888
  %v3352 = vunpack.c.l.b16 %v889
  %v3353 = vunpack.c.h.b16 %v889
  %v3354 = vunpack.c.l.b16 %v890
  %v3355 = vunpack.c.h.b16 %v890
  %v3356 = vunpack.c.l.b16 %v891
  %v3357 = vunpack.c.h.b16 %v891
  %v3358 = vunpack.c.l.b16 %v892
  %v3359 = vunpack.c.h.b16 %v892
  %v3360 = vunpack.c.l.b16 %v893
  %v3361 = vunpack.c.h.b16 %v893
  %v3362 = vunpack.c.l.b16 %v894
  %v3363 = vunpack.c.h.b16 %v894
  %v3364 = vunpack.c.l.b16 %v895
  %v3365 = vunpack.c.h.b16 %v895
  %v3366 = vunpack.c.l.b16 %v896
  %v3367 = vunpack.c.h.b16 %v896
  %v3368 = vunpack.c.l.b16 %v897
  %v3369 = vunpack.c.h.b16 %v897
  %v3370 = vunpack.c.l.b16 %v898
  %v3371 = vunpack.c.h.b16 %v898
  %v3372 = vunpack.c.l.b16 %v899
  %v3373 = vunpack.c.h.b16 %v899
  %v3374 = vunpack.c.l.b16 %v900
  %v3375 = vunpack.c.h.b16 %v900
  %v3376 = vunpack.c.l.b16 %v901
  %v3377 = vunpack.c.h.b16 %v901
  %v3378 = vunpack.c.l.b16 %v902
  %v3379 = vunpack.c.h.b16 %v902
  %v3380 = vunpack.c.l.b16 %v903
  %v3381 = vunpack.c.h.b16 %v903
  %v3382 = vunpack.c.l.b16 %v904
  %v3383 = vunpack.c.h.b16 %v904
  %v3384 = vunpack.c.l.b16 %v905
  %v3385 = vunpack.c.h.b16 %v905
  %v3386 = vunpack.c.l.b16 %v906
  %v3387 = vunpack.c.h.b16 %v906
  %v3388 = vunpack.c.l.b16 %v907
  %v3389 = vunpack.c.h.b16 %v907
  %v3390 = vunpack.c.l.b16 %v908
  %v3391 = vunpack.c.h.b16 %v908
  %v3392 = vunpack.c.l.b16 %v909
  %v3393 = vunpack.c.h.b16 %v909
  %v3394 = vunpack.c.l.b16 %v910
  %v3395 = vunpack.c.h.b16 %v910
  %v3396 = vunpack.c.l.b16 %v911
  %v3397 = vunpack.c.h.b16 %v911
  %v3398 = vunpack.c.l.b16 %v912
  %v3399 = vunpack.c.h.b16 %v912
  %v3400 = vunpack.c.l.b16 %v913
  %v3401 = vunpack.c.h.b16 %v913
  %v3402 = vunpack.c.l.b16 %v914
  %v3403 = vunpack.c.h.b16 %v914
  %v3404 = vunpack.c.l.b16 %v915
  %v3405 = vunpack.c.h.b16 %v915
  %v3406 = vunpack.c.l.b16 %v916
  %v3407 = vunpack.c.h.b16 %v916
  %v3408 = vunpack.c.l.b16 %v917
  %v3409 = vunpack.c.h.b16 %v917
  %v3410 = vunpack.c.l.b16 %v918
  %v3411 = vunpack.c.h.b16 %v918
  %v3412 = vunpack.c.l.b16 %v919
  %v3413 = vunpack.c.h.b16 %v919
  %v3414 = vunpack.c.l.b16 %v920
  %v3415 = vunpack.c.h.b16 %v920
  %v3416 = vunpack.c.l.b16 %v921
  %v3417 = vunpack.c.h.b16 %v921
  %v3418 = vunpack.c.l.b16 %v922
  %v3419 = vunpack.c.h.b16 %v922
  %v3420 = vunpack.c.l.b16 %v923
  %v3421 = vunpack.c.h.b16 %v923
  %v3422 = vunpack.c.l.b16 %v924
  %v3423 = vunpack.c.h.b16 %v924
  %v3424 = vunpack.c.l.b16 %v925
  %v3425 = vunpack.c.h.b16 %v925
  %v3426 = vunpack.c.l.b16 %v926
  %v3427 = vunpack.c.h.b16 %v926
  %v3428 = vunpack.c.l.b16 %v927
  %v3429 = vunpack.c.h.b16 %v927
  %v3430 = vunpack.c.l.b16 %v928
  %v3431 = vunpack.c.h.b16 %v928
  %v3432 = vunpack.c.l.b16 %v929
  %v3433 = vunpack.c.h.b16 %v929
  %v3434 = vunpack.c.l.b16 %v930
  %v3435 = vunpack.c.h.b16 %v930
  %v3436 = vunpack.c.l.b16 %v931
  %v3437 = vunpack.c.h.b16 %v931
  %v3438 = vunpack.c.l.b16 %v932
  %v3439 = vunpack.c.h.b16 %v932
  %v3440 = vunpack.c.l.b16 %v933
  %v3441 = vunpack.c.h.b16 %v933
  %v3442 = vunpack.c.l.b16 %v934
  %v3443 = vunpack.c.h.b16 %v934
  %v3444 = vunpack.c.l.b16 %v935
  %v3445 = vunpack.c.h.b16 %v935
  %v3446 = vunpack.c.l.b16 %v936
  %v3447 = vunpack.c.h.b16 %v936
  %v3448 = vunpack.c.l.b16 %v937
  %v3449 = vunpack.c.h.b16 %v937
  %v3450 = vunpack.c.l.b16 %v938
  %v3451 = vunpack.c.h.b16 %v938
  %v3452 = vunpack.c.l.b16 %v939
  %v3453 = vunpack.c.h.b16 %v939
  %v3454 = vunpack.c.l.b16 %v940
  %v3455 = vunpack.c.h.b16 %v940
  %v3456 = vunpack.c.l.b16 %v941
  %v3457 = vunpack.c.h.b16 %v941
  %v3458 = vunpack.c.l.b16 %v942
  %v3459 = vunpack.c.h.b16 %v942
  %v3460 = vunpack.c.l.b16 %v943
  %v3461 = vunpack.c.h.b16 %v943
  %v3462 = vunpack.c.l.b16 %v944
  %v3463 = vunpack.c.h.b16 %v944
  %v3464 = vunpack.c.l.b16 %v945
  %v3465 = vunpack.c.h.b16 %v945
  %v3466 = vunpack.c.l.b16 %v946
  %v3467 = vunpack.c.h.b16 %v946
  %v3468 = vunpack.c.l.b16 %v947
  %v3469 = vunpack.c.h.b16 %v947
  %v3470 = vunpack.c.l.b16 %v948
  %v3471 = vunpack.c.h.b16 %v948
  %v3472 = vunpack.c.l.b16 %v949
  %v3473 = vunpack.c.h.b16 %v949
  %v3474 = vunpack.c.l.b16 %v950
  %v3475 = vunpack.c.h.b16 %v950
  %v3476 = vunpack.c.l.b16 %v951
  %v3477 = vunpack.c.h.b16 %v951
  %v3478 = vunpack.c.l.b16 %v952
  %v3479 = vunpack.c.h.b16 %v952
  %v3480 = vunpack.c.l.b16 %v953
  %v3481 = vunpack.c.h.b16 %v953
  %v3482 = vunpack.c.l.b16 %v954
  %v3483 = vunpack.c.h.b16 %v954
  %v3484 = vunpack.c.l.b16 %v955
  %v3485 = vunpack.c.h.b16 %v955
  %v3486 = vunpack.c.l.b16 %v956
  %v3487 = vunpack.c.h.b16 %v956
  %v3488 = vunpack.c.l.b16 %v957
  %v3489 = vunpack.c.h.b16 %v957
  %v3490 = vunpack.c.l.b16 %v958
  %v3491 = vunpack.c.h.b16 %v958
  %v3492 = vunpack.c.l.b16 %v959
  %v3493 = vunpack.c.h.b16 %v959
  %v3494 = vunpack.c.l.b16 %v960
  %v3495 = vunpack.c.h.b16 %v960
  %v3496 = vunpack.c.l.b16 %v961
  %v3497 = vunpack.c.h.b16 %v961
  %v3498 = vunpack.c.l.b16 %v962
  %v3499 = vunpack.c.h.b16 %v962
  %v3500 = vunpack.c.l.b16 %v963
  %v3501 = vunpack.c.h.b16 %v963
  %v3502 = vunpack.c.l.b16 %v964
  %v3503 = vunpack.c.h.b16 %v964
  %v3504 = vunpack.c.l.b16 %v965
  %v3505 = vunpack.c.h.b16 %v965
  %v3506 = vunpack.c.l.b16 %v966
  %v3507 = vunpack.c.h.b16 %v966
  %v3508 = vunpack.c.l.b16 %v967
  %v3509 = vunpack.c.h.b16 %v967
  %v3510 = vunpack.c.l.b16 %v968
  %v3511 = vunpack.c.h.b16 %v968
  %v3512 = vunpack.c.l.b16 %v969
  %v3513 = vunpack.c.h.b16 %v969
  %v3514 = vunpack.c.l.b16 %v970
  %v3515 = vunpack.c.h.b16 %v970
  %v3516 = vunpack.c.l.b16 %v971
  %v3517 = vunpack.c.h.b16 %v971
  %v3518 = vunpack.c.l.b16 %v972
  %v3519 = vunpack.c.h.b16 %v972
  %v3520 = vunpack.c.l.b16 %v973
  %v3521 = vunpack.c.h.b16 %v973
  %v3522 = vunpack.c.l.b16 %v974
  %v3523 = vunpack.c.h.b16 %v974
  %v3524 = vunpack.c.l.b16 %v975
  %v3525 = vunpack.c.h.b16 %v975
  %v3526 = vunpack.c.l.b16 %v976
  %v3527 = vunpack.c.h.b16 %v976
  %v3528 = vunpack.c.l.b16 %v977
  %v3529 = vunpack.c.h.b16 %v977
  %v3530 = vunpack.c.l.b16 %v978
  %v3531 = vunpack.c.h.b16 %v978
  %v3532 = vunpack.c.l.b16 %v979
  %v3533 = vunpack.c.h.b16 %v979
  %v3534 = vunpack.c.l.b16 %v980
  %v3535 = vunpack.c.h.b16 %v980
  %v3536 = vunpack.c.l.b16 %v981
  %v3537 = vunpack.c.h.b16 %v981
  %v3538 = vunpack.c.l.b16 %v982
  %v3539 = vunpack.c.h.b16 %v982
  %v3540 = vunpack.c.l.b16 %v983
  %v3541 = vunpack.c.h.b16 %v983
  %v3542 = vunpack.c.l.b16 %v984
  %v3543 = vunpack.c.h.b16 %v984
  %v3544 = vunpack.c.l.b16 %v985
  %v3545 = vunpack.c.h.b16 %v985
  %v3546 = vunpack.c.l.b16 %v986
  %v3547 = vunpack.c.h.b16 %v986
  %v3548 = vunpack.c.l.b16 %v987
  %v3549 = vunpack.c.h.b16 %v987
  %v3550 = vunpack.c.l.b16 %v988
  %v3551 = vunpack.c.h.b16 %v988
  %v3552 = vunpack.c.l.b16 %v989
  %v3553 = vunpack.c.h.b16 %v989
  %v3554 = vunpack.c.l.b16 %v990
  %v3555 = vunpack.c.h.b16 %v990
  %v3556 = vunpack.c.l.b16 %v991
  %v3557 = vunpack.c.h.b16 %v991
  %v3558 = vunpack.c.l.b16 %v992
  %v3559 = vunpack.c.h.b16 %v992
  %v3560 = vunpack.c.l.b16 %v993
  %v3561 = vunpack.c.h.b16 %v993
  %v3562 = vunpack.c.l.b16 %v994
  %v3563 = vunpack.c.h.b16 %v994
  %v3564 = vunpack.c.l.b16 %v995
  %v3565 = vunpack.c.h.b16 %v995
  %v3566 = vunpack.c.l.b16 %v996
  %v3567 = vunpack.c.h.b16 %v996
  %v3568 = vunpack.c.l.b16 %v997
  %v3569 = vunpack.c.h.b16 %v997
  %v3570 = vunpack.c.l.b16 %v998
  %v3571 = vunpack.c.h.b16 %v998
  %v3572 = vunpack.c.l.b16 %v999
  %v3573 = vunpack.c.h.b16 %v999
  %v3574 = vunpack.c.l.b16 %v1000
  %v3575 = vunpack.c.h.b16 %v1000
  %v3576 = vunpack.c.l.b16 %v1001
  %v3577 = vunpack.c.h.b16 %v1001
  %v3578 = vunpack.c.l.b16 %v1002
  %v3579 = vunpack.c.h.b16 %v1002
  %v3580 = vunpack.c.l.b16 %v1003
  %v3581 = vunpack.c.h.b16 %v1003
  %v3582 = vunpack.c.l.b16 %v1004
  %v3583 = vunpack.c.h.b16 %v1004
  %v3584 = vunpack.c.l.b16 %v1005
  %v3585 = vunpack.c.h.b16 %v1005
  %v3586 = vunpack.c.l.b16 %v1006
  %v3587 = vunpack.c.h.b16 %v1006
  %v3588 = vunpack.c.l.b16 %v1007
  %v3589 = vunpack.c.h.b16 %v1007
  %v3590 = vunpack.c.l.b16 %v1008
  %v3591 = vunpack.c.h.b16 %v1008
  %v3592 = vunpack.c.l.b16 %v1009
  %v3593 = vunpack.c.h.b16 %v1009
  %v3594 = vunpack.c.l.b16 %v1010
  %v3595 = vunpack.c.h.b16 %v1010
  %v3596 = vunpack.c.l.b16 %v1011
  %v3597 = vunpack.c.h.b16 %v1011
  %v3598 = vunpack.c.l.b16 %v1012
  %v3599 = vunpack.c.h.b16 %v1012
  %v3600 = vunpack.c.l.b16 %v1013
  %v3601 = vunpack.c.h.b16 %v1013
  %v3602 = vunpack.c.l.b16 %v1014
  %v3603 = vunpack.c.h.b16 %v1014
  %v3604 = vunpack.c.l.b16 %v1015
  %v3605 = vunpack.c.h.b16 %v1015
  %v3606 = vunpack.c.l.b16 %v1016
  %v3607 = vunpack.c.h.b16 %v1016
  %v3608 = vunpack.c.l.b16 %v1017
  %v3609 = vunpack.c.h.b16 %v1017
  %v3610 = vunpack.c.l.b16 %v1018
  %v3611 = vunpack.c.h.b16 %v1018
  %v3612 = vunpack.c.l.b16 %v1019
  %v3613 = vunpack.c.h.b16 %v1019
  %v3614 = vunpack.c.l.b16 %v1020
  %v3615 = vunpack.c.h.b16 %v1020
  %v3616 = vunpack.c.l.b16 %v1021
  %v3617 = vunpack.c.h.b16 %v1021
  %v3618 = vunpack.c.l.b16 %v1022
  %v3619 = vunpack.c.h.b16 %v1022
  %v3620 = vunpack.c.l.b16 %v1023
  %v3621 = vunpack.c.h.b16 %v1023
  %v3622 = vunpack.c.l.b16 %v1024
  %v3623 = vunpack.c.h.b16 %v1024
  %v3624 = vunpack.c.l.b16 %v1025
  %v3625 = vunpack.c.h.b16 %v1025
  %v3626 = vunpack.c.l.b16 %v1026
  %v3627 = vunpack.c.h.b16 %v1026
  %v3628 = vunpack.c.l.b16 %v1027
  %v3629 = vunpack.c.h.b16 %v1027
  %v3630 = vunpack.c.l.b16 %v1028
  %v3631 = vunpack.c.h.b16 %v1028
  %v3632 = vunpack.c.l.b16 %v1029
  %v3633 = vunpack.c.h.b16 %v1029
  %v3634 = vunpack.c.l.b16 %v1030
  %v3635 = vunpack.c.h.b16 %v1030
  %v3636 = vunpack.c.l.b16 %v1031
  %v3637 = vunpack.c.h.b16 %v1031
  %v3638 = vunpack.c.l.b16 %v1032
  %v3639 = vunpack.c.h.b16 %v1032
  %v3640 = vunpack.c.l.b16 %v1033
  %v3641 = vunpack.c.h.b16 %v1033
  %v3642 = vunpack.c.l.b16 %v1034
  %v3643 = vunpack.c.h.b16 %v1034
  %v3644 = vunpack.c.l.b16 %v1035
  %v3645 = vunpack.c.h.b16 %v1035
  %v3646 = vunpack.c.l.b16 %v1036
  %v3647 = vunpack.c.h.b16 %v1036
  %v3648 = vunpack.c.l.b16 %v1037
  %v3649 = vunpack.c.h.b16 %v1037
  %v3650 = vunpack.c.l.b16 %v1038
  %v3651 = vunpack.c.h.b16 %v1038
  %v3652 = vunpack.c.l.b16 %v1039
  %v3653 = vunpack.c.h.b16 %v1039
  %v3654 = vunpack.c.l.b16 %v1040
  %v3655 = vunpack.c.h.b16 %v1040
  %v3656 = vunpack.c.l.b16 %v1041
  %v3657 = vunpack.c.h.b16 %v1041
  %v3658 = vunpack.c.l.b16 %v1042
  %v3659 = vunpack.c.h.b16 %v1042
  %v3660 = vunpack.c.l.b16 %v1043
  %v3661 = vunpack.c.h.b16 %v1043
  %v3662 = vunpack.c.l.b16 %v1044
  %v3663 = vunpack.c.h.b16 %v1044
  %v3664 = vunpack.c.l.b16 %v1045
  %v3665 = vunpack.c.h.b16 %v1045
  %v3666 = vunpack.c.l.b16 %v1046
  %v3667 = vunpack.c.h.b16 %v1046
  %v3668 = vunpack.c.l.b16 %v1047
  %v3669 = vunpack.c.h.b16 %v1047
  %v3670 = vunpack.c.l.b16 %v1048
  %v3671 = vunpack.c.h.b16 %v1048
  %v3672 = vunpack.c.l.b16 %v1049
  %v3673 = vunpack.c.h.b16 %v1049
  %v3674 = vunpack.c.l.b16 %v1050
  %v3675 = vunpack.c.h.b16 %v1050
  %v3676 = vunpack.c.l.b16 %v1051
  %v3677 = vunpack.c.h.b16 %v1051
  %v3678 = vunpack.c.l.b16 %v1052
  %v3679 = vunpack.c.h.b16 %v1052
  %v3680 = vunpack.c.l.b16 %v1053
  %v3681 = vunpack.c.h.b16 %v1053
  %v3682 = vunpack.c.l.b16 %v1054
  %v3683 = vunpack.c.h.b16 %v1054
  %v3684 = vunpack.c.l.b16 %v1055
  %v3685 = vunpack.c.h.b16 %v1055
  %v3686 = vunpack.c.l.b16 %v1056
  %v3687 = vunpack.c.h.b16 %v1056
  %v3688 = vunpack.c.l.b16 %v1057
  %v3689 = vunpack.c.h.b16 %v1057
  %v3690 = vunpack.c.l.b16 %v1058
  %v3691 = vunpack.c.h.b16 %v1058
  %v3692 = vunpack.c.l.b16 %v1059
  %v3693 = vunpack.c.h.b16 %v1059
  %v3694 = vunpack.c.l.b16 %v1060
  %v3695 = vunpack.c.h.b16 %v1060
  %v3696 = vunpack.c.l.b16 %v1061
  %v3697 = vunpack.c.h.b16 %v1061
  %v3698 = vunpack.c.l.b16 %v1062
  %v3699 = vunpack.c.h.b16 %v1062
  %v3700 = vunpack.c.l.b16 %v1063
  %v3701 = vunpack.c.h.b16 %v1063
  %v3702 = vunpack.c.l.b16 %v1064
  %v3703 = vunpack.c.h.b16 %v1064
  %v3704 = vunpack.c.l.b16 %v1065
  %v3705 = vunpack.c.h.b16 %v1065
  %v3706 = vunpack.c.l.b16 %v1066
  %v3707 = vunpack.c.h.b16 %v1066
  %v3708 = vunpack.c.l.b16 %v1067
  %v3709 = vunpack.c.h.b16 %v1067
  %v3710 = vunpack.c.l.b16 %v1068
  %v3711 = vunpack.c.h.b16 %v1068
  %v3712 = vunpack.c.l.b16 %v1069
  %v3713 = vunpack.c.h.b16 %v1069
  %v3714 = vunpack.c.l.b16 %v1070
  %v3715 = vunpack.c.h.b16 %v1070
  %v3716 = vunpack.c.l.b16 %v1071
  %v3717 = vunpack.c.h.b16 %v1071
  %v3718 = vunpack.c.l.b16 %v1072
  %v3719 = vunpack.c.h.b16 %v1072
  %v3720 = vunpack.c.l.b16 %v1073
  %v3721 = vunpack.c.h.b16 %v1073
  %v3722 = vunpack.c.l.b16 %v1074
  %v3723 = vunpack.c.h.b16 %v1074
  %v3724 = vunpack.c.l.b16 %v1075
  %v3725 = vunpack.c.h.b16 %v1075
  %v3726 = vunpack.c.l.b16 %v1076
  %v3727 = vunpack.c.h.b16 %v1076
  %v3728 = vunpack.c.l.b16 %v1077
  %v3729 = vunpack.c.h.b16 %v1077
  %v3730 = vunpack.c.l.b16 %v1078
  %v3731 = vunpack.c.h.b16 %v1078
  %v3732 = vunpack.c.l.b16 %v1079
  %v3733 = vunpack.c.h.b16 %v1079
  %v3734 = vunpack.c.l.b16 %v1080
  %v3735 = vunpack.c.h.b16 %v1080
  %v3736 = vunpack.c.l.b16 %v1081
  %v3737 = vunpack.c.h.b16 %v1081
  %v3738 = vunpack.c.l.b16 %v1082
  %v3739 = vunpack.c.h.b16 %v1082
  %v3740 = vunpack.c.l.b16 %v1083
  %v3741 = vunpack.c.h.b16 %v1083
  %v3742 = vunpack.c.l.b16 %v1084
  %v3743 = vunpack.c.h.b16 %v1084
  %v3744 = vunpack.c.l.b16 %v1085
  %v3745 = vunpack.c.h.b16 %v1085
  %v3746 = vunpack.c.l.b16 %v1086
  %v3747 = vunpack.c.h.b16 %v1086
  %v3748 = vunpack.c.l.b16 %v1087
  %v3749 = vunpack.c.h.b16 %v1087
  %v3750 = vunpack.c.l.b16 %v1088
  %v3751 = vunpack.c.h.b16 %v1088
  %v3752 = vunpack.c.l.b16 %v1089
  %v3753 = vunpack.c.h.b16 %v1089
  %v3754 = vunpack.c.l.b16 %v1090
  %v3755 = vunpack.c.h.b16 %v1090
  %v3756 = vunpack.c.l.b16 %v1091
  %v3757 = vunpack.c.h.b16 %v1091
  %v3758 = vunpack.c.l.b16 %v1092
  %v3759 = vunpack.c.h.b16 %v1092
  %v3760 = vunpack.c.l.b16 %v1093
  %v3761 = vunpack.c.h.b16 %v1093
  %v3762 = vunpack.c.l.b16 %v1094
  %v3763 = vunpack.c.h.b16 %v1094
  %v3764 = vunpack.c.l.b16 %v1095
  %v3765 = vunpack.c.h.b16 %v1095
  %v3766 = vunpack.c.l.b16 %v1096
  %v3767 = vunpack.c.h.b16 %v1096
  %v3768 = vunpack.c.l.b16 %v1097
  %v3769 = vunpack.c.h.b16 %v1097
  %v3770 = vunpack.c.l.b16 %v1098
  %v3771 = vunpack.c.h.b16 %v1098
  %v3772 = vunpack.c.l.b16 %v1099
  %v3773 = vunpack.c.h.b16 %v1099
  %v3774 = vunpack.c.l.b16 %v1100
  %v3775 = vunpack.c.h.b16 %v1100
  %v3776 = vunpack.c.l.b16 %v1101
  %v3777 = vunpack.c.h.b16 %v1101
  %v3778 = vunpack.c.l.b16 %v1102
  %v3779 = vunpack.c.h.b16 %v1102
  %v3780 = vunpack.c.l.b16 %v1103
  %v3781 = vunpack.c.h.b16 %v1103
  %v3782 = vunpack.c.l.b16 %v1104
  %v3783 = vunpack.c.h.b16 %v1104
  %v3784 = vunpack.c.l.b16 %v1105
  %v3785 = vunpack.c.h.b16 %v1105
  %v3786 = vunpack.c.l.b16 %v1106
  %v3787 = vunpack.c.h.b16 %v1106
  %v3788 = vunpack.c.l.b16 %v1107
  %v3789 = vunpack.c.h.b16 %v1107
  %v3790 = vunpack.c.l.b16 %v1108
  %v3791 = vunpack.c.h.b16 %v1108
  %v3792 = vunpack.c.l.b16 %v1109
  %v3793 = vunpack.c.h.b16 %v1109
  %v3794 = vunpack.c.l.b16 %v1110
  %v3795 = vunpack.c.h.b16 %v1110
  %v3796 = vunpack.c.l.b16 %v1111
  %v3797 = vunpack.c.h.b16 %v1111
  %v3798 = vunpack.c.l.b16 %v1112
  %v3799 = vunpack.c.h.b16 %v1112
  %v3800 = vunpack.c.l.b16 %v1113
  %v3801 = vunpack.c.h.b16 %v1113
  %v3802 = vunpack.c.l.b16 %v1114
  %v3803 = vunpack.c.h.b16 %v1114
  %v3804 = vunpack.c.l.b16 %v1115
  %v3805 = vunpack.c.h.b16 %v1115
  %v3806 = vunpack.c.l.b16 %v1116
  %v3807 = vunpack.c.h.b16 %v1116
  %v3808 = vunpack.c.l.b16 %v1117
  %v3809 = vunpack.c.h.b16 %v1117
  %v3810 = vunpack.c.l.b16 %v1118
  %v3811 = vunpack.c.h.b16 %v1118
  %v3812 = vunpack.c.l.b16 %v1119
  %v3813 = vunpack.c.h.b16 %v1119
  %v3814 = vunpack.c.l.b16 %v1120
  %v3815 = vunpack.c.h.b16 %v1120
  %v3816 = vunpack.c.l.b16 %v1121
  %v3817 = vunpack.c.h.b16 %v1121
  %v3818 = vunpack.c.l.b16 %v1122
  %v3819 = vunpack.c.h.b16 %v1122
  %v3820 = vunpack.c.l.b16 %v1123
  %v3821 = vunpack.c.h.b16 %v1123
  %v3822 = vunpack.c.l.b16 %v1124
  %v3823 = vunpack.c.h.b16 %v1124
  %v3824 = vunpack.c.l.b16 %v1125
  %v3825 = vunpack.c.h.b16 %v1125
  %v3826 = vunpack.c.l.b16 %v1126
  %v3827 = vunpack.c.h.b16 %v1126
  %v3828 = vunpack.c.l.b16 %v1127
  %v3829 = vunpack.c.h.b16 %v1127
  %v3830 = vunpack.c.l.b16 %v1128
  %v3831 = vunpack.c.h.b16 %v1128
  %v3832 = vunpack.c.l.b16 %v1129
  %v3833 = vunpack.c.h.b16 %v1129
  %v3834 = vunpack.c.l.b16 %v1130
  %v3835 = vunpack.c.h.b16 %v1130
  %v3836 = vunpack.c.l.b16 %v1131
  %v3837 = vunpack.c.h.b16 %v1131
  %v3838 = vunpack.c.l.b16 %v1132
  %v3839 = vunpack.c.h.b16 %v1132
  %v3840 = vunpack.c.l.b16 %v1133
  %v3841 = vunpack.c.h.b16 %v1133
  %v3842 = vunpack.c.l.b16 %v1134
  %v3843 = vunpack.c.h.b16 %v1134
  %v3844 = vunpack.c.l.b16 %v1135
  %v3845 = vunpack.c.h.b16 %v1135
  %v3846 = vunpack.c.l.b16 %v1136
  %v3847 = vunpack.c.h.b16 %v1136
  %v3848 = vunpack.c.l.b16 %v1137
  %v3849 = vunpack.c.h.b16 %v1137
  %v3850 = vunpack.c.l.b16 %v1138
  %v3851 = vunpack.c.h.b16 %v1138
  %v3852 = vunpack.c.l.b16 %v1139
  %v3853 = vunpack.c.h.b16 %v1139
  %v3854 = vunpack.c.l.b16 %v1140
  %v3855 = vunpack.c.h.b16 %v1140
  %v3856 = vunpack.c.l.b16 %v1141
  %v3857 = vunpack.c.h.b16 %v1141
  %v3858 = vunpack.c.l.b16 %v1142
  %v3859 = vunpack.c.h.b16 %v1142
  %v3860 = vunpack.c.l.b16 %v1143
  %v3861 = vunpack.c.h.b16 %v1143
  %v3862 = vunpack.c.l.b16 %v1144
  %v3863 = vunpack.c.h.b16 %v1144
  %v3864 = vunpack.c.l.b16 %v1145
  %v3865 = vunpack.c.h.b16 %v1145
  %v3866 = vunpack.c.l.b16 %v1146
  %v3867 = vunpack.c.h.b16 %v1146
  %v3868 = vunpack.c.l.b16 %v1147
  %v3869 = vunpack.c.h.b16 %v1147
  %v3870 = vunpack.c.l.b16 %v1148
  %v3871 = vunpack.c.h.b16 %v1148
  %v3872 = vunpack.c.l.b16 %v1149
  %v3873 = vunpack.c.h.b16 %v1149
  %v3874 = vunpack.c.l.b16 %v1150
  %v3875 = vunpack.c.h.b16 %v1150
  %v3876 = vunpack.c.l.b16 %v1151
  %v3877 = vunpack.c.h.b16 %v1151
  %v3878 = vunpack.c.l.b16 %v1152
  %v3879 = vunpack.c.h.b16 %v1152
  %v3880 = vunpack.c.l.b16 %v1153
  %v3881 = vunpack.c.h.b16 %v1153
  %v3882 = vunpack.c.l.b16 %v1154
  %v3883 = vunpack.c.h.b16 %v1154
  %v3884 = vunpack.c.l.b16 %v1155
  %v3885 = vunpack.c.h.b16 %v1155
  %v3886 = vunpack.c.l.b16 %v1156
  %v3887 = vunpack.c.h.b16 %v1156
  %v3888 = vunpack.c.l.b16 %v1157
  %v3889 = vunpack.c.h.b16 %v1157
  %v3890 = vunpack.c.l.b16 %v1158
  %v3891 = vunpack.c.h.b16 %v1158
  %v3892 = vunpack.c.l.b16 %v1159
  %v3893 = vunpack.c.h.b16 %v1159
  %v3894 = vunpack.c.l.b16 %v1160
  %v3895 = vunpack.c.h.b16 %v1160
  %v3896 = vunpack.c.l.b16 %v1161
  %v3897 = vunpack.c.h.b16 %v1161
  %v3898 = vunpack.c.l.b16 %v1162
  %v3899 = vunpack.c.h.b16 %v1162
  %v3900 = vunpack.c.l.b16 %v1163
  %v3901 = vunpack.c.h.b16 %v1163
  %v3902 = vunpack.c.l.b16 %v1164
  %v3903 = vunpack.c.h.b16 %v1164
  %v3904 = vunpack.c.l.b16 %v1165
  %v3905 = vunpack.c.h.b16 %v1165
  %v3906 = vunpack.c.l.b16 %v1166
  %v3907 = vunpack.c.h.b16 %v1166
  %v3908 = vunpack.c.l.b16 %v1167
  %v3909 = vunpack.c.h.b16 %v1167
  %v3910 = vunpack.c.l.b16 %v1168
  %v3911 = vunpack.c.h.b16 %v1168
  %v3912 = vunpack.c.l.b16 %v1169
  %v3913 = vunpack.c.h.b16 %v1169
  %v3914 = vunpack.c.l.b16 %v1170
  %v3915 = vunpack.c.h.b16 %v1170
  %v3916 = vunpack.c.l.b16 %v1171
  %v3917 = vunpack.c.h.b16 %v1171
  %v3918 = vunpack.c.l.b16 %v1172
  %v3919 = vunpack.c.h.b16 %v1172
  %v3920 = vunpack.c.l.b16 %v1173
  %v3921 = vunpack.c.h.b16 %v1173
  %v3922 = vunpack.c.l.b16 %v1174
  %v3923 = vunpack.c.h.b16 %v1174
  %v3924 = vunpack.c.l.b16 %v1175
  %v3925 = vunpack.c.h.b16 %v1175
  %v3926 = vunpack.c.l.b16 %v1176
  %v3927 = vunpack.c.h.b16 %v1176
  %v3928 = vunpack.c.l.b16 %v1177
  %v3929 = vunpack.c.h.b16 %v1177
  %v3930 = vunpack.c.l.b16 %v1178
  %v3931 = vunpack.c.h.b16 %v1178
  %v3932 = vunpack.c.l.b16 %v1179
  %v3933 = vunpack.c.h.b16 %v1179
  %v3934 = vunpack.c.l.b16 %v1180
  %v3935 = vunpack.c.h.b16 %v1180
  %v3936 = vunpack.c.l.b16 %v1181
  %v3937 = vunpack.c.h.b16 %v1181
  %v3938 = vunpack.c.l.b16 %v1182
  %v3939 = vunpack.c.h.b16 %v1182
  %v3940 = vunpack.c.l.b16 %v1183
  %v3941 = vunpack.c.h.b16 %v1183
  %v3942 = vunpack.c.l.b16 %v1184
  %v3943 = vunpack.c.h.b16 %v1184
  %v3944 = vunpack.c.l.b16 %v1185
  %v3945 = vunpack.c.h.b16 %v1185
  %v3946 = vunpack.c.l.b16 %v1186
  %v3947 = vunpack.c.h.b16 %v1186
  %v3948 = vunpack.c.l.b16 %v1187
  %v3949 = vunpack.c.h.b16 %v1187
  %v3950 = vunpack.c.l.b16 %v1188
  %v3951 = vunpack.c.h.b16 %v1188
  %v3952 = vunpack.c.l.b16 %v1189
  %v3953 = vunpack.c.h.b16 %v1189
  %v3954 = vunpack.c.l.b16 %v1190
  %v3955 = vunpack.c.h.b16 %v1190
  %v3956 = vunpack.c.l.b16 %v1191
  %v3957 = vunpack.c.h.b16 %v1191
  %v3958 = vunpack.c.l.b16 %v1192
  %v3959 = vunpack.c.h.b16 %v1192
  %v3960 = vunpack.c.l.b16 %v1193
  %v3961 = vunpack.c.h.b16 %v1193
  %v3962 = vunpack.c.l.b16 %v1194
  %v3963 = vunpack.c.h.b16 %v1194
  %v3964 = vunpack.c.l.b16 %v1195
  %v3965 = vunpack.c.h.b16 %v1195
  %v3966 = vunpack.c.l.b16 %v1196
  %v3967 = vunpack.c.h.b16 %v1196
  %v3968 = vunpack.c.l.b16 %v1197
  %v3969 = vunpack.c.h.b16 %v1197
  %v3970 = vunpack.c.l.b16 %v1198
  %v3971 = vunpack.c.h.b16 %v1198
  %v3972 = vunpack.c.l.b16 %v1199
  %v3973 = vunpack.c.h.b16 %v1199
  %v3974 = vunpack.c.l.b16 %v1200
  %v3975 = vunpack.c.h.b16 %v1200
  %v3976 = vunpack.c.l.b16 %v1201
  %v3977 = vunpack.c.h.b16 %v1201
  %v3978 = vunpack.c.l.b16 %v1202
  %v3979 = vunpack.c.h.b16 %v1202
  %v3980 = vunpack.c.l.b16 %v1203
  %v3981 = vunpack.c.h.b16 %v1203
  %v3982 = vunpack.c.l.b16 %v1204
  %v3983 = vunpack.c.h.b16 %v1204
  %v3984 = vunpack.c.l.b16 %v1205
  %v3985 = vunpack.c.h.b16 %v1205
  %v3986 = vunpack.c.l.b16 %v1206
  %v3987 = vunpack.c.h.b16 %v1206
  %v3988 = vunpack.c.l.b16 %v1207
  %v3989 = vunpack.c.h.b16 %v1207
  %v3990 = vunpack.c.l.b16 %v1208
  %v3991 = vunpack.c.h.b16 %v1208
  %v3992 = vunpack.c.l.b16 %v1209
  %v3993 = vunpack.c.h.b16 %v1209
  %v3994 = vunpack.c.l.b16 %v1210
  %v3995 = vunpack.c.h.b16 %v1210
  %v3996 = vunpack.c.l.b16 %v1211
  %v3997 = vunpack.c.h.b16 %v1211
  %v3998 = vunpack.c.l.b16 %v1212
  %v3999 = vunpack.c.h.b16 %v1212
  %v4000 = vunpack.c.l.b16 %v1213
  %v4001 = vunpack.c.h.b16 %v1213
  %v4002 = vunpack.c.l.b16 %v1214
  %v4003 = vunpack.c.h.b16 %v1214
  %v4004 = vunpack.c.l.b16 %v1215
  %v4005 = vunpack.c.h.b16 %v1215
  %v4006 = vunpack.c.l.b16 %v1216
  %v4007 = vunpack.c.h.b16 %v1216
  %v4008 = vunpack.c.l.b16 %v1217
  %v4009 = vunpack.c.h.b16 %v1217
  %v4010 = vunpack.c.l.b16 %v1218
  %v4011 = vunpack.c.h.b16 %v1218
  %v4012 = vunpack.c.l.b16 %v1219
  %v4013 = vunpack.c.h.b16 %v1219
  %v4014 = vunpack.c.l.b16 %v1220
  %v4015 = vunpack.c.h.b16 %v1220
  %v4016 = vunpack.c.l.b16 %v1221
  %v4017 = vunpack.c.h.b16 %v1221
  %v4018 = vunpack.c.l.b16 %v1222
  %v4019 = vunpack.c.h.b16 %v1222
  %v4020 = vunpack.c.l.b16 %v1223
  %v4021 = vunpack.c.h.b16 %v1223
  %v4022 = vunpack.c.l.b16 %v1224
  %v4023 = vunpack.c.h.b16 %v1224
  %v4024 = vunpack.c.l.b16 %v1225
  %v4025 = vunpack.c.h.b16 %v1225
  %v4026 = vunpack.c.l.b16 %v1226
  %v4027 = vunpack.c.h.b16 %v1226
  %v4028 = vunpack.c.l.b16 %v1227
  %v4029 = vunpack.c.h.b16 %v1227
  %v4030 = vunpack.c.l.b16 %v1228
  %v4031 = vunpack.c.h.b16 %v1228
  %v4032 = vunpack.c.l.b16 %v1229
  %v4033 = vunpack.c.h.b16 %v1229
  %v4034 = vunpack.c.l.b16 %v1230
  %v4035 = vunpack.c.h.b16 %v1230
  %v4036 = vunpack.c.l.b16 %v1231
  %v4037 = vunpack.c.h.b16 %v1231
  %v4038 = vunpack.c.l.b16 %v1232
  %v4039 = vunpack.c.h.b16 %v1232
  %v4040 = vunpack.c.l.b16 %v1233
  %v4041 = vunpack.c.h.b16 %v1233
  %v4042 = vunpack.c.l.b16 %v1234
  %v4043 = vunpack.c.h.b16 %v1234
  %v4044 = vunpack.c.l.b16 %v1235
  %v4045 = vunpack.c.h.b16 %v1235
  %v4046 = vunpack.c.l.b16 %v1236
  %v4047 = vunpack.c.h.b16 %v1236
  %v4048 = vunpack.c.l.b16 %v1237
  %v4049 = vunpack.c.h.b16 %v1237
  %v4050 = vunpack.c.l.b16 %v1238
  %v4051 = vunpack.c.h.b16 %v1238
  %v4052 = vunpack.c.l.b16 %v1239
  %v4053 = vunpack.c.h.b16 %v1239
  %v4054 = vunpack.c.l.b16 %v1240
  %v4055 = vunpack.c.h.b16 %v1240
  %v4056 = vunpack.c.l.b16 %v1241
  %v4057 = vunpack.c.h.b16 %v1241
  %v4058 = vunpack.c.l.b16 %v1242
  %v4059 = vunpack.c.h.b16 %v1242
  %v4060 = vunpack.c.l.b16 %v1243
  %v4061 = vunpack.c.h.b16 %v1243
  %v4062 = vunpack.c.l.b16 %v1244
  %v4063 = vunpack.c.h.b16 %v1244
  %v4064 = vunpack.c.l.b16 %v1245
  %v4065 = vunpack.c.h.b16 %v1245
  %v4066 = vunpack.c.l.b16 %v1246
  %v4067 = vunpack.c.h.b16 %v1246
  %v4068 = vunpack.c.l.b16 %v1247
  %v4069 = vunpack.c.h.b16 %v1247
  %v4070 = vunpack.c.l.b16 %v1248
  %v4071 = vunpack.c.h.b16 %v1248
  %v4072 = vunpack.c.l.b16 %v1249
  %v4073 = vunpack.c.h.b16 %v1249
  %v4074 = vunpack.c.l.b16 %v1250
  %v4075 = vunpack.c.h.b16 %v1250
  %v4076 = vunpack.c.l.b16 %v1251
  %v4077 = vunpack.c.h.b16 %v1251
  %v4078 = vunpack.c.l.b16 %v1252
  %v4079 = vunpack.c.h.b16 %v1252
  %v4080 = vunpack.c.l.b16 %v1253
  %v4081 = vunpack.c.h.b16 %v1253
  %v4082 = vunpack.c.l.b16 %v1254
  %v4083 = vunpack.c.h.b16 %v1254
  %v4084 = vunpack.c.l.b16 %v1255
  %v4085 = vunpack.c.h.b16 %v1255
  %v4086 = vunpack.c.l.b16 %v1256
  %v4087 = vunpack.c.h.b16 %v1256
  %v4088 = vunpack.c.l.b16 %v1257
  %v4089 = vunpack.c.h.b16 %v1257
  %v4090 = vunpack.c.l.b16 %v1258
  %v4091 = vunpack.c.h.b16 %v1258
  %v4092 = vunpack.c.l.b16 %v1259
  %v4093 = vunpack.c.h.b16 %v1259
  %v4094 = vunpack.c.l.b16 %v1260
  %v4095 = vunpack.c.h.b16 %v1260
  %v4096 = vunpack.c.l.b16 %v1261
  %v4097 = vunpack.c.h.b16 %v1261
  %v4098 = vunpack.c.l.b16 %v1262
  %v4099 = vunpack.c.h.b16 %v1262
  %v4100 = vunpack.c.l.b16 %v1263
  %v4101 = vunpack.c.h.b16 %v1263
  %v4102 = vunpack.c.l.b16 %v1264
  %v4103 = vunpack.c.h.b16 %v1264
  %v4104 = vunpack.c.l.b16 %v1265
  %v4105 = vunpack.c.h.b16 %v1265
  %v4106 = vunpack.c.l.b16 %v1266
  %v4107 = vunpack.c.h.b16 %v1266
  %v4108 = vunpack.c.l.b16 %v1267
  %v4109 = vunpack.c.h.b16 %v1267
  %v4110 = vunpack.c.l.b16 %v1268
  %v4111 = vunpack.c.h.b16 %v1268
  %v4112 = vunpack.c.l.b16 %v1269
  %v4113 = vunpack.c.h.b16 %v1269
  %v4114 = vunpack.c.l.b16 %v1270
  %v4115 = vunpack.c.h.b16 %v1270
  %v4116 = vunpack.c.l.b16 %v1271
  %v4117 = vunpack.c.h.b16 %v1271
  %v4118 = vunpack.c.l.b16 %v1272
  %v4119 = vunpack.c.h.b16 %v1272
  %v4120 = vunpack.c.l.b16 %v1273
  %v4121 = vunpack.c.h.b16 %v1273
  %v4122 = vunpack.c.l.b16 %v1274
  %v4123 = vunpack.c.h.b16 %v1274
  %v4124 = vunpack.c.l.b16 %v1275
  %v4125 = vunpack.c.h.b16 %v1275
  %v4126 = vunpack.c.l.b16 %v1276
  %v4127 = vunpack.c.h.b16 %v1276
  %v4128 = vunpack.c.l.b16 %v1277
  %v4129 = vunpack.c.h.b16 %v1277
  %v4130 = vunpack.c.l.b16 %v1278
  %v4131 = vunpack.c.h.b16 %v1278
  %v4132 = vunpack.c.l.b16 %v1279
  %v4133 = vunpack.c.h.b16 %v1279
  %v4134 = vunpack.c.l.b16 %v1280
  %v4135 = vunpack.c.h.b16 %v1280
  %v4136 = vunpack.c.l.b16 %v1281
  %v4137 = vunpack.c.h.b16 %v1281
  %v4138 = vunpack.c.l.b16 %v1282
  %v4139 = vunpack.c.h.b16 %v1282
  %v4140 = vunpack.c.l.b16 %v1283
  %v4141 = vunpack.c.h.b16 %v1283
  %v4142 = vunpack.c.l.b16 %v1284
  %v4143 = vunpack.c.h.b16 %v1284
  %v4144 = vunpack.c.l.b16 %v1285
  %v4145 = vunpack.c.h.b16 %v1285
  %v4146 = vunpack.c.l.b16 %v1286
  %v4147 = vunpack.c.h.b16 %v1286
  %v4148 = vunpack.c.l.b16 %v1287
  %v4149 = vunpack.c.h.b16 %v1287
  %v4150 = vunpack.c.l.b16 %v1288
  %v4151 = vunpack.c.h.b16 %v1288
  %v4152 = vunpack.c.l.b16 %v1289
  %v4153 = vunpack.c.h.b16 %v1289
  %v4154 = vunpack.c.l.b16 %v1290
  %v4155 = vunpack.c.h.b16 %v1290
  %v4156 = vunpack.c.l.b16 %v1291
  %v4157 = vunpack.c.h.b16 %v1291
  %v4158 = vunpack.c.l.b16 %v1292
  %v4159 = vunpack.c.h.b16 %v1292
  %v4160 = vunpack.c.l.b16 %v1293
  %v4161 = vunpack.c.h.b16 %v1293
  %v4162 = vunpack.c.l.b16 %v1294
  %v4163 = vunpack.c.h.b16 %v1294
  %v4164 = vunpack.c.l.b16 %v1295
  %v4165 = vunpack.c.h.b16 %v1295
  %v4166 = vunpack.c.l.b16 %v1296
  %v4167 = vunpack.c.h.b16 %v1296
  %v4168 = vunpack.c.l.b16 %v1297
  %v4169 = vunpack.c.h.b16 %v1297
  %v4170 = vunpack.c.l.b16 %v1298
  %v4171 = vunpack.c.h.b16 %v1298
  %v4172 = vunpack.c.l.b16 %v1299
  %v4173 = vunpack.c.h.b16 %v1299
  %v4174 = vunpack.c.l.b16 %v1300
  %v4175 = vunpack.c.h.b16 %v1300
  %v4176 = vunpack.c.l.b16 %v1301
  %v4177 = vunpack.c.h.b16 %v1301
  %v4178 = vunpack.c.l.b16 %v1302
  %v4179 = vunpack.c.h.b16 %v1302
  %v4180 = vunpack.c.l.b16 %v1303
  %v4181 = vunpack.c.h.b16 %v1303
  %v4182 = vunpack.c.l.b16 %v1304
  %v4183 = vunpack.c.h.b16 %v1304
  %v4184 = vunpack.c.l.b16 %v1305
  %v4185 = vunpack.c.h.b16 %v1305
  %v4186 = vunpack.c.l.b16 %v1306
  %v4187 = vunpack.c.h.b16 %v1306
  %v4188 = vunpack.c.l.b16 %v1307
  %v4189 = vunpack.c.h.b16 %v1307
  %v4190 = vunpack.c.l.b16 %v1308
  %v4191 = vunpack.c.h.b16 %v1308
  %v4192 = vunpack.c.l.b16 %v1309
  %v4193 = vunpack.c.h.b16 %v1309
  %v4194 = vunpack.c.l.b16 %v1310
  %v4195 = vunpack.c.h.b16 %v1310
  %v4196 = vunpack.c.l.b16 %v1311
  %v4197 = vunpack.c.h.b16 %v1311
  %v4198 = vunpack.c.l.b16 %v1312
  %v4199 = vunpack.c.h.b16 %v1312
  %v4200 = vunpack.c.l.b16 %v1313
  %v4201 = vunpack.c.h.b16 %v1313
  %v4202 = vunpack.c.l.b16 %v1314
  %v4203 = vunpack.c.h.b16 %v1314
  %v4204 = vunpack.c.l.b16 %v1315
  %v4205 = vunpack.c.h.b16 %v1315
  %v4206 = vunpack.c.l.b16 %v1316
  %v4207 = vunpack.c.h.b16 %v1316
  %v4208 = vunpack.c.l.b16 %v1317
  %v4209 = vunpack.c.h.b16 %v1317
  %v4210 = vunpack.c.l.b16 %v1318
  %v4211 = vunpack.c.h.b16 %v1318
  %v4212 = vunpack.c.l.b16 %v1319
  %v4213 = vunpack.c.h.b16 %v1319
  %v4214 = vunpack.c.l.b16 %v1320
  %v4215 = vunpack.c.h.b16 %v1320
  %v4216 = vunpack.c.l.b16 %v1321
  %v4217 = vunpack.c.h.b16 %v1321
  %v4218 = vunpack.c.l.b16 %v1322
  %v4219 = vunpack.c.h.b16 %v1322
  %v4220 = vunpack.c.l.b16 %v1323
  %v4221 = vunpack.c.h.b16 %v1323
  %v4222 = vunpack.c.l.b16 %v1324
  %v4223 = vunpack.c.h.b16 %v1324
  %v4224 = vunpack.c.l.b16 %v1325
  %v4225 = vunpack.c.h.b16 %v1325
  %v4226 = vunpack.c.l.b16 %v1326
  %v4227 = vunpack.c.h.b16 %v1326
  %v4228 = vunpack.c.l.b16 %v1327
  %v4229 = vunpack.c.h.b16 %v1327
  %v4230 = vunpack.c.l.b16 %v1328
  %v4231 = vunpack.c.h.b16 %v1328
  %v4232 = vunpack.c.l.b16 %v1329
  %v4233 = vunpack.c.h.b16 %v1329
  %v4234 = vunpack.c.l.b16 %v1330
  %v4235 = vunpack.c.h.b16 %v1330
  %v4236 = vunpack.c.l.b16 %v1331
  %v4237 = vunpack.c.h.b16 %v1331
  %v4238 = vunpack.c.l.b16 %v1332
  %v4239 = vunpack.c.h.b16 %v1332
  %v4240 = vunpack.c.l.b16 %v1333
  %v4241 = vunpack.c.h.b16 %v1333
  %v4242 = vunpack.c.l.b16 %v1334
  %v4243 = vunpack.c.h.b16 %v1334
  %v4244 = vunpack.c.l.b16 %v1335
  %v4245 = vunpack.c.h.b16 %v1335
  %v4246 = vunpack.c.l.b16 %v1336
  %v4247 = vunpack.c.h.b16 %v1336
  %v4248 = vunpack.c.l.b16 %v1337
  %v4249 = vunpack.c.h.b16 %v1337
  %v4250 = vunpack.c.l.b16 %v1338
  %v4251 = vunpack.c.h.b16 %v1338
  %v4252 = vunpack.c.l.b16 %v1339
  %v4253 = vunpack.c.h.b16 %v1339
  %v4254 = vunpack.c.l.b16 %v1340
  %v4255 = vunpack.c.h.b16 %v1340
  %v4256 = vunpack.c.l.b16 %v1341
  %v4257 = vunpack.c.h.b16 %v1341
  %v4258 = vunpack.c.l.b16 %v1342
  %v4259 = vunpack.c.h.b16 %v1342
  %v4260 = vunpack.c.l.b16 %v1343
  %v4261 = vunpack.c.h.b16 %v1343
  %v4262 = vunpack.c.l.b16 %v1344
  %v4263 = vunpack.c.h.b16 %v1344
  %v4264 = vunpack.c.l.b16 %v1345
  %v4265 = vunpack.c.h.b16 %v1345
  %v4266 = vunpack.c.l.b16 %v1346
  %v4267 = vunpack.c.h.b16 %v1346
  %v4268 = vunpack.c.l.b16 %v1347
  %v4269 = vunpack.c.h.b16 %v1347
  %v4270 = vunpack.c.l.b16 %v1348
  %v4271 = vunpack.c.h.b16 %v1348
  %v4272 = vunpack.c.l.b16 %v1349
  %v4273 = vunpack.c.h.b16 %v1349
  %v4274 = vunpack.c.l.b16 %v1350
  %v4275 = vunpack.c.h.b16 %v1350
  %v4276 = vunpack.c.l.b16 %v1351
  %v4277 = vunpack.c.h.b16 %v1351
  %v4278 = vunpack.c.l.b16 %v1352
  %v4279 = vunpack.c.h.b16 %v1352
  %v4280 = vunpack.c.l.b16 %v1353
  %v4281 = vunpack.c.h.b16 %v1353
  %v4282 = vunpack.c.l.b16 %v1354
  %v4283 = vunpack.c.h.b16 %v1354
  %v4284 = vunpack.c.l.b16 %v1355
  %v4285 = vunpack.c.h.b16 %v1355
  %v4286 = vunpack.c.l.b16 %v1356
  %v4287 = vunpack.c.h.b16 %v1356
  %v4288 = vunpack.c.l.b16 %v1357
  %v4289 = vunpack.c.h.b16 %v1357
  %v4290 = vunpack.c.l.b16 %v1358
  %v4291 = vunpack.c.h.b16 %v1358
  %v4292 = vunpack.c.l.b16 %v1359
  %v4293 = vunpack.c.h.b16 %v1359
  %v4294 = vunpack.c.l.b16 %v1360
  %v4295 = vunpack.c.h.b16 %v1360
  %v4296 = vunpack.c.l.b16 %v1361
  %v4297 = vunpack.c.h.b16 %v1361
  %v4298 = vunpack.c.l.b16 %v1362
  %v4299 = vunpack.c.h.b16 %v1362
  %v4300 = vunpack.c.l.b16 %v1363
  %v4301 = vunpack.c.h.b16 %v1363
  %v4302 = vunpack.c.l.b16 %v1364
  %v4303 = vunpack.c.h.b16 %v1364
  %v4304 = vunpack.c.l.b16 %v1365
  %v4305 = vunpack.c.h.b16 %v1365
  %v4306 = vunpack.c.l.b16 %v1366
  %v4307 = vunpack.c.h.b16 %v1366
  %v4308 = vunpack.c.l.b16 %v1367
  %v4309 = vunpack.c.h.b16 %v1367
  %v4310 = vunpack.c.l.b16 %v1368
  %v4311 = vunpack.c.h.b16 %v1368
  %v4312 = vunpack.c.l.b16 %v1369
  %v4313 = vunpack.c.h.b16 %v1369
  %v4314 = vunpack.c.l.b16 %v1370
  %v4315 = vunpack.c.h.b16 %v1370
  %v4316 = vunpack.c.l.b16 %v1371
  %v4317 = vunpack.c.h.b16 %v1371
  %v4318 = vunpack.c.l.b16 %v1372
  %v4319 = vunpack.c.h.b16 %v1372
  %v4320 = vunpack.c.l.b16 %v1373
  %v4321 = vunpack.c.h.b16 %v1373
  %v4322 = vunpack.c.l.b16 %v1374
  %v4323 = vunpack.c.h.b16 %v1374
  %v4324 = vunpack.c.l.b16 %v1375
  %v4325 = vunpack.c.h.b16 %v1375
  %v4326 = vunpack.c.l.b16 %v1376
  %v4327 = vunpack.c.h.b16 %v1376
  %v4328 = vunpack.c.l.b16 %v1377
  %v4329 = vunpack.c.h.b16 %v1377
  %v4330 = vunpack.c.l.b16 %v1378
  %v4331 = vunpack.c.h.b16 %v1378
  %v4332 = vunpack.c.l.b16 %v1379
  %v4333 = vunpack.c.h.b16 %v1379
  %v4334 = vunpack.c.l.b16 %v1380
  %v4335 = vunpack.c.h.b16 %v1380
  %v4336 = vunpack.c.l.b16 %v1381
  %v4337 = vunpack.c.h.b16 %v1381
  %v4338 = vunpack.c.l.b16 %v1382
  %v4339 = vunpack.c.h.b16 %v1382
  %v4340 = vunpack.c.l.b16 %v1383
  %v4341 = vunpack.c.h.b16 %v1383
  %v4342 = vunpack.c.l.b16 %v1384
  %v4343 = vunpack.c.h.b16 %v1384
  %v4344 = vunpack.c.l.b16 %v1385
  %v4345 = vunpack.c.h.b16 %v1385
  %v4346 = vunpack.c.l.b16 %v1386
  %v4347 = vunpack.c.h.b16 %v1386
  %v4348 = vunpack.c.l.b16 %v1387
  %v4349 = vunpack.c.h.b16 %v1387
  %v4350 = vunpack.c.l.b16 %v1388
  %v4351 = vunpack.c.h.b16 %v1388
  %v4352 = vunpack.c.l.b16 %v1389
  %v4353 = vunpack.c.h.b16 %v1389
  %v4354 = vunpack.c.l.b16 %v1390
  %v4355 = vunpack.c.h.b16 %v1390
  %v4356 = vunpack.c.l.b16 %v1391
  %v4357 = vunpack.c.h.b16 %v1391
  %v4358 = vunpack.c.l.b16 %v1392
  %v4359 = vunpack.c.h.b16 %v1392
  %v4360 = vunpack.c.l.b16 %v1393
  %v4361 = vunpack.c.h.b16 %v1393
  %v4362 = vunpack.c.l.b16 %v1394
  %v4363 = vunpack.c.h.b16 %v1394
  %v4364 = vunpack.c.l.b16 %v1395
  %v4365 = vunpack.c.h.b16 %v1395
  %v4366 = vunpack.c.l.b16 %v1396
  %v4367 = vunpack.c.h.b16 %v1396
  %v4368 = vunpack.c.l.b16 %v1397
  %v4369 = vunpack.c.h.b16 %v1397
  %v4370 = vunpack.c.l.b16 %v1398
  %v4371 = vunpack.c.h.b16 %v1398
  %v4372 = vunpack.c.l.b16 %v1399
  %v4373 = vunpack.c.h.b16 %v1399
  %v4374 = vunpack.c.l.b16 %v1400
  %v4375 = vunpack.c.h.b16 %v1400
  %v4376 = vunpack.c.l.b16 %v1401
  %v4377 = vunpack.c.h.b16 %v1401
  %v4378 = vunpack.c.l.b16 %v1402
  %v4379 = vunpack.c.h.b16 %v1402
  %v4380 = vunpack.c.l.b16 %v1403
  %v4381 = vunpack.c.h.b16 %v1403
  %v4382 = vunpack.c.l.b16 %v1404
  %v4383 = vunpack.c.h.b16 %v1404
  %v4384 = vunpack.c.l.b16 %v1405
  %v4385 = vunpack.c.h.b16 %v1405
  %v4386 = vunpack.c.l.b16 %v1406
  %v4387 = vunpack.c.h.b16 %v1406
  %v4388 = vunpack.c.l.b16 %v1407
  %v4389 = vunpack.c.h.b16 %v1407
  %v4390 = vunpack.c.l.b16 %v1408
  %v4391 = vunpack.c.h.b16 %v1408
  %v4392 = vunpack.c.l.b16 %v1409
  %v4393 = vunpack.c.h.b16 %v1409
  %v4394 = vunpack.c.l.b16 %v1410
  %v4395 = vunpack.c.h.b16 %v1410
  %v4396 = vunpack.c.l.b16 %v1411
  %v4397 = vunpack.c.h.b16 %v1411
  %v4398 = vunpack.c.l.b16 %v1412
  %v4399 = vunpack.c.h.b16 %v1412
  %v4400 = vunpack.c.l.b16 %v1413
  %v4401 = vunpack.c.h.b16 %v1413
  %v4402 = vunpack.c.l.b16 %v1414
  %v4403 = vunpack.c.h.b16 %v1414
  %v4404 = vunpack.c.l.b16 %v1415
  %v4405 = vunpack.c.h.b16 %v1415
  %v4406 = vunpack.c.l.b16 %v1416
  %v4407 = vunpack.c.h.b16 %v1416
  %v4408 = vunpack.c.l.b16 %v1417
  %v4409 = vunpack.c.h.b16 %v1417
  %v4410 = vunpack.c.l.b16 %v1418
  %v4411 = vunpack.c.h.b16 %v1418
  %v4412 = vunpack.c.l.b16 %v1419
  %v4413 = vunpack.c.h.b16 %v1419
  %v4414 = vunpack.c.l.b16 %v1420
  %v4415 = vunpack.c.h.b16 %v1420
  %v4416 = vunpack.c.l.b16 %v1421
  %v4417 = vunpack.c.h.b16 %v1421
  %v4418 = vunpack.c.l.b16 %v1422
  %v4419 = vunpack.c.h.b16 %v1422
  %v4420 = vunpack.c.l.b16 %v1423
  %v4421 = vunpack.c.h.b16 %v1423
  %v4422 = vunpack.c.l.b16 %v1424
  %v4423 = vunpack.c.h.b16 %v1424
  %v4424 = vunpack.c.l.b16 %v1425
  %v4425 = vunpack.c.h.b16 %v1425
  %v4426 = vunpack.c.l.b16 %v1426
  %v4427 = vunpack.c.h.b16 %v1426
  %v4428 = vunpack.c.l.b16 %v1427
  %v4429 = vunpack.c.h.b16 %v1427
  %v4430 = vunpack.c.l.b16 %v1428
  %v4431 = vunpack.c.h.b16 %v1428
  %v4432 = vunpack.c.l.b16 %v1429
  %v4433 = vunpack.c.h.b16 %v1429
  %v4434 = vunpack.c.l.b16 %v1430
  %v4435 = vunpack.c.h.b16 %v1430
  %v4436 = vunpack.c.l.b16 %v1431
  %v4437 = vunpack.c.h.b16 %v1431
  %v4438 = vunpack.c.l.b16 %v1432
  %v4439 = vunpack.c.h.b16 %v1432
  %v4440 = vunpack.c.l.b16 %v1433
  %v4441 = vunpack.c.h.b16 %v1433
  %v4442 = vunpack.c.l.b16 %v1434
  %v4443 = vunpack.c.h.b16 %v1434
  %v4444 = vunpack.c.l.b16 %v1435
  %v4445 = vunpack.c.h.b16 %v1435
  %v4446 = vunpack.c.l.b16 %v1436
  %v4447 = vunpack.c.h.b16 %v1436
  %v4448 = vunpack.c.l.b16 %v1437
  %v4449 = vunpack.c.h.b16 %v1437
  %v4450 = vunpack.c.l.b16 %v1438
  %v4451 = vunpack.c.h.b16 %v1438
  %v4452 = vunpack.c.l.b16 %v1439
  %v4453 = vunpack.c.h.b16 %v1439
  %v4454 = vunpack.c.l.b16 %v1440
  %v4455 = vunpack.c.h.b16 %v1440
  %v4456 = vunpack.c.l.b16 %v1441
  %v4457 = vunpack.c.h.b16 %v1441
  %v4458 = vunpack.c.l.b16 %v1442
  %v4459 = vunpack.c.h.b16 %v1442
  %v4460 = vunpack.c.l.b16 %v1443
  %v4461 = vunpack.c.h.b16 %v1443
  %v4462 = vunpack.c.l.b16 %v1444
  %v4463 = vunpack.c.h.b16 %v1444
  %v4464 = vunpack.c.l.b16 %v1445
  %v4465 = vunpack.c.h.b16 %v1445
  %v4466 = vunpack.c.l.b16 %v1446
  %v4467 = vunpack.c.h.b16 %v1446
  %v4468 = vunpack.c.l.b16 %v1447
  %v4469 = vunpack.c.h.b16 %v1447
  %v4470 = vunpack.c.l.b16 %v1448
  %v4471 = vunpack.c.h.b16 %v1448
  %v4472 = vunpack.c.l.b16 %v1449
  %v4473 = vunpack.c.h.b16 %v1449
  %v4474 = vunpack.c.l.b16 %v1450
  %v4475 = vunpack.c.h.b16 %v1450
  %v4476 = vunpack.c.l.b16 %v1451
  %v4477 = vunpack.c.h.b16 %v1451
  %v4478 = vunpack.c.l.b16 %v1452
  %v4479 = vunpack.c.h.b16 %v1452
  %v4480 = vunpack.c.l.b16 %v1453
  %v4481 = vunpack.c.h.b16 %v1453
  %v4482 = vunpack.c.l.b16 %v1454
  %v4483 = vunpack.c.h.b16 %v1454
  %v4484 = vunpack.c.l.b16 %v1455
  %v4485 = vunpack.c.h.b16 %v1455
  %v4486 = vunpack.c.l.b16 %v1456
  %v4487 = vunpack.c.h.b16 %v1456
  %v4488 = vunpack.c.l.b16 %v1457
  %v4489 = vunpack.c.h.b16 %v1457
  %v4490 = vunpack.c.l.b16 %v1458
  %v4491 = vunpack.c.h.b16 %v1458
  %v4492 = vunpack.c.l.b16 %v1459
  %v4493 = vunpack.c.h.b16 %v1459
  %v4494 = vunpack.c.l.b16 %v1460
  %v4495 = vunpack.c.h.b16 %v1460
  %v4496 = vunpack.c.l.b16 %v1461
  %v4497 = vunpack.c.h.b16 %v1461
  %v4498 = vunpack.c.l.b16 %v1462
  %v4499 = vunpack.c.h.b16 %v1462
  %v4500 = vunpack.c.l.b16 %v1463
  %v4501 = vunpack.c.h.b16 %v1463
  %v4502 = vunpack.c.l.b16 %v1464
  %v4503 = vunpack.c.h.b16 %v1464
  %v4504 = vunpack.c.l.b16 %v1465
  %v4505 = vunpack.c.h.b16 %v1465
  %v4506 = vunpack.c.l.b16 %v1466
  %v4507 = vunpack.c.h.b16 %v1466
  %v4508 = vunpack.c.l.b16 %v1467
  %v4509 = vunpack.c.h.b16 %v1467
  %v4510 = vunpack.c.l.b16 %v1468
  %v4511 = vunpack.c.h.b16 %v1468
  %v4512 = vunpack.c.l.b16 %v1469
  %v4513 = vunpack.c.h.b16 %v1469
  %v4514 = vunpack.c.l.b16 %v1470
  %v4515 = vunpack.c.h.b16 %v1470
  %v4516 = vunpack.c.l.b16 %v1471
  %v4517 = vunpack.c.h.b16 %v1471
  %v4518 = vunpack.c.l.b16 %v1472
  %v4519 = vunpack.c.h.b16 %v1472
  %v4520 = vunpack.c.l.b16 %v1473
  %v4521 = vunpack.c.h.b16 %v1473
  %v4522 = vunpack.c.l.b16 %v1474
  %v4523 = vunpack.c.h.b16 %v1474
  %v4524 = vunpack.c.l.b16 %v1475
  %v4525 = vunpack.c.h.b16 %v1475
  %v4526 = vunpack.c.l.b16 %v1476
  %v4527 = vunpack.c.h.b16 %v1476
  %v4528 = vunpack.c.l.b16 %v1477
  %v4529 = vunpack.c.h.b16 %v1477
  %v4530 = vunpack.c.l.b16 %v1478
  %v4531 = vunpack.c.h.b16 %v1478
  %v4532 = vunpack.c.l.b16 %v1479
  %v4533 = vunpack.c.h.b16 %v1479
  %v4534 = vunpack.c.l.b16 %v1480
  %v4535 = vunpack.c.h.b16 %v1480
  %v4536 = vunpack.c.l.b16 %v1481
  %v4537 = vunpack.c.h.b16 %v1481
  %v4538 = vunpack.c.l.b16 %v1482
  %v4539 = vunpack.c.h.b16 %v1482
  %v4540 = vunpack.c.l.b16 %v1483
  %v4541 = vunpack.c.h.b16 %v1483
  %v4542 = vunpack.c.l.b16 %v1484
  %v4543 = vunpack.c.h.b16 %v1484
  %v4544 = vunpack.c.l.b16 %v1485
  %v4545 = vunpack.c.h.b16 %v1485
  %v4546 = vunpack.c.l.b16 %v1486
  %v4547 = vunpack.c.h.b16 %v1486
  %v4548 = vunpack.c.l.b16 %v1487
  %v4549 = vunpack.c.h.b16 %v1487
  %v4550 = vunpack.c.l.b16 %v1488
  %v4551 = vunpack.c.h.b16 %v1488
  %v4552 = vunpack.c.l.b16 %v1489
  %v4553 = vunpack.c.h.b16 %v1489
  %v4554 = vunpack.c.l.b16 %v1490
  %v4555 = vunpack.c.h.b16 %v1490
  %v4556 = vunpack.c.l.b16 %v1491
  %v4557 = vunpack.c.h.b16 %v1491
  %v4558 = vunpack.c.l.b16 %v1492
  %v4559 = vunpack.c.h.b16 %v1492
  %v4560 = vunpack.c.l.b16 %v1493
  %v4561 = vunpack.c.h.b16 %v1493
  %v4562 = vunpack.c.l.b16 %v1494
  %v4563 = vunpack.c.h.b16 %v1494
  %v4564 = vunpack.c.l.b16 %v1495
  %v4565 = vunpack.c.h.b16 %v1495
  %v4566 = vunpack.c.l.b16 %v1496
  %v4567 = vunpack.c.h.b16 %v1496
  %v4568 = vunpack.c.l.b16 %v1497
  %v4569 = vunpack.c.h.b16 %v1497
  %v4570 = vunpack.c.l.b16 %v1498
  %v4571 = vunpack.c.h.b16 %v1498
  %v4572 = vunpack.c.l.b16 %v1499
  %v4573 = vunpack.c.h.b16 %v1499
  %v4574 = vunpack.c.l.b16 %v1500
  %v4575 = vunpack.c.h.b16 %v1500
  %v4576 = vunpack.c.l.b16 %v1501
  %v4577 = vunpack.c.h.b16 %v1501
  %v4578 = vunpack.c.l.b16 %v1502
  %v4579 = vunpack.c.h.b16 %v1502
  %v4580 = vunpack.c.l.b16 %v1503
  %v4581 = vunpack.c.h.b16 %v1503
  %v4582 = vunpack.c.l.b16 %v1504
  %v4583 = vunpack.c.h.b16 %v1504
  %v4584 = vunpack.c.l.b16 %v1505
  %v4585 = vunpack.c.h.b16 %v1505
  %v4586 = vunpack.c.l.b16 %v1506
  %v4587 = vunpack.c.h.b16 %v1506
  %v4588 = vunpack.c.l.b16 %v1507
  %v4589 = vunpack.c.h.b16 %v1507
  %v4590 = vunpack.c.l.b16 %v1508
  %v4591 = vunpack.c.h.b16 %v1508
  %v4592 = vunpack.c.l.b16 %v1509
  %v4593 = vunpack.c.h.b16 %v1509
  %v4594 = vunpack.c.l.b16 %v1510
  %v4595 = vunpack.c.h.b16 %v1510
  %v4596 = vunpack.c.l.b16 %v1511
  %v4597 = vunpack.c.h.b16 %v1511
  %v4598 = vunpack.c.l.b16 %v1512
  %v4599 = vunpack.c.h.b16 %v1512
  %v4600 = vunpack.c.l.b16 %v1513
  %v4601 = vunpack.c.h.b16 %v1513
  %v4602 = vunpack.c.l.b16 %v1514
  %v4603 = vunpack.c.h.b16 %v1514
  %v4604 = vunpack.c.l.b16 %v1515
  %v4605 = vunpack.c.h.b16 %v1515
  %v4606 = vunpack.c.l.b16 %v1516
  %v4607 = vunpack.c.h.b16 %v1516
  %v4608 = vunpack.c.l.b16 %v1517
  %v4609 = vunpack.c.h.b16 %v1517
  %v4610 = vunpack.c.l.b16 %v1518
  %v4611 = vunpack.c.h.b16 %v1518
  %v4612 = vunpack.c.l.b16 %v1519
  %v4613 = vunpack.c.h.b16 %v1519
  %v4614 = vunpack.c.l.b16 %v1520
  %v4615 = vunpack.c.h.b16 %v1520
  %v4616 = vunpack.c.l.b16 %v1521
  %v4617 = vunpack.c.h.b16 %v1521
  %v4618 = vunpack.c.l.b16 %v1522
  %v4619 = vunpack.c.h.b16 %v1522
  %v4620 = vunpack.c.l.b16 %v1523
  %v4621 = vunpack.c.h.b16 %v1523
  %v4622 = vunpack.c.l.b16 %v1524
  %v4623 = vunpack.c.h.b16 %v1524
  %v4624 = vunpack.c.l.b16 %v1525
  %v4625 = vunpack.c.h.b16 %v1525
  %v4626 = vunpack.c.l.b16 %v1526
  %v4627 = vunpack.c.h.b16 %v1526
  %v4628 = vunpack.c.l.b16 %v1527
  %v4629 = vunpack.c.h.b16 %v1527
  %v4630 = vunpack.c.l.b16 %v1528
  %v4631 = vunpack.c.h.b16 %v1528
  %v4632 = vunpack.c.l.b16 %v1529
  %v4633 = vunpack.c.h.b16 %v1529
  %v4634 = vunpack.c.l.b16 %v1530
  %v4635 = vunpack.c.h.b16 %v1530
  %v4636 = vunpack.c.l.b16 %v1531
  %v4637 = vunpack.c.h.b16 %v1531
  %v4638 = vunpack.c.l.b16 %v1532
  %v4639 = vunpack.c.h.b16 %v1532
  %v4640 = vunpack.c.l.b16 %v1533
  %v4641 = vunpack.c.h.b16 %v1533
  %v4642 = vunpack.c.l.b16 %v1534
  %v4643 = vunpack.c.h.b16 %v1534
  %v4644 = vunpack.c.l.b16 %v1535
  %v4645 = vunpack.c.h.b16 %v1535
  %v4646 = vunpack.c.l.b16 %v1536
  %v4647 = vunpack.c.h.b16 %v1536
  %v4648 = vunpack.c.l.b16 %v1537
  %v4649 = vunpack.c.h.b16 %v1537
  %v4650 = vunpack.c.l.b16 %v1538
  %v4651 = vunpack.c.h.b16 %v1538
  %v4652 = vunpack.c.l.b16 %v1539
  %v4653 = vunpack.c.h.b16 %v1539
  %v4654 = vunpack.c.l.b16 %v1540
  %v4655 = vunpack.c.h.b16 %v1540
  %v4656 = vunpack.c.l.b16 %v1541
  %v4657 = vunpack.c.h.b16 %v1541
  %v4658 = vunpack.c.l.b16 %v1542
  %v4659 = vunpack.c.h.b16 %v1542
  %v4660 = vunpack.c.l.b16 %v1543
  %v4661 = vunpack.c.h.b16 %v1543
  %v4662 = vunpack.c.l.b16 %v1544
  %v4663 = vunpack.c.h.b16 %v1544
  %v4664 = vunpack.c.l.b16 %v1545
  %v4665 = vunpack.c.h.b16 %v1545
  %v4666 = vunpack.c.l.b16 %v1546
  %v4667 = vunpack.c.h.b16 %v1546
  %v4668 = vunpack.c.l.b16 %v1547
  %v4669 = vunpack.c.h.b16 %v1547
  %v4670 = vunpack.c.l.b16 %v1548
  %v4671 = vunpack.c.h.b16 %v1548
  %v4672 = vunpack.c.l.b16 %v1549
  %v4673 = vunpack.c.h.b16 %v1549
  %v4674 = vunpack.c.l.b16 %v1550
  %v4675 = vunpack.c.h.b16 %v1550
  %v4676 = vunpack.c.l.b16 %v1551
  %v4677 = vunpack.c.h.b16 %v1551
  %v4678 = vunpack.c.l.b16 %v1552
  %v4679 = vunpack.c.h.b16 %v1552
  %v4680 = vunpack.c.l.b16 %v1553
  %v4681 = vunpack.c.h.b16 %v1553
  %v4682 = vunpack.c.l.b16 %v1554
  %v4683 = vunpack.c.h.b16 %v1554
  %v4684 = vunpack.c.l.b16 %v1555
  %v4685 = vunpack.c.h.b16 %v1555
  %v4686 = vunpack.c.l.b16 %v1556
  %v4687 = vunpack.c.h.b16 %v1556
  %v4688 = vunpack.c.l.b16 %v1557
  %v4689 = vunpack.c.h.b16 %v1557
  %v4690 = vunpack.c.l.b16 %v1558
  %v4691 = vunpack.c.h.b16 %v1558
  %v4692 = vunpack.c.l.b16 %v1559
  %v4693 = vunpack.c.h.b16 %v1559
  %v4694 = vunpack.c.l.b16 %v1560
  %v4695 = vunpack.c.h.b16 %v1560
  %v4696 = vunpack.c.l.b16 %v1561
  %v4697 = vunpack.c.h.b16 %v1561
  %v4698 = vunpack.c.l.b16 %v1562
  %v4699 = vunpack.c.h.b16 %v1562
  %v4700 = vunpack.c.l.b16 %v1563
  %v4701 = vunpack.c.h.b16 %v1563
  %v4702 = vunpack.c.l.b16 %v1564
  %v4703 = vunpack.c.h.b16 %v1564
  %v4704 = vunpack.c.l.b16 %v1565
  %v4705 = vunpack.c.h.b16 %v1565
  %v4706 = vunpack.c.l.b16 %v1566
  %v4707 = vunpack.c.h.b16 %v1566
  %v4708 = vunpack.c.l.b16 %v1567
  %v4709 = vunpack.c.h.b16 %v1567
  %v4710 = vunpack.c.l.b16 %v1568
  %v4711 = vunpack.c.h.b16 %v1568
  %v4712 = vunpack.c.l.b16 %v1569
  %v4713 = vunpack.c.h.b16 %v1569
  %v4714 = vunpack.c.l.b16 %v1570
  %v4715 = vunpack.c.h.b16 %v1570
  %v4716 = vunpack.c.l.b16 %v1571
  %v4717 = vunpack.c.h.b16 %v1571
  %v4718 = vunpack.c.l.b16 %v1572
  %v4719 = vunpack.c.h.b16 %v1572
  %v4720 = vunpack.c.l.b16 %v1573
  %v4721 = vunpack.c.h.b16 %v1573
  %v4722 = vunpack.c.l.b16 %v1574
  %v4723 = vunpack.c.h.b16 %v1574
  %v4724 = vunpack.c.l.b16 %v1575
  %v4725 = vunpack.c.h.b16 %v1575
  %v4726 = vunpack.c.l.b16 %v1576
  %v4727 = vunpack.c.h.b16 %v1576
  %v4728 = vunpack.c.l.b16 %v1577
  %v4729 = vunpack.c.h.b16 %v1577
  %v4730 = vunpack.c.l.b16 %v1578
  %v4731 = vunpack.c.h.b16 %v1578
  %v4732 = vunpack.c.l.b16 %v1579
  %v4733 = vunpack.c.h.b16 %v1579
  %v4734 = vunpack.c.l.b16 %v1580
  %v4735 = vunpack.c.h.b16 %v1580
  %v4736 = vunpack.c.l.b16 %v1581
  %v4737 = vunpack.c.h.b16 %v1581
  %v4738 = vunpack.c.l.b16 %v1582
  %v4739 = vunpack.c.h.b16 %v1582
  %v4740 = vunpack.c.l.b16 %v1583
  %v4741 = vunpack.c.h.b16 %v1583
  %v4742 = vunpack.c.l.b16 %v1584
  %v4743 = vunpack.c.h.b16 %v1584
  %v4744 = vunpack.c.l.b16 %v1585
  %v4745 = vunpack.c.h.b16 %v1585
  %v4746 = vunpack.c.l.b16 %v1586
  %v4747 = vunpack.c.h.b16 %v1586
  %v4748 = vunpack.c.l.b16 %v1587
  %v4749 = vunpack.c.h.b16 %v1587
  %v4750 = vunpack.c.l.b16 %v1588
  %v4751 = vunpack.c.h.b16 %v1588
  %v4752 = vunpack.c.l.b16 %v1589
  %v4753 = vunpack.c.h.b16 %v1589
  %v4754 = vunpack.c.l.b16 %v1590
  %v4755 = vunpack.c.h.b16 %v1590
  %v4756 = vunpack.c.l.b16 %v1591
  %v4757 = vunpack.c.h.b16 %v1591
  %v4758 = vunpack.c.l.b16 %v1592
  %v4759 = vunpack.c.h.b16 %v1592
  %v4760 = vunpack.c.l.b16 %v1593
  %v4761 = vunpack.c.h.b16 %v1593
  %v4762 = vunpack.c.l.b16 %v1594
  %v4763 = vunpack.c.h.b16 %v1594
  %v4764 = vunpack.c.l.b16 %v1595
  %v4765 = vunpack.c.h.b16 %v1595
  %v4766 = vunpack.c.l.b16 %v1596
  %v4767 = vunpack.c.h.b16 %v1596
  %v4768 = vunpack.c.l.b16 %v1597
  %v4769 = vunpack.c.h.b16 %v1597
  %v4770 = vunpack.c.l.b16 %v1598
  %v4771 = vunpack.c.h.b16 %v1598
  %v4772 = vunpack.c.l.b16 %v1599
  %v4773 = vunpack.c.h.b16 %v1599
  %v4774 = vunpack.c.l.b16 %v1600
  %v4775 = vunpack.c.h.b16 %v1600
  %v4776 = vunpack.c.l.b16 %v1601
  %v4777 = vunpack.c.h.b16 %v1601
  %v4778 = vunpack.c.l.b16 %v1602
  %v4779 = vunpack.c.h.b16 %v1602
  %v4780 = vunpack.c.l.b16 %v1603
  %v4781 = vunpack.c.h.b16 %v1603
  %v4782 = vunpack.c.l.b16 %v1604
  %v4783 = vunpack.c.h.b16 %v1604
  %v4784 = vunpack.c.l.b16 %v1605
  %v4785 = vunpack.c.h.b16 %v1605
  %v4786 = vunpack.c.l.b16 %v1606
  %v4787 = vunpack.c.h.b16 %v1606
  %v4788 = vunpack.c.l.b16 %v1607
  %v4789 = vunpack.c.h.b16 %v1607
  %v4790 = vunpack.c.l.b16 %v1608
  %v4791 = vunpack.c.h.b16 %v1608
  %v4792 = vunpack.c.l.b16 %v1609
  %v4793 = vunpack.c.h.b16 %v1609
  %v4794 = vunpack.c.l.b16 %v1610
  %v4795 = vunpack.c.h.b16 %v1610
  %v4796 = vunpack.c.l.b16 %v1611
  %v4797 = vunpack.c.h.b16 %v1611
  %v4798 = vunpack.c.l.b16 %v1612
  %v4799 = vunpack.c.h.b16 %v1612
  %v4800 = vunpack.c.l.b16 %v1613
  %v4801 = vunpack.c.h.b16 %v1613
  %v4802 = vunpack.c.l.b16 %v1614
  %v4803 = vunpack.c.h.b16 %v1614
  %v4804 = vunpack.c.l.b16 %v1615
  %v4805 = vunpack.c.h.b16 %v1615
  %v4806 = vunpack.c.l.b16 %v1616
  %v4807 = vunpack.c.h.b16 %v1616
  %v4808 = vunpack.c.l.b16 %v1617
  %v4809 = vunpack.c.h.b16 %v1617
  %v4810 = vunpack.c.l.b16 %v1618
  %v4811 = vunpack.c.h.b16 %v1618
  %v4812 = vunpack.c.l.b16 %v1619
  %v4813 = vunpack.c.h.b16 %v1619
  %v4814 = vunpack.c.l.b16 %v1620
  %v4815 = vunpack.c.h.b16 %v1620
  %v4816 = vunpack.c.l.b16 %v1621
  %v4817 = vunpack.c.h.b16 %v1621
  %v4818 = vunpack.c.l.b16 %v1622
  %v4819 = vunpack.c.h.b16 %v1622
  %v4820 = vunpack.c.l.b16 %v1623
  %v4821 = vunpack.c.h.b16 %v1623
  %v4822 = vunpack.c.l.b16 %v1624
  %v4823 = vunpack.c.h.b16 %v1624
  %v4824 = vunpack.c.l.b16 %v1625
  %v4825 = vunpack.c.h.b16 %v1625
  %v4826 = vunpack.c.l.b16 %v1626
  %v4827 = vunpack.c.h.b16 %v1626
  %v4828 = vunpack.c.l.b16 %v1627
  %v4829 = vunpack.c.h.b16 %v1627
  %v4830 = vunpack.c.l.b16 %v1628
  %v4831 = vunpack.c.h.b16 %v1628
  %v4832 = vunpack.c.l.b16 %v1629
  %v4833 = vunpack.c.h.b16 %v1629
  %v4834 = vunpack.c.l.b16 %v1630
  %v4835 = vunpack.c.h.b16 %v1630
  %v4836 = vunpack.c.l.b16 %v1631
  %v4837 = vunpack.c.h.b16 %v1631
  %v4838 = vunpack.c.l.b16 %v1632
  %v4839 = vunpack.c.h.b16 %v1632
  %v4840 = vunpack.c.l.b16 %v1633
  %v4841 = vunpack.c.h.b16 %v1633
  %v4842 = vunpack.c.l.b16 %v1634
  %v4843 = vunpack.c.h.b16 %v1634
  %v4844 = vunpack.c.l.b16 %v1635
  %v4845 = vunpack.c.h.b16 %v1635
  %v4846 = vunpack.c.l.b16 %v1636
  %v4847 = vunpack.c.h.b16 %v1636
  %v4848 = vunpack.c.l.b16 %v1637
  %v4849 = vunpack.c.h.b16 %v1637
  %v4850 = vunpack.c.l.b16 %v1638
  %v4851 = vunpack.c.h.b16 %v1638
  %v4852 = vunpack.c.l.b16 %v1639
  %v4853 = vunpack.c.h.b16 %v1639
  %v4854 = vunpack.c.l.b16 %v1640
  %v4855 = vunpack.c.h.b16 %v1640
  %v4856 = vunpack.c.l.b16 %v1641
  %v4857 = vunpack.c.h.b16 %v1641
  %v4858 = vunpack.c.l.b16 %v1642
  %v4859 = vunpack.c.h.b16 %v1642
  %v4860 = vunpack.c.l.b16 %v1643
  %v4861 = vunpack.c.h.b16 %v1643
  %v4862 = vunpack.c.l.b16 %v1644
  %v4863 = vunpack.c.h.b16 %v1644
  %v4864 = vunpack.c.l.b16 %v1645
  %v4865 = vunpack.c.h.b16 %v1645
  %v4866 = vunpack.c.l.b16 %v1646
  %v4867 = vunpack.c.h.b16 %v1646
  %v4868 = vunpack.c.l.b16 %v1647
  %v4869 = vunpack.c.h.b16 %v1647
  %v4870 = vunpack.c.l.b16 %v1648
  %v4871 = vunpack.c.h.b16 %v1648
  %v4872 = vunpack.c.l.b16 %v1649
  %v4873 = vunpack.c.h.b16 %v1649
  %v4874 = vunpack.c.l.b16 %v1650
  %v4875 = vunpack.c.h.b16 %v1650
  %v4876 = vunpack.c.l.b16 %v1651
  %v4877 = vunpack.c.h.b16 %v1651
  %v4878 = vunpack.c.l.b16 %v1652
  %v4879 = vunpack.c.h.b16 %v1652
  %v4880 = vunpack.c.l.b16 %v1653
  %v4881 = vunpack.c.h.b16 %v1653
  %v4882 = vunpack.c.l.b16 %v1654
  %v4883 = vunpack.c.h.b16 %v1654
  %v4884 = vunpack.c.l.b16 %v1655
  %v4885 = vunpack.c.h.b16 %v1655
  %v4886 = vunpack.c.l.b16 %v1656
  %v4887 = vunpack.c.h.b16 %v1656
  %v4888 = vunpack.c.l.b16 %v1657
  %v4889 = vunpack.c.h.b16 %v1657
  %v4890 = vunpack.c.l.b16 %v1658
  %v4891 = vunpack.c.h.b16 %v1658
  %v4892 = vunpack.c.l.b16 %v1659
  %v4893 = vunpack.c.h.b16 %v1659
  %v4894 = vunpack.c.l.b16 %v1660
  %v4895 = vunpack.c.h.b16 %v1660
  %v4896 = vunpack.c.l.b16 %v1661
  %v4897 = vunpack.c.h.b16 %v1661
  %v4898 = vunpack.c.l.b16 %v1662
  %v4899 = vunpack.c.h.b16 %v1662
  %v4900 = vunpack.c.l.b16 %v1663
  %v4901 = vunpack.c.h.b16 %v1663
  %v4902 = vunpack.c.l.b16 %v1664
  %v4903 = vunpack.c.h.b16 %v1664
  %v4904 = vunpack.c.l.b16 %v1665
  %v4905 = vunpack.c.h.b16 %v1665
  %v4906 = vunpack.c.l.b16 %v1666
  %v4907 = vunpack.c.h.b16 %v1666
  %v4908 = vunpack.c.l.b16 %v1667
  %v4909 = vunpack.c.h.b16 %v1667
  %v4910 = vunpack.c.l.b16 %v1668
  %v4911 = vunpack.c.h.b16 %v1668
  %v4912 = vunpack.c.l.b16 %v1669
  %v4913 = vunpack.c.h.b16 %v1669
  %v4914 = vunpack.c.l.b16 %v1670
  %v4915 = vunpack.c.h.b16 %v1670
  %v4916 = vunpack.c.l.b16 %v1671
  %v4917 = vunpack.c.h.b16 %v1671
  %v4918 = vunpack.c.l.b16 %v1672
  %v4919 = vunpack.c.h.b16 %v1672
  %v4920 = vunpack.c.l.b16 %v1673
  %v4921 = vunpack.c.h.b16 %v1673
  %v4922 = vunpack.c.l.b16 %v1674
  %v4923 = vunpack.c.h.b16 %v1674
  %v4924 = vunpack.c.l.b16 %v1675
  %v4925 = vunpack.c.h.b16 %v1675
  %v4926 = vunpack.c.l.b16 %v1676
  %v4927 = vunpack.c.h.b16 %v1676
  %v4928 = vunpack.c.l.b16 %v1677
  %v4929 = vunpack.c.h.b16 %v1677
  %v4930 = vunpack.c.l.b16 %v1678
  %v4931 = vunpack.c.h.b16 %v1678
  %v4932 = vunpack.c.l.b16 %v1679
  %v4933 = vunpack.c.h.b16 %v1679
  %v4934 = vunpack.c.l.b16 %v1680
  %v4935 = vunpack.c.h.b16 %v1680
  %v4936 = vunpack.c.l.b16 %v1681
  %v4937 = vunpack.c.h.b16 %v1681
  %v4938 = vunpack.c.l.b16 %v1682
  %v4939 = vunpack.c.h.b16 %v1682
  %v4940 = vunpack.c.l.b16 %v1683
  %v4941 = vunpack.c.h.b16 %v1683
  %v4942 = vunpack.c.l.b16 %v1684
  %v4943 = vunpack.c.h.b16 %v1684
  %v4944 = vunpack.c.l.b16 %v1685
  %v4945 = vunpack.c.h.b16 %v1685
  %v4946 = vunpack.c.l.b16 %v1686
  %v4947 = vunpack.c.h.b16 %v1686
  %v4948 = vunpack.c.l.b16 %v1687
  %v4949 = vunpack.c.h.b16 %v1687
  %v4950 = vunpack.c.l.b16 %v1688
  %v4951 = vunpack.c.h.b16 %v1688
  %v4952 = vunpack.c.l.b16 %v1689
  %v4953 = vunpack.c.h.b16 %v1689
  %v4954 = vunpack.c.l.b16 %v1690
  %v4955 = vunpack.c.h.b16 %v1690
  %v4956 = vunpack.c.l.b16 %v1691
  %v4957 = vunpack.c.h.b16 %v1691
  %v4958 = vunpack.c.l.b16 %v1692
  %v4959 = vunpack.c.h.b16 %v1692
  %v4960 = vunpack.c.l.b16 %v1693
  %v4961 = vunpack.c.h.b16 %v1693
  %v4962 = vunpack.c.l.b16 %v1694
  %v4963 = vunpack.c.h.b16 %v1694
  %v4964 = vunpack.c.l.b16 %v1695
  %v4965 = vunpack.c.h.b16 %v1695
  %v4966 = vunpack.c.l.b16 %v1696
  %v4967 = vunpack.c.h.b16 %v1696
  %v4968 = vunpack.c.l.b16 %v1697
  %v4969 = vunpack.c.h.b16 %v1697
  %v4970 = vunpack.c.l.b16 %v1698
  %v4971 = vunpack.c.h.b16 %v1698
  %v4972 = vunpack.c.l.b16 %v1699
  %v4973 = vunpack.c.h.b16 %v1699
  %v4974 = vunpack.c.l.b16 %v1700
  %v4975 = vunpack.c.h.b16 %v1700
  %v4976 = vunpack.c.l.b16 %v1701
  %v4977 = vunpack.c.h.b16 %v1701
  %v4978 = vunpack.c.l.b16 %v1702
  %v4979 = vunpack.c.h.b16 %v1702
  %v4980 = vunpack.c.l.b16 %v1703
  %v4981 = vunpack.c.h.b16 %v1703
  %v4982 = vunpack.c.l.b16 %v1704
  %v4983 = vunpack.c.h.b16 %v1704
  %v4984 = vunpack.c.l.b16 %v1705
  %v4985 = vunpack.c.h.b16 %v1705
  %v4986 = vunpack.c.l.b16 %v1706
  %v4987 = vunpack.c.h.b16 %v1706
  %v4988 = vunpack.c.l.b16 %v1707
  %v4989 = vunpack.c.h.b16 %v1707
  %v4990 = vunpack.c.l.b16 %v1708
  %v4991 = vunpack.c.h.b16 %v1708
  %v4992 = vunpack.c.l.b16 %v1709
  %v4993 = vunpack.c.h.b16 %v1709
  %v4994 = vunpack.c.l.b16 %v1710
  %v4995 = vunpack.c.h.b16 %v1710
  %v4996 = vunpack.c.l.b16 %v1711
  %v4997 = vunpack.c.h.b16 %v1711
  %v4998 = vunpack.c.l.b16 %v1712
  %v4999 = vunpack.c.h.b16 %v1712
  %v5000 = vunpack.c.l.b16 %v1713
  %v5001 = vunpack.c.h.b16 %v1713
  %v5002 = vunpack.c.l.b16 %v1714
  %v5003 = vunpack.c.h.b16 %v1714
  %v5004 = vunpack.c.l.b16 %v1715
  %v5005 = vunpack.c.h.b16 %v1715
  %v5006 = vunpack.c.l.b16 %v1716
  %v5007 = vunpack.c.h.b16 %v1716
  %v5008 = vunpack.c.l.b16 %v1717
  %v5009 = vunpack.c.h.b16 %v1717
  %v5010 = vunpack.c.l.b16 %v1718
  %v5011 = vunpack.c.h.b16 %v1718
  %v5012 = vunpack.c.l.b16 %v1719
  %v5013 = vunpack.c.h.b16 %v1719
  %v5014 = vunpack.c.l.b16 %v1720
  %v5015 = vunpack.c.h.b16 %v1720
  %v5016 = vunpack.c.l.b16 %v1721
  %v5017 = vunpack.c.h.b16 %v1721
  %v5018 = vunpack.c.l.b16 %v1722
  %v5019 = vunpack.c.h.b16 %v1722
  %v5020 = vunpack.c.l.b16 %v1723
  %v5021 = vunpack.c.h.b16 %v1723
  %v5022 = vpack.c.b16 %v2982, %v2974
  %v5023 = vpack.c.b16 %v2983, %v2975
  %v5024 = vpack.c.b16 %v2984, %v2976
  %v5025 = vpack.c.b16 %v2985, %v2977
  %v5026 = vpack.c.b16 %v2986, %v2978
  %v5027 = vpack.c.b16 %v2987, %v2979
  %v5028 = vpack.c.b16 %v2988, %v2980
  %v5029 = vpack.c.b16 %v2989, %v2981
  %v5030 = vpack.c.b16 %v2998, %v2990
  %v5031 = vpack.c.b16 %v2999, %v2991
  %v5032 = vpack.c.b16 %v3000, %v2992
  %v5033 = vpack.c.b16 %v3001, %v2993
  %v5034 = vpack.c.b16 %v3002, %v2994
  %v5035 = vpack.c.b16 %v3003, %v2995
  %v5036 = vpack.c.b16 %v3004, %v2996
  %v5037 = vpack.c.b16 %v3005, %v2997
  %v5038 = vpack.c.b16 %v3014, %v3006
  %v5039 = vpack.c.b16 %v3015, %v3007
  %v5040 = vpack.c.b16 %v3016, %v3008
  %v5041 = vpack.c.b16 %v3017, %v3009
  %v5042 = vpack.c.b16 %v3018, %v3010
  %v5043 = vpack.c.b16 %v3019, %v3011
  %v5044 = vpack.c.b16 %v3020, %v3012
  %v5045 = vpack.c.b16 %v3021, %v3013
  %v5046 = vpack.c.b16 %v3030, %v3022
  %v5047 = vpack.c.b16 %v3031, %v3023
  %v5048 = vpack.c.b16 %v3032, %v3024
  %v5049 = vpack.c.b16 %v3033, %v3025
  %v5050 = vpack.c.b16 %v3034, %v3026
  %v5051 = vpack.c.b16 %v3035, %v3027
  %v5052 = vpack.c.b16 %v3036, %v3028
  %v5053 = vpack.c.b16 %v3037, %v3029
  %v5054 = vpack.c.b16 %v3046, %v3038
  %v5055 = vpack.c.b16 %v3047, %v3039
  %v5056 = vpack.c.b16 %v3048, %v3040
  %v5057 = vpack.c.b16 %v3049, %v3041
  %v5058 = vpack.c.b16 %v3050, %v3042
  %v5059 = vpack.c.b16 %v3051, %v3043
  %v5060 = vpack.c.b16 %v3052, %v3044
  %v5061 = vpack.c.b16 %v3053, %v3045
  %v5062 = vpack.c.b16 %v3062, %v3054
  %v5063 = vpack.c.b16 %v3063, %v3055
  %v5064 = vpack.c.b16 %v3064, %v3056
  %v5065 = vpack.c.b16 %v3065, %v3057
  %v5066 = vpack.c.b16 %v3066, %v3058
  %v5067 = vpack.c.b16 %v3067, %v3059
  %v5068 = vpack.c.b16 %v3068, %v3060
  %v5069 = vpack.c.b16 %v3069, %v3061
  %v5070 = vpack.c.b16 %v3078, %v3070
  %v5071 = vpack.c.b16 %v3079, %v3071
  %v5072 = vpack.c.b16 %v3080, %v3072
  %v5073 = vpack.c.b16 %v3081, %v3073
  %v5074 = vpack.c.b16 %v3082, %v3074
  %v5075 = vpack.c.b16 %v3083, %v3075
  %v5076 = vpack.c.b16 %v3084, %v3076
  %v5077 = vpack.c.b16 %v3085, %v3077
  %v5078 = vpack.c.b16 %v3094, %v3086
  %v5079 = vpack.c.b16 %v3095, %v3087
  %v5080 = vpack.c.b16 %v3096, %v3088
  %v5081 = vpack.c.b16 %v3097, %v3089
  %v5082 = vpack.c.b16 %v3098, %v3090
  %v5083 = vpack.c.b16 %v3099, %v3091
  %v5084 = vpack.c.b16 %v3100, %v3092
  %v5085 = vpack.c.b16 %v3101, %v3093
  %v5086 = vpack.c.b16 %v3110, %v3102
  %v5087 = vpack.c.b16 %v3111, %v3103
  %v5088 = vpack.c.b16 %v3112, %v3104
  %v5089 = vpack.c.b16 %v3113, %v3105
  %v5090 = vpack.c.b16 %v3114, %v3106
  %v5091 = vpack.c.b16 %v3115, %v3107
  %v5092 = vpack.c.b16 %v3116, %v3108
  %v5093 = vpack.c.b16 %v3117, %v3109
  %v5094 = vpack.c.b16 %v3126, %v3118
  %v5095 = vpack.c.b16 %v3127, %v3119
  %v5096 = vpack.c.b16 %v3128, %v3120
  %v5097 = vpack.c.b16 %v3129, %v3121
  %v5098 = vpack.c.b16 %v3130, %v3122
  %v5099 = vpack.c.b16 %v3131, %v3123
  %v5100 = vpack.c.b16 %v3132, %v3124
  %v5101 = vpack.c.b16 %v3133, %v3125
  %v5102 = vpack.c.b16 %v3142, %v3134
  %v5103 = vpack.c.b16 %v3143, %v3135
  %v5104 = vpack.c.b16 %v3144, %v3136
  %v5105 = vpack.c.b16 %v3145, %v3137
  %v5106 = vpack.c.b16 %v3146, %v3138
  %v5107 = vpack.c.b16 %v3147, %v3139
  %v5108 = vpack.c.b16 %v3148, %v3140
  %v5109 = vpack.c.b16 %v3149, %v3141
  %v5110 = vpack.c.b16 %v3158, %v3150
  %v5111 = vpack.c.b16 %v3159, %v3151
  %v5112 = vpack.c.b16 %v3160, %v3152
  %v5113 = vpack.c.b16 %v3161, %v3153
  %v5114 = vpack.c.b16 %v3162, %v3154
  %v5115 = vpack.c.b16 %v3163, %v3155
  %v5116 = vpack.c.b16 %v3164, %v3156
  %v5117 = vpack.c.b16 %v3165, %v3157
  %v5118 = vpack.c.b16 %v3174, %v3166
  %v5119 = vpack.c.b16 %v3175, %v3167
  %v5120 = vpack.c.b16 %v3176, %v3168
  %v5121 = vpack.c.b16 %v3177, %v3169
  %v5122 = vpack.c.b16 %v3178, %v3170
  %v5123 = vpack.c.b16 %v3179, %v3171
  %v5124 = vpack.c.b16 %v3180, %v3172
  %v5125 = vpack.c.b16 %v3181, %v3173
  %v5126 = vpack.c.b16 %v3190, %v3182
  %v5127 = vpack.c.b16 %v3191, %v3183
  %v5128 = vpack.c.b16 %v3192, %v3184
  %v5129 = vpack.c.b16 %v3193, %v3185
  %v5130 = vpack.c.b16 %v3194, %v3186
  %v5131 = vpack.c.b16 %v3195, %v3187
  %v5132 = vpack.c.b16 %v3196, %v3188
  %v5133 = vpack.c.b16 %v3197, %v3189
  %v5134 = vpack.c.b16 %v3206, %v3198
  %v5135 = vpack.c.b16 %v3207, %v3199
  %v5136 = vpack.c.b16 %v3208, %v3200
  %v5137 = vpack.c.b16 %v3209, %v3201
  %v5138 = vpack.c.b16 %v3210, %v3202
  %v5139 = vpack.c.b16 %v3211, %v3203
  %v5140 = vpack.c.b16 %v3212, %v3204
  %v5141 = vpack.c.b16 %v3213, %v3205
  %v5142 = vpack.c.b16 %v3222, %v3214
  %v5143 = vpack.c.b16 %v3223, %v3215
  %v5144 = vpack.c.b16 %v3224, %v3216
  %v5145 = vpack.c.b16 %v3225, %v3217
  %v5146 = vpack.c.b16 %v3226, %v3218
  %v5147 = vpack.c.b16 %v3227, %v3219
  %v5148 = vpack.c.b16 %v3228, %v3220
  %v5149 = vpack.c.b16 %v3229, %v3221
  %v5150 = vpack.c.b16 %v3238, %v3230
  %v5151 = vpack.c.b16 %v3239, %v3231
  %v5152 = vpack.c.b16 %v3240, %v3232
  %v5153 = vpack.c.b16 %v3241, %v3233
  %v5154 = vpack.c.b16 %v3242, %v3234
  %v5155 = vpack.c.b16 %v3243, %v3235
  %v5156 = vpack.c.b16 %v3244, %v3236
  %v5157 = vpack.c.b16 %v3245, %v3237
  %v5158 = vpack.c.b16 %v3254, %v3246
  %v5159 = vpack.c.b16 %v3255, %v3247
  %v5160 = vpack.c.b16 %v3256, %v3248
  %v5161 = vpack.c.b16 %v3257, %v3249
  %v5162 = vpack.c.b16 %v3258, %v3250
  %v5163 = vpack.c.b16 %v3259, %v3251
  %v5164 = vpack.c.b16 %v3260, %v3252
  %v5165 = vpack.c.b16 %v3261, %v3253
  %v5166 = vpack.c.b16 %v3270, %v3262
  %v5167 = vpack.c.b16 %v3271, %v3263
  %v5168 = vpack.c.b16 %v3272, %v3264
  %v5169 = vpack.c.b16 %v3273, %v3265
  %v5170 = vpack.c.b16 %v3274, %v3266
  %v5171 = vpack.c.b16 %v3275, %v3267
  %v5172 = vpack.c.b16 %v3276, %v3268
  %v5173 = vpack.c.b16 %v3277, %v3269
  %v5174 = vpack.c.b16 %v3286, %v3278
  %v5175 = vpack.c.b16 %v3287, %v3279
  %v5176 = vpack.c.b16 %v3288, %v3280
  %v5177 = vpack.c.b16 %v3289, %v3281
  %v5178 = vpack.c.b16 %v3290, %v3282
  %v5179 = vpack.c.b16 %v3291, %v3283
  %v5180 = vpack.c.b16 %v3292, %v3284
  %v5181 = vpack.c.b16 %v3293, %v3285
  %v5182 = vpack.c.b16 %v3302, %v3294
  %v5183 = vpack.c.b16 %v3303, %v3295
  %v5184 = vpack.c.b16 %v3304, %v3296
  %v5185 = vpack.c.b16 %v3305, %v3297
  %v5186 = vpack.c.b16 %v3306, %v3298
  %v5187 = vpack.c.b16 %v3307, %v3299
  %v5188 = vpack.c.b16 %v3308, %v3300
  %v5189 = vpack.c.b16 %v3309, %v3301
  %v5190 = vpack.c.b16 %v3318, %v3310
  %v5191 = vpack.c.b16 %v3319, %v3311
  %v5192 = vpack.c.b16 %v3320, %v3312
  %v5193 = vpack.c.b16 %v3321, %v3313
  %v5194 = vpack.c.b16 %v3322, %v3314
  %v5195 = vpack.c.b16 %v3323, %v3315
  %v5196 = vpack.c.b16 %v3324, %v3316
  %v5197 = vpack.c.b16 %v3325, %v3317
  %v5198 = vpack.c.b16 %v3334, %v3326
  %v5199 = vpack.c.b16 %v3335, %v3327
  %v5200 = vpack.c.b16 %v3336, %v3328
  %v5201 = vpack.c.b16 %v3337, %v3329
  %v5202 = vpack.c.b16 %v3338, %v3330
  %v5203 = vpack.c.b16 %v3339, %v3331
  %v5204 = vpack.c.b16 %v3340, %v3332
  %v5205 = vpack.c.b16 %v3341, %v3333
  %v5206 = vpack.c.b16 %v3350, %v3342
  %v5207 = vpack.c.b16 %v3351, %v3343
  %v5208 = vpack.c.b16 %v3352, %v3344
  %v5209 = vpack.c.b16 %v3353, %v3345
  %v5210 = vpack.c.b16 %v3354, %v3346
  %v5211 = vpack.c.b16 %v3355, %v3347
  %v5212 = vpack.c.b16 %v3356, %v3348
  %v5213 = vpack.c.b16 %v3357, %v3349
  %v5214 = vpack.c.b16 %v3366, %v3358
  %v5215 = vpack.c.b16 %v3367, %v3359
  %v5216 = vpack.c.b16 %v3368, %v3360
  %v5217 = vpack.c.b16 %v3369, %v3361
  %v5218 = vpack.c.b16 %v3370, %v3362
  %v5219 = vpack.c.b16 %v3371, %v3363
  %v5220 = vpack.c.b16 %v3372, %v3364
  %v5221 = vpack.c.b16 %v3373, %v3365
  %v5222 = vpack.c.b16 %v3382, %v3374
  %v5223 = vpack.c.b16 %v3383, %v3375
  %v5224 = vpack.c.b16 %v3384, %v3376
  %v5225 = vpack.c.b16 %v3385, %v3377
  %v5226 = vpack.c.b16 %v3386, %v3378
  %v5227 = vpack.c.b16 %v3387, %v3379
  %v5228 = vpack.c.b16 %v3388, %v3380
  %v5229 = vpack.c.b16 %v3389, %v3381
  %v5230 = vpack.c.b16 %v3398, %v3390
  %v5231 = vpack.c.b16 %v3399, %v3391
  %v5232 = vpack.c.b16 %v3400, %v3392
  %v5233 = vpack.c.b16 %v3401, %v3393
  %v5234 = vpack.c.b16 %v3402, %v3394
  %v5235 = vpack.c.b16 %v3403, %v3395
  %v5236 = vpack.c.b16 %v3404, %v3396
  %v5237 = vpack.c.b16 %v3405, %v3397
  %v5238 = vpack.c.b16 %v3414, %v3406
  %v5239 = vpack.c.b16 %v3415, %v3407
  %v5240 = vpack.c.b16 %v3416, %v3408
  %v5241 = vpack.c.b16 %v3417, %v3409
  %v5242 = vpack.c.b16 %v3418, %v3410
  %v5243 = vpack.c.b16 %v3419, %v3411
  %v5244 = vpack.c.b16 %v3420, %v3412
  %v5245 = vpack.c.b16 %v3421, %v3413
  %v5246 = vpack.c.b16 %v3430, %v3422
  %v5247 = vpack.c.b16 %v3431, %v3423
  %v5248 = vpack.c.b16 %v3432, %v3424
  %v5249 = vpack.c.b16 %v3433, %v3425
  %v5250 = vpack.c.b16 %v3434, %v3426
  %v5251 = vpack.c.b16 %v3435, %v3427
  %v5252 = vpack.c.b16 %v3436, %v3428
  %v5253 = vpack.c.b16 %v3437, %v3429
  %v5254 = vpack.c.b16 %v3446, %v3438
  %v5255 = vpack.c.b16 %v3447, %v3439
  %v5256 = vpack.c.b16 %v3448, %v3440
  %v5257 = vpack.c.b16 %v3449, %v3441
  %v5258 = vpack.c.b16 %v3450, %v3442
  %v5259 = vpack.c.b16 %v3451, %v3443
  %v5260 = vpack.c.b16 %v3452, %v3444
  %v5261 = vpack.c.b16 %v3453, %v3445
  %v5262 = vpack.c.b16 %v3462, %v3454
  %v5263 = vpack.c.b16 %v3463, %v3455
  %v5264 = vpack.c.b16 %v3464, %v3456
  %v5265 = vpack.c.b16 %v3465, %v3457
  %v5266 = vpack.c.b16 %v3466, %v3458
  %v5267 = vpack.c.b16 %v3467, %v3459
  %v5268 = vpack.c.b16 %v3468, %v3460
  %v5269 = vpack.c.b16 %v3469, %v3461
  %v5270 = vpack.c.b16 %v3478, %v3470
  %v5271 = vpack.c.b16 %v3479, %v3471
  %v5272 = vpack.c.b16 %v3480, %v3472
  %v5273 = vpack.c.b16 %v3481, %v3473
  %v5274 = vpack.c.b16 %v3482, %v3474
  %v5275 = vpack.c.b16 %v3483, %v3475
  %v5276 = vpack.c.b16 %v3484, %v3476
  %v5277 = vpack.c.b16 %v3485, %v3477
  %v5278 = vpack.c.b16 %v3494, %v3486
  %v5279 = vpack.c.b16 %v3495, %v3487
  %v5280 = vpack.c.b16 %v3496, %v3488
  %v5281 = vpack.c.b16 %v3497, %v3489
  %v5282 = vpack.c.b16 %v3498, %v3490
  %v5283 = vpack.c.b16 %v3499, %v3491
  %v5284 = vpack.c.b16 %v3500, %v3492
  %v5285 = vpack.c.b16 %v3501, %v3493
  %v5286 = vpack.c.b16 %v3510, %v3502
  %v5287 = vpack.c.b16 %v3511, %v3503
  %v5288 = vpack.c.b16 %v3512, %v3504
  %v5289 = vpack.c.b16 %v3513, %v3505
  %v5290 = vpack.c.b16 %v3514, %v3506
  %v5291 = vpack.c.b16 %v3515, %v3507
  %v5292 = vpack.c.b16 %v3516, %v3508
  %v5293 = vpack.c.b16 %v3517, %v3509
  %v5294 = vpack.c.b16 %v3526, %v3518
  %v5295 = vpack.c.b16 %v3527, %v3519
  %v5296 = vpack.c.b16 %v3528, %v3520
  %v5297 = vpack.c.b16 %v3529, %v3521
  %v5298 = vpack.c.b16 %v3530, %v3522
  %v5299 = vpack.c.b16 %v3531, %v3523
  %v5300 = vpack.c.b16 %v3532, %v3524
  %v5301 = vpack.c.b16 %v3533, %v3525
  %v5302 = vpack.c.b16 %v3542, %v3534
  %v5303 = vpack.c.b16 %v3543, %v3535
  %v5304 = vpack.c.b16 %v3544, %v3536
  %v5305 = vpack.c.b16 %v3545, %v3537
  %v5306 = vpack.c.b16 %v3546, %v3538
  %v5307 = vpack.c.b16 %v3547, %v3539
  %v5308 = vpack.c.b16 %v3548, %v3540
  %v5309 = vpack.c.b16 %v3549, %v3541
  %v5310 = vpack.c.b16 %v3558, %v3550
  %v5311 = vpack.c.b16 %v3559, %v3551
  %v5312 = vpack.c.b16 %v3560, %v3552
  %v5313 = vpack.c.b16 %v3561, %v3553
  %v5314 = vpack.c.b16 %v3562, %v3554
  %v5315 = vpack.c.b16 %v3563, %v3555
  %v5316 = vpack.c.b16 %v3564, %v3556
  %v5317 = vpack.c.b16 %v3565, %v3557
  %v5318 = vpack.c.b16 %v3574, %v3566
  %v5319 = vpack.c.b16 %v3575, %v3567
  %v5320 = vpack.c.b16 %v3576, %v3568
  %v5321 = vpack.c.b16 %v3577, %v3569
  %v5322 = vpack.c.b16 %v3578, %v3570
  %v5323 = vpack.c.b16 %v3579, %v3571
  %v5324 = vpack.c.b16 %v3580, %v3572
  %v5325 = vpack.c.b16 %v3581, %v3573
  %v5326 = vpack.c.b16 %v3590, %v3582
  %v5327 = vpack.c.b16 %v3591, %v3583
  %v5328 = vpack.c.b16 %v3592, %v3584
  %v5329 = vpack.c.b16 %v3593, %v3585
  %v5330 = vpack.c.b16 %v3594, %v3586
  %v5331 = vpack.c.b16 %v3595, %v3587
  %v5332 = vpack.c.b16 %v3596, %v3588
  %v5333 = vpack.c.b16 %v3597, %v3589
  %v5334 = vpack.c.b16 %v3606, %v3598
  %v5335 = vpack.c.b16 %v3607, %v3599
  %v5336 = vpack.c.b16 %v3608, %v3600
  %v5337 = vpack.c.b16 %v3609, %v3601
  %v5338 = vpack.c.b16 %v3610, %v3602
  %v5339 = vpack.c.b16 %v3611, %v3603
  %v5340 = vpack.c.b16 %v3612, %v3604
  %v5341 = vpack.c.b16 %v3613, %v3605
  %v5342 = vpack.c.b16 %v3622, %v3614
  %v5343 = vpack.c.b16 %v3623, %v3615
  %v5344 = vpack.c.b16 %v3624, %v3616
  %v5345 = vpack.c.b16 %v3625, %v3617
  %v5346 = vpack.c.b16 %v3626, %v3618
  %v5347 = vpack.c.b16 %v3627, %v3619
  %v5348 = vpack.c.b16 %v3628, %v3620
  %v5349 = vpack.c.b16 %v3629, %v3621
  %v5350 = vpack.c.b16 %v3638, %v3630
  %v5351 = vpack.c.b16 %v3639, %v3631
  %v5352 = vpack.c.b16 %v3640, %v3632
  %v5353 = vpack.c.b16 %v3641, %v3633
  %v5354 = vpack.c.b16 %v3642, %v3634
  %v5355 = vpack.c.b16 %v3643, %v3635
  %v5356 = vpack.c.b16 %v3644, %v3636
  %v5357 = vpack.c.b16 %v3645, %v3637
  %v5358 = vpack.c.b16 %v3654, %v3646
  %v5359 = vpack.c.b16 %v3655, %v3647
  %v5360 = vpack.c.b16 %v3656, %v3648
  %v5361 = vpack.c.b16 %v3657, %v3649
  %v5362 = vpack.c.b16 %v3658, %v3650
  %v5363 = vpack.c.b16 %v3659, %v3651
  %v5364 = vpack.c.b16 %v3660, %v3652
  %v5365 = vpack.c.b16 %v3661, %v3653
  %v5366 = vpack.c.b16 %v3670, %v3662
  %v5367 = vpack.c.b16 %v3671, %v3663
  %v5368 = vpack.c.b16 %v3672, %v3664
  %v5369 = vpack.c.b16 %v3673, %v3665
  %v5370 = vpack.c.b16 %v3674, %v3666
  %v5371 = vpack.c.b16 %v3675, %v3667
  %v5372 = vpack.c.b16 %v3676, %v3668
  %v5373 = vpack.c.b16 %v3677, %v3669
  %v5374 = vpack.c.b16 %v3686, %v3678
  %v5375 = vpack.c.b16 %v3687, %v3679
  %v5376 = vpack.c.b16 %v3688, %v3680
  %v5377 = vpack.c.b16 %v3689, %v3681
  %v5378 = vpack.c.b16 %v3690, %v3682
  %v5379 = vpack.c.b16 %v3691, %v3683
  %v5380 = vpack.c.b16 %v3692, %v3684
  %v5381 = vpack.c.b16 %v3693, %v3685
  %v5382 = vpack.c.b16 %v3702, %v3694
  %v5383 = vpack.c.b16 %v3703, %v3695
  %v5384 = vpack.c.b16 %v3704, %v3696
  %v5385 = vpack.c.b16 %v3705, %v3697
  %v5386 = vpack.c.b16 %v3706, %v3698
  %v5387 = vpack.c.b16 %v3707, %v3699
  %v5388 = vpack.c.b16 %v3708, %v3700
  %v5389 = vpack.c.b16 %v3709, %v3701
  %v5390 = vpack.c.b16 %v3718, %v3710
  %v5391 = vpack.c.b16 %v3719, %v3711
  %v5392 = vpack.c.b16 %v3720, %v3712
  %v5393 = vpack.c.b16 %v3721, %v3713
  %v5394 = vpack.c.b16 %v3722, %v3714
  %v5395 = vpack.c.b16 %v3723, %v3715
  %v5396 = vpack.c.b16 %v3724, %v3716
  %v5397 = vpack.c.b16 %v3725, %v3717
  %v5398 = vpack.c.b16 %v3734, %v3726
  %v5399 = vpack.c.b16 %v3735, %v3727
  %v5400 = vpack.c.b16 %v3736, %v3728
  %v5401 = vpack.c.b16 %v3737, %v3729
  %v5402 = vpack.c.b16 %v3738, %v3730
  %v5403 = vpack.c.b16 %v3739, %v3731
  %v5404 = vpack.c.b16 %v3740, %v3732
  %v5405 = vpack.c.b16 %v3741, %v3733
  %v5406 = vpack.c.b16 %v3750, %v3742
  %v5407 = vpack.c.b16 %v3751, %v3743
  %v5408 = vpack.c.b16 %v3752, %v3744
  %v5409 = vpack.c.b16 %v3753, %v3745
  %v5410 = vpack.c.b16 %v3754, %v3746
  %v5411 = vpack.c.b16 %v3755, %v3747
  %v5412 = vpack.c.b16 %v3756, %v3748
  %v5413 = vpack.c.b16 %v3757, %v3749
  %v5414 = vpack.c.b16 %v3766, %v3758
  %v5415 = vpack.c.b16 %v3767, %v3759
  %v5416 = vpack.c.b16 %v3768, %v3760
  %v5417 = vpack.c.b16 %v3769, %v3761
  %v5418 = vpack.c.b16 %v3770, %v3762
  %v5419 = vpack.c.b16 %v3771, %v3763
  %v5420 = vpack.c.b16 %v3772, %v3764
  %v5421 = vpack.c.b16 %v3773, %v3765
  %v5422 = vpack.c.b16 %v3782, %v3774
  %v5423 = vpack.c.b16 %v3783, %v3775
  %v5424 = vpack.c.b16 %v3784, %v3776
  %v5425 = vpack.c.b16 %v3785, %v3777
  %v5426 = vpack.c.b16 %v3786, %v3778
  %v5427 = vpack.c.b16 %v3787, %v3779
  %v5428 = vpack.c.b16 %v3788, %v3780
  %v5429 = vpack.c.b16 %v3789, %v3781
  %v5430 = vpack.c.b16 %v3798, %v3790
  %v5431 = vpack.c.b16 %v3799, %v3791
  %v5432 = vpack.c.b16 %v3800, %v3792
  %v5433 = vpack.c.b16 %v3801, %v3793
  %v5434 = vpack.c.b16 %v3802, %v3794
  %v5435 = vpack.c.b16 %v3803, %v3795
  %v5436 = vpack.c.b16 %v3804, %v3796
  %v5437 = vpack.c.b16 %v3805, %v3797
  %v5438 = vpack.c.b16 %v3814, %v3806
  %v5439 = vpack.c.b16 %v3815, %v3807
  %v5440 = vpack.c.b16 %v3816, %v3808
  %v5441 = vpack.c.b16 %v3817, %v3809
  %v5442 = vpack.c.b16 %v3818, %v3810
  %v5443 = vpack.c.b16 %v3819, %v3811
  %v5444 = vpack.c.b16 %v3820, %v3812
  %v5445 = vpack.c.b16 %v3821, %v3813
  %v5446 = vpack.c.b16 %v3830, %v3822
  %v5447 = vpack.c.b16 %v3831, %v3823
  %v5448 = vpack.c.b16 %v3832, %v3824
  %v5449 = vpack.c.b16 %v3833, %v3825
  %v5450 = vpack.c.b16 %v3834, %v3826
  %v5451 = vpack.c.b16 %v3835, %v3827
  %v5452 = vpack.c.b16 %v3836, %v3828
  %v5453 = vpack.c.b16 %v3837, %v3829
  %v5454 = vpack.c.b16 %v3846, %v3838
  %v5455 = vpack.c.b16 %v3847, %v3839
  %v5456 = vpack.c.b16 %v3848, %v3840
  %v5457 = vpack.c.b16 %v3849, %v3841
  %v5458 = vpack.c.b16 %v3850, %v3842
  %v5459 = vpack.c.b16 %v3851, %v3843
  %v5460 = vpack.c.b16 %v3852, %v3844
  %v5461 = vpack.c.b16 %v3853, %v3845
  %v5462 = vpack.c.b16 %v3862, %v3854
  %v5463 = vpack.c.b16 %v3863, %v3855
  %v5464 = vpack.c.b16 %v3864, %v3856
  %v5465 = vpack.c.b16 %v3865, %v3857
  %v5466 = vpack.c.b16 %v3866, %v3858
  %v5467 = vpack.c.b16 %v3867, %v3859
  %v5468 = vpack.c.b16 %v3868, %v3860
  %v5469 = vpack.c.b16 %v3869, %v3861
  %v5470 = vpack.c.b16 %v3878, %v3870
  %v5471 = vpack.c.b16 %v3879, %v3871
  %v5472 = vpack.c.b16 %v3880, %v3872
  %v5473 = vpack.c.b16 %v3881, %v3873
  %v5474 = vpack.c.b16 %v3882, %v3874
  %v5475 = vpack.c.b16 %v3883, %v3875
  %v5476 = vpack.c.b16 %v3884, %v3876
  %v5477 = vpack.c.b16 %v3885, %v3877
  %v5478 = vpack.c.b16 %v3894, %v3886
  %v5479 = vpack.c.b16 %v3895, %v3887
  %v5480 = vpack.c.b16 %v3896, %v3888
  %v5481 = vpack.c.b16 %v3897, %v3889
  %v5482 = vpack.c.b16 %v3898, %v3890
  %v5483 = vpack.c.b16 %v3899, %v3891
  %v5484 = vpack.c.b16 %v3900, %v3892
  %v5485 = vpack.c.b16 %v3901, %v3893
  %v5486 = vpack.c.b16 %v3910, %v3902
  %v5487 = vpack.c.b16 %v3911, %v3903
  %v5488 = vpack.c.b16 %v3912, %v3904
  %v5489 = vpack.c.b16 %v3913, %v3905
  %v5490 = vpack.c.b16 %v3914, %v3906
  %v5491 = vpack.c.b16 %v3915, %v3907
  %v5492 = vpack.c.b16 %v3916, %v3908
  %v5493 = vpack.c.b16 %v3917, %v3909
  %v5494 = vpack.c.b16 %v3926, %v3918
  %v5495 = vpack.c.b16 %v3927, %v3919
  %v5496 = vpack.c.b16 %v3928, %v3920
  %v5497 = vpack.c.b16 %v3929, %v3921
  %v5498 = vpack.c.b16 %v3930, %v3922
  %v5499 = vpack.c.b16 %v3931, %v3923
  %v5500 = vpack.c.b16 %v3932, %v3924
  %v5501 = vpack.c.b16 %v3933, %v3925
  %v5502 = vpack.c.b16 %v3942, %v3934
  %v5503 = vpack.c.b16 %v3943, %v3935
  %v5504 = vpack.c.b16 %v3944, %v3936
  %v5505 = vpack.c.b16 %v3945, %v3937
  %v5506 = vpack.c.b16 %v3946, %v3938
  %v5507 = vpack.c.b16 %v3947, %v3939
  %v5508 = vpack.c.b16 %v3948, %v3940
  %v5509 = vpack.c.b16 %v3949, %v3941
  %v5510 = vpack.c.b16 %v3958, %v3950
  %v5511 = vpack.c.b16 %v3959, %v3951
  %v5512 = vpack.c.b16 %v3960, %v3952
  %v5513 = vpack.c.b16 %v3961, %v3953
  %v5514 = vpack.c.b16 %v3962, %v3954
  %v5515 = vpack.c.b16 %v3963, %v3955
  %v5516 = vpack.c.b16 %v3964, %v3956
  %v5517 = vpack.c.b16 %v3965, %v3957
  %v5518 = vpack.c.b16 %v3974, %v3966
  %v5519 = vpack.c.b16 %v3975, %v3967
  %v5520 = vpack.c.b16 %v3976, %v3968
  %v5521 = vpack.c.b16 %v3977, %v3969
  %v5522 = vpack.c.b16 %v3978, %v3970
  %v5523 = vpack.c.b16 %v3979, %v3971
  %v5524 = vpack.c.b16 %v3980, %v3972
  %v5525 = vpack.c.b16 %v3981, %v3973
  %v5526 = vpack.c.b16 %v3990, %v3982
  %v5527 = vpack.c.b16 %v3991, %v3983
  %v5528 = vpack.c.b16 %v3992, %v3984
  %v5529 = vpack.c.b16 %v3993, %v3985
  %v5530 = vpack.c.b16 %v3994, %v3986
  %v5531 = vpack.c.b16 %v3995, %v3987
  %v5532 = vpack.c.b16 %v3996, %v3988
  %v5533 = vpack.c.b16 %v3997, %v3989
  %v5534 = vpack.c.b16 %v4006, %v3998
  %v5535 = vpack.c.b16 %v4007, %v3999
  %v5536 = vpack.c.b16 %v4008, %v4000
  %v5537 = vpack.c.b16 %v4009, %v4001
  %v5538 = vpack.c.b16 %v4010, %v4002
  %v5539 = vpack.c.b16 %v4011, %v4003
  %v5540 = vpack.c.b16 %v4012, %v4004
  %v5541 = vpack.c.b16 %v4013, %v4005
  %v5542 = vpack.c.b16 %v4022, %v4014
  %v5543 = vpack.c.b16 %v4023, %v4015
  %v5544 = vpack.c.b16 %v4024, %v4016
  %v5545 = vpack.c.b16 %v4025, %v4017
  %v5546 = vpack.c.b16 %v4026, %v4018
  %v5547 = vpack.c.b16 %v4027, %v4019
  %v5548 = vpack.c.b16 %v4028, %v4020
  %v5549 = vpack.c.b16 %v4029, %v4021
  %v5550 = vpack.c.b16 %v4038, %v4030
  %v5551 = vpack.c.b16 %v4039, %v4031
  %v5552 = vpack.c.b16 %v4040, %v4032
  %v5553 = vpack.c.b16 %v4041, %v4033
  %v5554 = vpack.c.b16 %v4042, %v4034
  %v5555 = vpack.c.b16 %v4043, %v4035
  %v5556 = vpack.c.b16 %v4044, %v4036
  %v5557 = vpack.c.b16 %v4045, %v4037
  %v5558 = vpack.c.b16 %v4054, %v4046
  %v5559 = vpack.c.b16 %v4055, %v4047
  %v5560 = vpack.c.b16 %v4056, %v4048
  %v5561 = vpack.c.b16 %v4057, %v4049
  %v5562 = vpack.c.b16 %v4058, %v4050
  %v5563 = vpack.c.b16 %v4059, %v4051
  %v5564 = vpack.c.b16 %v4060, %v4052
  %v5565 = vpack.c.b16 %v4061, %v4053
  %v5566 = vpack.c.b16 %v4070, %v4062
  %v5567 = vpack.c.b16 %v4071, %v4063
  %v5568 = vpack.c.b16 %v4072, %v4064
  %v5569 = vpack.c.b16 %v4073, %v4065
  %v5570 = vpack.c.b16 %v4074, %v4066
  %v5571 = vpack.c.b16 %v4075, %v4067
  %v5572 = vpack.c.b16 %v4076, %v4068
  %v5573 = vpack.c.b16 %v4077, %v4069
  %v5574 = vpack.c.b16 %v4086, %v4078
  %v5575 = vpack.c.b16 %v4087, %v4079
  %v5576 = vpack.c.b16 %v4088, %v4080
  %v5577 = vpack.c.b16 %v4089, %v4081
  %v5578 = vpack.c.b16 %v4090, %v4082
  %v5579 = vpack.c.b16 %v4091, %v4083
  %v5580 = vpack.c.b16 %v4092, %v4084
  %v5581 = vpack.c.b16 %v4093, %v4085
  %v5582 = vpack.c.b16 %v4102, %v4094
  %v5583 = vpack.c.b16 %v4103, %v4095
  %v5584 = vpack.c.b16 %v4104, %v4096
  %v5585 = vpack.c.b16 %v4105, %v4097
  %v5586 = vpack.c.b16 %v4106, %v4098
  %v5587 = vpack.c.b16 %v4107, %v4099
  %v5588 = vpack.c.b16 %v4108, %v4100
  %v5589 = vpack.c.b16 %v4109, %v4101
  %v5590 = vpack.c.b16 %v4118, %v4110
  %v5591 = vpack.c.b16 %v4119, %v4111
  %v5592 = vpack.c.b16 %v4120, %v4112
  %v5593 = vpack.c.b16 %v4121, %v4113
  %v5594 = vpack.c.b16 %v4122, %v4114
  %v5595 = vpack.c.b16 %v4123, %v4115
  %v5596 = vpack.c.b16 %v4124, %v4116
  %v5597 = vpack.c.b16 %v4125, %v4117
  %v5598 = vpack.c.b16 %v4134, %v4126
  %v5599 = vpack.c.b16 %v4135, %v4127
  %v5600 = vpack.c.b16 %v4136, %v4128
  %v5601 = vpack.c.b16 %v4137, %v4129
  %v5602 = vpack.c.b16 %v4138, %v4130
  %v5603 = vpack.c.b16 %v4139, %v4131
  %v5604 = vpack.c.b16 %v4140, %v4132
  %v5605 = vpack.c.b16 %v4141, %v4133
  %v5606 = vpack.c.b16 %v4150, %v4142
  %v5607 = vpack.c.b16 %v4151, %v4143
  %v5608 = vpack.c.b16 %v4152, %v4144
  %v5609 = vpack.c.b16 %v4153, %v4145
  %v5610 = vpack.c.b16 %v4154, %v4146
  %v5611 = vpack.c.b16 %v4155, %v4147
  %v5612 = vpack.c.b16 %v4156, %v4148
  %v5613 = vpack.c.b16 %v4157, %v4149
  %v5614 = vpack.c.b16 %v4166, %v4158
  %v5615 = vpack.c.b16 %v4167, %v4159
  %v5616 = vpack.c.b16 %v4168, %v4160
  %v5617 = vpack.c.b16 %v4169, %v4161
  %v5618 = vpack.c.b16 %v4170, %v4162
  %v5619 = vpack.c.b16 %v4171, %v4163
  %v5620 = vpack.c.b16 %v4172, %v4164
  %v5621 = vpack.c.b16 %v4173, %v4165
  %v5622 = vpack.c.b16 %v4182, %v4174
  %v5623 = vpack.c.b16 %v4183, %v4175
  %v5624 = vpack.c.b16 %v4184, %v4176
  %v5625 = vpack.c.b16 %v4185, %v4177
  %v5626 = vpack.c.b16 %v4186, %v4178
  %v5627 = vpack.c.b16 %v4187, %v4179
  %v5628 = vpack.c.b16 %v4188, %v4180
  %v5629 = vpack.c.b16 %v4189, %v4181
  %v5630 = vpack.c.b16 %v4198, %v4190
  %v5631 = vpack.c.b16 %v4199, %v4191
  %v5632 = vpack.c.b16 %v4200, %v4192
  %v5633 = vpack.c.b16 %v4201, %v4193
  %v5634 = vpack.c.b16 %v4202, %v4194
  %v5635 = vpack.c.b16 %v4203, %v4195
  %v5636 = vpack.c.b16 %v4204, %v4196
  %v5637 = vpack.c.b16 %v4205, %v4197
  %v5638 = vpack.c.b16 %v4214, %v4206
  %v5639 = vpack.c.b16 %v4215, %v4207
  %v5640 = vpack.c.b16 %v4216, %v4208
  %v5641 = vpack.c.b16 %v4217, %v4209
  %v5642 = vpack.c.b16 %v4218, %v4210
  %v5643 = vpack.c.b16 %v4219, %v4211
  %v5644 = vpack.c.b16 %v4220, %v4212
  %v5645 = vpack.c.b16 %v4221, %v4213
  %v5646 = vpack.c.b16 %v4230, %v4222
  %v5647 = vpack.c.b16 %v4231, %v4223
  %v5648 = vpack.c.b16 %v4232, %v4224
  %v5649 = vpack.c.b16 %v4233, %v4225
  %v5650 = vpack.c.b16 %v4234, %v4226
  %v5651 = vpack.c.b16 %v4235, %v4227
  %v5652 = vpack.c.b16 %v4236, %v4228
  %v5653 = vpack.c.b16 %v4237, %v4229
  %v5654 = vpack.c.b16 %v4246, %v4238
  %v5655 = vpack.c.b16 %v4247, %v4239
  %v5656 = vpack.c.b16 %v4248, %v4240
  %v5657 = vpack.c.b16 %v4249, %v4241
  %v5658 = vpack.c.b16 %v4250, %v4242
  %v5659 = vpack.c.b16 %v4251, %v4243
  %v5660 = vpack.c.b16 %v4252, %v4244
  %v5661 = vpack.c.b16 %v4253, %v4245
  %v5662 = vpack.c.b16 %v4262, %v4254
  %v5663 = vpack.c.b16 %v4263, %v4255
  %v5664 = vpack.c.b16 %v4264, %v4256
  %v5665 = vpack.c.b16 %v4265, %v4257
  %v5666 = vpack.c.b16 %v4266, %v4258
  %v5667 = vpack.c.b16 %v4267, %v4259
  %v5668 = vpack.c.b16 %v4268, %v4260
  %v5669 = vpack.c.b16 %v4269, %v4261
  %v5670 = vpack.c.b16 %v4278, %v4270
  %v5671 = vpack.c.b16 %v4279, %v4271
  %v5672 = vpack.c.b16 %v4280, %v4272
  %v5673 = vpack.c.b16 %v4281, %v4273
  %v5674 = vpack.c.b16 %v4282, %v4274
  %v5675 = vpack.c.b16 %v4283, %v4275
  %v5676 = vpack.c.b16 %v4284, %v4276
  %v5677 = vpack.c.b16 %v4285, %v4277
  %v5678 = vpack.c.b16 %v4294, %v4286
  %v5679 = vpack.c.b16 %v4295, %v4287
  %v5680 = vpack.c.b16 %v4296, %v4288
  %v5681 = vpack.c.b16 %v4297, %v4289
  %v5682 = vpack.c.b16 %v4298, %v4290
  %v5683 = vpack.c.b16 %v4299, %v4291
  %v5684 = vpack.c.b16 %v4300, %v4292
  %v5685 = vpack.c.b16 %v4301, %v4293
  %v5686 = vpack.c.b16 %v4310, %v4302
  %v5687 = vpack.c.b16 %v4311, %v4303
  %v5688 = vpack.c.b16 %v4312, %v4304
  %v5689 = vpack.c.b16 %v4313, %v4305
  %v5690 = vpack.c.b16 %v4314, %v4306
  %v5691 = vpack.c.b16 %v4315, %v4307
  %v5692 = vpack.c.b16 %v4316, %v4308
  %v5693 = vpack.c.b16 %v4317, %v4309
  %v5694 = vpack.c.b16 %v4326, %v4318
  %v5695 = vpack.c.b16 %v4327, %v4319
  %v5696 = vpack.c.b16 %v4328, %v4320
  %v5697 = vpack.c.b16 %v4329, %v4321
  %v5698 = vpack.c.b16 %v4330, %v4322
  %v5699 = vpack.c.b16 %v4331, %v4323
  %v5700 = vpack.c.b16 %v4332, %v4324
  %v5701 = vpack.c.b16 %v4333, %v4325
  %v5702 = vpack.c.b16 %v4342, %v4334
  %v5703 = vpack.c.b16 %v4343, %v4335
  %v5704 = vpack.c.b16 %v4344, %v4336
  %v5705 = vpack.c.b16 %v4345, %v4337
  %v5706 = vpack.c.b16 %v4346, %v4338
  %v5707 = vpack.c.b16 %v4347, %v4339
  %v5708 = vpack.c.b16 %v4348, %v4340
  %v5709 = vpack.c.b16 %v4349, %v4341
  %v5710 = vpack.c.b16 %v4358, %v4350
  %v5711 = vpack.c.b16 %v4359, %v4351
  %v5712 = vpack.c.b16 %v4360, %v4352
  %v5713 = vpack.c.b16 %v4361, %v4353
  %v5714 = vpack.c.b16 %v4362, %v4354
  %v5715 = vpack.c.b16 %v4363, %v4355
  %v5716 = vpack.c.b16 %v4364, %v4356
  %v5717 = vpack.c.b16 %v4365, %v4357
  %v5718 = vpack.c.b16 %v4374, %v4366
  %v5719 = vpack.c.b16 %v4375, %v4367
  %v5720 = vpack.c.b16 %v4376, %v4368
  %v5721 = vpack.c.b16 %v4377, %v4369
  %v5722 = vpack.c.b16 %v4378, %v4370
  %v5723 = vpack.c.b16 %v4379, %v4371
  %v5724 = vpack.c.b16 %v4380, %v4372
  %v5725 = vpack.c.b16 %v4381, %v4373
  %v5726 = vpack.c.b16 %v4390, %v4382
  %v5727 = vpack.c.b16 %v4391, %v4383
  %v5728 = vpack.c.b16 %v4392, %v4384
  %v5729 = vpack.c.b16 %v4393, %v4385
  %v5730 = vpack.c.b16 %v4394, %v4386
  %v5731 = vpack.c.b16 %v4395, %v4387
  %v5732 = vpack.c.b16 %v4396, %v4388
  %v5733 = vpack.c.b16 %v4397, %v4389
  %v5734 = vpack.c.b16 %v4406, %v4398
  %v5735 = vpack.c.b16 %v4407, %v4399
  %v5736 = vpack.c.b16 %v4408, %v4400
  %v5737 = vpack.c.b16 %v4409, %v4401
  %v5738 = vpack.c.b16 %v4410, %v4402
  %v5739 = vpack.c.b16 %v4411, %v4403
  %v5740 = vpack.c.b16 %v4412, %v4404
  %v5741 = vpack.c.b16 %v4413, %v4405
  %v5742 = vpack.c.b16 %v4422, %v4414
  %v5743 = vpack.c.b16 %v4423, %v4415
  %v5744 = vpack.c.b16 %v4424, %v4416
  %v5745 = vpack.c.b16 %v4425, %v4417
  %v5746 = vpack.c.b16 %v4426, %v4418
  %v5747 = vpack.c.b16 %v4427, %v4419
  %v5748 = vpack.c.b16 %v4428, %v4420
  %v5749 = vpack.c.b16 %v4429, %v4421
  %v5750 = vpack.c.b16 %v4438, %v4430
  %v5751 = vpack.c.b16 %v4439, %v4431
  %v5752 = vpack.c.b16 %v4440, %v4432
  %v5753 = vpack.c.b16 %v4441, %v4433
  %v5754 = vpack.c.b16 %v4442, %v4434
  %v5755 = vpack.c.b16 %v4443, %v4435
  %v5756 = vpack.c.b16 %v4444, %v4436
  %v5757 = vpack.c.b16 %v4445, %v4437
  %v5758 = vpack.c.b16 %v4454, %v4446
  %v5759 = vpack.c.b16 %v4455, %v4447
  %v5760 = vpack.c.b16 %v4456, %v4448
  %v5761 = vpack.c.b16 %v4457, %v4449
  %v5762 = vpack.c.b16 %v4458, %v4450
  %v5763 = vpack.c.b16 %v4459, %v4451
  %v5764 = vpack.c.b16 %v4460, %v4452
  %v5765 = vpack.c.b16 %v4461, %v4453
  %v5766 = vpack.c.b16 %v4470, %v4462
  %v5767 = vpack.c.b16 %v4471, %v4463
  %v5768 = vpack.c.b16 %v4472, %v4464
  %v5769 = vpack.c.b16 %v4473, %v4465
  %v5770 = vpack.c.b16 %v4474, %v4466
  %v5771 = vpack.c.b16 %v4475, %v4467
  %v5772 = vpack.c.b16 %v4476, %v4468
  %v5773 = vpack.c.b16 %v4477, %v4469
  %v5774 = vpack.c.b16 %v4486, %v4478
  %v5775 = vpack.c.b16 %v4487, %v4479
  %v5776 = vpack.c.b16 %v4488, %v4480
  %v5777 = vpack.c.b16 %v4489, %v4481
  %v5778 = vpack.c.b16 %v4490, %v4482
  %v5779 = vpack.c.b16 %v4491, %v4483
  %v5780 = vpack.c.b16 %v4492, %v4484
  %v5781 = vpack.c.b16 %v4493, %v4485
  %v5782 = vpack.c.b16 %v4502, %v4494
  %v5783 = vpack.c.b16 %v4503, %v4495
  %v5784 = vpack.c.b16 %v4504, %v4496
  %v5785 = vpack.c.b16 %v4505, %v4497
  %v5786 = vpack.c.b16 %v4506, %v4498
  %v5787 = vpack.c.b16 %v4507, %v4499
  %v5788 = vpack.c.b16 %v4508, %v4500
  %v5789 = vpack.c.b16 %v4509, %v4501
  %v5790 = vpack.c.b16 %v4518, %v4510
  %v5791 = vpack.c.b16 %v4519, %v4511
  %v5792 = vpack.c.b16 %v4520, %v4512
  %v5793 = vpack.c.b16 %v4521, %v4513
  %v5794 = vpack.c.b16 %v4522, %v4514
  %v5795 = vpack.c.b16 %v4523, %v4515
  %v5796 = vpack.c.b16 %v4524, %v4516
  %v5797 = vpack.c.b16 %v4525, %v4517
  %v5798 = vpack.c.b16 %v4534, %v4526
  %v5799 = vpack.c.b16 %v4535, %v4527
  %v5800 = vpack.c.b16 %v4536, %v4528
  %v5801 = vpack.c.b16 %v4537, %v4529
  %v5802 = vpack.c.b16 %v4538, %v4530
  %v5803 = vpack.c.b16 %v4539, %v4531
  %v5804 = vpack.c.b16 %v4540, %v4532
  %v5805 = vpack.c.b16 %v4541, %v4533
  %v5806 = vpack.c.b16 %v4550, %v4542
  %v5807 = vpack.c.b16 %v4551, %v4543
  %v5808 = vpack.c.b16 %v4552, %v4544
  %v5809 = vpack.c.b16 %v4553, %v4545
  %v5810 = vpack.c.b16 %v4554, %v4546
  %v5811 = vpack.c.b16 %v4555, %v4547
  %v5812 = vpack.c.b16 %v4556, %v4548
  %v5813 = vpack.c.b16 %v4557, %v4549
  %v5814 = vpack.c.b16 %v4566, %v4558
  %v5815 = vpack.c.b16 %v4567, %v4559
  %v5816 = vpack.c.b16 %v4568, %v4560
  %v5817 = vpack.c.b16 %v4569, %v4561
  %v5818 = vpack.c.b16 %v4570, %v4562
  %v5819 = vpack.c.b16 %v4571, %v4563
  %v5820 = vpack.c.b16 %v4572, %v4564
  %v5821 = vpack.c.b16 %v4573, %v4565
  %v5822 = vpack.c.b16 %v4582, %v4574
  %v5823 = vpack.c.b16 %v4583, %v4575
  %v5824 = vpack.c.b16 %v4584, %v4576
  %v5825 = vpack.c.b16 %v4585, %v4577
  %v5826 = vpack.c.b16 %v4586, %v4578
  %v5827 = vpack.c.b16 %v4587, %v4579
  %v5828 = vpack.c.b16 %v4588, %v4580
  %v5829 = vpack.c.b16 %v4589, %v4581
  %v5830 = vpack.c.b16 %v4598, %v4590
  %v5831 = vpack.c.b16 %v4599, %v4591
  %v5832 = vpack.c.b16 %v4600, %v4592
  %v5833 = vpack.c.b16 %v4601, %v4593
  %v5834 = vpack.c.b16 %v4602, %v4594
  %v5835 = vpack.c.b16 %v4603, %v4595
  %v5836 = vpack.c.b16 %v4604, %v4596
  %v5837 = vpack.c.b16 %v4605, %v4597
  %v5838 = vpack.c.b16 %v4614, %v4606
  %v5839 = vpack.c.b16 %v4615, %v4607
  %v5840 = vpack.c.b16 %v4616, %v4608
  %v5841 = vpack.c.b16 %v4617, %v4609
  %v5842 = vpack.c.b16 %v4618, %v4610
  %v5843 = vpack.c.b16 %v4619, %v4611
  %v5844 = vpack.c.b16 %v4620, %v4612
  %v5845 = vpack.c.b16 %v4621, %v4613
  %v5846 = vpack.c.b16 %v4630, %v4622
  %v5847 = vpack.c.b16 %v4631, %v4623
  %v5848 = vpack.c.b16 %v4632, %v4624
  %v5849 = vpack.c.b16 %v4633, %v4625
  %v5850 = vpack.c.b16 %v4634, %v4626
  %v5851 = vpack.c.b16 %v4635, %v4627
  %v5852 = vpack.c.b16 %v4636, %v4628
  %v5853 = vpack.c.b16 %v4637, %v4629
  %v5854 = vpack.c.b16 %v4646, %v4638
  %v5855 = vpack.c.b16 %v4647, %v4639
  %v5856 = vpack.c.b16 %v4648, %v4640
  %v5857 = vpack.c.b16 %v4649, %v4641
  %v5858 = vpack.c.b16 %v4650, %v4642
  %v5859 = vpack.c.b16 %v4651, %v4643
  %v5860 = vpack.c.b16 %v4652, %v4644
  %v5861 = vpack.c.b16 %v4653, %v4645
  %v5862 = vpack.c.b16 %v4662, %v4654
  %v5863 = vpack.c.b16 %v4663, %v4655
  %v5864 = vpack.c.b16 %v4664, %v4656
  %v5865 = vpack.c.b16 %v4665, %v4657
  %v5866 = vpack.c.b16 %v4666, %v4658
  %v5867 = vpack.c.b16 %v4667, %v4659
  %v5868 = vpack.c.b16 %v4668, %v4660
  %v5869 = vpack.c.b16 %v4669, %v4661
  %v5870 = vpack.c.b16 %v4678, %v4670
  %v5871 = vpack.c.b16 %v4679, %v4671
  %v5872 = vpack.c.b16 %v4680, %v4672
  %v5873 = vpack.c.b16 %v4681, %v4673
  %v5874 = vpack.c.b16 %v4682, %v4674
  %v5875 = vpack.c.b16 %v4683, %v4675
  %v5876 = vpack.c.b16 %v4684, %v4676
  %v5877 = vpack.c.b16 %v4685, %v4677
  %v5878 = vpack.c.b16 %v4694, %v4686
  %v5879 = vpack.c.b16 %v4695, %v4687
  %v5880 = vpack.c.b16 %v4696, %v4688
  %v5881 = vpack.c.b16 %v4697, %v4689
  %v5882 = vpack.c.b16 %v4698, %v4690
  %v5883 = vpack.c.b16 %v4699, %v4691
  %v5884 = vpack.c.b16 %v4700, %v4692
  %v5885 = vpack.c.b16 %v4701, %v4693
  %v5886 = vpack.c.b16 %v4710, %v4702
  %v5887 = vpack.c.b16 %v4711, %v4703
  %v5888 = vpack.c.b16 %v4712, %v4704
  %v5889 = vpack.c.b16 %v4713, %v4705
  %v5890 = vpack.c.b16 %v4714, %v4706
  %v5891 = vpack.c.b16 %v4715, %v4707
  %v5892 = vpack.c.b16 %v4716, %v4708
  %v5893 = vpack.c.b16 %v4717, %v4709
  %v5894 = vpack.c.b16 %v4726, %v4718
  %v5895 = vpack.c.b16 %v4727, %v4719
  %v5896 = vpack.c.b16 %v4728, %v4720
  %v5897 = vpack.c.b16 %v4729, %v4721
  %v5898 = vpack.c.b16 %v4730, %v4722
  %v5899 = vpack.c.b16 %v4731, %v4723
  %v5900 = vpack.c.b16 %v4732, %v4724
  %v5901 = vpack.c.b16 %v4733, %v4725
  %v5902 = vpack.c.b16 %v4742, %v4734
  %v5903 = vpack.c.b16 %v4743, %v4735
  %v5904 = vpack.c.b16 %v4744, %v4736
  %v5905 = vpack.c.b16 %v4745, %v4737
  %v5906 = vpack.c.b16 %v4746, %v4738
  %v5907 = vpack.c.b16 %v4747, %v4739
  %v5908 = vpack.c.b16 %v4748, %v4740
  %v5909 = vpack.c.b16 %v4749, %v4741
  %v5910 = vpack.c.b16 %v4758, %v4750
  %v5911 = vpack.c.b16 %v4759, %v4751
  %v5912 = vpack.c.b16 %v4760, %v4752
  %v5913 = vpack.c.b16 %v4761, %v4753
  %v5914 = vpack.c.b16 %v4762, %v4754
  %v5915 = vpack.c.b16 %v4763, %v4755
  %v5916 = vpack.c.b16 %v4764, %v4756
  %v5917 = vpack.c.b16 %v4765, %v4757
  %v5918 = vpack.c.b16 %v4774, %v4766
  %v5919 = vpack.c.b16 %v4775, %v4767
  %v5920 = vpack.c.b16 %v4776, %v4768
  %v5921 = vpack.c.b16 %v4777, %v4769
  %v5922 = vpack.c.b16 %v4778, %v4770
  %v5923 = vpack.c.b16 %v4779, %v4771
  %v5924 = vpack.c.b16 %v4780, %v4772
  %v5925 = vpack.c.b16 %v4781, %v4773
  %v5926 = vpack.c.b16 %v4790, %v4782
  %v5927 = vpack.c.b16 %v4791, %v4783
  %v5928 = vpack.c.b16 %v4792, %v4784
  %v5929 = vpack.c.b16 %v4793, %v4785
  %v5930 = vpack.c.b16 %v4794, %v4786
  %v5931 = vpack.c.b16 %v4795, %v4787
  %v5932 = vpack.c.b16 %v4796, %v4788
  %v5933 = vpack.c.b16 %v4797, %v4789
  %v5934 = vpack.c.b16 %v4806, %v4798
  %v5935 = vpack.c.b16 %v4807, %v4799
  %v5936 = vpack.c.b16 %v4808, %v4800
  %v5937 = vpack.c.b16 %v4809, %v4801
  %v5938 = vpack.c.b16 %v4810, %v4802
  %v5939 = vpack.c.b16 %v4811, %v4803
  %v5940 = vpack.c.b16 %v4812, %v4804
  %v5941 = vpack.c.b16 %v4813, %v4805
  %v5942 = vpack.c.b16 %v4822, %v4814
  %v5943 = vpack.c.b16 %v4823, %v4815
  %v5944 = vpack.c.b16 %v4824, %v4816
  %v5945 = vpack.c.b16 %v4825, %v4817
  %v5946 = vpack.c.b16 %v4826, %v4818
  %v5947 = vpack.c.b16 %v4827, %v4819
  %v5948 = vpack.c.b16 %v4828, %v4820
  %v5949 = vpack.c.b16 %v4829, %v4821
  %v5950 = vpack.c.b16 %v4838, %v4830
  %v5951 = vpack.c.b16 %v4839, %v4831
  %v5952 = vpack.c.b16 %v4840, %v4832
  %v5953 = vpack.c.b16 %v4841, %v4833
  %v5954 = vpack.c.b16 %v4842, %v4834
  %v5955 = vpack.c.b16 %v4843, %v4835
  %v5956 = vpack.c.b16 %v4844, %v4836
  %v5957 = vpack.c.b16 %v4845, %v4837
  %v5958 = vpack.c.b16 %v4854, %v4846
  %v5959 = vpack.c.b16 %v4855, %v4847
  %v5960 = vpack.c.b16 %v4856, %v4848
  %v5961 = vpack.c.b16 %v4857, %v4849
  %v5962 = vpack.c.b16 %v4858, %v4850
  %v5963 = vpack.c.b16 %v4859, %v4851
  %v5964 = vpack.c.b16 %v4860, %v4852
  %v5965 = vpack.c.b16 %v4861, %v4853
  %v5966 = vpack.c.b16 %v4870, %v4862
  %v5967 = vpack.c.b16 %v4871, %v4863
  %v5968 = vpack.c.b16 %v4872, %v4864
  %v5969 = vpack.c.b16 %v4873, %v4865
  %v5970 = vpack.c.b16 %v4874, %v4866
  %v5971 = vpack.c.b16 %v4875, %v4867
  %v5972 = vpack.c.b16 %v4876, %v4868
  %v5973 = vpack.c.b16 %v4877, %v4869
  %v5974 = vpack.c.b16 %v4886, %v4878
  %v5975 = vpack.c.b16 %v4887, %v4879
  %v5976 = vpack.c.b16 %v4888, %v4880
  %v5977 = vpack.c.b16 %v4889, %v4881
  %v5978 = vpack.c.b16 %v4890, %v4882
  %v5979 = vpack.c.b16 %v4891, %v4883
  %v5980 = vpack.c.b16 %v4892, %v4884
  %v5981 = vpack.c.b16 %v4893, %v4885
  %v5982 = vpack.c.b16 %v4902, %v4894
  %v5983 = vpack.c.b16 %v4903, %v4895
  %v5984 = vpack.c.b16 %v4904, %v4896
  %v5985 = vpack.c.b16 %v4905, %v4897
  %v5986 = vpack.c.b16 %v4906, %v4898
  %v5987 = vpack.c.b16 %v4907, %v4899
  %v5988 = vpack.c.b16 %v4908, %v4900
  %v5989 = vpack.c.b16 %v4909, %v4901
  %v5990 = vpack.c.b16 %v4918, %v4910
  %v5991 = vpack.c.b16 %v4919, %v4911
  %v5992 = vpack.c.b16 %v4920, %v4912
  %v5993 = vpack.c.b16 %v4921, %v4913
  %v5994 = vpack.c.b16 %v4922, %v4914
  %v5995 = vpack.c.b16 %v4923, %v4915
  %v5996 = vpack.c.b16 %v4924, %v4916
  %v5997 = vpack.c.b16 %v4925, %v4917
  %v5998 = vpack.c.b16 %v4934, %v4926
  %v5999 = vpack.c.b16 %v4935, %v4927
  %v6000 = vpack.c.b16 %v4936, %v4928
  %v6001 = vpack.c.b16 %v4937, %v4929
  %v6002 = vpack.c.b16 %v4938, %v4930
  %v6003 = vpack.c.b16 %v4939, %v4931
  %v6004 = vpack.c.b16 %v4940, %v4932
  %v6005 = vpack.c.b16 %v4941, %v4933
  %v6006 = vpack.c.b16 %v4950, %v4942
  %v6007 = vpack.c.b16 %v4951, %v4943
  %v6008 = vpack.c.b16 %v4952, %v4944
  %v6009 = vpack.c.b16 %v4953, %v4945
  %v6010 = vpack.c.b16 %v4954, %v4946
  %v6011 = vpack.c.b16 %v4955, %v4947
  %v6012 = vpack.c.b16 %v4956, %v4948
  %v6013 = vpack.c.b16 %v4957, %v4949
  %v6014 = vpack.c.b16 %v4966, %v4958
  %v6015 = vpack.c.b16 %v4967, %v4959
  %v6016 = vpack.c.b16 %v4968, %v4960
  %v6017 = vpack.c.b16 %v4969, %v4961
  %v6018 = vpack.c.b16 %v4970, %v4962
  %v6019 = vpack.c.b16 %v4971, %v4963
  %v6020 = vpack.c.b16 %v4972, %v4964
  %v6021 = vpack.c.b16 %v4973, %v4965
  %v6022 = vpack.c.b16 %v4982, %v4974
  %v6023 = vpack.c.b16 %v4983, %v4975
  %v6024 = vpack.c.b16 %v4984, %v4976
  %v6025 = vpack.c.b16 %v4985, %v4977
  %v6026 = vpack.c.b16 %v4986, %v4978
  %v6027 = vpack.c.b16 %v4987, %v4979
  %v6028 = vpack.c.b16 %v4988, %v4980
  %v6029 = vpack.c.b16 %v4989, %v4981
  %v6030 = vpack.c.b16 %v4998, %v4990
  %v6031 = vpack.c.b16 %v4999, %v4991
  %v6032 = vpack.c.b16 %v5000, %v4992
  %v6033 = vpack.c.b16 %v5001, %v4993
  %v6034 = vpack.c.b16 %v5002, %v4994
  %v6035 = vpack.c.b16 %v5003, %v4995
  %v6036 = vpack.c.b16 %v5004, %v4996
  %v6037 = vpack.c.b16 %v5005, %v4997
  %v6038 = vpack.c.b16 %v5014, %v5006
  %v6039 = vpack.c.b16 %v5015, %v5007
  %v6040 = vpack.c.b16 %v5016, %v5008
  %v6041 = vpack.c.b16 %v5017, %v5009
  %v6042 = vpack.c.b16 %v5018, %v5010
  %v6043 = vpack.c.b16 %v5019, %v5011
  %v6044 = vpack.c.b16 %v5020, %v5012
  %v6045 = vpack.c.b16 %v5021, %v5013
  %7070 = vmatprep.subr.bf16.mxu0 %v5023
  %7071 = vmatpush1.bf16.msra.mxu0 %v5022
  %7072 = vmatprep.subr.bf16.mxu0 %v5031
  %7073 = vmatpush1.bf16.msra.mxu0 %v5030
  %7074 = vmatprep.subr.bf16.mxu0 %v5039
  %7075 = vmatpush1.bf16.msra.mxu0 %v5038
  %7076 = vmatprep.subr.bf16.mxu0 %v5047
  %7077 = vmatpush1.bf16.msra.mxu0 %v5046
  %7078 = vmatprep.subr.bf16.mxu0 %v5055
  %7079 = vmatpush1.bf16.msra.mxu0 %v5054
  %7080 = vmatprep.subr.bf16.mxu0 %v5063
  %7081 = vmatpush1.bf16.msra.mxu0 %v5062
  %7082 = vmatprep.subr.bf16.mxu0 %v5071
  %7083 = vmatpush1.bf16.msra.mxu0 %v5070
  %7084 = vmatprep.subr.bf16.mxu0 %v5079
  %7085 = vmatpush1.bf16.msra.mxu0 %v5078
  %7086 = vmatprep.subr.bf16.mxu0 %v5087
  %7087 = vmatpush1.bf16.msra.mxu0 %v5086
  %7088 = vmatprep.subr.bf16.mxu0 %v5095
  %7089 = vmatpush1.bf16.msra.mxu0 %v5094
  %7090 = vmatprep.subr.bf16.mxu0 %v5103
  %7091 = vmatpush1.bf16.msra.mxu0 %v5102
  %7092 = vmatprep.subr.bf16.mxu0 %v5111
  %7093 = vmatpush1.bf16.msra.mxu0 %v5110
  %7094 = vmatprep.subr.bf16.mxu0 %v5119
  %7095 = vmatpush1.bf16.msra.mxu0 %v5118
  %7096 = vmatprep.subr.bf16.mxu0 %v5127
  %7097 = vmatpush1.bf16.msra.mxu0 %v5126
  %7098 = vmatprep.subr.bf16.mxu0 %v5135
  %7099 = vmatpush1.bf16.msra.mxu0 %v5134
  %7100 = vmatprep.subr.bf16.mxu0 %v5143
  %7101 = vmatpush1.bf16.msra.mxu0 %v5142
  %7102 = vmatprep.mubr.bf16.mxu0 %v1854
  %7103 = vmatmul.mubr.bf16.gmra.mrb[0].mxu0 %v1840
  %v7104 = vpop.f32.mrb[0].mxu0
  %v7105 = vadd.f32 %v1729, %v7104
  %v7106 = vpop.f32.mrb[0].mxu0
  %v7107 = vadd.f32 %v1733, %v7106
  %v7108 = vpop.f32.mrb[0].mxu0
  %v7109 = vpop.f32.mrb[0].mxu0
  %7110 = vdwg.mxu0
  %7111 = vmatprep.subr.bf16.mxu0 %v5151
  %7112 = vmatpush1.bf16.msra.mxu0 %v5150
  %7113 = vmatprep.subr.bf16.mxu0 %v5159
  %7114 = vmatpush1.bf16.msra.mxu0 %v5158
  %7115 = vmatprep.subr.bf16.mxu0 %v5167
  %7116 = vmatpush1.bf16.msra.mxu0 %v5166
  %7117 = vmatprep.subr.bf16.mxu0 %v5175
  %7118 = vmatpush1.bf16.msra.mxu0 %v5174
  %7119 = vmatprep.subr.bf16.mxu0 %v5183
  %7120 = vmatpush1.bf16.msra.mxu0 %v5182
  %7121 = vmatprep.subr.bf16.mxu0 %v5191
  %7122 = vmatpush1.bf16.msra.mxu0 %v5190
  %7123 = vmatprep.subr.bf16.mxu0 %v5199
  %7124 = vmatpush1.bf16.msra.mxu0 %v5198
  %7125 = vmatprep.subr.bf16.mxu0 %v5207
  %7126 = vmatpush1.bf16.msra.mxu0 %v5206
  %7127 = vmatprep.subr.bf16.mxu0 %v5215
  %7128 = vmatpush1.bf16.msra.mxu0 %v5214
  %7129 = vmatprep.subr.bf16.mxu0 %v5223
  %7130 = vmatpush1.bf16.msra.mxu0 %v5222
  %7131 = vmatprep.subr.bf16.mxu0 %v5231
  %7132 = vmatpush1.bf16.msra.mxu0 %v5230
  %7133 = vmatprep.subr.bf16.mxu0 %v5239
  %7134 = vmatpush1.bf16.msra.mxu0 %v5238
  %7135 = vmatprep.subr.bf16.mxu0 %v5247
  %7136 = vmatpush1.bf16.msra.mxu0 %v5246
  %7137 = vmatprep.subr.bf16.mxu0 %v5255
  %7138 = vmatpush1.bf16.msra.mxu0 %v5254
  %7139 = vmatprep.subr.bf16.mxu0 %v5263
  %7140 = vmatpush1.bf16.msra.mxu0 %v5262
  %7141 = vmatprep.subr.bf16.mxu0 %v5271
  %7142 = vmatpush1.bf16.msra.mxu0 %v5270
  %7143 = vmatprep.mubr.bf16.mxu0 %v1864
  %7144 = vmatmul.mubr.bf16.gmra.mrb[0].mxu0 %v1862
  %v7145 = vpop.f32.mrb[0].mxu0
  %v7146 = vadd.f32 %v7105, %v7145
  %v7147 = vpop.f32.mrb[0].mxu0
  %v7148 = vadd.f32 %v7107, %v7147
  %v7149 = vpop.f32.mrb[0].mxu0
  %v7150 = vpop.f32.mrb[0].mxu0
  %7151 = vdwg.mxu0
  %7152 = vmatprep.subr.bf16.mxu0 %v5279
  %7153 = vmatpush1.bf16.msra.mxu0 %v5278
  %7154 = vmatprep.subr.bf16.mxu0 %v5287
  %7155 = vmatpush1.bf16.msra.mxu0 %v5286
  %7156 = vmatprep.subr.bf16.mxu0 %v5295
  %7157 = vmatpush1.bf16.msra.mxu0 %v5294
  %7158 = vmatprep.subr.bf16.mxu0 %v5303
  %7159 = vmatpush1.bf16.msra.mxu0 %v5302
  %7160 = vmatprep.subr.bf16.mxu0 %v5311
  %7161 = vmatpush1.bf16.msra.mxu0 %v5310
  %7162 = vmatprep.subr.bf16.mxu0 %v5319
  %7163 = vmatpush1.bf16.msra.mxu0 %v5318
  %7164 = vmatprep.subr.bf16.mxu0 %v5327
  %7165 = vmatpush1.bf16.msra.mxu0 %v5326
  %7166 = vmatprep.subr.bf16.mxu0 %v5335
  %7167 = vmatpush1.bf16.msra.mxu0 %v5334
  %7168 = vmatprep.subr.bf16.mxu0 %v5343
  %7169 = vmatpush1.bf16.msra.mxu0 %v5342
  %7170 = vmatprep.subr.bf16.mxu0 %v5351
  %7171 = vmatpush1.bf16.msra.mxu0 %v5350
  %7172 = vmatprep.subr.bf16.mxu0 %v5359
  %7173 = vmatpush1.bf16.msra.mxu0 %v5358
  %7174 = vmatprep.subr.bf16.mxu0 %v5367
  %7175 = vmatpush1.bf16.msra.mxu0 %v5366
  %7176 = vmatprep.subr.bf16.mxu0 %v5375
  %7177 = vmatpush1.bf16.msra.mxu0 %v5374
  %7178 = vmatprep.subr.bf16.mxu0 %v5383
  %7179 = vmatpush1.bf16.msra.mxu0 %v5382
  %7180 = vmatprep.subr.bf16.mxu0 %v5391
  %7181 = vmatpush1.bf16.msra.mxu0 %v5390
  %7182 = vmatprep.subr.bf16.mxu0 %v5399
  %7183 = vmatpush1.bf16.msra.mxu0 %v5398
  %7184 = vmatprep.mubr.bf16.mxu0 %v1861
  %7185 = vmatmul.mubr.bf16.gmra.mrb[0].mxu0 %v1847
  %v7186 = vpop.f32.mrb[0].mxu0
  %v7187 = vadd.f32 %v7146, %v7186
  %v7188 = vpop.f32.mrb[0].mxu0
  %v7189 = vadd.f32 %v7148, %v7188
  %v7190 = vpop.f32.mrb[0].mxu0
  %v7191 = vpop.f32.mrb[0].mxu0
  %7192 = vdwg.mxu0
  %7193 = vmatprep.subr.bf16.mxu0 %v5407
  %7194 = vmatpush1.bf16.msra.mxu0 %v5406
  %7195 = vmatprep.subr.bf16.mxu0 %v5415
  %7196 = vmatpush1.bf16.msra.mxu0 %v5414
  %7197 = vmatprep.subr.bf16.mxu0 %v5423
  %7198 = vmatpush1.bf16.msra.mxu0 %v5422
  %7199 = vmatprep.subr.bf16.mxu0 %v5431
  %7200 = vmatpush1.bf16.msra.mxu0 %v5430
  %7201 = vmatprep.subr.bf16.mxu0 %v5439
  %7202 = vmatpush1.bf16.msra.mxu0 %v5438
  %7203 = vmatprep.subr.bf16.mxu0 %v5447
  %7204 = vmatpush1.bf16.msra.mxu0 %v5446
  %7205 = vmatprep.subr.bf16.mxu0 %v5455
  %7206 = vmatpush1.bf16.msra.mxu0 %v5454
  %7207 = vmatprep.subr.bf16.mxu0 %v5463
  %7208 = vmatpush1.bf16.msra.mxu0 %v5462
  %7209 = vmatprep.subr.bf16.mxu0 %v5471
  %7210 = vmatpush1.bf16.msra.mxu0 %v5470
  %7211 = vmatprep.subr.bf16.mxu0 %v5479
  %7212 = vmatpush1.bf16.msra.mxu0 %v5478
  %7213 = vmatprep.subr.bf16.mxu0 %v5487
  %7214 = vmatpush1.bf16.msra.mxu0 %v5486
  %7215 = vmatprep.subr.bf16.mxu0 %v5495
  %7216 = vmatpush1.bf16.msra.mxu0 %v5494
  %7217 = vmatprep.subr.bf16.mxu0 %v5503
  %7218 = vmatpush1.bf16.msra.mxu0 %v5502
  %7219 = vmatprep.subr.bf16.mxu0 %v5511
  %7220 = vmatpush1.bf16.msra.mxu0 %v5510
  %7221 = vmatprep.subr.bf16.mxu0 %v5519
  %7222 = vmatpush1.bf16.msra.mxu0 %v5518
  %7223 = vmatprep.subr.bf16.mxu0 %v5527
  %7224 = vmatpush1.bf16.msra.mxu0 %v5526
  %7225 = vmatprep.mubr.bf16.mxu0 %v1865
  %7226 = vmatmul.mubr.bf16.gmra.mrb[0].mxu0 %v1863
  %v7227 = vpop.f32.mrb[0].mxu0
  %v7228 = vadd.f32 %v7187, %v7227
  %v7229 = vpop.f32.mrb[0].mxu0
  %v7230 = vadd.f32 %v7189, %v7229
  %v7231 = vpop.f32.mrb[0].mxu0
  %v7232 = vpop.f32.mrb[0].mxu0
  %7233 = vdwg.mxu0
  %7234 = vmatprep.subr.bf16.mxu0 %v5535
  %7235 = vmatpush1.bf16.msra.mxu0 %v5534
  %7236 = vmatprep.subr.bf16.mxu0 %v5543
  %7237 = vmatpush1.bf16.msra.mxu0 %v5542
  %7238 = vmatprep.subr.bf16.mxu0 %v5551
  %7239 = vmatpush1.bf16.msra.mxu0 %v5550
  %7240 = vmatprep.subr.bf16.mxu0 %v5559
  %7241 = vmatpush1.bf16.msra.mxu0 %v5558
  %7242 = vmatprep.subr.bf16.mxu0 %v5567
  %7243 = vmatpush1.bf16.msra.mxu0 %v5566
  %7244 = vmatprep.subr.bf16.mxu0 %v5575
  %7245 = vmatpush1.bf16.msra.mxu0 %v5574
  %7246 = vmatprep.subr.bf16.mxu0 %v5583
  %7247 = vmatpush1.bf16.msra.mxu0 %v5582
  %7248 = vmatprep.subr.bf16.mxu0 %v5591
  %7249 = vmatpush1.bf16.msra.mxu0 %v5590
  %7250 = vmatprep.subr.bf16.mxu0 %v5599
  %7251 = vmatpush1.bf16.msra.mxu0 %v5598
  %7252 = vmatprep.subr.bf16.mxu0 %v5607
  %7253 = vmatpush1.bf16.msra.mxu0 %v5606
  %7254 = vmatprep.subr.bf16.mxu0 %v5615
  %7255 = vmatpush1.bf16.msra.mxu0 %v5614
  %7256 = vmatprep.subr.bf16.mxu0 %v5623
  %7257 = vmatpush1.bf16.msra.mxu0 %v5622
  %7258 = vmatprep.subr.bf16.mxu0 %v5631
  %7259 = vmatpush1.bf16.msra.mxu0 %v5630
  %7260 = vmatprep.subr.bf16.mxu0 %v5639
  %7261 = vmatpush1.bf16.msra.mxu0 %v5638
  %7262 = vmatprep.subr.bf16.mxu0 %v5647
  %7263 = vmatpush1.bf16.msra.mxu0 %v5646
  %7264 = vmatprep.subr.bf16.mxu0 %v5655
  %7265 = vmatpush1.bf16.msra.mxu0 %v5654
  %7266 = vmatprep.mubr.bf16.mxu0 %v1922
  %7267 = vmatmul.mubr.bf16.gmra.mrb[0].mxu0 %v1908
  %v7268 = vpop.f32.mrb[0].mxu0
  %v7269 = vadd.f32 %v7228, %v7268
  %v7270 = vpop.f32.mrb[0].mxu0
  %v7271 = vadd.f32 %v7230, %v7270
  %v7272 = vpop.f32.mrb[0].mxu0
  %v7273 = vpop.f32.mrb[0].mxu0
  %7274 = vdwg.mxu0
  %7275 = vmatprep.subr.bf16.mxu0 %v5663
  %7276 = vmatpush1.bf16.msra.mxu0 %v5662
  %7277 = vmatprep.subr.bf16.mxu0 %v5671
  %7278 = vmatpush1.bf16.msra.mxu0 %v5670
  %7279 = vmatprep.subr.bf16.mxu0 %v5679
  %7280 = vmatpush1.bf16.msra.mxu0 %v5678
  %7281 = vmatprep.subr.bf16.mxu0 %v5687
  %7282 = vmatpush1.bf16.msra.mxu0 %v5686
  %7283 = vmatprep.subr.bf16.mxu0 %v5695
  %7284 = vmatpush1.bf16.msra.mxu0 %v5694
  %7285 = vmatprep.subr.bf16.mxu0 %v5703
  %7286 = vmatpush1.bf16.msra.mxu0 %v5702
  %7287 = vmatprep.subr.bf16.mxu0 %v5711
  %7288 = vmatpush1.bf16.msra.mxu0 %v5710
  %7289 = vmatprep.subr.bf16.mxu0 %v5719
  %7290 = vmatpush1.bf16.msra.mxu0 %v5718
  %7291 = vmatprep.subr.bf16.mxu0 %v5727
  %7292 = vmatpush1.bf16.msra.mxu0 %v5726
  %7293 = vmatprep.subr.bf16.mxu0 %v5735
  %7294 = vmatpush1.bf16.msra.mxu0 %v5734
  %7295 = vmatprep.subr.bf16.mxu0 %v5743
  %7296 = vmatpush1.bf16.msra.mxu0 %v5742
  %7297 = vmatprep.subr.bf16.mxu0 %v5751
  %7298 = vmatpush1.bf16.msra.mxu0 %v5750
  %7299 = vmatprep.subr.bf16.mxu0 %v5759
  %7300 = vmatpush1.bf16.msra.mxu0 %v5758
  %7301 = vmatprep.subr.bf16.mxu0 %v5767
  %7302 = vmatpush1.bf16.msra.mxu0 %v5766
  %7303 = vmatprep.subr.bf16.mxu0 %v5775
  %7304 = vmatpush1.bf16.msra.mxu0 %v5774
  %7305 = vmatprep.subr.bf16.mxu0 %v5783
  %7306 = vmatpush1.bf16.msra.mxu0 %v5782
  %7307 = vmatprep.mubr.bf16.mxu0 %v1932
  %7308 = vmatmul.mubr.bf16.gmra.mrb[0].mxu0 %v1930
  %v7309 = vpop.f32.mrb[0].mxu0
  %v7310 = vadd.f32 %v7269, %v7309
  %v7311 = vpop.f32.mrb[0].mxu0
  %v7312 = vadd.f32 %v7271, %v7311
  %v7313 = vpop.f32.mrb[0].mxu0
  %v7314 = vpop.f32.mrb[0].mxu0
  %7315 = vdwg.mxu0
  %7316 = vmatprep.subr.bf16.mxu0 %v5791
  %7317 = vmatpush1.bf16.msra.mxu0 %v5790
  %7318 = vmatprep.subr.bf16.mxu0 %v5799
  %7319 = vmatpush1.bf16.msra.mxu0 %v5798
  %7320 = vmatprep.subr.bf16.mxu0 %v5807
  %7321 = vmatpush1.bf16.msra.mxu0 %v5806
  %7322 = vmatprep.subr.bf16.mxu0 %v5815
  %7323 = vmatpush1.bf16.msra.mxu0 %v5814
  %7324 = vmatprep.subr.bf16.mxu0 %v5823
  %7325 = vmatpush1.bf16.msra.mxu0 %v5822
  %7326 = vmatprep.subr.bf16.mxu0 %v5831
  %7327 = vmatpush1.bf16.msra.mxu0 %v5830
  %7328 = vmatprep.subr.bf16.mxu0 %v5839
  %7329 = vmatpush1.bf16.msra.mxu0 %v5838
  %7330 = vmatprep.subr.bf16.mxu0 %v5847
  %7331 = vmatpush1.bf16.msra.mxu0 %v5846
  %7332 = vmatprep.subr.bf16.mxu0 %v5855
  %7333 = vmatpush1.bf16.msra.mxu0 %v5854
  %7334 = vmatprep.subr.bf16.mxu0 %v5863
  %7335 = vmatpush1.bf16.msra.mxu0 %v5862
  %7336 = vmatprep.subr.bf16.mxu0 %v5871
  %7337 = vmatpush1.bf16.msra.mxu0 %v5870
  %7338 = vmatprep.subr.bf16.mxu0 %v5879
  %7339 = vmatpush1.bf16.msra.mxu0 %v5878
  %7340 = vmatprep.subr.bf16.mxu0 %v5887
  %7341 = vmatpush1.bf16.msra.mxu0 %v5886
  %7342 = vmatprep.subr.bf16.mxu0 %v5895
  %7343 = vmatpush1.bf16.msra.mxu0 %v5894
  %7344 = vmatprep.subr.bf16.mxu0 %v5903
  %7345 = vmatpush1.bf16.msra.mxu0 %v5902
  %7346 = vmatprep.subr.bf16.mxu0 %v5911
  %7347 = vmatpush1.bf16.msra.mxu0 %v5910
  %7348 = vmatprep.mubr.bf16.mxu0 %v1929
  %7349 = vmatmul.mubr.bf16.gmra.mrb[0].mxu0 %v1915
  %v7350 = vpop.f32.mrb[0].mxu0
  %v7351 = vadd.f32 %v7310, %v7350
  %v7352 = vpop.f32.mrb[0].mxu0
  %v7353 = vadd.f32 %v7312, %v7352
  %v7354 = vpop.f32.mrb[0].mxu0
  %v7355 = vpop.f32.mrb[0].mxu0
  %7356 = vdwg.mxu0
  %7357 = vmatprep.subr.bf16.mxu0 %v5919
  %7358 = vmatpush1.bf16.msra.mxu0 %v5918
  %7359 = vmatprep.subr.bf16.mxu0 %v5927
  %7360 = vmatpush1.bf16.msra.mxu0 %v5926
  %7361 = vmatprep.subr.bf16.mxu0 %v5935
  %7362 = vmatpush1.bf16.msra.mxu0 %v5934
  %7363 = vmatprep.subr.bf16.mxu0 %v5943
  %7364 = vmatpush1.bf16.msra.mxu0 %v5942
  %7365 = vmatprep.subr.bf16.mxu0 %v5951
  %7366 = vmatpush1.bf16.msra.mxu0 %v5950
  %7367 = vmatprep.subr.bf16.mxu0 %v5959
  %7368 = vmatpush1.bf16.msra.mxu0 %v5958
  %7369 = vmatprep.subr.bf16.mxu0 %v5967
  %7370 = vmatpush1.bf16.msra.mxu0 %v5966
  %7371 = vmatprep.subr.bf16.mxu0 %v5975
  %7372 = vmatpush1.bf16.msra.mxu0 %v5974
  %7373 = vmatprep.subr.bf16.mxu0 %v5983
  %7374 = vmatpush1.bf16.msra.mxu0 %v5982
  %7375 = vmatprep.subr.bf16.mxu0 %v5991
  %7376 = vmatpush1.bf16.msra.mxu0 %v5990
  %7377 = vmatprep.subr.bf16.mxu0 %v5999
  %7378 = vmatpush1.bf16.msra.mxu0 %v5998
  %7379 = vmatprep.subr.bf16.mxu0 %v6007
  %7380 = vmatpush1.bf16.msra.mxu0 %v6006
  %7381 = vmatprep.subr.bf16.mxu0 %v6015
  %7382 = vmatpush1.bf16.msra.mxu0 %v6014
  %7383 = vmatprep.subr.bf16.mxu0 %v6023
  %7384 = vmatpush1.bf16.msra.mxu0 %v6022
  %7385 = vmatprep.subr.bf16.mxu0 %v6031
  %7386 = vmatpush1.bf16.msra.mxu0 %v6030
  %7387 = vmatprep.subr.bf16.mxu0 %v6039
  %7388 = vmatpush1.bf16.msra.mxu0 %v6038
  %7389 = vmatprep.mubr.bf16.mxu0 %v1933
  %7390 = vmatmul.mubr.bf16.gmra.mrb[0].mxu0 %v1931
  %v7391 = vpop.f32.mrb[0].mxu0
  %v7392 = vadd.f32 %v7351, %v7391
  %v7393 = vpop.f32.mrb[0].mxu0
  %v7394 = vadd.f32 %v7353, %v7393
  %v7395 = vpop.f32.mrb[0].mxu0
  %v7396 = vpop.f32.mrb[0].mxu0
  %7397 = vdwg.mxu0
  %7398 = vmatprep.subr.bf16.mxu0 %v5025
  %7399 = vmatpush1.bf16.msra.mxu0 %v5024
  %7400 = vmatprep.subr.bf16.mxu0 %v5033
  %7401 = vmatpush1.bf16.msra.mxu0 %v5032
  %7402 = vmatprep.subr.bf16.mxu0 %v5041
  %7403 = vmatpush1.bf16.msra.mxu0 %v5040
  %7404 = vmatprep.subr.bf16.mxu0 %v5049
  %7405 = vmatpush1.bf16.msra.mxu0 %v5048
  %7406 = vmatprep.subr.bf16.mxu0 %v5057
  %7407 = vmatpush1.bf16.msra.mxu0 %v5056
  %7408 = vmatprep.subr.bf16.mxu0 %v5065
  %7409 = vmatpush1.bf16.msra.mxu0 %v5064
  %7410 = vmatprep.subr.bf16.mxu0 %v5073
  %7411 = vmatpush1.bf16.msra.mxu0 %v5072
  %7412 = vmatprep.subr.bf16.mxu0 %v5081
  %7413 = vmatpush1.bf16.msra.mxu0 %v5080
  %7414 = vmatprep.subr.bf16.mxu0 %v5089
  %7415 = vmatpush1.bf16.msra.mxu0 %v5088
  %7416 = vmatprep.subr.bf16.mxu0 %v5097
  %7417 = vmatpush1.bf16.msra.mxu0 %v5096
  %7418 = vmatprep.subr.bf16.mxu0 %v5105
  %7419 = vmatpush1.bf16.msra.mxu0 %v5104
  %7420 = vmatprep.subr.bf16.mxu0 %v5113
  %7421 = vmatpush1.bf16.msra.mxu0 %v5112
  %7422 = vmatprep.subr.bf16.mxu0 %v5121
  %7423 = vmatpush1.bf16.msra.mxu0 %v5120
  %7424 = vmatprep.subr.bf16.mxu0 %v5129
  %7425 = vmatpush1.bf16.msra.mxu0 %v5128
  %7426 = vmatprep.subr.bf16.mxu0 %v5137
  %7427 = vmatpush1.bf16.msra.mxu0 %v5136
  %7428 = vmatprep.subr.bf16.mxu0 %v5145
  %7429 = vmatpush1.bf16.msra.mxu0 %v5144
  %7430 = vmatprep.mubr.bf16.mxu0 %v1854
  %7431 = vmatmul.mubr.bf16.gmra.mrb[0].mxu0 %v1840
  %v7432 = vpop.f32.mrb[0].mxu0
  %v7433 = vadd.f32 %v1737, %v7432
  %v7434 = vpop.f32.mrb[0].mxu0
  %v7435 = vadd.f32 %v1741, %v7434
  %v7436 = vpop.f32.mrb[0].mxu0
  %v7437 = vpop.f32.mrb[0].mxu0
  %7438 = vdwg.mxu0
  %7439 = vmatprep.subr.bf16.mxu0 %v5153
  %7440 = vmatpush1.bf16.msra.mxu0 %v5152
  %7441 = vmatprep.subr.bf16.mxu0 %v5161
  %7442 = vmatpush1.bf16.msra.mxu0 %v5160
  %7443 = vmatprep.subr.bf16.mxu0 %v5169
  %7444 = vmatpush1.bf16.msra.mxu0 %v5168
  %7445 = vmatprep.subr.bf16.mxu0 %v5177
  %7446 = vmatpush1.bf16.msra.mxu0 %v5176
  %7447 = vmatprep.subr.bf16.mxu0 %v5185
  %7448 = vmatpush1.bf16.msra.mxu0 %v5184
  %7449 = vmatprep.subr.bf16.mxu0 %v5193
  %7450 = vmatpush1.bf16.msra.mxu0 %v5192
  %7451 = vmatprep.subr.bf16.mxu0 %v5201
  %7452 = vmatpush1.bf16.msra.mxu0 %v5200
  %7453 = vmatprep.subr.bf16.mxu0 %v5209
  %7454 = vmatpush1.bf16.msra.mxu0 %v5208
  %7455 = vmatprep.subr.bf16.mxu0 %v5217
  %7456 = vmatpush1.bf16.msra.mxu0 %v5216
  %7457 = vmatprep.subr.bf16.mxu0 %v5225
  %7458 = vmatpush1.bf16.msra.mxu0 %v5224
  %7459 = vmatprep.subr.bf16.mxu0 %v5233
  %7460 = vmatpush1.bf16.msra.mxu0 %v5232
  %7461 = vmatprep.subr.bf16.mxu0 %v5241
  %7462 = vmatpush1.bf16.msra.mxu0 %v5240
  %7463 = vmatprep.subr.bf16.mxu0 %v5249
  %7464 = vmatpush1.bf16.msra.mxu0 %v5248
  %7465 = vmatprep.subr.bf16.mxu0 %v5257
  %7466 = vmatpush1.bf16.msra.mxu0 %v5256
  %7467 = vmatprep.subr.bf16.mxu0 %v5265
  %7468 = vmatpush1.bf16.msra.mxu0 %v5264
  %7469 = vmatprep.subr.bf16.mxu0 %v5273
  %7470 = vmatpush1.bf16.msra.mxu0 %v5272
  %7471 = vmatprep.mubr.bf16.mxu0 %v1864
  %7472 = vmatmul.mubr.bf16.gmra.mrb[0].mxu0 %v1862
  %v7473 = vpop.f32.mrb[0].mxu0
  %v7474 = vadd.f32 %v7433, %v7473
  %v7475 = vpop.f32.mrb[0].mxu0
  %v7476 = vadd.f32 %v7435, %v7475
  %v7477 = vpop.f32.mrb[0].mxu0
  %v7478 = vpop.f32.mrb[0].mxu0
  %7479 = vdwg.mxu0
  %7480 = vmatprep.subr.bf16.mxu0 %v5281
  %7481 = vmatpush1.bf16.msra.mxu0 %v5280
  %7482 = vmatprep.subr.bf16.mxu0 %v5289
  %7483 = vmatpush1.bf16.msra.mxu0 %v5288
  %7484 = vmatprep.subr.bf16.mxu0 %v5297
  %7485 = vmatpush1.bf16.msra.mxu0 %v5296
  %7486 = vmatprep.subr.bf16.mxu0 %v5305
  %7487 = vmatpush1.bf16.msra.mxu0 %v5304
  %7488 = vmatprep.subr.bf16.mxu0 %v5313
  %7489 = vmatpush1.bf16.msra.mxu0 %v5312
  %7490 = vmatprep.subr.bf16.mxu0 %v5321
  %7491 = vmatpush1.bf16.msra.mxu0 %v5320
  %7492 = vmatprep.subr.bf16.mxu0 %v5329
  %7493 = vmatpush1.bf16.msra.mxu0 %v5328
  %7494 = vmatprep.subr.bf16.mxu0 %v5337
  %7495 = vmatpush1.bf16.msra.mxu0 %v5336
  %7496 = vmatprep.subr.bf16.mxu0 %v5345
  %7497 = vmatpush1.bf16.msra.mxu0 %v5344
  %7498 = vmatprep.subr.bf16.mxu0 %v5353
  %7499 = vmatpush1.bf16.msra.mxu0 %v5352
  %7500 = vmatprep.subr.bf16.mxu0 %v5361
  %7501 = vmatpush1.bf16.msra.mxu0 %v5360
  %7502 = vmatprep.subr.bf16.mxu0 %v5369
  %7503 = vmatpush1.bf16.msra.mxu0 %v5368
  %7504 = vmatprep.subr.bf16.mxu0 %v5377
  %7505 = vmatpush1.bf16.msra.mxu0 %v5376
  %7506 = vmatprep.subr.bf16.mxu0 %v5385
  %7507 = vmatpush1.bf16.msra.mxu0 %v5384
  %7508 = vmatprep.subr.bf16.mxu0 %v5393
  %7509 = vmatpush1.bf16.msra.mxu0 %v5392
  %7510 = vmatprep.subr.bf16.mxu0 %v5401
  %7511 = vmatpush1.bf16.msra.mxu0 %v5400
  %7512 = vmatprep.mubr.bf16.mxu0 %v1861
  %7513 = vmatmul.mubr.bf16.gmra.mrb[0].mxu0 %v1847
  %v7514 = vpop.f32.mrb[0].mxu0
  %v7515 = vadd.f32 %v7474, %v7514
  %v7516 = vpop.f32.mrb[0].mxu0
  %v7517 = vadd.f32 %v7476, %v7516
  %v7518 = vpop.f32.mrb[0].mxu0
  %v7519 = vpop.f32.mrb[0].mxu0
  %7520 = vdwg.mxu0
  %7521 = vmatprep.subr.bf16.mxu0 %v5409
  %7522 = vmatpush1.bf16.msra.mxu0 %v5408
  %7523 = vmatprep.subr.bf16.mxu0 %v5417
  %7524 = vmatpush1.bf16.msra.mxu0 %v5416
  %7525 = vmatprep.subr.bf16.mxu0 %v5425
  %7526 = vmatpush1.bf16.msra.mxu0 %v5424
  %7527 = vmatprep.subr.bf16.mxu0 %v5433
  %7528 = vmatpush1.bf16.msra.mxu0 %v5432
  %7529 = vmatprep.subr.bf16.mxu0 %v5441
  %7530 = vmatpush1.bf16.msra.mxu0 %v5440
  %7531 = vmatprep.subr.bf16.mxu0 %v5449
  %7532 = vmatpush1.bf16.msra.mxu0 %v5448
  %7533 = vmatprep.subr.bf16.mxu0 %v5457
  %7534 = vmatpush1.bf16.msra.mxu0 %v5456
  %7535 = vmatprep.subr.bf16.mxu0 %v5465
  %7536 = vmatpush1.bf16.msra.mxu0 %v5464
  %7537 = vmatprep.subr.bf16.mxu0 %v5473
  %7538 = vmatpush1.bf16.msra.mxu0 %v5472
  %7539 = vmatprep.subr.bf16.mxu0 %v5481
  %7540 = vmatpush1.bf16.msra.mxu0 %v5480
  %7541 = vmatprep.subr.bf16.mxu0 %v5489
  %7542 = vmatpush1.bf16.msra.mxu0 %v5488
  %7543 = vmatprep.subr.bf16.mxu0 %v5497
  %7544 = vmatpush1.bf16.msra.mxu0 %v5496
  %7545 = vmatprep.subr.bf16.mxu0 %v5505
  %7546 = vmatpush1.bf16.msra.mxu0 %v5504
  %7547 = vmatprep.subr.bf16.mxu0 %v5513
  %7548 = vmatpush1.bf16.msra.mxu0 %v5512
  %7549 = vmatprep.subr.bf16.mxu0 %v5521
  %7550 = vmatpush1.bf16.msra.mxu0 %v5520
  %7551 = vmatprep.subr.bf16.mxu0 %v5529
  %7552 = vmatpush1.bf16.msra.mxu0 %v5528
  %7553 = vmatprep.mubr.bf16.mxu0 %v1865
  %7554 = vmatmul.mubr.bf16.gmra.mrb[0].mxu0 %v1863
  %v7555 = vpop.f32.mrb[0].mxu0
  %v7556 = vadd.f32 %v7515, %v7555
  %v7557 = vpop.f32.mrb[0].mxu0
  %v7558 = vadd.f32 %v7517, %v7557
  %v7559 = vpop.f32.mrb[0].mxu0
  %v7560 = vpop.f32.mrb[0].mxu0
  %7561 = vdwg.mxu0
  %7562 = vmatprep.subr.bf16.mxu0 %v5537
  %7563 = vmatpush1.bf16.msra.mxu0 %v5536
  %7564 = vmatprep.subr.bf16.mxu0 %v5545
  %7565 = vmatpush1.bf16.msra.mxu0 %v5544
  %7566 = vmatprep.subr.bf16.mxu0 %v5553
  %7567 = vmatpush1.bf16.msra.mxu0 %v5552
  %7568 = vmatprep.subr.bf16.mxu0 %v5561
  %7569 = vmatpush1.bf16.msra.mxu0 %v5560
  %7570 = vmatprep.subr.bf16.mxu0 %v5569
  %7571 = vmatpush1.bf16.msra.mxu0 %v5568
  %7572 = vmatprep.subr.bf16.mxu0 %v5577
  %7573 = vmatpush1.bf16.msra.mxu0 %v5576
  %7574 = vmatprep.subr.bf16.mxu0 %v5585
  %7575 = vmatpush1.bf16.msra.mxu0 %v5584
  %7576 = vmatprep.subr.bf16.mxu0 %v5593
  %7577 = vmatpush1.bf16.msra.mxu0 %v5592
  %7578 = vmatprep.subr.bf16.mxu0 %v5601
  %7579 = vmatpush1.bf16.msra.mxu0 %v5600
  %7580 = vmatprep.subr.bf16.mxu0 %v5609
  %7581 = vmatpush1.bf16.msra.mxu0 %v5608
  %7582 = vmatprep.subr.bf16.mxu0 %v5617
  %7583 = vmatpush1.bf16.msra.mxu0 %v5616
  %7584 = vmatprep.subr.bf16.mxu0 %v5625
  %7585 = vmatpush1.bf16.msra.mxu0 %v5624
  %7586 = vmatprep.subr.bf16.mxu0 %v5633
  %7587 = vmatpush1.bf16.msra.mxu0 %v5632
  %7588 = vmatprep.subr.bf16.mxu0 %v5641
  %7589 = vmatpush1.bf16.msra.mxu0 %v5640
  %7590 = vmatprep.subr.bf16.mxu0 %v5649
  %7591 = vmatpush1.bf16.msra.mxu0 %v5648
  %7592 = vmatprep.subr.bf16.mxu0 %v5657
  %7593 = vmatpush1.bf16.msra.mxu0 %v5656
  %7594 = vmatprep.mubr.bf16.mxu0 %v1922
  %7595 = vmatmul.mubr.bf16.gmra.mrb[0].mxu0 %v1908
  %v7596 = vpop.f32.mrb[0].mxu0
  %v7597 = vadd.f32 %v7556, %v7596
  %v7598 = vpop.f32.mrb[0].mxu0
  %v7599 = vadd.f32 %v7558, %v7598
  %v7600 = vpop.f32.mrb[0].mxu0
  %v7601 = vpop.f32.mrb[0].mxu0
  %7602 = vdwg.mxu0
  %7603 = vmatprep.subr.bf16.mxu0 %v5665
  %7604 = vmatpush1.bf16.msra.mxu0 %v5664
  %7605 = vmatprep.subr.bf16.mxu0 %v5673
  %7606 = vmatpush1.bf16.msra.mxu0 %v5672
  %7607 = vmatprep.subr.bf16.mxu0 %v5681
  %7608 = vmatpush1.bf16.msra.mxu0 %v5680
  %7609 = vmatprep.subr.bf16.mxu0 %v5689
  %7610 = vmatpush1.bf16.msra.mxu0 %v5688
  %7611 = vmatprep.subr.bf16.mxu0 %v5697
  %7612 = vmatpush1.bf16.msra.mxu0 %v5696
  %7613 = vmatprep.subr.bf16.mxu0 %v5705
  %7614 = vmatpush1.bf16.msra.mxu0 %v5704
  %7615 = vmatprep.subr.bf16.mxu0 %v5713
  %7616 = vmatpush1.bf16.msra.mxu0 %v5712
  %7617 = vmatprep.subr.bf16.mxu0 %v5721
  %7618 = vmatpush1.bf16.msra.mxu0 %v5720
  %7619 = vmatprep.subr.bf16.mxu0 %v5729
  %7620 = vmatpush1.bf16.msra.mxu0 %v5728
  %7621 = vmatprep.subr.bf16.mxu0 %v5737
  %7622 = vmatpush1.bf16.msra.mxu0 %v5736
  %7623 = vmatprep.subr.bf16.mxu0 %v5745
  %7624 = vmatpush1.bf16.msra.mxu0 %v5744
  %7625 = vmatprep.subr.bf16.mxu0 %v5753
  %7626 = vmatpush1.bf16.msra.mxu0 %v5752
  %7627 = vmatprep.subr.bf16.mxu0 %v5761
  %7628 = vmatpush1.bf16.msra.mxu0 %v5760
  %7629 = vmatprep.subr.bf16.mxu0 %v5769
  %7630 = vmatpush1.bf16.msra.mxu0 %v5768
  %7631 = vmatprep.subr.bf16.mxu0 %v5777
  %7632 = vmatpush1.bf16.msra.mxu0 %v5776
  %7633 = vmatprep.subr.bf16.mxu0 %v5785
  %7634 = vmatpush1.bf16.msra.mxu0 %v5784
  %7635 = vmatprep.mubr.bf16.mxu0 %v1932
  %7636 = vmatmul.mubr.bf16.gmra.mrb[0].mxu0 %v1930
  %v7637 = vpop.f32.mrb[0].mxu0
  %v7638 = vadd.f32 %v7597, %v7637
  %v7639 = vpop.f32.mrb[0].mxu0
  %v7640 = vadd.f32 %v7599, %v7639
  %v7641 = vpop.f32.mrb[0].mxu0
  %v7642 = vpop.f32.mrb[0].mxu0
  %7643 = vdwg.mxu0
  %7644 = vmatprep.subr.bf16.mxu0 %v5793
  %7645 = vmatpush1.bf16.msra.mxu0 %v5792
  %7646 = vmatprep.subr.bf16.mxu0 %v5801
  %7647 = vmatpush1.bf16.msra.mxu0 %v5800
  %7648 = vmatprep.subr.bf16.mxu0 %v5809
  %7649 = vmatpush1.bf16.msra.mxu0 %v5808
  %7650 = vmatprep.subr.bf16.mxu0 %v5817
  %7651 = vmatpush1.bf16.msra.mxu0 %v5816
  %7652 = vmatprep.subr.bf16.mxu0 %v5825
  %7653 = vmatpush1.bf16.msra.mxu0 %v5824
  %7654 = vmatprep.subr.bf16.mxu0 %v5833
  %7655 = vmatpush1.bf16.msra.mxu0 %v5832
  %7656 = vmatprep.subr.bf16.mxu0 %v5841
  %7657 = vmatpush1.bf16.msra.mxu0 %v5840
  %7658 = vmatprep.subr.bf16.mxu0 %v5849
  %7659 = vmatpush1.bf16.msra.mxu0 %v5848
  %7660 = vmatprep.subr.bf16.mxu0 %v5857
  %7661 = vmatpush1.bf16.msra.mxu0 %v5856
  %7662 = vmatprep.subr.bf16.mxu0 %v5865
  %7663 = vmatpush1.bf16.msra.mxu0 %v5864
  %7664 = vmatprep.subr.bf16.mxu0 %v5873
  %7665 = vmatpush1.bf16.msra.mxu0 %v5872
  %7666 = vmatprep.subr.bf16.mxu0 %v5881
  %7667 = vmatpush1.bf16.msra.mxu0 %v5880
  %7668 = vmatprep.subr.bf16.mxu0 %v5889
  %7669 = vmatpush1.bf16.msra.mxu0 %v5888
  %7670 = vmatprep.subr.bf16.mxu0 %v5897
  %7671 = vmatpush1.bf16.msra.mxu0 %v5896
  %7672 = vmatprep.subr.bf16.mxu0 %v5905
  %7673 = vmatpush1.bf16.msra.mxu0 %v5904
  %7674 = vmatprep.subr.bf16.mxu0 %v5913
  %7675 = vmatpush1.bf16.msra.mxu0 %v5912
  %7676 = vmatprep.mubr.bf16.mxu0 %v1929
  %7677 = vmatmul.mubr.bf16.gmra.mrb[0].mxu0 %v1915
  %v7678 = vpop.f32.mrb[0].mxu0
  %v7679 = vadd.f32 %v7638, %v7678
  %v7680 = vpop.f32.mrb[0].mxu0
  %v7681 = vadd.f32 %v7640, %v7680
  %v7682 = vpop.f32.mrb[0].mxu0
  %v7683 = vpop.f32.mrb[0].mxu0
  %7684 = vdwg.mxu0
  %7685 = vmatprep.subr.bf16.mxu0 %v5921
  %7686 = vmatpush1.bf16.msra.mxu0 %v5920
  %7687 = vmatprep.subr.bf16.mxu0 %v5929
  %7688 = vmatpush1.bf16.msra.mxu0 %v5928
  %7689 = vmatprep.subr.bf16.mxu0 %v5937
  %7690 = vmatpush1.bf16.msra.mxu0 %v5936
  %7691 = vmatprep.subr.bf16.mxu0 %v5945
  %7692 = vmatpush1.bf16.msra.mxu0 %v5944
  %7693 = vmatprep.subr.bf16.mxu0 %v5953
  %7694 = vmatpush1.bf16.msra.mxu0 %v5952
  %7695 = vmatprep.subr.bf16.mxu0 %v5961
  %7696 = vmatpush1.bf16.msra.mxu0 %v5960
  %7697 = vmatprep.subr.bf16.mxu0 %v5969
  %7698 = vmatpush1.bf16.msra.mxu0 %v5968
  %7699 = vmatprep.subr.bf16.mxu0 %v5977
  %7700 = vmatpush1.bf16.msra.mxu0 %v5976
  %7701 = vmatprep.subr.bf16.mxu0 %v5985
  %7702 = vmatpush1.bf16.msra.mxu0 %v5984
  %7703 = vmatprep.subr.bf16.mxu0 %v5993
  %7704 = vmatpush1.bf16.msra.mxu0 %v5992
  %7705 = vmatprep.subr.bf16.mxu0 %v6001
  %7706 = vmatpush1.bf16.msra.mxu0 %v6000
  %7707 = vmatprep.subr.bf16.mxu0 %v6009
  %7708 = vmatpush1.bf16.msra.mxu0 %v6008
  %7709 = vmatprep.subr.bf16.mxu0 %v6017
  %7710 = vmatpush1.bf16.msra.mxu0 %v6016
  %7711 = vmatprep.subr.bf16.mxu0 %v6025
  %7712 = vmatpush1.bf16.msra.mxu0 %v6024
  %7713 = vmatprep.subr.bf16.mxu0 %v6033
  %7714 = vmatpush1.bf16.msra.mxu0 %v6032
  %7715 = vmatprep.subr.bf16.mxu0 %v6041
  %7716 = vmatpush1.bf16.msra.mxu0 %v6040
  %7717 = vmatprep.mubr.bf16.mxu0 %v1933
  %7718 = vmatmul.mubr.bf16.gmra.mrb[0].mxu0 %v1931
  %v7719 = vpop.f32.mrb[0].mxu0
  %v7720 = vadd.f32 %v7679, %v7719
  %v7721 = vpop.f32.mrb[0].mxu0
  %v7722 = vadd.f32 %v7681, %v7721
  %v7723 = vpop.f32.mrb[0].mxu0
  %v7724 = vpop.f32.mrb[0].mxu0
  %7725 = vdwg.mxu0
  %7726 = vmatprep.subr.bf16.mxu0 %v5027
  %7727 = vmatpush1.bf16.msra.mxu0 %v5026
  %7728 = vmatprep.subr.bf16.mxu0 %v5035
  %7729 = vmatpush1.bf16.msra.mxu0 %v5034
  %7730 = vmatprep.subr.bf16.mxu0 %v5043
  %7731 = vmatpush1.bf16.msra.mxu0 %v5042
  %7732 = vmatprep.subr.bf16.mxu0 %v5051
  %7733 = vmatpush1.bf16.msra.mxu0 %v5050
  %7734 = vmatprep.subr.bf16.mxu0 %v5059
  %7735 = vmatpush1.bf16.msra.mxu0 %v5058
  %7736 = vmatprep.subr.bf16.mxu0 %v5067
  %7737 = vmatpush1.bf16.msra.mxu0 %v5066
  %7738 = vmatprep.subr.bf16.mxu0 %v5075
  %7739 = vmatpush1.bf16.msra.mxu0 %v5074
  %7740 = vmatprep.subr.bf16.mxu0 %v5083
  %7741 = vmatpush1.bf16.msra.mxu0 %v5082
  %7742 = vmatprep.subr.bf16.mxu0 %v5091
  %7743 = vmatpush1.bf16.msra.mxu0 %v5090
  %7744 = vmatprep.subr.bf16.mxu0 %v5099
  %7745 = vmatpush1.bf16.msra.mxu0 %v5098
  %7746 = vmatprep.subr.bf16.mxu0 %v5107
  %7747 = vmatpush1.bf16.msra.mxu0 %v5106
  %7748 = vmatprep.subr.bf16.mxu0 %v5115
  %7749 = vmatpush1.bf16.msra.mxu0 %v5114
  %7750 = vmatprep.subr.bf16.mxu0 %v5123
  %7751 = vmatpush1.bf16.msra.mxu0 %v5122
  %7752 = vmatprep.subr.bf16.mxu0 %v5131
  %7753 = vmatpush1.bf16.msra.mxu0 %v5130
  %7754 = vmatprep.subr.bf16.mxu0 %v5139
  %7755 = vmatpush1.bf16.msra.mxu0 %v5138
  %7756 = vmatprep.subr.bf16.mxu0 %v5147
  %7757 = vmatpush1.bf16.msra.mxu0 %v5146
  %7758 = vmatprep.mubr.bf16.mxu0 %v1854
  %7759 = vmatmul.mubr.bf16.gmra.mrb[0].mxu0 %v1840
  %v7760 = vpop.f32.mrb[0].mxu0
  %v7761 = vadd.f32 %v1745, %v7760
  %v7762 = vpop.f32.mrb[0].mxu0
  %v7763 = vadd.f32 %v1749, %v7762
  %v7764 = vpop.f32.mrb[0].mxu0
  %v7765 = vpop.f32.mrb[0].mxu0
  %7766 = vdwg.mxu0
  %7767 = vmatprep.subr.bf16.mxu0 %v5155
  %7768 = vmatpush1.bf16.msra.mxu0 %v5154
  %7769 = vmatprep.subr.bf16.mxu0 %v5163
  %7770 = vmatpush1.bf16.msra.mxu0 %v5162
  %7771 = vmatprep.subr.bf16.mxu0 %v5171
  %7772 = vmatpush1.bf16.msra.mxu0 %v5170
  %7773 = vmatprep.subr.bf16.mxu0 %v5179
  %7774 = vmatpush1.bf16.msra.mxu0 %v5178
  %7775 = vmatprep.subr.bf16.mxu0 %v5187
  %7776 = vmatpush1.bf16.msra.mxu0 %v5186
  %7777 = vmatprep.subr.bf16.mxu0 %v5195
  %7778 = vmatpush1.bf16.msra.mxu0 %v5194
  %7779 = vmatprep.subr.bf16.mxu0 %v5203
  %7780 = vmatpush1.bf16.msra.mxu0 %v5202
  %7781 = vmatprep.subr.bf16.mxu0 %v5211
  %7782 = vmatpush1.bf16.msra.mxu0 %v5210
  %7783 = vmatprep.subr.bf16.mxu0 %v5219
  %7784 = vmatpush1.bf16.msra.mxu0 %v5218
  %7785 = vmatprep.subr.bf16.mxu0 %v5227
  %7786 = vmatpush1.bf16.msra.mxu0 %v5226
  %7787 = vmatprep.subr.bf16.mxu0 %v5235
  %7788 = vmatpush1.bf16.msra.mxu0 %v5234
  %7789 = vmatprep.subr.bf16.mxu0 %v5243
  %7790 = vmatpush1.bf16.msra.mxu0 %v5242
  %7791 = vmatprep.subr.bf16.mxu0 %v5251
  %7792 = vmatpush1.bf16.msra.mxu0 %v5250
  %7793 = vmatprep.subr.bf16.mxu0 %v5259
  %7794 = vmatpush1.bf16.msra.mxu0 %v5258
  %7795 = vmatprep.subr.bf16.mxu0 %v5267
  %7796 = vmatpush1.bf16.msra.mxu0 %v5266
  %7797 = vmatprep.subr.bf16.mxu0 %v5275
  %7798 = vmatpush1.bf16.msra.mxu0 %v5274
  %7799 = vmatprep.mubr.bf16.mxu0 %v1864
  %7800 = vmatmul.mubr.bf16.gmra.mrb[0].mxu0 %v1862
  %v7801 = vpop.f32.mrb[0].mxu0
  %v7802 = vadd.f32 %v7761, %v7801
  %v7803 = vpop.f32.mrb[0].mxu0
  %v7804 = vadd.f32 %v7763, %v7803
  %v7805 = vpop.f32.mrb[0].mxu0
  %v7806 = vpop.f32.mrb[0].mxu0
  %7807 = vdwg.mxu0
  %7808 = vmatprep.subr.bf16.mxu0 %v5283
  %7809 = vmatpush1.bf16.msra.mxu0 %v5282
  %7810 = vmatprep.subr.bf16.mxu0 %v5291
  %7811 = vmatpush1.bf16.msra.mxu0 %v5290
  %7812 = vmatprep.subr.bf16.mxu0 %v5299
  %7813 = vmatpush1.bf16.msra.mxu0 %v5298
  %7814 = vmatprep.subr.bf16.mxu0 %v5307
  %7815 = vmatpush1.bf16.msra.mxu0 %v5306
  %7816 = vmatprep.subr.bf16.mxu0 %v5315
  %7817 = vmatpush1.bf16.msra.mxu0 %v5314
  %7818 = vmatprep.subr.bf16.mxu0 %v5323
  %7819 = vmatpush1.bf16.msra.mxu0 %v5322
  %7820 = vmatprep.subr.bf16.mxu0 %v5331
  %7821 = vmatpush1.bf16.msra.mxu0 %v5330
  %7822 = vmatprep.subr.bf16.mxu0 %v5339
  %7823 = vmatpush1.bf16.msra.mxu0 %v5338
  %7824 = vmatprep.subr.bf16.mxu0 %v5347
  %7825 = vmatpush1.bf16.msra.mxu0 %v5346
  %7826 = vmatprep.subr.bf16.mxu0 %v5355
  %7827 = vmatpush1.bf16.msra.mxu0 %v5354
  %7828 = vmatprep.subr.bf16.mxu0 %v5363
  %7829 = vmatpush1.bf16.msra.mxu0 %v5362
  %7830 = vmatprep.subr.bf16.mxu0 %v5371
  %7831 = vmatpush1.bf16.msra.mxu0 %v5370
  %7832 = vmatprep.subr.bf16.mxu0 %v5379
  %7833 = vmatpush1.bf16.msra.mxu0 %v5378
  %7834 = vmatprep.subr.bf16.mxu0 %v5387
  %7835 = vmatpush1.bf16.msra.mxu0 %v5386
  %7836 = vmatprep.subr.bf16.mxu0 %v5395
  %7837 = vmatpush1.bf16.msra.mxu0 %v5394
  %7838 = vmatprep.subr.bf16.mxu0 %v5403
  %7839 = vmatpush1.bf16.msra.mxu0 %v5402
  %7840 = vmatprep.mubr.bf16.mxu0 %v1861
  %7841 = vmatmul.mubr.bf16.gmra.mrb[0].mxu0 %v1847
  %v7842 = vpop.f32.mrb[0].mxu0
  %v7843 = vadd.f32 %v7802, %v7842
  %v7844 = vpop.f32.mrb[0].mxu0
  %v7845 = vadd.f32 %v7804, %v7844
  %v7846 = vpop.f32.mrb[0].mxu0
  %v7847 = vpop.f32.mrb[0].mxu0
  %7848 = vdwg.mxu0
  %7849 = vmatprep.subr.bf16.mxu0 %v5411
  %7850 = vmatpush1.bf16.msra.mxu0 %v5410
  %7851 = vmatprep.subr.bf16.mxu0 %v5419
  %7852 = vmatpush1.bf16.msra.mxu0 %v5418
  %7853 = vmatprep.subr.bf16.mxu0 %v5427
  %7854 = vmatpush1.bf16.msra.mxu0 %v5426
  %7855 = vmatprep.subr.bf16.mxu0 %v5435
  %7856 = vmatpush1.bf16.msra.mxu0 %v5434
  %7857 = vmatprep.subr.bf16.mxu0 %v5443
  %7858 = vmatpush1.bf16.msra.mxu0 %v5442
  %7859 = vmatprep.subr.bf16.mxu0 %v5451
  %7860 = vmatpush1.bf16.msra.mxu0 %v5450
  %7861 = vmatprep.subr.bf16.mxu0 %v5459
  %7862 = vmatpush1.bf16.msra.mxu0 %v5458
  %7863 = vmatprep.subr.bf16.mxu0 %v5467
  %7864 = vmatpush1.bf16.msra.mxu0 %v5466
  %7865 = vmatprep.subr.bf16.mxu0 %v5475
  %7866 = vmatpush1.bf16.msra.mxu0 %v5474
  %7867 = vmatprep.subr.bf16.mxu0 %v5483
  %7868 = vmatpush1.bf16.msra.mxu0 %v5482
  %7869 = vmatprep.subr.bf16.mxu0 %v5491
  %7870 = vmatpush1.bf16.msra.mxu0 %v5490
  %7871 = vmatprep.subr.bf16.mxu0 %v5499
  %7872 = vmatpush1.bf16.msra.mxu0 %v5498
  %7873 = vmatprep.subr.bf16.mxu0 %v5507
  %7874 = vmatpush1.bf16.msra.mxu0 %v5506
  %7875 = vmatprep.subr.bf16.mxu0 %v5515
  %7876 = vmatpush1.bf16.msra.mxu0 %v5514
  %7877 = vmatprep.subr.bf16.mxu0 %v5523
  %7878 = vmatpush1.bf16.msra.mxu0 %v5522
  %7879 = vmatprep.subr.bf16.mxu0 %v5531
  %7880 = vmatpush1.bf16.msra.mxu0 %v5530
  %7881 = vmatprep.mubr.bf16.mxu0 %v1865
  %7882 = vmatmul.mubr.bf16.gmra.mrb[0].mxu0 %v1863
  %v7883 = vpop.f32.mrb[0].mxu0
  %v7884 = vadd.f32 %v7843, %v7883
  %v7885 = vpop.f32.mrb[0].mxu0
  %v7886 = vadd.f32 %v7845, %v7885
  %v7887 = vpop.f32.mrb[0].mxu0
  %v7888 = vpop.f32.mrb[0].mxu0
  %7889 = vdwg.mxu0
  %7890 = vmatprep.subr.bf16.mxu0 %v5539
  %7891 = vmatpush1.bf16.msra.mxu0 %v5538
  %7892 = vmatprep.subr.bf16.mxu0 %v5547
  %7893 = vmatpush1.bf16.msra.mxu0 %v5546
  %7894 = vmatprep.subr.bf16.mxu0 %v5555
  %7895 = vmatpush1.bf16.msra.mxu0 %v5554
  %7896 = vmatprep.subr.bf16.mxu0 %v5563
  %7897 = vmatpush1.bf16.msra.mxu0 %v5562
  %7898 = vmatprep.subr.bf16.mxu0 %v5571
  %7899 = vmatpush1.bf16.msra.mxu0 %v5570
  %7900 = vmatprep.subr.bf16.mxu0 %v5579
  %7901 = vmatpush1.bf16.msra.mxu0 %v5578
  %7902 = vmatprep.subr.bf16.mxu0 %v5587
  %7903 = vmatpush1.bf16.msra.mxu0 %v5586
  %7904 = vmatprep.subr.bf16.mxu0 %v5595
  %7905 = vmatpush1.bf16.msra.mxu0 %v5594
  %7906 = vmatprep.subr.bf16.mxu0 %v5603
  %7907 = vmatpush1.bf16.msra.mxu0 %v5602
  %7908 = vmatprep.subr.bf16.mxu0 %v5611
  %7909 = vmatpush1.bf16.msra.mxu0 %v5610
  %7910 = vmatprep.subr.bf16.mxu0 %v5619
  %7911 = vmatpush1.bf16.msra.mxu0 %v5618
  %7912 = vmatprep.subr.bf16.mxu0 %v5627
  %7913 = vmatpush1.bf16.msra.mxu0 %v5626
  %7914 = vmatprep.subr.bf16.mxu0 %v5635
  %7915 = vmatpush1.bf16.msra.mxu0 %v5634
  %7916 = vmatprep.subr.bf16.mxu0 %v5643
  %7917 = vmatpush1.bf16.msra.mxu0 %v5642
  %7918 = vmatprep.subr.bf16.mxu0 %v5651
  %7919 = vmatpush1.bf16.msra.mxu0 %v5650
  %7920 = vmatprep.subr.bf16.mxu0 %v5659
  %7921 = vmatpush1.bf16.msra.mxu0 %v5658
  %7922 = vmatprep.mubr.bf16.mxu0 %v1922
  %7923 = vmatmul.mubr.bf16.gmra.mrb[0].mxu0 %v1908
  %v7924 = vpop.f32.mrb[0].mxu0
  %v7925 = vadd.f32 %v7884, %v7924
  %v7926 = vpop.f32.mrb[0].mxu0
  %v7927 = vadd.f32 %v7886, %v7926
  %v7928 = vpop.f32.mrb[0].mxu0
  %v7929 = vpop.f32.mrb[0].mxu0
  %7930 = vdwg.mxu0
  %7931 = vmatprep.subr.bf16.mxu0 %v5667
  %7932 = vmatpush1.bf16.msra.mxu0 %v5666
  %7933 = vmatprep.subr.bf16.mxu0 %v5675
  %7934 = vmatpush1.bf16.msra.mxu0 %v5674
  %7935 = vmatprep.subr.bf16.mxu0 %v5683
  %7936 = vmatpush1.bf16.msra.mxu0 %v5682
  %7937 = vmatprep.subr.bf16.mxu0 %v5691
  %7938 = vmatpush1.bf16.msra.mxu0 %v5690
  %7939 = vmatprep.subr.bf16.mxu0 %v5699
  %7940 = vmatpush1.bf16.msra.mxu0 %v5698
  %7941 = vmatprep.subr.bf16.mxu0 %v5707
  %7942 = vmatpush1.bf16.msra.mxu0 %v5706
  %7943 = vmatprep.subr.bf16.mxu0 %v5715
  %7944 = vmatpush1.bf16.msra.mxu0 %v5714
  %7945 = vmatprep.subr.bf16.mxu0 %v5723
  %7946 = vmatpush1.bf16.msra.mxu0 %v5722
  %7947 = vmatprep.subr.bf16.mxu0 %v5731
  %7948 = vmatpush1.bf16.msra.mxu0 %v5730
  %7949 = vmatprep.subr.bf16.mxu0 %v5739
  %7950 = vmatpush1.bf16.msra.mxu0 %v5738
  %7951 = vmatprep.subr.bf16.mxu0 %v5747
  %7952 = vmatpush1.bf16.msra.mxu0 %v5746
  %7953 = vmatprep.subr.bf16.mxu0 %v5755
  %7954 = vmatpush1.bf16.msra.mxu0 %v5754
  %7955 = vmatprep.subr.bf16.mxu0 %v5763
  %7956 = vmatpush1.bf16.msra.mxu0 %v5762
  %7957 = vmatprep.subr.bf16.mxu0 %v5771
  %7958 = vmatpush1.bf16.msra.mxu0 %v5770
  %7959 = vmatprep.subr.bf16.mxu0 %v5779
  %7960 = vmatpush1.bf16.msra.mxu0 %v5778
  %7961 = vmatprep.subr.bf16.mxu0 %v5787
  %7962 = vmatpush1.bf16.msra.mxu0 %v5786
  %7963 = vmatprep.mubr.bf16.mxu0 %v1932
  %7964 = vmatmul.mubr.bf16.gmra.mrb[0].mxu0 %v1930
  %v7965 = vpop.f32.mrb[0].mxu0
  %v7966 = vadd.f32 %v7925, %v7965
  %v7967 = vpop.f32.mrb[0].mxu0
  %v7968 = vadd.f32 %v7927, %v7967
  %v7969 = vpop.f32.mrb[0].mxu0
  %v7970 = vpop.f32.mrb[0].mxu0
  %7971 = vdwg.mxu0
  %7972 = vmatprep.subr.bf16.mxu0 %v5795
  %7973 = vmatpush1.bf16.msra.mxu0 %v5794
  %7974 = vmatprep.subr.bf16.mxu0 %v5803
  %7975 = vmatpush1.bf16.msra.mxu0 %v5802
  %7976 = vmatprep.subr.bf16.mxu0 %v5811
  %7977 = vmatpush1.bf16.msra.mxu0 %v5810
  %7978 = vmatprep.subr.bf16.mxu0 %v5819
  %7979 = vmatpush1.bf16.msra.mxu0 %v5818
  %7980 = vmatprep.subr.bf16.mxu0 %v5827
  %7981 = vmatpush1.bf16.msra.mxu0 %v5826
  %7982 = vmatprep.subr.bf16.mxu0 %v5835
  %7983 = vmatpush1.bf16.msra.mxu0 %v5834
  %7984 = vmatprep.subr.bf16.mxu0 %v5843
  %7985 = vmatpush1.bf16.msra.mxu0 %v5842
  %7986 = vmatprep.subr.bf16.mxu0 %v5851
  %7987 = vmatpush1.bf16.msra.mxu0 %v5850
  %7988 = vmatprep.subr.bf16.mxu0 %v5859
  %7989 = vmatpush1.bf16.msra.mxu0 %v5858
  %7990 = vmatprep.subr.bf16.mxu0 %v5867
  %7991 = vmatpush1.bf16.msra.mxu0 %v5866
  %7992 = vmatprep.subr.bf16.mxu0 %v5875
  %7993 = vmatpush1.bf16.msra.mxu0 %v5874
  %7994 = vmatprep.subr.bf16.mxu0 %v5883
  %7995 = vmatpush1.bf16.msra.mxu0 %v5882
  %7996 = vmatprep.subr.bf16.mxu0 %v5891
  %7997 = vmatpush1.bf16.msra.mxu0 %v5890
  %7998 = vmatprep.subr.bf16.mxu0 %v5899
  %7999 = vmatpush1.bf16.msra.mxu0 %v5898
  %8000 = vmatprep.subr.bf16.mxu0 %v5907
  %8001 = vmatpush1.bf16.msra.mxu0 %v5906
  %8002 = vmatprep.subr.bf16.mxu0 %v5915
  %8003 = vmatpush1.bf16.msra.mxu0 %v5914
  %8004 = vmatprep.mubr.bf16.mxu0 %v1929
  %8005 = vmatmul.mubr.bf16.gmra.mrb[0].mxu0 %v1915
  %v8006 = vpop.f32.mrb[0].mxu0
  %v8007 = vadd.f32 %v7966, %v8006
  %v8008 = vpop.f32.mrb[0].mxu0
  %v8009 = vadd.f32 %v7968, %v8008
  %v8010 = vpop.f32.mrb[0].mxu0
  %v8011 = vpop.f32.mrb[0].mxu0
  %8012 = vdwg.mxu0
  %8013 = vmatprep.subr.bf16.mxu0 %v5923
  %8014 = vmatpush1.bf16.msra.mxu0 %v5922
  %8015 = vmatprep.subr.bf16.mxu0 %v5931
  %8016 = vmatpush1.bf16.msra.mxu0 %v5930
  %8017 = vmatprep.subr.bf16.mxu0 %v5939
  %8018 = vmatpush1.bf16.msra.mxu0 %v5938
  %8019 = vmatprep.subr.bf16.mxu0 %v5947
  %8020 = vmatpush1.bf16.msra.mxu0 %v5946
  %8021 = vmatprep.subr.bf16.mxu0 %v5955
  %8022 = vmatpush1.bf16.msra.mxu0 %v5954
  %8023 = vmatprep.subr.bf16.mxu0 %v5963
  %8024 = vmatpush1.bf16.msra.mxu0 %v5962
  %8025 = vmatprep.subr.bf16.mxu0 %v5971
  %8026 = vmatpush1.bf16.msra.mxu0 %v5970
  %8027 = vmatprep.subr.bf16.mxu0 %v5979
  %8028 = vmatpush1.bf16.msra.mxu0 %v5978
  %8029 = vmatprep.subr.bf16.mxu0 %v5987
  %8030 = vmatpush1.bf16.msra.mxu0 %v5986
  %8031 = vmatprep.subr.bf16.mxu0 %v5995
  %8032 = vmatpush1.bf16.msra.mxu0 %v5994
  %8033 = vmatprep.subr.bf16.mxu0 %v6003
  %8034 = vmatpush1.bf16.msra.mxu0 %v6002
  %8035 = vmatprep.subr.bf16.mxu0 %v6011
  %8036 = vmatpush1.bf16.msra.mxu0 %v6010
  %8037 = vmatprep.subr.bf16.mxu0 %v6019
  %8038 = vmatpush1.bf16.msra.mxu0 %v6018
  %8039 = vmatprep.subr.bf16.mxu0 %v6027
  %8040 = vmatpush1.bf16.msra.mxu0 %v6026
  %8041 = vmatprep.subr.bf16.mxu0 %v6035
  %8042 = vmatpush1.bf16.msra.mxu0 %v6034
  %8043 = vmatprep.subr.bf16.mxu0 %v6043
  %8044 = vmatpush1.bf16.msra.mxu0 %v6042
  %8045 = vmatprep.mubr.bf16.mxu0 %v1933
  %8046 = vmatmul.mubr.bf16.gmra.mrb[0].mxu0 %v1931
  %v8047 = vpop.f32.mrb[0].mxu0
  %v8048 = vadd.f32 %v8007, %v8047
  %v8049 = vpop.f32.mrb[0].mxu0
  %v8050 = vadd.f32 %v8009, %v8049
  %v8051 = vpop.f32.mrb[0].mxu0
  %v8052 = vpop.f32.mrb[0].mxu0
  %8053 = vdwg.mxu0
  %8054 = vmatprep.subr.bf16.mxu0 %v5029
  %8055 = vmatpush1.bf16.msra.mxu0 %v5028
  %8056 = vmatprep.subr.bf16.mxu0 %v5037
  %8057 = vmatpush1.bf16.msra.mxu0 %v5036
  %8058 = vmatprep.subr.bf16.mxu0 %v5045
  %8059 = vmatpush1.bf16.msra.mxu0 %v5044
  %8060 = vmatprep.subr.bf16.mxu0 %v5053
  %8061 = vmatpush1.bf16.msra.mxu0 %v5052
  %8062 = vmatprep.subr.bf16.mxu0 %v5061
  %8063 = vmatpush1.bf16.msra.mxu0 %v5060
  %8064 = vmatprep.subr.bf16.mxu0 %v5069
  %8065 = vmatpush1.bf16.msra.mxu0 %v5068
  %8066 = vmatprep.subr.bf16.mxu0 %v5077
  %8067 = vmatpush1.bf16.msra.mxu0 %v5076
  %8068 = vmatprep.subr.bf16.mxu0 %v5085
  %8069 = vmatpush1.bf16.msra.mxu0 %v5084
  %8070 = vmatprep.subr.bf16.mxu0 %v5093
  %8071 = vmatpush1.bf16.msra.mxu0 %v5092
  %8072 = vmatprep.subr.bf16.mxu0 %v5101
  %8073 = vmatpush1.bf16.msra.mxu0 %v5100
  %8074 = vmatprep.subr.bf16.mxu0 %v5109
  %8075 = vmatpush1.bf16.msra.mxu0 %v5108
  %8076 = vmatprep.subr.bf16.mxu0 %v5117
  %8077 = vmatpush1.bf16.msra.mxu0 %v5116
  %8078 = vmatprep.subr.bf16.mxu0 %v5125
  %8079 = vmatpush1.bf16.msra.mxu0 %v5124
  %8080 = vmatprep.subr.bf16.mxu0 %v5133
  %8081 = vmatpush1.bf16.msra.mxu0 %v5132
  %8082 = vmatprep.subr.bf16.mxu0 %v5141
  %8083 = vmatpush1.bf16.msra.mxu0 %v5140
  %8084 = vmatprep.subr.bf16.mxu0 %v5149
  %8085 = vmatpush1.bf16.msra.mxu0 %v5148
  %8086 = vmatprep.mubr.bf16.mxu0 %v1854
  %8087 = vmatmul.mubr.bf16.gmra.mrb[0].mxu0 %v1840
  %v8088 = vpop.f32.mrb[0].mxu0
  %v8089 = vadd.f32 %v1753, %v8088
  %v8090 = vpop.f32.mrb[0].mxu0
  %v8091 = vadd.f32 %v1757, %v8090
  %v8092 = vpop.f32.mrb[0].mxu0
  %v8093 = vpop.f32.mrb[0].mxu0
  %8094 = vdwg.mxu0
  %8095 = vmatprep.subr.bf16.mxu0 %v5157
  %8096 = vmatpush1.bf16.msra.mxu0 %v5156
  %8097 = vmatprep.subr.bf16.mxu0 %v5165
  %8098 = vmatpush1.bf16.msra.mxu0 %v5164
  %8099 = vmatprep.subr.bf16.mxu0 %v5173
  %8100 = vmatpush1.bf16.msra.mxu0 %v5172
  %8101 = vmatprep.subr.bf16.mxu0 %v5181
  %8102 = vmatpush1.bf16.msra.mxu0 %v5180
  %8103 = vmatprep.subr.bf16.mxu0 %v5189
  %8104 = vmatpush1.bf16.msra.mxu0 %v5188
  %8105 = vmatprep.subr.bf16.mxu0 %v5197
  %8106 = vmatpush1.bf16.msra.mxu0 %v5196
  %8107 = vmatprep.subr.bf16.mxu0 %v5205
  %8108 = vmatpush1.bf16.msra.mxu0 %v5204
  %8109 = vmatprep.subr.bf16.mxu0 %v5213
  %8110 = vmatpush1.bf16.msra.mxu0 %v5212
  %8111 = vmatprep.subr.bf16.mxu0 %v5221
  %8112 = vmatpush1.bf16.msra.mxu0 %v5220
  %8113 = vmatprep.subr.bf16.mxu0 %v5229
  %8114 = vmatpush1.bf16.msra.mxu0 %v5228
  %8115 = vmatprep.subr.bf16.mxu0 %v5237
  %8116 = vmatpush1.bf16.msra.mxu0 %v5236
  %8117 = vmatprep.subr.bf16.mxu0 %v5245
  %8118 = vmatpush1.bf16.msra.mxu0 %v5244
  %8119 = vmatprep.subr.bf16.mxu0 %v5253
  %8120 = vmatpush1.bf16.msra.mxu0 %v5252
  %8121 = vmatprep.subr.bf16.mxu0 %v5261
  %8122 = vmatpush1.bf16.msra.mxu0 %v5260
  %8123 = vmatprep.subr.bf16.mxu0 %v5269
  %8124 = vmatpush1.bf16.msra.mxu0 %v5268
  %8125 = vmatprep.subr.bf16.mxu0 %v5277
  %8126 = vmatpush1.bf16.msra.mxu0 %v5276
  %8127 = vmatprep.mubr.bf16.mxu0 %v1864
  %8128 = vmatmul.mubr.bf16.gmra.mrb[0].mxu0 %v1862
  %v8129 = vpop.f32.mrb[0].mxu0
  %v8130 = vadd.f32 %v8089, %v8129
  %v8131 = vpop.f32.mrb[0].mxu0
  %v8132 = vadd.f32 %v8091, %v8131
  %v8133 = vpop.f32.mrb[0].mxu0
  %v8134 = vpop.f32.mrb[0].mxu0
  %8135 = vdwg.mxu0
  %8136 = vmatprep.subr.bf16.mxu0 %v5285
  %8137 = vmatpush1.bf16.msra.mxu0 %v5284
  %8138 = vmatprep.subr.bf16.mxu0 %v5293
  %8139 = vmatpush1.bf16.msra.mxu0 %v5292
  %8140 = vmatprep.subr.bf16.mxu0 %v5301
  %8141 = vmatpush1.bf16.msra.mxu0 %v5300
  %8142 = vmatprep.subr.bf16.mxu0 %v5309
  %8143 = vmatpush1.bf16.msra.mxu0 %v5308
  %8144 = vmatprep.subr.bf16.mxu0 %v5317
  %8145 = vmatpush1.bf16.msra.mxu0 %v5316
  %8146 = vmatprep.subr.bf16.mxu0 %v5325
  %8147 = vmatpush1.bf16.msra.mxu0 %v5324
  %8148 = vmatprep.subr.bf16.mxu0 %v5333
  %8149 = vmatpush1.bf16.msra.mxu0 %v5332
  %8150 = vmatprep.subr.bf16.mxu0 %v5341
  %8151 = vmatpush1.bf16.msra.mxu0 %v5340
  %8152 = vmatprep.subr.bf16.mxu0 %v5349
  %8153 = vmatpush1.bf16.msra.mxu0 %v5348
  %8154 = vmatprep.subr.bf16.mxu0 %v5357
  %8155 = vmatpush1.bf16.msra.mxu0 %v5356
  %8156 = vmatprep.subr.bf16.mxu0 %v5365
  %8157 = vmatpush1.bf16.msra.mxu0 %v5364
  %8158 = vmatprep.subr.bf16.mxu0 %v5373
  %8159 = vmatpush1.bf16.msra.mxu0 %v5372
  %8160 = vmatprep.subr.bf16.mxu0 %v5381
  %8161 = vmatpush1.bf16.msra.mxu0 %v5380
  %8162 = vmatprep.subr.bf16.mxu0 %v5389
  %8163 = vmatpush1.bf16.msra.mxu0 %v5388
  %8164 = vmatprep.subr.bf16.mxu0 %v5397
  %8165 = vmatpush1.bf16.msra.mxu0 %v5396
  %8166 = vmatprep.subr.bf16.mxu0 %v5405
  %8167 = vmatpush1.bf16.msra.mxu0 %v5404
  %8168 = vmatprep.mubr.bf16.mxu0 %v1861
  %8169 = vmatmul.mubr.bf16.gmra.mrb[0].mxu0 %v1847
  %v8170 = vpop.f32.mrb[0].mxu0
  %v8171 = vadd.f32 %v8130, %v8170
  %v8172 = vpop.f32.mrb[0].mxu0
  %v8173 = vadd.f32 %v8132, %v8172
  %v8174 = vpop.f32.mrb[0].mxu0
  %v8175 = vpop.f32.mrb[0].mxu0
  %8176 = vdwg.mxu0
  %8177 = vmatprep.subr.bf16.mxu0 %v5413
  %8178 = vmatpush1.bf16.msra.mxu0 %v5412
  %8179 = vmatprep.subr.bf16.mxu0 %v5421
  %8180 = vmatpush1.bf16.msra.mxu0 %v5420
  %8181 = vmatprep.subr.bf16.mxu0 %v5429
  %8182 = vmatpush1.bf16.msra.mxu0 %v5428
  %8183 = vmatprep.subr.bf16.mxu0 %v5437
  %8184 = vmatpush1.bf16.msra.mxu0 %v5436
  %8185 = vmatprep.subr.bf16.mxu0 %v5445
  %8186 = vmatpush1.bf16.msra.mxu0 %v5444
  %8187 = vmatprep.subr.bf16.mxu0 %v5453
  %8188 = vmatpush1.bf16.msra.mxu0 %v5452
  %8189 = vmatprep.subr.bf16.mxu0 %v5461
  %8190 = vmatpush1.bf16.msra.mxu0 %v5460
  %8191 = vmatprep.subr.bf16.mxu0 %v5469
  %8192 = vmatpush1.bf16.msra.mxu0 %v5468
  %8193 = vmatprep.subr.bf16.mxu0 %v5477
  %8194 = vmatpush1.bf16.msra.mxu0 %v5476
  %8195 = vmatprep.subr.bf16.mxu0 %v5485
  %8196 = vmatpush1.bf16.msra.mxu0 %v5484
  %8197 = vmatprep.subr.bf16.mxu0 %v5493
  %8198 = vmatpush1.bf16.msra.mxu0 %v5492
  %8199 = vmatprep.subr.bf16.mxu0 %v5501
  %8200 = vmatpush1.bf16.msra.mxu0 %v5500
  %8201 = vmatprep.subr.bf16.mxu0 %v5509
  %8202 = vmatpush1.bf16.msra.mxu0 %v5508
  %8203 = vmatprep.subr.bf16.mxu0 %v5517
  %8204 = vmatpush1.bf16.msra.mxu0 %v5516
  %8205 = vmatprep.subr.bf16.mxu0 %v5525
  %8206 = vmatpush1.bf16.msra.mxu0 %v5524
  %8207 = vmatprep.subr.bf16.mxu0 %v5533
  %8208 = vmatpush1.bf16.msra.mxu0 %v5532
  %8209 = vmatprep.mubr.bf16.mxu0 %v1865
  %8210 = vmatmul.mubr.bf16.gmra.mrb[0].mxu0 %v1863
  %v8211 = vpop.f32.mrb[0].mxu0
  %v8212 = vadd.f32 %v8171, %v8211
  %v8213 = vpop.f32.mrb[0].mxu0
  %v8214 = vadd.f32 %v8173, %v8213
  %v8215 = vpop.f32.mrb[0].mxu0
  %v8216 = vpop.f32.mrb[0].mxu0
  %8217 = vdwg.mxu0
  %8218 = vmatprep.subr.bf16.mxu0 %v5541
  %8219 = vmatpush1.bf16.msra.mxu0 %v5540
  %8220 = vmatprep.subr.bf16.mxu0 %v5549
  %8221 = vmatpush1.bf16.msra.mxu0 %v5548
  %8222 = vmatprep.subr.bf16.mxu0 %v5557
  %8223 = vmatpush1.bf16.msra.mxu0 %v5556
  %8224 = vmatprep.subr.bf16.mxu0 %v5565
  %8225 = vmatpush1.bf16.msra.mxu0 %v5564
  %8226 = vmatprep.subr.bf16.mxu0 %v5573
  %8227 = vmatpush1.bf16.msra.mxu0 %v5572
  %8228 = vmatprep.subr.bf16.mxu0 %v5581
  %8229 = vmatpush1.bf16.msra.mxu0 %v5580
  %8230 = vmatprep.subr.bf16.mxu0 %v5589
  %8231 = vmatpush1.bf16.msra.mxu0 %v5588
  %8232 = vmatprep.subr.bf16.mxu0 %v5597
  %8233 = vmatpush1.bf16.msra.mxu0 %v5596
  %8234 = vmatprep.subr.bf16.mxu0 %v5605
  %8235 = vmatpush1.bf16.msra.mxu0 %v5604
  %8236 = vmatprep.subr.bf16.mxu0 %v5613
  %8237 = vmatpush1.bf16.msra.mxu0 %v5612
  %8238 = vmatprep.subr.bf16.mxu0 %v5621
  %8239 = vmatpush1.bf16.msra.mxu0 %v5620
  %8240 = vmatprep.subr.bf16.mxu0 %v5629
  %8241 = vmatpush1.bf16.msra.mxu0 %v5628
  %8242 = vmatprep.subr.bf16.mxu0 %v5637
  %8243 = vmatpush1.bf16.msra.mxu0 %v5636
  %8244 = vmatprep.subr.bf16.mxu0 %v5645
  %8245 = vmatpush1.bf16.msra.mxu0 %v5644
  %8246 = vmatprep.subr.bf16.mxu0 %v5653
  %8247 = vmatpush1.bf16.msra.mxu0 %v5652
  %8248 = vmatprep.subr.bf16.mxu0 %v5661
  %8249 = vmatpush1.bf16.msra.mxu0 %v5660
  %8250 = vmatprep.mubr.bf16.mxu0 %v1922
  %8251 = vmatmul.mubr.bf16.gmra.mrb[0].mxu0 %v1908
  %v8252 = vpop.f32.mrb[0].mxu0
  %v8253 = vadd.f32 %v8212, %v8252
  %v8254 = vpop.f32.mrb[0].mxu0
  %v8255 = vadd.f32 %v8214, %v8254
  %v8256 = vpop.f32.mrb[0].mxu0
  %v8257 = vpop.f32.mrb[0].mxu0
  %8258 = vdwg.mxu0
  %8259 = vmatprep.subr.bf16.mxu0 %v5669
  %8260 = vmatpush1.bf16.msra.mxu0 %v5668
  %8261 = vmatprep.subr.bf16.mxu0 %v5677
  %8262 = vmatpush1.bf16.msra.mxu0 %v5676
  %8263 = vmatprep.subr.bf16.mxu0 %v5685
  %8264 = vmatpush1.bf16.msra.mxu0 %v5684
  %8265 = vmatprep.subr.bf16.mxu0 %v5693
  %8266 = vmatpush1.bf16.msra.mxu0 %v5692
  %8267 = vmatprep.subr.bf16.mxu0 %v5701
  %8268 = vmatpush1.bf16.msra.mxu0 %v5700
  %8269 = vmatprep.subr.bf16.mxu0 %v5709
  %8270 = vmatpush1.bf16.msra.mxu0 %v5708
  %8271 = vmatprep.subr.bf16.mxu0 %v5717
  %8272 = vmatpush1.bf16.msra.mxu0 %v5716
  %8273 = vmatprep.subr.bf16.mxu0 %v5725
  %8274 = vmatpush1.bf16.msra.mxu0 %v5724
  %8275 = vmatprep.subr.bf16.mxu0 %v5733
  %8276 = vmatpush1.bf16.msra.mxu0 %v5732
  %8277 = vmatprep.subr.bf16.mxu0 %v5741
  %8278 = vmatpush1.bf16.msra.mxu0 %v5740
  %8279 = vmatprep.subr.bf16.mxu0 %v5749
  %8280 = vmatpush1.bf16.msra.mxu0 %v5748
  %8281 = vmatprep.subr.bf16.mxu0 %v5757
  %8282 = vmatpush1.bf16.msra.mxu0 %v5756
  %8283 = vmatprep.subr.bf16.mxu0 %v5765
  %8284 = vmatpush1.bf16.msra.mxu0 %v5764
  %8285 = vmatprep.subr.bf16.mxu0 %v5773
  %8286 = vmatpush1.bf16.msra.mxu0 %v5772
  %8287 = vmatprep.subr.bf16.mxu0 %v5781
  %8288 = vmatpush1.bf16.msra.mxu0 %v5780
  %8289 = vmatprep.subr.bf16.mxu0 %v5789
  %8290 = vmatpush1.bf16.msra.mxu0 %v5788
  %8291 = vmatprep.mubr.bf16.mxu0 %v1932
  %8292 = vmatmul.mubr.bf16.gmra.mrb[0].mxu0 %v1930
  %v8293 = vpop.f32.mrb[0].mxu0
  %v8294 = vadd.f32 %v8253, %v8293
  %v8295 = vpop.f32.mrb[0].mxu0
  %v8296 = vadd.f32 %v8255, %v8295
  %v8297 = vpop.f32.mrb[0].mxu0
  %v8298 = vpop.f32.mrb[0].mxu0
  %8299 = vdwg.mxu0
  %8300 = vmatprep.subr.bf16.mxu0 %v5797
  %8301 = vmatpush1.bf16.msra.mxu0 %v5796
  %8302 = vmatprep.subr.bf16.mxu0 %v5805
  %8303 = vmatpush1.bf16.msra.mxu0 %v5804
  %8304 = vmatprep.subr.bf16.mxu0 %v5813
  %8305 = vmatpush1.bf16.msra.mxu0 %v5812
  %8306 = vmatprep.subr.bf16.mxu0 %v5821
  %8307 = vmatpush1.bf16.msra.mxu0 %v5820
  %8308 = vmatprep.subr.bf16.mxu0 %v5829
  %8309 = vmatpush1.bf16.msra.mxu0 %v5828
  %8310 = vmatprep.subr.bf16.mxu0 %v5837
  %8311 = vmatpush1.bf16.msra.mxu0 %v5836
  %8312 = vmatprep.subr.bf16.mxu0 %v5845
  %8313 = vmatpush1.bf16.msra.mxu0 %v5844
  %8314 = vmatprep.subr.bf16.mxu0 %v5853
  %8315 = vmatpush1.bf16.msra.mxu0 %v5852
  %8316 = vmatprep.subr.bf16.mxu0 %v5861
  %8317 = vmatpush1.bf16.msra.mxu0 %v5860
  %8318 = vmatprep.subr.bf16.mxu0 %v5869
  %8319 = vmatpush1.bf16.msra.mxu0 %v5868
  %8320 = vmatprep.subr.bf16.mxu0 %v5877
  %8321 = vmatpush1.bf16.msra.mxu0 %v5876
  %8322 = vmatprep.subr.bf16.mxu0 %v5885
  %8323 = vmatpush1.bf16.msra.mxu0 %v5884
  %8324 = vmatprep.subr.bf16.mxu0 %v5893
  %8325 = vmatpush1.bf16.msra.mxu0 %v5892
  %8326 = vmatprep.subr.bf16.mxu0 %v5901
  %8327 = vmatpush1.bf16.msra.mxu0 %v5900
  %8328 = vmatprep.subr.bf16.mxu0 %v5909
  %8329 = vmatpush1.bf16.msra.mxu0 %v5908
  %8330 = vmatprep.subr.bf16.mxu0 %v5917
  %8331 = vmatpush1.bf16.msra.mxu0 %v5916
  %8332 = vmatprep.mubr.bf16.mxu0 %v1929
  %8333 = vmatmul.mubr.bf16.gmra.mrb[0].mxu0 %v1915
  %v8334 = vpop.f32.mrb[0].mxu0
  %v8335 = vadd.f32 %v8294, %v8334
  %v8336 = vpop.f32.mrb[0].mxu0
  %v8337 = vadd.f32 %v8296, %v8336
  %v8338 = vpop.f32.mrb[0].mxu0
  %v8339 = vpop.f32.mrb[0].mxu0
  %8340 = vdwg.mxu0
  %8341 = vmatprep.subr.bf16.mxu0 %v5925
  %8342 = vmatpush1.bf16.msra.mxu0 %v5924
  %8343 = vmatprep.subr.bf16.mxu0 %v5933
  %8344 = vmatpush1.bf16.msra.mxu0 %v5932
  %8345 = vmatprep.subr.bf16.mxu0 %v5941
  %8346 = vmatpush1.bf16.msra.mxu0 %v5940
  %8347 = vmatprep.subr.bf16.mxu0 %v5949
  %8348 = vmatpush1.bf16.msra.mxu0 %v5948
  %8349 = vmatprep.subr.bf16.mxu0 %v5957
  %8350 = vmatpush1.bf16.msra.mxu0 %v5956
  %8351 = vmatprep.subr.bf16.mxu0 %v5965
  %8352 = vmatpush1.bf16.msra.mxu0 %v5964
  %8353 = vmatprep.subr.bf16.mxu0 %v5973
  %8354 = vmatpush1.bf16.msra.mxu0 %v5972
  %8355 = vmatprep.subr.bf16.mxu0 %v5981
  %8356 = vmatpush1.bf16.msra.mxu0 %v5980
  %8357 = vmatprep.subr.bf16.mxu0 %v5989
  %8358 = vmatpush1.bf16.msra.mxu0 %v5988
  %8359 = vmatprep.subr.bf16.mxu0 %v5997
  %8360 = vmatpush1.bf16.msra.mxu0 %v5996
  %8361 = vmatprep.subr.bf16.mxu0 %v6005
  %8362 = vmatpush1.bf16.msra.mxu0 %v6004
  %8363 = vmatprep.subr.bf16.mxu0 %v6013
  %8364 = vmatpush1.bf16.msra.mxu0 %v6012
  %8365 = vmatprep.subr.bf16.mxu0 %v6021
  %8366 = vmatpush1.bf16.msra.mxu0 %v6020
  %8367 = vmatprep.subr.bf16.mxu0 %v6029
  %8368 = vmatpush1.bf16.msra.mxu0 %v6028
  %8369 = vmatprep.subr.bf16.mxu0 %v6037
  %8370 = vmatpush1.bf16.msra.mxu0 %v6036
  %8371 = vmatprep.subr.bf16.mxu0 %v6045
  %8372 = vmatpush1.bf16.msra.mxu0 %v6044
  %8373 = vmatprep.mubr.bf16.mxu0 %v1933
  %8374 = vmatmul.mubr.bf16.gmra.mrb[0].mxu0 %v1931
  %v8375 = vpop.f32.mrb[0].mxu0
  %v8376 = vadd.f32 %v8335, %v8375
  %v8377 = vpop.f32.mrb[0].mxu0
  %v8378 = vadd.f32 %v8337, %v8377
  %v8379 = vpop.f32.mrb[0].mxu0
  %v8380 = vpop.f32.mrb[0].mxu0
  %8381 = vdwg.mxu0
  %v8382 = vmax.f32 %v7392, 0.0
  %v8383 = vmax.f32 %v7394, 0.0
  %v8384 = vmax.f32 %v7720, 0.0
  %v8385 = vmax.f32 %v7722, 0.0
  %v8386 = vmax.f32 %v8048, 0.0
  %v8387 = vmax.f32 %v8050, 0.0
  %v8388 = vmax.f32 %v8376, 0.0
  %v8389 = vmax.f32 %v8378, 0.0
  %v8390 = vpack.c.bf16 %v8382, %v8382
  %v8391 = vpack.c.bf16 %v8383, %v8383
  %v8392 = vpack.c.bf16 %v8384, %v8384
  %v8393 = vpack.c.bf16 %v8385, %v8385
  %v8394 = vpack.c.bf16 %v8386, %v8386
  %v8395 = vpack.c.bf16 %v8387, %v8387
  %v8396 = vpack.c.bf16 %v8388, %v8388
  %v8397 = vpack.c.bf16 %v8389, %v8389
  %v8398 = vld [vmem:[%s7] sm:$0xf]
  %v8399 = vld [vmem:[%s7 + $0x4] sm:$0xf]
  %v8400 = vld [vmem:[%s7 + $0x8] sm:$0xf]
  %v8401 = vld [vmem:[%s7 + $0xc] sm:$0xf]
  %v8402 = vld [vmem:[%s7 + $0x10] sm:$0xf]
  %v8403 = vld [vmem:[%s7 + $0x14] sm:$0xf]
  %v8404 = vld [vmem:[%s7 + $0x18] sm:$0xf]
  %v8405 = vld [vmem:[%s7 + $0x1c] sm:$0xf]
  %v8406 = vld [vmem:[%s7 + $0x20] sm:$0xf]
  %v8407 = vld [vmem:[%s7 + $0x24] sm:$0xf]
  %v8408 = vld [vmem:[%s7 + $0x28] sm:$0xf]
  %v8409 = vld [vmem:[%s7 + $0x2c] sm:$0xf]
  %v8410 = vld [vmem:[%s7 + $0x30] sm:$0xf]
  %v8411 = vld [vmem:[%s7 + $0x34] sm:$0xf]
  %v8412 = vld [vmem:[%s7 + $0x38] sm:$0xf]
  %v8413 = vld [vmem:[%s7 + $0x3c] sm:$0xf]
  %v8414 = vld [vmem:[%s7 + $0x40] sm:$0xf]
  %v8415 = vld [vmem:[%s7 + $0x44] sm:$0xf]
  %v8416 = vld [vmem:[%s7 + $0x48] sm:$0xf]
  %v8417 = vld [vmem:[%s7 + $0x4c] sm:$0xf]
  %v8418 = vld [vmem:[%s7 + $0x50] sm:$0xf]
  %v8419 = vld [vmem:[%s7 + $0x54] sm:$0xf]
  %v8420 = vld [vmem:[%s7 + $0x58] sm:$0xf]
  %v8421 = vld [vmem:[%s7 + $0x5c] sm:$0xf]
  %v8422 = vld [vmem:[%s7 + $0x60] sm:$0xf]
  %v8423 = vld [vmem:[%s7 + $0x64] sm:$0xf]
  %v8424 = vld [vmem:[%s7 + $0x68] sm:$0xf]
  %v8425 = vld [vmem:[%s7 + $0x6c] sm:$0xf]
  %v8426 = vld [vmem:[%s7 + $0x70] sm:$0xf]
  %v8427 = vld [vmem:[%s7 + $0x74] sm:$0xf]
  %v8428 = vld [vmem:[%s7 + $0x78] sm:$0xf]
  %v8429 = vld [vmem:[%s7 + $0x7c] sm:$0xf]
  %v8430 = vld [vmem:[%s7 + $0x80] sm:$0xf]
  %v8431 = vld [vmem:[%s7 + $0x84] sm:$0xf]
  %v8432 = vld [vmem:[%s7 + $0x88] sm:$0xf]
  %v8433 = vld [vmem:[%s7 + $0x8c] sm:$0xf]
  %v8434 = vld [vmem:[%s7 + $0x90] sm:$0xf]
  %v8435 = vld [vmem:[%s7 + $0x94] sm:$0xf]
  %v8436 = vld [vmem:[%s7 + $0x98] sm:$0xf]
  %v8437 = vld [vmem:[%s7 + $0x9c] sm:$0xf]
  %v8438 = vld [vmem:[%s7 + $0xa0] sm:$0xf]
  %v8439 = vld [vmem:[%s7 + $0xa4] sm:$0xf]
  %v8440 = vld [vmem:[%s7 + $0xa8] sm:$0xf]
  %v8441 = vld [vmem:[%s7 + $0xac] sm:$0xf]
  %v8442 = vld [vmem:[%s7 + $0xb0] sm:$0xf]
  %v8443 = vld [vmem:[%s7 + $0xb4] sm:$0xf]
  %v8444 = vld [vmem:[%s7 + $0xb8] sm:$0xf]
  %v8445 = vld [vmem:[%s7 + $0xbc] sm:$0xf]
  %v8446 = vld [vmem:[%s7 + $0xc0] sm:$0xf]
  %v8447 = vld [vmem:[%s7 + $0xc4] sm:$0xf]
  %v8448 = vld [vmem:[%s7 + $0xc8] sm:$0xf]
  %v8449 = vld [vmem:[%s7 + $0xcc] sm:$0xf]
  %v8450 = vld [vmem:[%s7 + $0xd0] sm:$0xf]
  %v8451 = vld [vmem:[%s7 + $0xd4] sm:$0xf]
  %v8452 = vld [vmem:[%s7 + $0xd8] sm:$0xf]
  %v8453 = vld [vmem:[%s7 + $0xdc] sm:$0xf]
  %v8454 = vld [vmem:[%s7 + $0xe0] sm:$0xf]
  %v8455 = vld [vmem:[%s7 + $0xe4] sm:$0xf]
  %v8456 = vld [vmem:[%s7 + $0xe8] sm:$0xf]
  %v8457 = vld [vmem:[%s7 + $0xec] sm:$0xf]
  %v8458 = vld [vmem:[%s7 + $0xf0] sm:$0xf]
  %v8459 = vld [vmem:[%s7 + $0xf4] sm:$0xf]
  %v8460 = vld [vmem:[%s7 + $0xf8] sm:$0xf]
  %v8461 = vld [vmem:[%s7 + $0xfc] sm:$0xf]
  %v8462 = vld [vmem:[%s7 + $0x100] sm:$0xf]
  %v8463 = vld [vmem:[%s7 + $0x104] sm:$0xf]
  %v8464 = vld [vmem:[%s7 + $0x108] sm:$0xf]
  %v8465 = vld [vmem:[%s7 + $0x10c] sm:$0xf]
  %v8466 = vld [vmem:[%s7 + $0x110] sm:$0xf]
  %v8467 = vld [vmem:[%s7 + $0x114] sm:$0xf]
  %v8468 = vld [vmem:[%s7 + $0x118] sm:$0xf]
  %v8469 = vld [vmem:[%s7 + $0x11c] sm:$0xf]
  %v8470 = vld [vmem:[%s7 + $0x120] sm:$0xf]
  %v8471 = vld [vmem:[%s7 + $0x124] sm:$0xf]
  %v8472 = vld [vmem:[%s7 + $0x128] sm:$0xf]
  %v8473 = vld [vmem:[%s7 + $0x12c] sm:$0xf]
  %v8474 = vld [vmem:[%s7 + $0x130] sm:$0xf]
  %v8475 = vld [vmem:[%s7 + $0x134] sm:$0xf]
  %v8476 = vld [vmem:[%s7 + $0x138] sm:$0xf]
  %v8477 = vld [vmem:[%s7 + $0x13c] sm:$0xf]
  %v8478 = vld [vmem:[%s7 + $0x140] sm:$0xf]
  %v8479 = vld [vmem:[%s7 + $0x144] sm:$0xf]
  %v8480 = vld [vmem:[%s7 + $0x148] sm:$0xf]
  %v8481 = vld [vmem:[%s7 + $0x14c] sm:$0xf]
  %v8482 = vld [vmem:[%s7 + $0x150] sm:$0xf]
  %v8483 = vld [vmem:[%s7 + $0x154] sm:$0xf]
  %v8484 = vld [vmem:[%s7 + $0x158] sm:$0xf]
  %v8485 = vld [vmem:[%s7 + $0x15c] sm:$0xf]
  %v8486 = vld [vmem:[%s7 + $0x160] sm:$0xf]
  %v8487 = vld [vmem:[%s7 + $0x164] sm:$0xf]
  %v8488 = vld [vmem:[%s7 + $0x168] sm:$0xf]
  %v8489 = vld [vmem:[%s7 + $0x16c] sm:$0xf]
  %v8490 = vld [vmem:[%s7 + $0x170] sm:$0xf]
  %v8491 = vld [vmem:[%s7 + $0x174] sm:$0xf]
  %v8492 = vld [vmem:[%s7 + $0x178] sm:$0xf]
  %v8493 = vld [vmem:[%s7 + $0x17c] sm:$0xf]
  %v8494 = vld [vmem:[%s7 + $0x180] sm:$0xf]
  %v8495 = vld [vmem:[%s7 + $0x184] sm:$0xf]
  %v8496 = vld [vmem:[%s7 + $0x188] sm:$0xf]
  %v8497 = vld [vmem:[%s7 + $0x18c] sm:$0xf]
  %v8498 = vld [vmem:[%s7 + $0x190] sm:$0xf]
  %v8499 = vld [vmem:[%s7 + $0x194] sm:$0xf]
  %v8500 = vld [vmem:[%s7 + $0x198] sm:$0xf]
  %v8501 = vld [vmem:[%s7 + $0x19c] sm:$0xf]
  %v8502 = vld [vmem:[%s7 + $0x1a0] sm:$0xf]
  %v8503 = vld [vmem:[%s7 + $0x1a4] sm:$0xf]
  %v8504 = vld [vmem:[%s7 + $0x1a8] sm:$0xf]
  %v8505 = vld [vmem:[%s7 + $0x1ac] sm:$0xf]
  %v8506 = vld [vmem:[%s7 + $0x1b0] sm:$0xf]
  %v8507 = vld [vmem:[%s7 + $0x1b4] sm:$0xf]
  %v8508 = vld [vmem:[%s7 + $0x1b8] sm:$0xf]
  %v8509 = vld [vmem:[%s7 + $0x1bc] sm:$0xf]
  %v8510 = vld [vmem:[%s7 + $0x1c0] sm:$0xf]
  %v8511 = vld [vmem:[%s7 + $0x1c4] sm:$0xf]
  %v8512 = vld [vmem:[%s7 + $0x1c8] sm:$0xf]
  %v8513 = vld [vmem:[%s7 + $0x1cc] sm:$0xf]
  %v8514 = vld [vmem:[%s7 + $0x1d0] sm:$0xf]
  %v8515 = vld [vmem:[%s7 + $0x1d4] sm:$0xf]
  %v8516 = vld [vmem:[%s7 + $0x1d8] sm:$0xf]
  %v8517 = vld [vmem:[%s7 + $0x1dc] sm:$0xf]
  %v8518 = vld [vmem:[%s7 + $0x1e0] sm:$0xf]
  %v8519 = vld [vmem:[%s7 + $0x1e4] sm:$0xf]
  %v8520 = vld [vmem:[%s7 + $0x1e8] sm:$0xf]
  %v8521 = vld [vmem:[%s7 + $0x1ec] sm:$0xf]
  %v8522 = vld [vmem:[%s7 + $0x1f0] sm:$0xf]
  %v8523 = vld [vmem:[%s7 + $0x1f4] sm:$0xf]
  %v8524 = vld [vmem:[%s7 + $0x1f8] sm:$0xf]
  %v8525 = vld [vmem:[%s7 + $0x1fc] sm:$0xf]
  %v8526 = vld [vmem:[%s8] sm:$0x1]
  %v8528 = vlaneseq
  %v8529 = vshrl.u32 %v8528, 7
  %v8530 = vsub.s32 0, %v8529
  %v8531 = vrot.slane %v8526, %v8530
  %v8661 = vunpack.c.l.b16 %v8398
  %v8662 = vunpack.c.l.b16 %v8399
  %v8663 = vunpack.c.l.b16 %v8400
  %v8664 = vunpack.c.l.b16 %v8401
  %v8665 = vunpack.c.l.b16 %v8402
  %v8666 = vunpack.c.l.b16 %v8403
  %v8667 = vunpack.c.l.b16 %v8404
  %v8668 = vunpack.c.l.b16 %v8405
  %v8669 = vunpack.c.l.b16 %v8406
  %v8670 = vunpack.c.l.b16 %v8407
  %v8671 = vunpack.c.l.b16 %v8408
  %v8672 = vunpack.c.l.b16 %v8409
  %v8673 = vunpack.c.l.b16 %v8410
  %v8674 = vunpack.c.l.b16 %v8411
  %v8675 = vunpack.c.l.b16 %v8412
  %v8676 = vunpack.c.l.b16 %v8413
  %v8677 = vunpack.c.l.b16 %v8414
  %v8678 = vunpack.c.l.b16 %v8415
  %v8679 = vunpack.c.l.b16 %v8416
  %v8680 = vunpack.c.l.b16 %v8417
  %v8681 = vunpack.c.l.b16 %v8418
  %v8682 = vunpack.c.l.b16 %v8419
  %v8683 = vunpack.c.l.b16 %v8420
  %v8684 = vunpack.c.l.b16 %v8421
  %v8685 = vunpack.c.l.b16 %v8422
  %v8686 = vunpack.c.l.b16 %v8423
  %v8687 = vunpack.c.l.b16 %v8424
  %v8688 = vunpack.c.l.b16 %v8425
  %v8689 = vunpack.c.l.b16 %v8426
  %v8690 = vunpack.c.l.b16 %v8427
  %v8691 = vunpack.c.l.b16 %v8428
  %v8692 = vunpack.c.l.b16 %v8429
  %v8693 = vunpack.c.l.b16 %v8430
  %v8694 = vunpack.c.l.b16 %v8431
  %v8695 = vunpack.c.l.b16 %v8432
  %v8696 = vunpack.c.l.b16 %v8433
  %v8697 = vunpack.c.l.b16 %v8434
  %v8698 = vunpack.c.l.b16 %v8435
  %v8699 = vunpack.c.l.b16 %v8436
  %v8700 = vunpack.c.l.b16 %v8437
  %v8701 = vunpack.c.l.b16 %v8438
  %v8702 = vunpack.c.l.b16 %v8439
  %v8703 = vunpack.c.l.b16 %v8440
  %v8704 = vunpack.c.l.b16 %v8441
  %v8705 = vunpack.c.l.b16 %v8442
  %v8706 = vunpack.c.l.b16 %v8443
  %v8707 = vunpack.c.l.b16 %v8444
  %v8708 = vunpack.c.l.b16 %v8445
  %v8709 = vunpack.c.l.b16 %v8446
  %v8710 = vunpack.c.l.b16 %v8447
  %v8711 = vunpack.c.l.b16 %v8448
  %v8712 = vunpack.c.l.b16 %v8449
  %v8713 = vunpack.c.l.b16 %v8450
  %v8714 = vunpack.c.l.b16 %v8451
  %v8715 = vunpack.c.l.b16 %v8452
  %v8716 = vunpack.c.l.b16 %v8453
  %v8717 = vunpack.c.l.b16 %v8454
  %v8718 = vunpack.c.l.b16 %v8455
  %v8719 = vunpack.c.l.b16 %v8456
  %v8720 = vunpack.c.l.b16 %v8457
  %v8721 = vunpack.c.l.b16 %v8458
  %v8722 = vunpack.c.l.b16 %v8459
  %v8723 = vunpack.c.l.b16 %v8460
  %v8724 = vunpack.c.l.b16 %v8461
  %v8725 = vunpack.c.l.b16 %v8462
  %v8726 = vunpack.c.l.b16 %v8463
  %v8727 = vunpack.c.l.b16 %v8464
  %v8728 = vunpack.c.l.b16 %v8465
  %v8729 = vunpack.c.l.b16 %v8466
  %v8730 = vunpack.c.l.b16 %v8467
  %v8731 = vunpack.c.l.b16 %v8468
  %v8732 = vunpack.c.l.b16 %v8469
  %v8733 = vunpack.c.l.b16 %v8470
  %v8734 = vunpack.c.l.b16 %v8471
  %v8735 = vunpack.c.l.b16 %v8472
  %v8736 = vunpack.c.l.b16 %v8473
  %v8737 = vunpack.c.l.b16 %v8474
  %v8738 = vunpack.c.l.b16 %v8475
  %v8739 = vunpack.c.l.b16 %v8476
  %v8740 = vunpack.c.l.b16 %v8477
  %v8741 = vunpack.c.l.b16 %v8478
  %v8742 = vunpack.c.l.b16 %v8479
  %v8743 = vunpack.c.l.b16 %v8480
  %v8744 = vunpack.c.l.b16 %v8481
  %v8745 = vunpack.c.l.b16 %v8482
  %v8746 = vunpack.c.l.b16 %v8483
  %v8747 = vunpack.c.l.b16 %v8484
  %v8748 = vunpack.c.l.b16 %v8485
  %v8749 = vunpack.c.l.b16 %v8486
  %v8750 = vunpack.c.l.b16 %v8487
  %v8751 = vunpack.c.l.b16 %v8488
  %v8752 = vunpack.c.l.b16 %v8489
  %v8753 = vunpack.c.l.b16 %v8490
  %v8754 = vunpack.c.l.b16 %v8491
  %v8755 = vunpack.c.l.b16 %v8492
  %v8756 = vunpack.c.l.b16 %v8493
  %v8757 = vunpack.c.l.b16 %v8494
  %v8758 = vunpack.c.l.b16 %v8495
  %v8759 = vunpack.c.l.b16 %v8496
  %v8760 = vunpack.c.l.b16 %v8497
  %v8761 = vunpack.c.l.b16 %v8498
  %v8762 = vunpack.c.l.b16 %v8499
  %v8763 = vunpack.c.l.b16 %v8500
  %v8764 = vunpack.c.l.b16 %v8501
  %v8765 = vunpack.c.l.b16 %v8502
  %v8766 = vunpack.c.l.b16 %v8503
  %v8767 = vunpack.c.l.b16 %v8504
  %v8768 = vunpack.c.l.b16 %v8505
  %v8769 = vunpack.c.l.b16 %v8506
  %v8770 = vunpack.c.l.b16 %v8507
  %v8771 = vunpack.c.l.b16 %v8508
  %v8772 = vunpack.c.l.b16 %v8509
  %v8773 = vunpack.c.l.b16 %v8510
  %v8774 = vunpack.c.l.b16 %v8511
  %v8775 = vunpack.c.l.b16 %v8512
  %v8776 = vunpack.c.l.b16 %v8513
  %v8777 = vunpack.c.l.b16 %v8514
  %v8778 = vunpack.c.l.b16 %v8515
  %v8779 = vunpack.c.l.b16 %v8516
  %v8780 = vunpack.c.l.b16 %v8517
  %v8781 = vunpack.c.l.b16 %v8518
  %v8782 = vunpack.c.l.b16 %v8519
  %v8783 = vunpack.c.l.b16 %v8520
  %v8784 = vunpack.c.l.b16 %v8521
  %v8785 = vunpack.c.l.b16 %v8522
  %v8786 = vunpack.c.l.b16 %v8523
  %v8787 = vunpack.c.l.b16 %v8524
  %v8788 = vunpack.c.l.b16 %v8525
  %v8789 = vpack.c.b16 %v8662, %v8661
  %v8790 = vpack.c.b16 %v8664, %v8663
  %v8791 = vpack.c.b16 %v8666, %v8665
  %v8792 = vpack.c.b16 %v8668, %v8667
  %v8793 = vpack.c.b16 %v8670, %v8669
  %v8794 = vpack.c.b16 %v8672, %v8671
  %v8795 = vpack.c.b16 %v8674, %v8673
  %v8796 = vpack.c.b16 %v8676, %v8675
  %v8797 = vpack.c.b16 %v8678, %v8677
  %v8798 = vpack.c.b16 %v8680, %v8679
  %v8799 = vpack.c.b16 %v8682, %v8681
  %v8800 = vpack.c.b16 %v8684, %v8683
  %v8801 = vpack.c.b16 %v8686, %v8685
  %v8802 = vpack.c.b16 %v8688, %v8687
  %v8803 = vpack.c.b16 %v8690, %v8689
  %v8804 = vpack.c.b16 %v8692, %v8691
  %v8805 = vpack.c.b16 %v8694, %v8693
  %v8806 = vpack.c.b16 %v8696, %v8695
  %v8807 = vpack.c.b16 %v8698, %v8697
  %v8808 = vpack.c.b16 %v8700, %v8699
  %v8809 = vpack.c.b16 %v8702, %v8701
  %v8810 = vpack.c.b16 %v8704, %v8703
  %v8811 = vpack.c.b16 %v8706, %v8705
  %v8812 = vpack.c.b16 %v8708, %v8707
  %v8813 = vpack.c.b16 %v8710, %v8709
  %v8814 = vpack.c.b16 %v8712, %v8711
  %v8815 = vpack.c.b16 %v8714, %v8713
  %v8816 = vpack.c.b16 %v8716, %v8715
  %v8817 = vpack.c.b16 %v8718, %v8717
  %v8818 = vpack.c.b16 %v8720, %v8719
  %v8819 = vpack.c.b16 %v8722, %v8721
  %v8820 = vpack.c.b16 %v8724, %v8723
  %v8821 = vpack.c.b16 %v8726, %v8725
  %v8822 = vpack.c.b16 %v8728, %v8727
  %v8823 = vpack.c.b16 %v8730, %v8729
  %v8824 = vpack.c.b16 %v8732, %v8731
  %v8825 = vpack.c.b16 %v8734, %v8733
  %v8826 = vpack.c.b16 %v8736, %v8735
  %v8827 = vpack.c.b16 %v8738, %v8737
  %v8828 = vpack.c.b16 %v8740, %v8739
  %v8829 = vpack.c.b16 %v8742, %v8741
  %v8830 = vpack.c.b16 %v8744, %v8743
  %v8831 = vpack.c.b16 %v8746, %v8745
  %v8832 = vpack.c.b16 %v8748, %v8747
  %v8833 = vpack.c.b16 %v8750, %v8749
  %v8834 = vpack.c.b16 %v8752, %v8751
  %v8835 = vpack.c.b16 %v8754, %v8753
  %v8836 = vpack.c.b16 %v8756, %v8755
  %v8837 = vpack.c.b16 %v8758, %v8757
  %v8838 = vpack.c.b16 %v8760, %v8759
  %v8839 = vpack.c.b16 %v8762, %v8761
  %v8840 = vpack.c.b16 %v8764, %v8763
  %v8841 = vpack.c.b16 %v8766, %v8765
  %v8842 = vpack.c.b16 %v8768, %v8767
  %v8843 = vpack.c.b16 %v8770, %v8769
  %v8844 = vpack.c.b16 %v8772, %v8771
  %v8845 = vpack.c.b16 %v8774, %v8773
  %v8846 = vpack.c.b16 %v8776, %v8775
  %v8847 = vpack.c.b16 %v8778, %v8777
  %v8848 = vpack.c.b16 %v8780, %v8779
  %v8849 = vpack.c.b16 %v8782, %v8781
  %v8850 = vpack.c.b16 %v8784, %v8783
  %v8851 = vpack.c.b16 %v8786, %v8785
  %v8852 = vpack.c.b16 %v8788, %v8787
  %8917 = vmatprep.subr.bf16.mxu0 0
  %8918 = vmatpush1.bf16.msra.mxu0 %v8789
  %8919 = vmatprep.subr.bf16.mxu0 0
  %8920 = vmatpush1.bf16.msra.mxu0 %v8790
  %8921 = vmatprep.subr.bf16.mxu0 0
  %8922 = vmatpush1.bf16.msra.mxu0 %v8791
  %8923 = vmatprep.subr.bf16.mxu0 0
  %8924 = vmatpush1.bf16.msra.mxu0 %v8792
  %8925 = vmatprep.subr.bf16.mxu0 0
  %8926 = vmatpush1.bf16.msra.mxu0 %v8793
  %8927 = vmatprep.subr.bf16.mxu0 0
  %8928 = vmatpush1.bf16.msra.mxu0 %v8794
  %8929 = vmatprep.subr.bf16.mxu0 0
  %8930 = vmatpush1.bf16.msra.mxu0 %v8795
  %8931 = vmatprep.subr.bf16.mxu0 0
  %8932 = vmatpush1.bf16.msra.mxu0 %v8796
  %8933 = vmatprep.subr.bf16.mxu0 0
  %8934 = vmatpush1.bf16.msra.mxu0 %v8797
  %8935 = vmatprep.subr.bf16.mxu0 0
  %8936 = vmatpush1.bf16.msra.mxu0 %v8798
  %8937 = vmatprep.subr.bf16.mxu0 0
  %8938 = vmatpush1.bf16.msra.mxu0 %v8799
  %8939 = vmatprep.subr.bf16.mxu0 0
  %8940 = vmatpush1.bf16.msra.mxu0 %v8800
  %8941 = vmatprep.subr.bf16.mxu0 0
  %8942 = vmatpush1.bf16.msra.mxu0 %v8801
  %8943 = vmatprep.subr.bf16.mxu0 0
  %8944 = vmatpush1.bf16.msra.mxu0 %v8802
  %8945 = vmatprep.subr.bf16.mxu0 0
  %8946 = vmatpush1.bf16.msra.mxu0 %v8803
  %8947 = vmatprep.subr.bf16.mxu0 0
  %8948 = vmatpush1.bf16.msra.mxu0 %v8804
  %8949 = vmatprep.mubr.bf16.mxu0 %v8391
  %8950 = vmatmul.mubr.bf16.gmra.mrb[0].mxu0 %v8390
  %v8951 = vpop.f32.mrb[0].mxu0
  %v8952 = vadd.f32 %v8531, %v8951
  %v8953 = vpop.f32.mrb[0].mxu0
  %v8954 = vpop.f32.mrb[0].mxu0
  %v8955 = vpop.f32.mrb[0].mxu0
  %8956 = vdwg.mxu0
  %8957 = vmatprep.subr.bf16.mxu0 0
  %8958 = vmatpush1.bf16.msra.mxu0 %v8805
  %8959 = vmatprep.subr.bf16.mxu0 0
  %8960 = vmatpush1.bf16.msra.mxu0 %v8806
  %8961 = vmatprep.subr.bf16.mxu0 0
  %8962 = vmatpush1.bf16.msra.mxu0 %v8807
  %8963 = vmatprep.subr.bf16.mxu0 0
  %8964 = vmatpush1.bf16.msra.mxu0 %v8808
  %8965 = vmatprep.subr.bf16.mxu0 0
  %8966 = vmatpush1.bf16.msra.mxu0 %v8809
  %8967 = vmatprep.subr.bf16.mxu0 0
  %8968 = vmatpush1.bf16.msra.mxu0 %v8810
  %8969 = vmatprep.subr.bf16.mxu0 0
  %8970 = vmatpush1.bf16.msra.mxu0 %v8811
  %8971 = vmatprep.subr.bf16.mxu0 0
  %8972 = vmatpush1.bf16.msra.mxu0 %v8812
  %8973 = vmatprep.subr.bf16.mxu0 0
  %8974 = vmatpush1.bf16.msra.mxu0 %v8813
  %8975 = vmatprep.subr.bf16.mxu0 0
  %8976 = vmatpush1.bf16.msra.mxu0 %v8814
  %8977 = vmatprep.subr.bf16.mxu0 0
  %8978 = vmatpush1.bf16.msra.mxu0 %v8815
  %8979 = vmatprep.subr.bf16.mxu0 0
  %8980 = vmatpush1.bf16.msra.mxu0 %v8816
  %8981 = vmatprep.subr.bf16.mxu0 0
  %8982 = vmatpush1.bf16.msra.mxu0 %v8817
  %8983 = vmatprep.subr.bf16.mxu0 0
  %8984 = vmatpush1.bf16.msra.mxu0 %v8818
  %8985 = vmatprep.subr.bf16.mxu0 0
  %8986 = vmatpush1.bf16.msra.mxu0 %v8819
  %8987 = vmatprep.subr.bf16.mxu0 0
  %8988 = vmatpush1.bf16.msra.mxu0 %v8820
  %8989 = vmatprep.mubr.bf16.mxu0 %v8393
  %8990 = vmatmul.mubr.bf16.gmra.mrb[0].mxu0 %v8392
  %v8991 = vpop.f32.mrb[0].mxu0
  %v8992 = vadd.f32 %v8952, %v8991
  %v8993 = vpop.f32.mrb[0].mxu0
  %v8994 = vpop.f32.mrb[0].mxu0
  %v8995 = vpop.f32.mrb[0].mxu0
  %8996 = vdwg.mxu0
  %8997 = vmatprep.subr.bf16.mxu0 0
  %8998 = vmatpush1.bf16.msra.mxu0 %v8821
  %8999 = vmatprep.subr.bf16.mxu0 0
  %9000 = vmatpush1.bf16.msra.mxu0 %v8822
  %9001 = vmatprep.subr.bf16.mxu0 0
  %9002 = vmatpush1.bf16.msra.mxu0 %v8823
  %9003 = vmatprep.subr.bf16.mxu0 0
  %9004 = vmatpush1.bf16.msra.mxu0 %v8824
  %9005 = vmatprep.subr.bf16.mxu0 0
  %9006 = vmatpush1.bf16.msra.mxu0 %v8825
  %9007 = vmatprep.subr.bf16.mxu0 0
  %9008 = vmatpush1.bf16.msra.mxu0 %v8826
  %9009 = vmatprep.subr.bf16.mxu0 0
  %9010 = vmatpush1.bf16.msra.mxu0 %v8827
  %9011 = vmatprep.subr.bf16.mxu0 0
  %9012 = vmatpush1.bf16.msra.mxu0 %v8828
  %9013 = vmatprep.subr.bf16.mxu0 0
  %9014 = vmatpush1.bf16.msra.mxu0 %v8829
  %9015 = vmatprep.subr.bf16.mxu0 0
  %9016 = vmatpush1.bf16.msra.mxu0 %v8830
  %9017 = vmatprep.subr.bf16.mxu0 0
  %9018 = vmatpush1.bf16.msra.mxu0 %v8831
  %9019 = vmatprep.subr.bf16.mxu0 0
  %9020 = vmatpush1.bf16.msra.mxu0 %v8832
  %9021 = vmatprep.subr.bf16.mxu0 0
  %9022 = vmatpush1.bf16.msra.mxu0 %v8833
  %9023 = vmatprep.subr.bf16.mxu0 0
  %9024 = vmatpush1.bf16.msra.mxu0 %v8834
  %9025 = vmatprep.subr.bf16.mxu0 0
  %9026 = vmatpush1.bf16.msra.mxu0 %v8835
  %9027 = vmatprep.subr.bf16.mxu0 0
  %9028 = vmatpush1.bf16.msra.mxu0 %v8836
  %9029 = vmatprep.mubr.bf16.mxu0 %v8395
  %9030 = vmatmul.mubr.bf16.gmra.mrb[0].mxu0 %v8394
  %v9031 = vpop.f32.mrb[0].mxu0
  %v9032 = vadd.f32 %v8992, %v9031
  %v9033 = vpop.f32.mrb[0].mxu0
  %v9034 = vpop.f32.mrb[0].mxu0
  %v9035 = vpop.f32.mrb[0].mxu0
  %9036 = vdwg.mxu0
  %9037 = vmatprep.subr.bf16.mxu0 0
  %9038 = vmatpush1.bf16.msra.mxu0 %v8837
  %9039 = vmatprep.subr.bf16.mxu0 0
  %9040 = vmatpush1.bf16.msra.mxu0 %v8838
  %9041 = vmatprep.subr.bf16.mxu0 0
  %9042 = vmatpush1.bf16.msra.mxu0 %v8839
  %9043 = vmatprep.subr.bf16.mxu0 0
  %9044 = vmatpush1.bf16.msra.mxu0 %v8840
  %9045 = vmatprep.subr.bf16.mxu0 0
  %9046 = vmatpush1.bf16.msra.mxu0 %v8841
  %9047 = vmatprep.subr.bf16.mxu0 0
  %9048 = vmatpush1.bf16.msra.mxu0 %v8842
  %9049 = vmatprep.subr.bf16.mxu0 0
  %9050 = vmatpush1.bf16.msra.mxu0 %v8843
  %9051 = vmatprep.subr.bf16.mxu0 0
  %9052 = vmatpush1.bf16.msra.mxu0 %v8844
  %9053 = vmatprep.subr.bf16.mxu0 0
  %9054 = vmatpush1.bf16.msra.mxu0 %v8845
  %9055 = vmatprep.subr.bf16.mxu0 0
  %9056 = vmatpush1.bf16.msra.mxu0 %v8846
  %9057 = vmatprep.subr.bf16.mxu0 0
  %9058 = vmatpush1.bf16.msra.mxu0 %v8847
  %9059 = vmatprep.subr.bf16.mxu0 0
  %9060 = vmatpush1.bf16.msra.mxu0 %v8848
  %9061 = vmatprep.subr.bf16.mxu0 0
  %9062 = vmatpush1.bf16.msra.mxu0 %v8849
  %9063 = vmatprep.subr.bf16.mxu0 0
  %9064 = vmatpush1.bf16.msra.mxu0 %v8850
  %9065 = vmatprep.subr.bf16.mxu0 0
  %9066 = vmatpush1.bf16.msra.mxu0 %v8851
  %9067 = vmatprep.subr.bf16.mxu0 0
  %9068 = vmatpush1.bf16.msra.mxu0 %v8852
  %9069 = vmatprep.mubr.bf16.mxu0 %v8397
  %9070 = vmatmul.mubr.bf16.gmra.mrb[0].mxu0 %v8396
  %v9071 = vpop.f32.mrb[0].mxu0
  %v9072 = vadd.f32 %v9032, %v9071
  %v9073 = vpop.f32.mrb[0].mxu0
  %v9074 = vpop.f32.mrb[0].mxu0
  %v9075 = vpop.f32.mrb[0].mxu0
  %9076 = vdwg.mxu0
  %9077 = vst [vmem:[%s9] sm:$0xff] %v9072
  // Predicated region
  $region38: #{inception_aux_forward.1} parent=0 // pred_check
    _
  $region39: #{inception_aux_forward.1} parent=0 // pred_check_branch
    %9079 = sbr.rel (0) target = $region41
  $region40: #{inception_aux_forward.1} parent=0 // pred_region
    _
  $region41: #{inception_aux_forward.1} parent=0 // pred_fallthru
    _
  // Predicated region
  $region42: #{inception_aux_forward.1} parent=0 // pred_check
    _
  $region43: #{inception_aux_forward.1} parent=0 // pred_check_branch
    %9081 = sbr.rel (0) target = $region45
  $region44: #{inception_aux_forward.1} parent=0 // pred_region
    _
  $region45: #{inception_aux_forward.1} parent=0 // pred_fallthru
    _

</llo_original>
